<compile_context>
chip_gen: v7x
topology: tpu7x:2x2x1
jax: 0.10.0
libtpu: 0.0.40
codegen_flags: <defaults>
</compile_context>

<pallas_src>
import functools

import jax
import jax.numpy as jnp
from jax import lax
from jax.experimental import pallas as pl
from jax.experimental.pallas import tpu as pltpu

BN_EPS = 1e-5


def _round_up(x, m):
    return (x + m - 1) // m * m


def _divisor_tile(d, prefs=(512, 384, 256, 128)):
    """Largest preferred tile that exactly divides d (d is a multiple of 128)."""
    for t in prefs:
        if d % t == 0:
            return t
    return d


_ROW_CAPS = None


def _row_caps():
    """(matmul row cap, bn_relu row cap), gated on TPU generation.
    Bigger tiles on 128-MiB-VMEM parts; conservative on v7x (64 MiB) / unknown."""
    global _ROW_CAPS
    if _ROW_CAPS is None:
        try:
            kind = jax.devices()[0].device_kind.lower()
        except Exception:  # pragma: no cover
            kind = ""
        if ("v5" in kind) or ("v6" in kind):
            _ROW_CAPS = (1024, 2048)
        else:
            _ROW_CAPS = (512, 1024)
    return _ROW_CAPS


def _row_tile(m, cap):
    """Row (second-minor) tile: one full tile if m <= cap, else a divisor of m,
    else pad m up to a multiple of 128 (rare)."""
    if m <= cap:
        return m, m
    for t in (cap, 1024, 512, 256, 128):
        if t <= cap and m % t == 0:
            return t, m
    return 128, _round_up(m, 128)


# ---------------------------------------------------------------------------
# Kernel 1: fused BatchNorm(scale,shift) + ReLU + 1x1 conv  (tiled MXU matmul)
#   out[M, N] = relu(x[M, K] * scale[K] + shift[K]) @ w[K, N]
# ---------------------------------------------------------------------------
def _bn_relu_mm_kernel(x_ref, s_ref, b_ref, w_ref, o_ref):
    a = jnp.maximum(x_ref[...].astype(jnp.float32) * s_ref[...] + b_ref[...], 0.0)
    o_ref[...] = jnp.dot(a.astype(jnp.bfloat16), w_ref[...],
                         preferred_element_type=jnp.float32).astype(o_ref.dtype)


def _bn_relu_mm_acc_kernel(x_ref, s_ref, b_ref, w_ref, o_ref, acc_ref):
    @pl.when(pl.program_id(2) == 0)
    def _():
        acc_ref[...] = jnp.zeros_like(acc_ref)

    a = jnp.maximum(x_ref[...].astype(jnp.float32) * s_ref[...] + b_ref[...], 0.0)
    acc_ref[...] += jnp.dot(a.astype(jnp.bfloat16), w_ref[...],
                            preferred_element_type=jnp.float32)

    @pl.when(pl.program_id(2) == pl.num_programs(2) - 1)
    def _():
        o_ref[...] = acc_ref[...].astype(o_ref.dtype)


def bn_relu_matmul_pallas(x2d, scale, shift, w):
    """x2d: [M, Ka] activations; scale/shift: [Kp] f32; w: [Kp, Np] bf16.
    Only the first Kp (<= Ka) input channels are read. Returns [M, Np] bf16."""
    M, Ka = x2d.shape
    Kp, Np = w.shape
    assert Kp <= Ka and Kp % 128 == 0 and Np % 128 == 0
    assert scale.shape == (Kp,) and shift.shape == (Kp,)

    cap, _ = _row_caps()
    tm, Mp = _row_tile(M, cap)
    tk = _divisor_tile(Kp)
    tn = _divisor_tile(Np)
    nk = Kp // tk
    if Mp != M:
        x2d = jnp.zeros((Mp, Ka), x2d.dtype).at[:M].set(x2d)
    s2 = scale.reshape(1, Kp).astype(jnp.float32)
    b2 = shift.reshape(1, Kp).astype(jnp.float32)

    if nk == 1:
        # Single K tile: no k axis, no accumulator scratch, no init/finalize.
        out = pl.pallas_call(
            _bn_relu_mm_kernel,
            out_shape=jax.ShapeDtypeStruct((Mp, Np), jnp.bfloat16),
            grid_spec=pltpu.PrefetchScalarGridSpec(
                num_scalar_prefetch=0,
                grid=(Mp // tm, Np // tn),
                in_specs=[
                    pl.BlockSpec((tm, tk), lambda i, j: (i, 0)),
                    pl.BlockSpec((1, tk), lambda i, j: (0, 0)),
                    pl.BlockSpec((1, tk), lambda i, j: (0, 0)),
                    pl.BlockSpec((tk, tn), lambda i, j: (0, j)),
                ],
                out_specs=pl.BlockSpec((tm, tn), lambda i, j: (i, j)),
            ),
            compiler_params=pltpu.CompilerParams(
                dimension_semantics=("parallel", "parallel")),
        )(x2d, s2, b2, w)
    else:
        out = pl.pallas_call(
            _bn_relu_mm_acc_kernel,
            out_shape=jax.ShapeDtypeStruct((Mp, Np), jnp.bfloat16),
            grid_spec=pltpu.PrefetchScalarGridSpec(
                num_scalar_prefetch=0,
                grid=(Mp // tm, Np // tn, nk),
                in_specs=[
                    pl.BlockSpec((tm, tk), lambda i, j, k: (i, k)),
                    pl.BlockSpec((1, tk), lambda i, j, k: (0, k)),
                    pl.BlockSpec((1, tk), lambda i, j, k: (0, k)),
                    pl.BlockSpec((tk, tn), lambda i, j, k: (k, j)),
                ],
                out_specs=pl.BlockSpec((tm, tn), lambda i, j, k: (i, j)),
                scratch_shapes=[pltpu.VMEM((tm, tn), jnp.float32)],
            ),
            compiler_params=pltpu.CompilerParams(
                dimension_semantics=("parallel", "parallel", "arbitrary")),
        )(x2d, s2, b2, w)
    return out if Mp == M else out[:M]


# ---------------------------------------------------------------------------
# Kernel 2: fused BatchNorm + ReLU + 3x3 conv (stride 1, pad 1)
#   Halo lives in a VMEM scratch (only the 4 border strips are zeroed), the W
#   shift is done once per dj (3 relayouts instead of 9), multiple images are
#   batched per grid step so each of the 9 MXU matmuls has M = Bt*H*W rows.
# ---------------------------------------------------------------------------
def _pick_batch_tile(N, H, W, Cp, tn, budget=6 * 1024 * 1024):
    per_img = (H * W * Cp * 6                     # f32 act + bf16 relu temp
               + (H + 2) * (W + 2) * Cp * 2       # bf16 halo scratch
               + H * W * Cp * 4                   # tap copies (bf16, ~2 live)
               + H * W * tn * 4                   # f32 accumulator
               + H * W * Cp * 4)                  # double-buffered bf16 input
    for d in range(N, 0, -1):
        if N % d == 0 and d * per_img <= budget:
            return d
    return 1


def _make_bn_relu_conv3x3_kernel(Bt, H, W, Cp, tn):
    HP, WP = H + 2, W + 2

    def kernel(x_ref, s_ref, b_ref, w_ref, o_ref, yp_ref):
        # Zero only the 1-pixel halo border (O(perimeter), not O(area)); done
        # every step so megacore grid splits never see an uninitialized halo.
        yp_ref[:, 0:1, :, :] = jnp.zeros((Bt, 1, WP, Cp), jnp.bfloat16)
        yp_ref[:, HP - 1:HP, :, :] = jnp.zeros((Bt, 1, WP, Cp), jnp.bfloat16)
        yp_ref[:, :, 0:1, :] = jnp.zeros((Bt, HP, 1, Cp), jnp.bfloat16)
        yp_ref[:, :, WP - 1:WP, :] = jnp.zeros((Bt, HP, 1, Cp), jnp.bfloat16)

        # BN + ReLU (the conv's zero padding logically happens AFTER relu, and
        # the halo is built after relu here, so it is genuinely zero).
        # NOTE: recomputed per output-channel tile j; with g_p = 128 there is
        # exactly one j tile so nothing is wasted.
        x = x_ref[...].astype(jnp.float32)                     # (Bt, H, W, Cp)
        y = jnp.maximum(x * s_ref[...] + b_ref[...], 0.0).astype(jnp.bfloat16)
        yp_ref[:, 1:H + 1, 1:W + 1, :] = y

        acc = jnp.zeros((Bt * H * W, tn), jnp.float32)
        for dj in range(3):
            # One sublane-offset load + flatten per dj; di windows are then
            # contiguous row ranges of the flattened column.
            col = yp_ref[:, :, dj:dj + W, :].reshape(Bt, HP * W, Cp)
            for di in range(3):
                win = col[:, di * W:(di + H) * W, :].reshape(Bt * H * W, Cp)
                acc = acc + jnp.dot(win, w_ref[di * 3 + dj],
                                    preferred_element_type=jnp.float32)
        o_ref[...] = acc.reshape(Bt, H * W, tn).astype(o_ref.dtype)

    return kernel


def bn_relu_conv3x3_pallas(x, scale, shift, w):
    """x: [N, H, W, Cp] bf16 (unpadded spatially); scale/shift: [Cp];
    w: [9, Cp, Np] bf16.  Returns conv3x3(relu(x*scale+shift), s1, p1)."""
    N, H, W, Cp = x.shape
    nine, Cw, Np = w.shape
    assert nine == 9 and Cw == Cp and Cp % 128 == 0 and Np % 128 == 0
    tn = _divisor_tile(Np)
    Bt = _pick_batch_tile(N, H, W, Cp, tn)
    s2 = scale.reshape(1, Cp).astype(jnp.float32)
    b2 = shift.reshape(1, Cp).astype(jnp.float32)
    kernel = _make_bn_relu_conv3x3_kernel(Bt, H, W, Cp, tn)
    out = pl.pallas_call(
        kernel,
        out_shape=jax.ShapeDtypeStruct((N, H * W, Np), jnp.bfloat16),
        grid_spec=pltpu.PrefetchScalarGridSpec(
            num_scalar_prefetch=0,
            grid=(N // Bt, Np // tn),
            in_specs=[
                pl.BlockSpec((Bt, H, W, Cp), lambda b, j: (b, 0, 0, 0)),
                pl.BlockSpec((1, Cp), lambda b, j: (0, 0)),
                pl.BlockSpec((1, Cp), lambda b, j: (0, 0)),
                pl.BlockSpec((9, Cp, tn), lambda b, j: (0, 0, j)),
            ],
            out_specs=pl.BlockSpec((Bt, H * W, tn), lambda b, j: (b, 0, j)),
            scratch_shapes=[pltpu.VMEM((Bt, H + 2, W + 2, Cp), jnp.bfloat16)],
        ),
        compiler_params=pltpu.CompilerParams(
            dimension_semantics=("parallel", "parallel")),
    )(x, s2, b2, w)
    return out.reshape(N, H, W, Np)


# ---------------------------------------------------------------------------
# Kernel 3: transition = fused BN + ReLU + 2x2 average pool + 1x1 conv.
#   Pool and the 1x1 conv commute (both linear), so we pool in VMEM and run
#   the matmul on 4x fewer rows.
# ---------------------------------------------------------------------------
def _make_bn_relu_pool_mm_kernel(Bt, H, W, Cp, tn):
    Ho, Wo = H // 2, W // 2

    def kernel(x_ref, s_ref, b_ref, w_ref, o_ref):
        x = x_ref[...].astype(jnp.float32)                     # (Bt, H, W, Cp)
        y = jnp.maximum(x * s_ref[...] + b_ref[...], 0.0)
        # 2x2 average pool in VMEM: pair-sum rows, then pair-sum columns.
        y = y.reshape(Bt, Ho, 2, W, Cp)
        y = y[:, :, 0] + y[:, :, 1]                            # (Bt, Ho, W, Cp)
        y = y.reshape(Bt, Ho, Wo, 2, Cp)
        y = y[:, :, :, 0, :] + y[:, :, :, 1, :]                # (Bt, Ho, Wo, Cp)
        p = (y * 0.25).reshape(Bt * Ho * Wo, Cp).astype(jnp.bfloat16)
        out = jnp.dot(p, w_ref[...], preferred_element_type=jnp.float32)
        o_ref[...] = out.reshape(Bt, Ho * Wo, tn).astype(o_ref.dtype)

    return kernel


def bn_relu_pool_matmul_pallas(x, scale, shift, w):
    """x: [N, H, W, Cp] bf16; scale/shift: [Cp]; w: [Cp, Np] bf16.
    Returns avgpool2x2(relu(bn(x))) @ w  ==  avgpool2x2(relu(bn(x)) @ w)."""
    N, H, W, Cp = x.shape
    Kw, Np = w.shape
    assert Kw == Cp and Cp % 128 == 0 and Np % 128 == 0
    assert H % 2 == 0 and W % 2 == 0
    Ho, Wo = H // 2, W // 2
    tn = _divisor_tile(Np)
    Bt = _pick_batch_tile(N, H, W, Cp, tn)
    s2 = scale.reshape(1, Cp).astype(jnp.float32)
    b2 = shift.reshape(1, Cp).astype(jnp.float32)
    kernel = _make_bn_relu_pool_mm_kernel(Bt, H, W, Cp, tn)
    out = pl.pallas_call(
        kernel,
        out_shape=jax.ShapeDtypeStruct((N, Ho * Wo, Np), jnp.bfloat16),
        grid_spec=pltpu.PrefetchScalarGridSpec(
            num_scalar_prefetch=0,
            grid=(N // Bt, Np // tn),
            in_specs=[
                pl.BlockSpec((Bt, H, W, Cp), lambda b, j: (b, 0, 0, 0)),
                pl.BlockSpec((1, Cp), lambda b, j: (0, 0)),
                pl.BlockSpec((1, Cp), lambda b, j: (0, 0)),
                # TODO(synk): K is untiled inside this kernel; fine at these
                # sizes, would need a k grid axis for very wide transitions.
                pl.BlockSpec((Cp, tn), lambda b, j: (0, j)),
            ],
            out_specs=pl.BlockSpec((Bt, Ho * Wo, tn), lambda b, j: (b, 0, j)),
        ),
        compiler_params=pltpu.CompilerParams(
            dimension_semantics=("parallel", "parallel")),
    )(x, s2, b2, w)
    return out.reshape(N, Ho, Wo, Np)


# ---------------------------------------------------------------------------
# Kernel 4: standalone fused BN + ReLU (used only for norm0 and norm5)
# ---------------------------------------------------------------------------
def _bn_relu_kernel(x_ref, s_ref, b_ref, o_ref):
    o_ref[...] = jnp.maximum(
        x_ref[...].astype(jnp.float32) * s_ref[...] + b_ref[...], 0.0
    ).astype(o_ref.dtype)


def bn_relu_pallas(x2d, scale, shift):
    M, C = x2d.shape
    assert C % 128 == 0
    _, cap = _row_caps()
    tm, Mp = _row_tile(M, cap)
    if Mp != M:
        x2d = jnp.zeros((Mp, C), x2d.dtype).at[:M].set(x2d)
    out = pl.pallas_call(
        _bn_relu_kernel,
        out_shape=jax.ShapeDtypeStruct((Mp, C), jnp.bfloat16),
        grid_spec=pltpu.PrefetchScalarGridSpec(
            num_scalar_prefetch=0,
            grid=(Mp // tm,),
            in_specs=[
                pl.BlockSpec((tm, C), lambda i: (i, 0)),
                pl.BlockSpec((1, C), lambda i: (0, 0)),
                pl.BlockSpec((1, C), lambda i: (0, 0)),
            ],
            out_specs=pl.BlockSpec((tm, C), lambda i: (i, 0)),
        ),
        compiler_params=pltpu.CompilerParams(dimension_semantics=("parallel",)),
    )(x2d, scale.reshape(1, C).astype(jnp.float32),
      shift.reshape(1, C).astype(jnp.float32))
    return out if Mp == M else out[:M]


# ---------------------------------------------------------------------------
# JAX glue around the Pallas kernels
# ---------------------------------------------------------------------------
def _channel_sums(x, c_valid):
    """Per-channel sum and sum-of-squares over (N, H, W) for the first c_valid
    channels.  TODO(synk): batch-statistic reduction kept as plain-JAX glue."""
    xf = x[..., :c_valid].astype(jnp.float32)
    return jnp.sum(xf, axis=(0, 1, 2)), jnp.sum(xf * xf, axis=(0, 1, 2))


def _scale_shift_from_sums(s, ss, count, c_pad):
    """Training-mode BatchNorm2d (gamma=1, beta=0) folded to per-channel
    (scale, shift) from cached moments; padded channels get scale=shift=0."""
    mean = s / count
    var = jnp.maximum(ss / count - mean * mean, 0.0)   # biased var (torch)
    scale = 1.0 / jnp.sqrt(var + BN_EPS)
    shift = -mean * scale
    c = s.shape[0]
    if c_pad > c:
        pad = jnp.zeros((c_pad - c,), jnp.float32)
        scale = jnp.concatenate([scale, pad])
        shift = jnp.concatenate([shift, pad])
    return scale, shift


def maxpool2d(x, k=3, stride=2, pad=1):
    # TODO(synk): max pooling kept as plain-JAX reduce_window glue.
    return lax.reduce_window(
        x, jnp.array(-jnp.inf, x.dtype), lax.max,
        (1, k, k, 1), (1, stride, stride, 1),
        ((0, 0), (pad, pad), (pad, pad), (0, 0)))


# ---------------------------------------------------------------------------
# Parameter init: torch-style initializers, then reshape/zero-pad/cast the conv
# weights ONCE into the MXU-friendly bf16 layouts used by the kernels.
# ---------------------------------------------------------------------------
def _kaiming_conv(key, kh, kw, cin, cout):
    std = (2.0 / (cin * kh * kw)) ** 0.5       # kaiming_normal_, fan_in, relu gain
    return jax.random.normal(key, (kh, kw, cin, cout), jnp.float32) * std


def init_densenet_params(key, growth_rate, block_config, num_init_features,
                         bn_size, num_classes):
    keys = iter(jax.random.split(key, 1024))
    g = growth_rate
    cb = bn_size * g
    cb_p = _round_up(cb, 128)
    g_p = _round_up(g, 128)

    params = {"conv0": _kaiming_conv(next(keys), 7, 7, 3, num_init_features)}

    num_features = num_init_features
    blocks = []
    for i, num_layers in enumerate(block_config):
        layers = []
        for l in range(num_layers):
            cin = num_features + l * g
            kp = _round_up(cin, 128)
            w1 = _kaiming_conv(next(keys), 1, 1, cin, cb).reshape(cin, cb)
            w1p = (jnp.zeros((kp, cb_p), jnp.float32)
                   .at[:cin, :cb].set(w1).astype(jnp.bfloat16))
            w2 = _kaiming_conv(next(keys), 3, 3, cb, g).reshape(9, cb, g)
            w2p = (jnp.zeros((9, cb_p, g_p), jnp.float32)
                   .at[:, :cb, :g].set(w2).astype(jnp.bfloat16))
            layers.append({"w1": w1p, "w2": w2p})
        blocks.append(layers)
        num_features = num_features + num_layers * g
        if i != len(block_config) - 1:
            cout = num_features // 2
            ct_p = _round_up(num_features, 128)
            co_p = _round_up(cout, 128)
            wt = _kaiming_conv(next(keys), 1, 1, num_features, cout)
            wt = wt.reshape(num_features, cout)
            params[f"transition{i + 1}"] = (
                jnp.zeros((ct_p, co_p), jnp.float32)
                .at[:num_features, :cout].set(wt).astype(jnp.bfloat16))
            num_features = cout
    params["blocks"] = blocks

    bound = 1.0 / (num_features ** 0.5)
    params["fc_w"] = jax.random.uniform(
        next(keys), (num_features, num_classes), jnp.float32, -bound, bound)
    params["fc_b"] = jnp.zeros((num_classes,), jnp.float32)  # constant_(bias, 0)
    return params, num_features


# ---------------------------------------------------------------------------
# Full DenseNet forward
# ---------------------------------------------------------------------------
def densenet_forward(params, x_nchw, *, growth_rate, block_config,
                     num_init_features, bn_size):
    g = growth_rate
    x = jnp.transpose(x_nchw, (0, 2, 3, 1)).astype(jnp.float32)   # NCHW -> NHWC

    # --- stem: conv0 (7x7 s2 p3) -> norm0 -> relu0 -> pool0
    # TODO(synk): 7x7 stride-2 stem conv left to XLA's conv (single 3-channel
    # layer, gather-heavy, not worth a Pallas kernel).
    x = lax.conv_general_dilated(
        x, params["conv0"], window_strides=(2, 2), padding=((3, 3), (3, 3)),
        dimension_numbers=("NHWC", "HWIO", "NHWC"))
    cf = num_init_features
    cf_p = _round_up(cf, 128)
    if cf_p > cf:
        x = jnp.pad(x, ((0, 0), (0, 0), (0, 0), (0, cf_p - cf)))
    N_, H_, W_, _ = x.shape
    s0, ss0 = _channel_sums(x, cf)
    sc0, sh0 = _scale_shift_from_sums(s0, ss0, N_ * H_ * W_, cf_p)
    x = bn_relu_pallas(x.reshape(-1, cf_p), sc0, sh0).reshape(N_, H_, W_, cf_p)
    x = maxpool2d(x, 3, 2, 1)

    num_features = num_init_features
    run_s = run_ss = None
    count = 1
    for i, num_layers in enumerate(block_config):
        N_, H_, W_, Cc = x.shape
        count = N_ * H_ * W_
        C0 = num_features
        Ctot = C0 + num_layers * g
        Ctot_p = _round_up(Ctot, 128)
        # One preallocated channel buffer per dense block (concat is free).
        if Ctot_p > Cc:
            buf = jnp.concatenate(
                [x, jnp.zeros((N_, H_, W_, Ctot_p - Cc), x.dtype)], axis=-1)
        else:
            buf = x
        # Incremental BN-moments cache: old channels never change, so only the
        # newly appended g channels are reduced each layer (no O(L^2) passes).
        run_s, run_ss = _channel_sums(buf, C0)

        for l in range(num_layers):
            cin = C0 + l * g
            w1 = params["blocks"][i][l]["w1"]          # (Kp, Cb_p) bf16
            w2 = params["blocks"][i][l]["w2"]          # (9, Cb_p, g_p) bf16
            kp = w1.shape[0]
            # norm1 + relu1 + conv1 (1x1) fused; scale/shift from cached moments
            s1, b1 = _scale_shift_from_sums(run_s, run_ss, count, kp)
            bott = bn_relu_matmul_pallas(
                buf.reshape(count, Ctot_p), s1, b1, w1)
            cbp = bott.shape[-1]
            bott = bott.reshape(N_, H_, W_, cbp)
            # norm2 + relu2 + conv2 (3x3, pad 1) fused; halo built in-kernel.
            bs, bss = _channel_sums(bott, bn_size * g)
            s2c, b2c = _scale_shift_from_sums(bs, bss, count, cbp)
            new = bn_relu_conv3x3_pallas(bott, s2c, b2c, w2)
            new_g = new[..., :g]                       # drop_rate = 0 -> identity
            ns, nss = _channel_sums(new_g, g)
            run_s = jnp.concatenate([run_s, ns])
            run_ss = jnp.concatenate([run_ss, nss])
            # TODO(synk): could write the conv output straight into `buf` via
            # input_output_aliases + channel-offset out index_map; here we rely
            # on XLA lowering this to an in-place dynamic-update-slice.
            buf = buf.at[..., cin:cin + g].set(new_g)

        x = buf
        num_features = Ctot
        if i != len(block_config) - 1:
            wt = params[f"transition{i + 1}"]          # (Ctot_p, Cout_p) bf16
            st, bt = _scale_shift_from_sums(run_s, run_ss, count, Ctot_p)
            # Pool and 1x1 conv commute -> fused BN+ReLU+pool+matmul kernel
            # (4x fewer MXU FLOPs, no separate avgpool HBM round trip).
            x = bn_relu_pool_matmul_pallas(x, st, bt, wt)
            num_features //= 2

    # norm5 (+ the F.relu in forward), adaptive_avg_pool2d((1,1)), classifier.
    # norm5 reuses the last block's cached moments.
    N_, H_, W_, Cp_ = x.shape
    s5, b5 = _scale_shift_from_sums(run_s, run_ss, N_ * H_ * W_, Cp_)
    x = bn_relu_pallas(x.reshape(-1, Cp_), s5, b5).reshape(N_, H_, W_, Cp_)
    pooled = jnp.mean(x.astype(jnp.float32), axis=(1, 2))[:, :num_features]
    # TODO(synk): classifier left as plain jnp.dot (tiny M/N).
    logits = pooled @ params["fc_w"] + params["fc_b"][None, :]
    return logits


# ---------------------------------------------------------------------------
if __name__ == "__main__":
    key = jax.random.PRNGKey(0)
    k_param, k_x = jax.random.split(key)

    # Small DenseNet-BC config (constructor-compatible with the torch module)
    growth_rate = 8
    block_config = (2, 2)
    num_init_features = 16
    bn_size = 2
    num_classes = 10

    params, num_features = init_densenet_params(
        k_param, growth_rate, block_config, num_init_features, bn_size,
        num_classes)

    # NCHW input, RGB, like the PyTorch module expects
    x = jax.random.normal(k_x, (2, 3, 32, 32), jnp.float32)

    fwd = jax.jit(functools.partial(
        densenet_forward, growth_rate=growth_rate, block_config=block_config,
        num_init_features=num_init_features, bn_size=bn_size))
    out = fwd(params, x)
    jax.block_until_ready(out)

    assert out.shape == (2, num_classes), out.shape
    assert out.dtype == jnp.float32
    print("KERNEL_OK")
</pallas_src>

<mosaic_0001>
module attributes {stable_mosaic.version = 11 : i64} {
  func.func @_bn_relu_kernel(%arg0: i32, %arg1: memref<512x128xf32, #tpu.memory_space<vmem>>, %arg2: memref<1x128xf32, #tpu.memory_space<vmem>>, %arg3: memref<1x128xf32, #tpu.memory_space<vmem>>, %arg4: memref<512x128xbf16, #tpu.memory_space<vmem>>) attributes {dimension_semantics = [#tpu.dimension_semantics<parallel>], iteration_bounds = array<i64: 1>, scalar_prefetch = 0 : i64, scratch_operands = 0 : i64, tpu.core_type = #tpu.core_type<tc>, window_params = [{transform_indices = @transform_0, window_bounds = array<i64: 512, 128>}, {pipeline_mode = #tpu.pipeline_mode<synchronous>, transform_indices = @transform_1, window_bounds = array<i64: 1, 128>}, {pipeline_mode = #tpu.pipeline_mode<synchronous>, transform_indices = @transform_2, window_bounds = array<i64: 1, 128>}, {transform_indices = @transform_3, window_bounds = array<i64: 512, 128>}]} {
    %c0 = arith.constant 0 : index
    %c0_0 = arith.constant 0 : index
    %0 = vector.load %arg1[%c0, %c0_0] : memref<512x128xf32, #tpu.memory_space<vmem>>, vector<512x128xf32>
    %c0_1 = arith.constant 0 : index
    %c0_2 = arith.constant 0 : index
    %1 = vector.load %arg2[%c0_1, %c0_2] : memref<1x128xf32, #tpu.memory_space<vmem>>, vector<1x128xf32>
    %2 = vector.broadcast %1 : vector<1x128xf32> to vector<512x128xf32>
    %3 = arith.mulf %0, %2 : vector<512x128xf32>
    %c0_3 = arith.constant 0 : index
    %c0_4 = arith.constant 0 : index
    %4 = vector.load %arg3[%c0_3, %c0_4] : memref<1x128xf32, #tpu.memory_space<vmem>>, vector<1x128xf32>
    %5 = vector.broadcast %4 : vector<1x128xf32> to vector<512x128xf32>
    %6 = arith.addf %3, %5 : vector<512x128xf32>
    %cst = arith.constant 0.000000e+00 : f32
    %7 = vector.broadcast %cst : f32 to vector<512x128xf32>
    %8 = arith.maximumf %6, %7 : vector<512x128xf32>
    %9 = arith.truncf %8 : vector<512x128xf32> to vector<512x128xbf16>
    %c0_5 = arith.constant 0 : index
    %c0_6 = arith.constant 0 : index
    %10 = vector.load %arg4[%c0_5, %c0_6] : memref<512x128xbf16, #tpu.memory_space<vmem>>, vector<512x128xbf16>
    tpu.vector_store %arg4[%c0_5, %c0_6], %9 {strides = array<i32>} : memref<512x128xbf16, #tpu.memory_space<vmem>>, vector<512x128xbf16>,
    return
  }
  func.func @transform_0(%arg0: i32) -> (i32, i32) {
    %c0_i32 = arith.constant 0 : i32
    %c0_i32_0 = arith.constant 0 : i32
    return %arg0, %c0_i32 : i32, i32
  }
  func.func @transform_1(%arg0: i32) -> (i32, i32) {
    %c0_i32 = arith.constant 0 : i32
    %c0_i32_0 = arith.constant 0 : i32
    %c0_i32_1 = arith.constant 0 : i32
    return %c0_i32, %c0_i32_0 : i32, i32
  }
  func.func @transform_2(%arg0: i32) -> (i32, i32) {
    %c0_i32 = arith.constant 0 : i32
    %c0_i32_0 = arith.constant 0 : i32
    %c0_i32_1 = arith.constant 0 : i32
    return %c0_i32, %c0_i32_0 : i32, i32
  }
  func.func @transform_3(%arg0: i32) -> (i32, i32) {
    %c0_i32 = arith.constant 0 : i32
    %c0_i32_0 = arith.constant 0 : i32
    return %arg0, %c0_i32 : i32, i32
  }
}

module attributes {stable_mosaic.version = 11 : i64} {
  func.func @_bn_relu_mm_kernel(%arg0: i32, %arg1: i32, %arg2: memref<128x128xbf16, #tpu.memory_space<vmem>>, %arg3: memref<1x128xf32, #tpu.memory_space<vmem>>, %arg4: memref<1x128xf32, #tpu.memory_space<vmem>>, %arg5: memref<128x128xbf16, #tpu.memory_space<vmem>>, %arg6: memref<128x128xbf16, #tpu.memory_space<vmem>>) attributes {dimension_semantics = [#tpu.dimension_semantics<parallel>, #tpu.dimension_semantics<parallel>], iteration_bounds = array<i64: 1, 1>, scalar_prefetch = 0 : i64, scratch_operands = 0 : i64, tpu.core_type = #tpu.core_type<tc>, window_params = [{transform_indices = @transform_0, window_bounds = array<i64: 128, 128>}, {pipeline_mode = #tpu.pipeline_mode<synchronous>, transform_indices = @transform_1, window_bounds = array<i64: 1, 128>}, {pipeline_mode = #tpu.pipeline_mode<synchronous>, transform_indices = @transform_2, window_bounds = array<i64: 1, 128>}, {transform_indices = @transform_3, window_bounds = array<i64: 128, 128>}, {transform_indices = @transform_4, window_bounds = array<i64: 128, 128>}]} {
    %c0 = arith.constant 0 : index
    %c0_0 = arith.constant 0 : index
    %0 = vector.load %arg2[%c0, %c0_0] : memref<128x128xbf16, #tpu.memory_space<vmem>>, vector<128x128xbf16>
    %1 = arith.extf %0 : vector<128x128xbf16> to vector<128x128xf32>
    %c0_1 = arith.constant 0 : index
    %c0_2 = arith.constant 0 : index
    %2 = vector.load %arg3[%c0_1, %c0_2] : memref<1x128xf32, #tpu.memory_space<vmem>>, vector<1x128xf32>
    %3 = vector.broadcast %2 : vector<1x128xf32> to vector<128x128xf32>
    %4 = arith.mulf %1, %3 : vector<128x128xf32>
    %c0_3 = arith.constant 0 : index
    %c0_4 = arith.constant 0 : index
    %5 = vector.load %arg4[%c0_3, %c0_4] : memref<1x128xf32, #tpu.memory_space<vmem>>, vector<1x128xf32>
    %6 = vector.broadcast %5 : vector<1x128xf32> to vector<128x128xf32>
    %7 = arith.addf %4, %6 : vector<128x128xf32>
    %cst = arith.constant 0.000000e+00 : f32
    %8 = vector.broadcast %cst : f32 to vector<128x128xf32>
    %9 = arith.maximumf %7, %8 : vector<128x128xf32>
    %10 = arith.truncf %9 : vector<128x128xf32> to vector<128x128xbf16>
    %c0_5 = arith.constant 0 : index
    %c0_6 = arith.constant 0 : index
    %11 = vector.load %arg5[%c0_5, %c0_6] : memref<128x128xbf16, #tpu.memory_space<vmem>>, vector<128x128xbf16>
    %cst_7 = arith.constant dense<0.000000e+00> : vector<128x128xf32>
    %12 = tpu.matmul %10, %11, %cst_7 {dimension_numbers = #tpu.dot_dimension_numbers<[1], [0], [0], [1], [0, 0, 1, 1], [], []>} : vector<128x128xbf16>, vector<128x128xbf16>, vector<128x128xf32> -> vector<128x128xf32>
    %13 = arith.truncf %12 : vector<128x128xf32> to vector<128x128xbf16>
    %c0_8 = arith.constant 0 : index
    %c0_9 = arith.constant 0 : index
    %14 = vector.load %arg6[%c0_8, %c0_9] : memref<128x128xbf16, #tpu.memory_space<vmem>>, vector<128x128xbf16>
    tpu.vector_store %arg6[%c0_8, %c0_9], %13 {strides = array<i32>} : memref<128x128xbf16, #tpu.memory_space<vmem>>, vector<128x128xbf16>,
    return
  }
  func.func @transform_0(%arg0: i32, %arg1: i32) -> (i32, i32) {
    %c0_i32 = arith.constant 0 : i32
    %c0_i32_0 = arith.constant 0 : i32
    return %arg0, %c0_i32 : i32, i32
  }
  func.func @transform_1(%arg0: i32, %arg1: i32) -> (i32, i32) {
    %c0_i32 = arith.constant 0 : i32
    %c0_i32_0 = arith.constant 0 : i32
    %c0_i32_1 = arith.constant 0 : i32
    return %c0_i32, %c0_i32_0 : i32, i32
  }
  func.func @transform_2(%arg0: i32, %arg1: i32) -> (i32, i32) {
    %c0_i32 = arith.constant 0 : i32
    %c0_i32_0 = arith.constant 0 : i32
    %c0_i32_1 = arith.constant 0 : i32
    return %c0_i32, %c0_i32_0 : i32, i32
  }
  func.func @transform_3(%arg0: i32, %arg1: i32) -> (i32, i32) {
    %c0_i32 = arith.constant 0 : i32
    %c0_i32_0 = arith.constant 0 : i32
    return %c0_i32, %arg1 : i32, i32
  }
  func.func @transform_4(%arg0: i32, %arg1: i32) -> (i32, i32) {
    %c0_i32 = arith.constant 0 : i32
    return %arg0, %arg1 : i32, i32
  }
}

module attributes {stable_mosaic.version = 11 : i64} {
  func.func @kernel(%arg0: i32, %arg1: i32, %arg2: memref<2x8x8x128xbf16, #tpu.memory_space<vmem>>, %arg3: memref<1x128xf32, #tpu.memory_space<vmem>>, %arg4: memref<1x128xf32, #tpu.memory_space<vmem>>, %arg5: memref<9x128x128xbf16, #tpu.memory_space<vmem>>, %arg6: memref<2x64x128xbf16, #tpu.memory_space<vmem>>, %arg7: memref<2x10x10x128xbf16, #tpu.memory_space<vmem>>) attributes {dimension_semantics = [#tpu.dimension_semantics<parallel>, #tpu.dimension_semantics<parallel>], iteration_bounds = array<i64: 1, 1>, scalar_prefetch = 0 : i64, scratch_operands = 1 : i64, tpu.core_type = #tpu.core_type<tc>, window_params = [{transform_indices = @transform_0, window_bounds = array<i64: 2, 8, 8, 128>}, {pipeline_mode = #tpu.pipeline_mode<synchronous>, transform_indices = @transform_1, window_bounds = array<i64: 1, 128>}, {pipeline_mode = #tpu.pipeline_mode<synchronous>, transform_indices = @transform_2, window_bounds = array<i64: 1, 128>}, {transform_indices = @transform_3, window_bounds = array<i64: 9, 128, 128>}, {transform_indices = @transform_4, window_bounds = array<i64: 2, 64, 128>}]} {
    %cst = arith.constant 0.000000e+00 : bf16
    %0 = vector.broadcast %cst : bf16 to vector<2x1x10x128xbf16>
    %c0 = arith.constant 0 : index
    %c0_0 = arith.constant 0 : index
    %c0_1 = arith.constant 0 : index
    %c0_2 = arith.constant 0 : index
    %1 = vector.load %arg7[%c0, %c0_0, %c0_1, %c0_2] : memref<2x10x10x128xbf16, #tpu.memory_space<vmem>>, vector<2x1x10x128xbf16>
    tpu.vector_store %arg7[%c0, %c0_0, %c0_1, %c0_2], %0 {strides = array<i32>} : memref<2x10x10x128xbf16, #tpu.memory_space<vmem>>, vector<2x1x10x128xbf16>,
    %cst_3 = arith.constant 0.000000e+00 : bf16
    %2 = vector.broadcast %cst_3 : bf16 to vector<2x1x10x128xbf16>
    %c0_4 = arith.constant 0 : index
    %c9 = arith.constant 9 : index
    %c0_5 = arith.constant 0 : index
    %c0_6 = arith.constant 0 : index
    %3 = vector.load %arg7[%c0_4, %c9, %c0_5, %c0_6] : memref<2x10x10x128xbf16, #tpu.memory_space<vmem>>, vector<2x1x10x128xbf16>
    tpu.vector_store %arg7[%c0_4, %c9, %c0_5, %c0_6], %2 {strides = array<i32>} : memref<2x10x10x128xbf16, #tpu.memory_space<vmem>>, vector<2x1x10x128xbf16>,
    %cst_7 = arith.constant 0.000000e+00 : bf16
    %4 = vector.broadcast %cst_7 : bf16 to vector<2x10x1x128xbf16>
    %c0_8 = arith.constant 0 : index
    %c0_9 = arith.constant 0 : index
    %c0_10 = arith.constant 0 : index
    %c0_11 = arith.constant 0 : index
    %5 = vector.load %arg7[%c0_8, %c0_9, %c0_10, %c0_11] : memref<2x10x10x128xbf16, #tpu.memory_space<vmem>>, vector<2x10x1x128xbf16>
    tpu.vector_store %arg7[%c0_8, %c0_9, %c0_10, %c0_11], %4 {strides = array<i32>} : memref<2x10x10x128xbf16, #tpu.memory_space<vmem>>, vector<2x10x1x128xbf16>,
    %cst_12 = arith.constant 0.000000e+00 : bf16
    %6 = vector.broadcast %cst_12 : bf16 to vector<2x10x1x128xbf16>
    %c0_13 = arith.constant 0 : index
    %c0_14 = arith.constant 0 : index
    %c9_15 = arith.constant 9 : index
    %c0_16 = arith.constant 0 : index
    %7 = vector.load %arg7[%c0_13, %c0_14, %c9_15, %c0_16] : memref<2x10x10x128xbf16, #tpu.memory_space<vmem>>, vector<2x10x1x128xbf16>
    tpu.vector_store %arg7[%c0_13, %c0_14, %c9_15, %c0_16], %6 {strides = array<i32>} : memref<2x10x10x128xbf16, #tpu.memory_space<vmem>>, vector<2x10x1x128xbf16>,
    %c0_17 = arith.constant 0 : index
    %c0_18 = arith.constant 0 : index
    %c0_19 = arith.constant 0 : index
    %c0_20 = arith.constant 0 : index
    %8 = vector.load %arg2[%c0_17, %c0_18, %c0_19, %c0_20] : memref<2x8x8x128xbf16, #tpu.memory_space<vmem>>, vector<2x8x8x128xbf16>
    %9 = arith.extf %8 : vector<2x8x8x128xbf16> to vector<2x8x8x128xf32>
    %c0_21 = arith.constant 0 : index
    %c0_22 = arith.constant 0 : index
    %10 = vector.load %arg3[%c0_21, %c0_22] : memref<1x128xf32, #tpu.memory_space<vmem>>, vector<1x128xf32>
    %11 = vector.shape_cast %10 : vector<1x128xf32> to vector<1x1x1x128xf32>
    %12 = vector.broadcast %11 : vector<1x1x1x128xf32> to vector<2x8x8x128xf32>
    %13 = arith.mulf %9, %12 : vector<2x8x8x128xf32>
    %c0_23 = arith.constant 0 : index
    %c0_24 = arith.constant 0 : index
    %14 = vector.load %arg4[%c0_23, %c0_24] : memref<1x128xf32, #tpu.memory_space<vmem>>, vector<1x128xf32>
    %15 = vector.shape_cast %14 : vector<1x128xf32> to vector<1x1x1x128xf32>
    %16 = vector.broadcast %15 : vector<1x1x1x128xf32> to vector<2x8x8x128xf32>
    %17 = arith.addf %13, %16 : vector<2x8x8x128xf32>
    %cst_25 = arith.constant 0.000000e+00 : f32
    %18 = vector.broadcast %cst_25 : f32 to vector<2x8x8x128xf32>
    %19 = arith.maximumf %17, %18 : vector<2x8x8x128xf32>
    %20 = arith.truncf %19 : vector<2x8x8x128xf32> to vector<2x8x8x128xbf16>
    %c0_26 = arith.constant 0 : index
    %c1 = arith.constant 1 : index
    %c1_27 = arith.constant 1 : index
    %c0_28 = arith.constant 0 : index
    %21 = vector.load %arg7[%c0_26, %c1, %c1_27, %c0_28] : memref<2x10x10x128xbf16, #tpu.memory_space<vmem>>, vector<2x8x8x128xbf16>
    tpu.vector_store %arg7[%c0_26, %c1, %c1_27, %c0_28], %20 {strides = array<i32>} : memref<2x10x10x128xbf16, #tpu.memory_space<vmem>>, vector<2x8x8x128xbf16>,
    %cst_29 = arith.constant 0.000000e+00 : f32
    %22 = vector.broadcast %cst_29 : f32 to vector<128x128xf32>
    %c0_30 = arith.constant 0 : index
    %c0_31 = arith.constant 0 : index
    %c0_32 = arith.constant 0 : index
    %c0_33 = arith.constant 0 : index
    %23 = vector.load %arg7[%c0_30, %c0_31, %c0_32, %c0_33] : memref<2x10x10x128xbf16, #tpu.memory_space<vmem>>, vector<2x10x8x128xbf16>
    %24 = vector.shape_cast %23 : vector<2x10x8x128xbf16> to vector<2x80x128xbf16>
    %25 = vector.extract_strided_slice %24 {offsets = [0, 0, 0], sizes = [2, 64, 128], strides = [1, 1, 1]} : vector<2x80x128xbf16> to vector<2x64x128xbf16>
    %26 = vector.shape_cast %25 : vector<2x64x128xbf16> to vector<128x128xbf16>
    %c0_34 = arith.constant 0 : index
    %c0_35 = arith.constant 0 : index
    %c0_36 = arith.constant 0 : index
    %27 = vector.load %arg5[%c0_34, %c0_35, %c0_36] : memref<9x128x128xbf16, #tpu.memory_space<vmem>>, vector<1x128x128xbf16>
    %28 = vector.shape_cast %27 : vector<1x128x128xbf16> to vector<128x128xbf16>
    %cst_37 = arith.constant dense<0.000000e+00> : vector<128x128xf32>
    %29 = tpu.matmul %26, %28, %cst_37 {dimension_numbers = #tpu.dot_dimension_numbers<[1], [0], [0], [1], [0, 0, 1, 1], [], []>} : vector<128x128xbf16>, vector<128x128xbf16>, vector<128x128xf32> -> vector<128x128xf32>
    %30 = arith.addf %22, %29 : vector<128x128xf32>
    %31 = vector.extract_strided_slice %24 {offsets = [0, 8, 0], sizes = [2, 64, 128], strides = [1, 1, 1]} : vector<2x80x128xbf16> to vector<2x64x128xbf16>
    %32 = vector.shape_cast %31 : vector<2x64x128xbf16> to vector<128x128xbf16>
    %c3 = arith.constant 3 : index
    %c0_38 = arith.constant 0 : index
    %c0_39 = arith.constant 0 : index
    %33 = vector.load %arg5[%c3, %c0_38, %c0_39] : memref<9x128x128xbf16, #tpu.memory_space<vmem>>, vector<1x128x128xbf16>
    %34 = vector.shape_cast %33 : vector<1x128x128xbf16> to vector<128x128xbf16>
    %cst_40 = arith.constant dense<0.000000e+00> : vector<128x128xf32>
    %35 = tpu.matmul %32, %34, %cst_40 {dimension_numbers = #tpu.dot_dimension_numbers<[1], [0], [0], [1], [0, 0, 1, 1], [], []>} : vector<128x128xbf16>, vector<128x128xbf16>, vector<128x128xf32> -> vector<128x128xf32>
    %36 = arith.addf %30, %35 : vector<128x128xf32>
    %37 = vector.extract_strided_slice %24 {offsets = [0, 16, 0], sizes = [2, 64, 128], strides = [1, 1, 1]} : vector<2x80x128xbf16> to vector<2x64x128xbf16>
    %38 = vector.shape_cast %37 : vector<2x64x128xbf16> to vector<128x128xbf16>
    %c6 = arith.constant 6 : index
    %c0_41 = arith.constant 0 : index
    %c0_42 = arith.constant 0 : index
    %39 = vector.load %arg5[%c6, %c0_41, %c0_42] : memref<9x128x128xbf16, #tpu.memory_space<vmem>>, vector<1x128x128xbf16>
    %40 = vector.shape_cast %39 : vector<1x128x128xbf16> to vector<128x128xbf16>
    %cst_43 = arith.constant dense<0.000000e+00> : vector<128x128xf32>
    %41 = tpu.matmul %38, %40, %cst_43 {dimension_numbers = #tpu.dot_dimension_numbers<[1], [0], [0], [1], [0, 0, 1, 1], [], []>} : vector<128x128xbf16>, vector<128x128xbf16>, vector<128x128xf32> -> vector<128x128xf32>
    %42 = arith.addf %36, %41 : vector<128x128xf32>
    %c0_44 = arith.constant 0 : index
    %c0_45 = arith.constant 0 : index
    %c1_46 = arith.constant 1 : index
    %c0_47 = arith.constant 0 : index
    %43 = vector.load %arg7[%c0_44, %c0_45, %c1_46, %c0_47] : memref<2x10x10x128xbf16, #tpu.memory_space<vmem>>, vector<2x10x8x128xbf16>
    %44 = vector.shape_cast %43 : vector<2x10x8x128xbf16> to vector<2x80x128xbf16>
    %45 = vector.extract_strided_slice %44 {offsets = [0, 0, 0], sizes = [2, 64, 128], strides = [1, 1, 1]} : vector<2x80x128xbf16> to vector<2x64x128xbf16>
    %46 = vector.shape_cast %45 : vector<2x64x128xbf16> to vector<128x128xbf16>
    %c1_48 = arith.constant 1 : index
    %c0_49 = arith.constant 0 : index
    %c0_50 = arith.constant 0 : index
    %47 = vector.load %arg5[%c1_48, %c0_49, %c0_50] : memref<9x128x128xbf16, #tpu.memory_space<vmem>>, vector<1x128x128xbf16>
    %48 = vector.shape_cast %47 : vector<1x128x128xbf16> to vector<128x128xbf16>
    %cst_51 = arith.constant dense<0.000000e+00> : vector<128x128xf32>
    %49 = tpu.matmul %46, %48, %cst_51 {dimension_numbers = #tpu.dot_dimension_numbers<[1], [0], [0], [1], [0, 0, 1, 1], [], []>} : vector<128x128xbf16>, vector<128x128xbf16>, vector<128x128xf32> -> vector<128x128xf32>
    %50 = arith.addf %42, %49 : vector<128x128xf32>
    %51 = vector.extract_strided_slice %44 {offsets = [0, 8, 0], sizes = [2, 64, 128], strides = [1, 1, 1]} : vector<2x80x128xbf16> to vector<2x64x128xbf16>
    %52 = vector.shape_cast %51 : vector<2x64x128xbf16> to vector<128x128xbf16>
    %c4 = arith.constant 4 : index
    %c0_52 = arith.constant 0 : index
    %c0_53 = arith.constant 0 : index
    %53 = vector.load %arg5[%c4, %c0_52, %c0_53] : memref<9x128x128xbf16, #tpu.memory_space<vmem>>, vector<1x128x128xbf16>
    %54 = vector.shape_cast %53 : vector<1x128x128xbf16> to vector<128x128xbf16>
    %cst_54 = arith.constant dense<0.000000e+00> : vector<128x128xf32>
    %55 = tpu.matmul %52, %54, %cst_54 {dimension_numbers = #tpu.dot_dimension_numbers<[1], [0], [0], [1], [0, 0, 1, 1], [], []>} : vector<128x128xbf16>, vector<128x128xbf16>, vector<128x128xf32> -> vector<128x128xf32>
    %56 = arith.addf %50, %55 : vector<128x128xf32>
    %57 = vector.extract_strided_slice %44 {offsets = [0, 16, 0], sizes = [2, 64, 128], strides = [1, 1, 1]} : vector<2x80x128xbf16> to vector<2x64x128xbf16>
    %58 = vector.shape_cast %57 : vector<2x64x128xbf16> to vector<128x128xbf16>
    %c7 = arith.constant 7 : index
    %c0_55 = arith.constant 0 : index
    %c0_56 = arith.constant 0 : index
    %59 = vector.load %arg5[%c7, %c0_55, %c0_56] : memref<9x128x128xbf16, #tpu.memory_space<vmem>>, vector<1x128x128xbf16>
    %60 = vector.shape_cast %59 : vector<1x128x128xbf16> to vector<128x128xbf16>
    %cst_57 = arith.constant dense<0.000000e+00> : vector<128x128xf32>
    %61 = tpu.matmul %58, %60, %cst_57 {dimension_numbers = #tpu.dot_dimension_numbers<[1], [0], [0], [1], [0, 0, 1, 1], [], []>} : vector<128x128xbf16>, vector<128x128xbf16>, vector<128x128xf32> -> vector<128x128xf32>
    %62 = arith.addf %56, %61 : vector<128x128xf32>
    %c0_58 = arith.constant 0 : index
    %c0_59 = arith.constant 0 : index
    %c2 = arith.constant 2 : index
    %c0_60 = arith.constant 0 : index
    %63 = vector.load %arg7[%c0_58, %c0_59, %c2, %c0_60] : memref<2x10x10x128xbf16, #tpu.memory_space<vmem>>, vector<2x10x8x128xbf16>
    %64 = vector.shape_cast %63 : vector<2x10x8x128xbf16> to vector<2x80x128xbf16>
    %65 = vector.extract_strided_slice %64 {offsets = [0, 0, 0], sizes = [2, 64, 128], strides = [1, 1, 1]} : vector<2x80x128xbf16> to vector<2x64x128xbf16>
    %66 = vector.shape_cast %65 : vector<2x64x128xbf16> to vector<128x128xbf16>
    %c2_61 = arith.constant 2 : index
    %c0_62 = arith.constant 0 : index
    %c0_63 = arith.constant 0 : index
    %67 = vector.load %arg5[%c2_61, %c0_62, %c0_63] : memref<9x128x128xbf16, #tpu.memory_space<vmem>>, vector<1x128x128xbf16>
    %68 = vector.shape_cast %67 : vector<1x128x128xbf16> to vector<128x128xbf16>
    %cst_64 = arith.constant dense<0.000000e+00> : vector<128x128xf32>
    %69 = tpu.matmul %66, %68, %cst_64 {dimension_numbers = #tpu.dot_dimension_numbers<[1], [0], [0], [1], [0, 0, 1, 1], [], []>} : vector<128x128xbf16>, vector<128x128xbf16>, vector<128x128xf32> -> vector<128x128xf32>
    %70 = arith.addf %62, %69 : vector<128x128xf32>
    %71 = vector.extract_strided_slice %64 {offsets = [0, 8, 0], sizes = [2, 64, 128], strides = [1, 1, 1]} : vector<2x80x128xbf16> to vector<2x64x128xbf16>
    %72 = vector.shape_cast %71 : vector<2x64x128xbf16> to vector<128x128xbf16>
    %c5 = arith.constant 5 : index
    %c0_65 = arith.constant 0 : index
    %c0_66 = arith.constant 0 : index
    %73 = vector.load %arg5[%c5, %c0_65, %c0_66] : memref<9x128x128xbf16, #tpu.memory_space<vmem>>, vector<1x128x128xbf16>
    %74 = vector.shape_cast %73 : vector<1x128x128xbf16> to vector<128x128xbf16>
    %cst_67 = arith.constant dense<0.000000e+00> : vector<128x128xf32>
    %75 = tpu.matmul %72, %74, %cst_67 {dimension_numbers = #tpu.dot_dimension_numbers<[1], [0], [0], [1], [0, 0, 1, 1], [], []>} : vector<128x128xbf16>, vector<128x128xbf16>, vector<128x128xf32> -> vector<128x128xf32>
    %76 = arith.addf %70, %75 : vector<128x128xf32>
    %77 = vector.extract_strided_slice %64 {offsets = [0, 16, 0], sizes = [2, 64, 128], strides = [1, 1, 1]} : vector<2x80x128xbf16> to vector<2x64x128xbf16>
    %78 = vector.shape_cast %77 : vector<2x64x128xbf16> to vector<128x128xbf16>
    %c8 = arith.constant 8 : index
    %c0_68 = arith.constant 0 : index
    %c0_69 = arith.constant 0 : index
    %79 = vector.load %arg5[%c8, %c0_68, %c0_69] : memref<9x128x128xbf16, #tpu.memory_space<vmem>>, vector<1x128x128xbf16>
    %80 = vector.shape_cast %79 : vector<1x128x128xbf16> to vector<128x128xbf16>
    %cst_70 = arith.constant dense<0.000000e+00> : vector<128x128xf32>
    %81 = tpu.matmul %78, %80, %cst_70 {dimension_numbers = #tpu.dot_dimension_numbers<[1], [0], [0], [1], [0, 0, 1, 1], [], []>} : vector<128x128xbf16>, vector<128x128xbf16>, vector<128x128xf32> -> vector<128x128xf32>
    %82 = arith.addf %76, %81 : vector<128x128xf32>
    %83 = vector.shape_cast %82 : vector<128x128xf32> to vector<2x64x128xf32>
    %84 = arith.truncf %83 : vector<2x64x128xf32> to vector<2x64x128xbf16>
    %c0_71 = arith.constant 0 : index
    %c0_72 = arith.constant 0 : index
    %c0_73 = arith.constant 0 : index
    %85 = vector.load %arg6[%c0_71, %c0_72, %c0_73] : memref<2x64x128xbf16, #tpu.memory_space<vmem>>, vector<2x64x128xbf16>
    tpu.vector_store %arg6[%c0_71, %c0_72, %c0_73], %84 {strides = array<i32>} : memref<2x64x128xbf16, #tpu.memory_space<vmem>>, vector<2x64x128xbf16>,
    return
  }
  func.func @transform_0(%arg0: i32, %arg1: i32) -> (i32, i32, i32, i32) {
    %c0_i32 = arith.constant 0 : i32
    %c0_i32_0 = arith.constant 0 : i32
    %c0_i32_1 = arith.constant 0 : i32
    %c0_i32_2 = arith.constant 0 : i32
    return %arg0, %c0_i32, %c0_i32_0, %c0_i32_1 : i32, i32, i32, i32
  }
  func.func @transform_1(%arg0: i32, %arg1: i32) -> (i32, i32) {
    %c0_i32 = arith.constant 0 : i32
    %c0_i32_0 = arith.constant 0 : i32
    %c0_i32_1 = arith.constant 0 : i32
    return %c0_i32, %c0_i32_0 : i32, i32
  }
  func.func @transform_2(%arg0: i32, %arg1: i32) -> (i32, i32) {
    %c0_i32 = arith.constant 0 : i32
    %c0_i32_0 = arith.constant 0 : i32
    %c0_i32_1 = arith.constant 0 : i32
    return %c0_i32, %c0_i32_0 : i32, i32
  }
  func.func @transform_3(%arg0: i32, %arg1: i32) -> (i32, i32, i32) {
    %c0_i32 = arith.constant 0 : i32
    %c0_i32_0 = arith.constant 0 : i32
    %c0_i32_1 = arith.constant 0 : i32
    return %c0_i32, %c0_i32_0, %arg1 : i32, i32, i32
  }
  func.func @transform_4(%arg0: i32, %arg1: i32) -> (i32, i32, i32) {
    %c0_i32 = arith.constant 0 : i32
    %c0_i32_0 = arith.constant 0 : i32
    return %arg0, %c0_i32, %arg1 : i32, i32, i32
  }
}

module attributes {stable_mosaic.version = 11 : i64} {
  func.func @kernel(%arg0: i32, %arg1: i32, %arg2: memref<2x8x8x128xbf16, #tpu.memory_space<vmem>>, %arg3: memref<1x128xf32, #tpu.memory_space<vmem>>, %arg4: memref<1x128xf32, #tpu.memory_space<vmem>>, %arg5: memref<128x128xbf16, #tpu.memory_space<vmem>>, %arg6: memref<2x16x128xbf16, #tpu.memory_space<vmem>>) attributes {dimension_semantics = [#tpu.dimension_semantics<parallel>, #tpu.dimension_semantics<parallel>], iteration_bounds = array<i64: 1, 1>, scalar_prefetch = 0 : i64, scratch_operands = 0 : i64, tpu.core_type = #tpu.core_type<tc>, window_params = [{transform_indices = @transform_0, window_bounds = array<i64: 2, 8, 8, 128>}, {pipeline_mode = #tpu.pipeline_mode<synchronous>, transform_indices = @transform_1, window_bounds = array<i64: 1, 128>}, {pipeline_mode = #tpu.pipeline_mode<synchronous>, transform_indices = @transform_2, window_bounds = array<i64: 1, 128>}, {transform_indices = @transform_3, window_bounds = array<i64: 128, 128>}, {transform_indices = @transform_4, window_bounds = array<i64: 2, 16, 128>}]} {
    %c0 = arith.constant 0 : index
    %c0_0 = arith.constant 0 : index
    %c0_1 = arith.constant 0 : index
    %c0_2 = arith.constant 0 : index
    %0 = vector.load %arg2[%c0, %c0_0, %c0_1, %c0_2] : memref<2x8x8x128xbf16, #tpu.memory_space<vmem>>, vector<2x8x8x128xbf16>
    %1 = arith.extf %0 : vector<2x8x8x128xbf16> to vector<2x8x8x128xf32>
    %c0_3 = arith.constant 0 : index
    %c0_4 = arith.constant 0 : index
    %2 = vector.load %arg3[%c0_3, %c0_4] : memref<1x128xf32, #tpu.memory_space<vmem>>, vector<1x128xf32>
    %3 = vector.shape_cast %2 : vector<1x128xf32> to vector<1x1x1x128xf32>
    %4 = vector.broadcast %3 : vector<1x1x1x128xf32> to vector<2x8x8x128xf32>
    %5 = arith.mulf %1, %4 : vector<2x8x8x128xf32>
    %c0_5 = arith.constant 0 : index
    %c0_6 = arith.constant 0 : index
    %6 = vector.load %arg4[%c0_5, %c0_6] : memref<1x128xf32, #tpu.memory_space<vmem>>, vector<1x128xf32>
    %7 = vector.shape_cast %6 : vector<1x128xf32> to vector<1x1x1x128xf32>
    %8 = vector.broadcast %7 : vector<1x1x1x128xf32> to vector<2x8x8x128xf32>
    %9 = arith.addf %5, %8 : vector<2x8x8x128xf32>
    %cst = arith.constant 0.000000e+00 : f32
    %10 = vector.broadcast %cst : f32 to vector<2x8x8x128xf32>
    %11 = arith.maximumf %9, %10 : vector<2x8x8x128xf32>
    %12 = vector.shape_cast %11 : vector<2x8x8x128xf32> to vector<2x4x2x8x128xf32>
    %13 = vector.extract_strided_slice %12 {offsets = [0, 0, 0, 0, 0], sizes = [2, 4, 1, 8, 128], strides = [1, 1, 1, 1, 1]} : vector<2x4x2x8x128xf32> to vector<2x4x1x8x128xf32>
    %14 = vector.shape_cast %13 : vector<2x4x1x8x128xf32> to vector<2x4x8x128xf32>
    %15 = vector.extract_strided_slice %12 {offsets = [0, 0, 1, 0, 0], sizes = [2, 4, 1, 8, 128], strides = [1, 1, 1, 1, 1]} : vector<2x4x2x8x128xf32> to vector<2x4x1x8x128xf32>
    %16 = vector.shape_cast %15 : vector<2x4x1x8x128xf32> to vector<2x4x8x128xf32>
    %17 = arith.addf %14, %16 : vector<2x4x8x128xf32>
    %18 = vector.shape_cast %17 : vector<2x4x8x128xf32> to vector<2x4x4x2x128xf32>
    %19 = vector.extract_strided_slice %18 {offsets = [0, 0, 0, 0, 0], sizes = [2, 4, 4, 1, 128], strides = [1, 1, 1, 1, 1]} : vector<2x4x4x2x128xf32> to vector<2x4x4x1x128xf32>
    %20 = vector.shape_cast %19 : vector<2x4x4x1x128xf32> to vector<2x4x4x128xf32>
    %21 = vector.extract_strided_slice %18 {offsets = [0, 0, 0, 1, 0], sizes = [2, 4, 4, 1, 128], strides = [1, 1, 1, 1, 1]} : vector<2x4x4x2x128xf32> to vector<2x4x4x1x128xf32>
    %22 = vector.shape_cast %21 : vector<2x4x4x1x128xf32> to vector<2x4x4x128xf32>
    %23 = arith.addf %20, %22 : vector<2x4x4x128xf32>
    %cst_7 = arith.constant 2.500000e-01 : f32
    %24 = vector.broadcast %cst_7 : f32 to vector<2x4x4x128xf32>
    %25 = arith.mulf %23, %24 : vector<2x4x4x128xf32>
    %26 = vector.shape_cast %25 : vector<2x4x4x128xf32> to vector<32x128xf32>
    %27 = arith.truncf %26 : vector<32x128xf32> to vector<32x128xbf16>
    %c0_8 = arith.constant 0 : index
    %c0_9 = arith.constant 0 : index
    %28 = vector.load %arg5[%c0_8, %c0_9] : memref<128x128xbf16, #tpu.memory_space<vmem>>, vector<128x128xbf16>
    %cst_10 = arith.constant dense<0.000000e+00> : vector<32x128xf32>
    %29 = tpu.matmul %27, %28, %cst_10 {dimension_numbers = #tpu.dot_dimension_numbers<[1], [0], [0], [1], [0, 0, 1, 1], [], []>} : vector<32x128xbf16>, vector<128x128xbf16>, vector<32x128xf32> -> vector<32x128xf32>
    %30 = vector.shape_cast %29 : vector<32x128xf32> to vector<2x16x128xf32>
    %31 = arith.truncf %30 : vector<2x16x128xf32> to vector<2x16x128xbf16>
    %c0_11 = arith.constant 0 : index
    %c0_12 = arith.constant 0 : index
    %c0_13 = arith.constant 0 : index
    %32 = vector.load %arg6[%c0_11, %c0_12, %c0_13] : memref<2x16x128xbf16, #tpu.memory_space<vmem>>, vector<2x16x128xbf16>
    tpu.vector_store %arg6[%c0_11, %c0_12, %c0_13], %31 {strides = array<i32>} : memref<2x16x128xbf16, #tpu.memory_space<vmem>>, vector<2x16x128xbf16>,
    return
  }
  func.func @transform_0(%arg0: i32, %arg1: i32) -> (i32, i32, i32, i32) {
    %c0_i32 = arith.constant 0 : i32
    %c0_i32_0 = arith.constant 0 : i32
    %c0_i32_1 = arith.constant 0 : i32
    %c0_i32_2 = arith.constant 0 : i32
    return %arg0, %c0_i32, %c0_i32_0, %c0_i32_1 : i32, i32, i32, i32
  }
  func.func @transform_1(%arg0: i32, %arg1: i32) -> (i32, i32) {
    %c0_i32 = arith.constant 0 : i32
    %c0_i32_0 = arith.constant 0 : i32
    %c0_i32_1 = arith.constant 0 : i32
    return %c0_i32, %c0_i32_0 : i32, i32
  }
  func.func @transform_2(%arg0: i32, %arg1: i32) -> (i32, i32) {
    %c0_i32 = arith.constant 0 : i32
    %c0_i32_0 = arith.constant 0 : i32
    %c0_i32_1 = arith.constant 0 : i32
    return %c0_i32, %c0_i32_0 : i32, i32
  }
  func.func @transform_3(%arg0: i32, %arg1: i32) -> (i32, i32) {
    %c0_i32 = arith.constant 0 : i32
    %c0_i32_0 = arith.constant 0 : i32
    return %c0_i32, %arg1 : i32, i32
  }
  func.func @transform_4(%arg0: i32, %arg1: i32) -> (i32, i32, i32) {
    %c0_i32 = arith.constant 0 : i32
    %c0_i32_0 = arith.constant 0 : i32
    return %arg0, %c0_i32, %arg1 : i32, i32, i32
  }
}

module attributes {stable_mosaic.version = 11 : i64} {
  func.func @_bn_relu_mm_kernel(%arg0: i32, %arg1: i32, %arg2: memref<32x128xbf16, #tpu.memory_space<vmem>>, %arg3: memref<1x128xf32, #tpu.memory_space<vmem>>, %arg4: memref<1x128xf32, #tpu.memory_space<vmem>>, %arg5: memref<128x128xbf16, #tpu.memory_space<vmem>>, %arg6: memref<32x128xbf16, #tpu.memory_space<vmem>>) attributes {dimension_semantics = [#tpu.dimension_semantics<parallel>, #tpu.dimension_semantics<parallel>], iteration_bounds = array<i64: 1, 1>, scalar_prefetch = 0 : i64, scratch_operands = 0 : i64, tpu.core_type = #tpu.core_type<tc>, window_params = [{transform_indices = @transform_0, window_bounds = array<i64: 32, 128>}, {pipeline_mode = #tpu.pipeline_mode<synchronous>, transform_indices = @transform_1, window_bounds = array<i64: 1, 128>}, {pipeline_mode = #tpu.pipeline_mode<synchronous>, transform_indices = @transform_2, window_bounds = array<i64: 1, 128>}, {transform_indices = @transform_3, window_bounds = array<i64: 128, 128>}, {transform_indices = @transform_4, window_bounds = array<i64: 32, 128>}]} {
    %c0 = arith.constant 0 : index
    %c0_0 = arith.constant 0 : index
    %0 = vector.load %arg2[%c0, %c0_0] : memref<32x128xbf16, #tpu.memory_space<vmem>>, vector<32x128xbf16>
    %1 = arith.extf %0 : vector<32x128xbf16> to vector<32x128xf32>
    %c0_1 = arith.constant 0 : index
    %c0_2 = arith.constant 0 : index
    %2 = vector.load %arg3[%c0_1, %c0_2] : memref<1x128xf32, #tpu.memory_space<vmem>>, vector<1x128xf32>
    %3 = vector.broadcast %2 : vector<1x128xf32> to vector<32x128xf32>
    %4 = arith.mulf %1, %3 : vector<32x128xf32>
    %c0_3 = arith.constant 0 : index
    %c0_4 = arith.constant 0 : index
    %5 = vector.load %arg4[%c0_3, %c0_4] : memref<1x128xf32, #tpu.memory_space<vmem>>, vector<1x128xf32>
    %6 = vector.broadcast %5 : vector<1x128xf32> to vector<32x128xf32>
    %7 = arith.addf %4, %6 : vector<32x128xf32>
    %cst = arith.constant 0.000000e+00 : f32
    %8 = vector.broadcast %cst : f32 to vector<32x128xf32>
    %9 = arith.maximumf %7, %8 : vector<32x128xf32>
    %10 = arith.truncf %9 : vector<32x128xf32> to vector<32x128xbf16>
    %c0_5 = arith.constant 0 : index
    %c0_6 = arith.constant 0 : index
    %11 = vector.load %arg5[%c0_5, %c0_6] : memref<128x128xbf16, #tpu.memory_space<vmem>>, vector<128x128xbf16>
    %cst_7 = arith.constant dense<0.000000e+00> : vector<32x128xf32>
    %12 = tpu.matmul %10, %11, %cst_7 {dimension_numbers = #tpu.dot_dimension_numbers<[1], [0], [0], [1], [0, 0, 1, 1], [], []>} : vector<32x128xbf16>, vector<128x128xbf16>, vector<32x128xf32> -> vector<32x128xf32>
    %13 = arith.truncf %12 : vector<32x128xf32> to vector<32x128xbf16>
    %c0_8 = arith.constant 0 : index
    %c0_9 = arith.constant 0 : index
    %14 = vector.load %arg6[%c0_8, %c0_9] : memref<32x128xbf16, #tpu.memory_space<vmem>>, vector<32x128xbf16>
    tpu.vector_store %arg6[%c0_8, %c0_9], %13 {strides = array<i32>} : memref<32x128xbf16, #tpu.memory_space<vmem>>, vector<32x128xbf16>,
    return
  }
  func.func @transform_0(%arg0: i32, %arg1: i32) -> (i32, i32) {
    %c0_i32 = arith.constant 0 : i32
    %c0_i32_0 = arith.constant 0 : i32
    return %arg0, %c0_i32 : i32, i32
  }
  func.func @transform_1(%arg0: i32, %arg1: i32) -> (i32, i32) {
    %c0_i32 = arith.constant 0 : i32
    %c0_i32_0 = arith.constant 0 : i32
    %c0_i32_1 = arith.constant 0 : i32
    return %c0_i32, %c0_i32_0 : i32, i32
  }
  func.func @transform_2(%arg0: i32, %arg1: i32) -> (i32, i32) {
    %c0_i32 = arith.constant 0 : i32
    %c0_i32_0 = arith.constant 0 : i32
    %c0_i32_1 = arith.constant 0 : i32
    return %c0_i32, %c0_i32_0 : i32, i32
  }
  func.func @transform_3(%arg0: i32, %arg1: i32) -> (i32, i32) {
    %c0_i32 = arith.constant 0 : i32
    %c0_i32_0 = arith.constant 0 : i32
    return %c0_i32, %arg1 : i32, i32
  }
  func.func @transform_4(%arg0: i32, %arg1: i32) -> (i32, i32) {
    %c0_i32 = arith.constant 0 : i32
    return %arg0, %arg1 : i32, i32
  }
}

module attributes {stable_mosaic.version = 11 : i64} {
  func.func @kernel(%arg0: i32, %arg1: i32, %arg2: memref<2x4x4x128xbf16, #tpu.memory_space<vmem>>, %arg3: memref<1x128xf32, #tpu.memory_space<vmem>>, %arg4: memref<1x128xf32, #tpu.memory_space<vmem>>, %arg5: memref<9x128x128xbf16, #tpu.memory_space<vmem>>, %arg6: memref<2x16x128xbf16, #tpu.memory_space<vmem>>, %arg7: memref<2x6x6x128xbf16, #tpu.memory_space<vmem>>) attributes {dimension_semantics = [#tpu.dimension_semantics<parallel>, #tpu.dimension_semantics<parallel>], iteration_bounds = array<i64: 1, 1>, scalar_prefetch = 0 : i64, scratch_operands = 1 : i64, tpu.core_type = #tpu.core_type<tc>, window_params = [{transform_indices = @transform_0, window_bounds = array<i64: 2, 4, 4, 128>}, {pipeline_mode = #tpu.pipeline_mode<synchronous>, transform_indices = @transform_1, window_bounds = array<i64: 1, 128>}, {pipeline_mode = #tpu.pipeline_mode<synchronous>, transform_indices = @transform_2, window_bounds = array<i64: 1, 128>}, {transform_indices = @transform_3, window_bounds = array<i64: 9, 128, 128>}, {transform_indices = @transform_4, window_bounds = array<i64: 2, 16, 128>}]} {
    %cst = arith.constant 0.000000e+00 : bf16
    %0 = vector.broadcast %cst : bf16 to vector<2x1x6x128xbf16>
    %c0 = arith.constant 0 : index
    %c0_0 = arith.constant 0 : index
    %c0_1 = arith.constant 0 : index
    %c0_2 = arith.constant 0 : index
    %1 = vector.load %arg7[%c0, %c0_0, %c0_1, %c0_2] : memref<2x6x6x128xbf16, #tpu.memory_space<vmem>>, vector<2x1x6x128xbf16>
    tpu.vector_store %arg7[%c0, %c0_0, %c0_1, %c0_2], %0 {strides = array<i32>} : memref<2x6x6x128xbf16, #tpu.memory_space<vmem>>, vector<2x1x6x128xbf16>,
    %cst_3 = arith.constant 0.000000e+00 : bf16
    %2 = vector.broadcast %cst_3 : bf16 to vector<2x1x6x128xbf16>
    %c0_4 = arith.constant 0 : index
    %c5 = arith.constant 5 : index
    %c0_5 = arith.constant 0 : index
    %c0_6 = arith.constant 0 : index
    %3 = vector.load %arg7[%c0_4, %c5, %c0_5, %c0_6] : memref<2x6x6x128xbf16, #tpu.memory_space<vmem>>, vector<2x1x6x128xbf16>
    tpu.vector_store %arg7[%c0_4, %c5, %c0_5, %c0_6], %2 {strides = array<i32>} : memref<2x6x6x128xbf16, #tpu.memory_space<vmem>>, vector<2x1x6x128xbf16>,
    %cst_7 = arith.constant 0.000000e+00 : bf16
    %4 = vector.broadcast %cst_7 : bf16 to vector<2x6x1x128xbf16>
    %c0_8 = arith.constant 0 : index
    %c0_9 = arith.constant 0 : index
    %c0_10 = arith.constant 0 : index
    %c0_11 = arith.constant 0 : index
    %5 = vector.load %arg7[%c0_8, %c0_9, %c0_10, %c0_11] : memref<2x6x6x128xbf16, #tpu.memory_space<vmem>>, vector<2x6x1x128xbf16>
    tpu.vector_store %arg7[%c0_8, %c0_9, %c0_10, %c0_11], %4 {strides = array<i32>} : memref<2x6x6x128xbf16, #tpu.memory_space<vmem>>, vector<2x6x1x128xbf16>,
    %cst_12 = arith.constant 0.000000e+00 : bf16
    %6 = vector.broadcast %cst_12 : bf16 to vector<2x6x1x128xbf16>
    %c0_13 = arith.constant 0 : index
    %c0_14 = arith.constant 0 : index
    %c5_15 = arith.constant 5 : index
    %c0_16 = arith.constant 0 : index
    %7 = vector.load %arg7[%c0_13, %c0_14, %c5_15, %c0_16] : memref<2x6x6x128xbf16, #tpu.memory_space<vmem>>, vector<2x6x1x128xbf16>
    tpu.vector_store %arg7[%c0_13, %c0_14, %c5_15, %c0_16], %6 {strides = array<i32>} : memref<2x6x6x128xbf16, #tpu.memory_space<vmem>>, vector<2x6x1x128xbf16>,
    %c0_17 = arith.constant 0 : index
    %c0_18 = arith.constant 0 : index
    %c0_19 = arith.constant 0 : index
    %c0_20 = arith.constant 0 : index
    %8 = vector.load %arg2[%c0_17, %c0_18, %c0_19, %c0_20] : memref<2x4x4x128xbf16, #tpu.memory_space<vmem>>, vector<2x4x4x128xbf16>
    %9 = arith.extf %8 : vector<2x4x4x128xbf16> to vector<2x4x4x128xf32>
    %c0_21 = arith.constant 0 : index
    %c0_22 = arith.constant 0 : index
    %10 = vector.load %arg3[%c0_21, %c0_22] : memref<1x128xf32, #tpu.memory_space<vmem>>, vector<1x128xf32>
    %11 = vector.shape_cast %10 : vector<1x128xf32> to vector<1x1x1x128xf32>
    %12 = vector.broadcast %11 : vector<1x1x1x128xf32> to vector<2x4x4x128xf32>
    %13 = arith.mulf %9, %12 : vector<2x4x4x128xf32>
    %c0_23 = arith.constant 0 : index
    %c0_24 = arith.constant 0 : index
    %14 = vector.load %arg4[%c0_23, %c0_24] : memref<1x128xf32, #tpu.memory_space<vmem>>, vector<1x128xf32>
    %15 = vector.shape_cast %14 : vector<1x128xf32> to vector<1x1x1x128xf32>
    %16 = vector.broadcast %15 : vector<1x1x1x128xf32> to vector<2x4x4x128xf32>
    %17 = arith.addf %13, %16 : vector<2x4x4x128xf32>
    %cst_25 = arith.constant 0.000000e+00 : f32
    %18 = vector.broadcast %cst_25 : f32 to vector<2x4x4x128xf32>
    %19 = arith.maximumf %17, %18 : vector<2x4x4x128xf32>
    %20 = arith.truncf %19 : vector<2x4x4x128xf32> to vector<2x4x4x128xbf16>
    %c0_26 = arith.constant 0 : index
    %c1 = arith.constant 1 : index
    %c1_27 = arith.constant 1 : index
    %c0_28 = arith.constant 0 : index
    %21 = vector.load %arg7[%c0_26, %c1, %c1_27, %c0_28] : memref<2x6x6x128xbf16, #tpu.memory_space<vmem>>, vector<2x4x4x128xbf16>
    tpu.vector_store %arg7[%c0_26, %c1, %c1_27, %c0_28], %20 {strides = array<i32>} : memref<2x6x6x128xbf16, #tpu.memory_space<vmem>>, vector<2x4x4x128xbf16>,
    %cst_29 = arith.constant 0.000000e+00 : f32
    %22 = vector.broadcast %cst_29 : f32 to vector<32x128xf32>
    %c0_30 = arith.constant 0 : index
    %c0_31 = arith.constant 0 : index
    %c0_32 = arith.constant 0 : index
    %c0_33 = arith.constant 0 : index
    %23 = vector.load %arg7[%c0_30, %c0_31, %c0_32, %c0_33] : memref<2x6x6x128xbf16, #tpu.memory_space<vmem>>, vector<2x6x4x128xbf16>
    %24 = vector.shape_cast %23 : vector<2x6x4x128xbf16> to vector<2x24x128xbf16>
    %25 = vector.extract_strided_slice %24 {offsets = [0, 0, 0], sizes = [2, 16, 128], strides = [1, 1, 1]} : vector<2x24x128xbf16> to vector<2x16x128xbf16>
    %26 = vector.shape_cast %25 : vector<2x16x128xbf16> to vector<32x128xbf16>
    %c0_34 = arith.constant 0 : index
    %c0_35 = arith.constant 0 : index
    %c0_36 = arith.constant 0 : index
    %27 = vector.load %arg5[%c0_34, %c0_35, %c0_36] : memref<9x128x128xbf16, #tpu.memory_space<vmem>>, vector<1x128x128xbf16>
    %28 = vector.shape_cast %27 : vector<1x128x128xbf16> to vector<128x128xbf16>
    %cst_37 = arith.constant dense<0.000000e+00> : vector<32x128xf32>
    %29 = tpu.matmul %26, %28, %cst_37 {dimension_numbers = #tpu.dot_dimension_numbers<[1], [0], [0], [1], [0, 0, 1, 1], [], []>} : vector<32x128xbf16>, vector<128x128xbf16>, vector<32x128xf32> -> vector<32x128xf32>
    %30 = arith.addf %22, %29 : vector<32x128xf32>
    %31 = vector.extract_strided_slice %24 {offsets = [0, 4, 0], sizes = [2, 16, 128], strides = [1, 1, 1]} : vector<2x24x128xbf16> to vector<2x16x128xbf16>
    %32 = vector.shape_cast %31 : vector<2x16x128xbf16> to vector<32x128xbf16>
    %c3 = arith.constant 3 : index
    %c0_38 = arith.constant 0 : index
    %c0_39 = arith.constant 0 : index
    %33 = vector.load %arg5[%c3, %c0_38, %c0_39] : memref<9x128x128xbf16, #tpu.memory_space<vmem>>, vector<1x128x128xbf16>
    %34 = vector.shape_cast %33 : vector<1x128x128xbf16> to vector<128x128xbf16>
    %cst_40 = arith.constant dense<0.000000e+00> : vector<32x128xf32>
    %35 = tpu.matmul %32, %34, %cst_40 {dimension_numbers = #tpu.dot_dimension_numbers<[1], [0], [0], [1], [0, 0, 1, 1], [], []>} : vector<32x128xbf16>, vector<128x128xbf16>, vector<32x128xf32> -> vector<32x128xf32>
    %36 = arith.addf %30, %35 : vector<32x128xf32>
    %37 = vector.extract_strided_slice %24 {offsets = [0, 8, 0], sizes = [2, 16, 128], strides = [1, 1, 1]} : vector<2x24x128xbf16> to vector<2x16x128xbf16>
    %38 = vector.shape_cast %37 : vector<2x16x128xbf16> to vector<32x128xbf16>
    %c6 = arith.constant 6 : index
    %c0_41 = arith.constant 0 : index
    %c0_42 = arith.constant 0 : index
    %39 = vector.load %arg5[%c6, %c0_41, %c0_42] : memref<9x128x128xbf16, #tpu.memory_space<vmem>>, vector<1x128x128xbf16>
    %40 = vector.shape_cast %39 : vector<1x128x128xbf16> to vector<128x128xbf16>
    %cst_43 = arith.constant dense<0.000000e+00> : vector<32x128xf32>
    %41 = tpu.matmul %38, %40, %cst_43 {dimension_numbers = #tpu.dot_dimension_numbers<[1], [0], [0], [1], [0, 0, 1, 1], [], []>} : vector<32x128xbf16>, vector<128x128xbf16>, vector<32x128xf32> -> vector<32x128xf32>
    %42 = arith.addf %36, %41 : vector<32x128xf32>
    %c0_44 = arith.constant 0 : index
    %c0_45 = arith.constant 0 : index
    %c1_46 = arith.constant 1 : index
    %c0_47 = arith.constant 0 : index
    %43 = vector.load %arg7[%c0_44, %c0_45, %c1_46, %c0_47] : memref<2x6x6x128xbf16, #tpu.memory_space<vmem>>, vector<2x6x4x128xbf16>
    %44 = vector.shape_cast %43 : vector<2x6x4x128xbf16> to vector<2x24x128xbf16>
    %45 = vector.extract_strided_slice %44 {offsets = [0, 0, 0], sizes = [2, 16, 128], strides = [1, 1, 1]} : vector<2x24x128xbf16> to vector<2x16x128xbf16>
    %46 = vector.shape_cast %45 : vector<2x16x128xbf16> to vector<32x128xbf16>
    %c1_48 = arith.constant 1 : index
    %c0_49 = arith.constant 0 : index
    %c0_50 = arith.constant 0 : index
    %47 = vector.load %arg5[%c1_48, %c0_49, %c0_50] : memref<9x128x128xbf16, #tpu.memory_space<vmem>>, vector<1x128x128xbf16>
    %48 = vector.shape_cast %47 : vector<1x128x128xbf16> to vector<128x128xbf16>
    %cst_51 = arith.constant dense<0.000000e+00> : vector<32x128xf32>
    %49 = tpu.matmul %46, %48, %cst_51 {dimension_numbers = #tpu.dot_dimension_numbers<[1], [0], [0], [1], [0, 0, 1, 1], [], []>} : vector<32x128xbf16>, vector<128x128xbf16>, vector<32x128xf32> -> vector<32x128xf32>
    %50 = arith.addf %42, %49 : vector<32x128xf32>
    %51 = vector.extract_strided_slice %44 {offsets = [0, 4, 0], sizes = [2, 16, 128], strides = [1, 1, 1]} : vector<2x24x128xbf16> to vector<2x16x128xbf16>
    %52 = vector.shape_cast %51 : vector<2x16x128xbf16> to vector<32x128xbf16>
    %c4 = arith.constant 4 : index
    %c0_52 = arith.constant 0 : index
    %c0_53 = arith.constant 0 : index
    %53 = vector.load %arg5[%c4, %c0_52, %c0_53] : memref<9x128x128xbf16, #tpu.memory_space<vmem>>, vector<1x128x128xbf16>
    %54 = vector.shape_cast %53 : vector<1x128x128xbf16> to vector<128x128xbf16>
    %cst_54 = arith.constant dense<0.000000e+00> : vector<32x128xf32>
    %55 = tpu.matmul %52, %54, %cst_54 {dimension_numbers = #tpu.dot_dimension_numbers<[1], [0], [0], [1], [0, 0, 1, 1], [], []>} : vector<32x128xbf16>, vector<128x128xbf16>, vector<32x128xf32> -> vector<32x128xf32>
    %56 = arith.addf %50, %55 : vector<32x128xf32>
    %57 = vector.extract_strided_slice %44 {offsets = [0, 8, 0], sizes = [2, 16, 128], strides = [1, 1, 1]} : vector<2x24x128xbf16> to vector<2x16x128xbf16>
    %58 = vector.shape_cast %57 : vector<2x16x128xbf16> to vector<32x128xbf16>
    %c7 = arith.constant 7 : index
    %c0_55 = arith.constant 0 : index
    %c0_56 = arith.constant 0 : index
    %59 = vector.load %arg5[%c7, %c0_55, %c0_56] : memref<9x128x128xbf16, #tpu.memory_space<vmem>>, vector<1x128x128xbf16>
    %60 = vector.shape_cast %59 : vector<1x128x128xbf16> to vector<128x128xbf16>
    %cst_57 = arith.constant dense<0.000000e+00> : vector<32x128xf32>
    %61 = tpu.matmul %58, %60, %cst_57 {dimension_numbers = #tpu.dot_dimension_numbers<[1], [0], [0], [1], [0, 0, 1, 1], [], []>} : vector<32x128xbf16>, vector<128x128xbf16>, vector<32x128xf32> -> vector<32x128xf32>
    %62 = arith.addf %56, %61 : vector<32x128xf32>
    %c0_58 = arith.constant 0 : index
    %c0_59 = arith.constant 0 : index
    %c2 = arith.constant 2 : index
    %c0_60 = arith.constant 0 : index
    %63 = vector.load %arg7[%c0_58, %c0_59, %c2, %c0_60] : memref<2x6x6x128xbf16, #tpu.memory_space<vmem>>, vector<2x6x4x128xbf16>
    %64 = vector.shape_cast %63 : vector<2x6x4x128xbf16> to vector<2x24x128xbf16>
    %65 = vector.extract_strided_slice %64 {offsets = [0, 0, 0], sizes = [2, 16, 128], strides = [1, 1, 1]} : vector<2x24x128xbf16> to vector<2x16x128xbf16>
    %66 = vector.shape_cast %65 : vector<2x16x128xbf16> to vector<32x128xbf16>
    %c2_61 = arith.constant 2 : index
    %c0_62 = arith.constant 0 : index
    %c0_63 = arith.constant 0 : index
    %67 = vector.load %arg5[%c2_61, %c0_62, %c0_63] : memref<9x128x128xbf16, #tpu.memory_space<vmem>>, vector<1x128x128xbf16>
    %68 = vector.shape_cast %67 : vector<1x128x128xbf16> to vector<128x128xbf16>
    %cst_64 = arith.constant dense<0.000000e+00> : vector<32x128xf32>
    %69 = tpu.matmul %66, %68, %cst_64 {dimension_numbers = #tpu.dot_dimension_numbers<[1], [0], [0], [1], [0, 0, 1, 1], [], []>} : vector<32x128xbf16>, vector<128x128xbf16>, vector<32x128xf32> -> vector<32x128xf32>
    %70 = arith.addf %62, %69 : vector<32x128xf32>
    %71 = vector.extract_strided_slice %64 {offsets = [0, 4, 0], sizes = [2, 16, 128], strides = [1, 1, 1]} : vector<2x24x128xbf16> to vector<2x16x128xbf16>
    %72 = vector.shape_cast %71 : vector<2x16x128xbf16> to vector<32x128xbf16>
    %c5_65 = arith.constant 5 : index
    %c0_66 = arith.constant 0 : index
    %c0_67 = arith.constant 0 : index
    %73 = vector.load %arg5[%c5_65, %c0_66, %c0_67] : memref<9x128x128xbf16, #tpu.memory_space<vmem>>, vector<1x128x128xbf16>
    %74 = vector.shape_cast %73 : vector<1x128x128xbf16> to vector<128x128xbf16>
    %cst_68 = arith.constant dense<0.000000e+00> : vector<32x128xf32>
    %75 = tpu.matmul %72, %74, %cst_68 {dimension_numbers = #tpu.dot_dimension_numbers<[1], [0], [0], [1], [0, 0, 1, 1], [], []>} : vector<32x128xbf16>, vector<128x128xbf16>, vector<32x128xf32> -> vector<32x128xf32>
    %76 = arith.addf %70, %75 : vector<32x128xf32>
    %77 = vector.extract_strided_slice %64 {offsets = [0, 8, 0], sizes = [2, 16, 128], strides = [1, 1, 1]} : vector<2x24x128xbf16> to vector<2x16x128xbf16>
    %78 = vector.shape_cast %77 : vector<2x16x128xbf16> to vector<32x128xbf16>
    %c8 = arith.constant 8 : index
    %c0_69 = arith.constant 0 : index
    %c0_70 = arith.constant 0 : index
    %79 = vector.load %arg5[%c8, %c0_69, %c0_70] : memref<9x128x128xbf16, #tpu.memory_space<vmem>>, vector<1x128x128xbf16>
    %80 = vector.shape_cast %79 : vector<1x128x128xbf16> to vector<128x128xbf16>
    %cst_71 = arith.constant dense<0.000000e+00> : vector<32x128xf32>
    %81 = tpu.matmul %78, %80, %cst_71 {dimension_numbers = #tpu.dot_dimension_numbers<[1], [0], [0], [1], [0, 0, 1, 1], [], []>} : vector<32x128xbf16>, vector<128x128xbf16>, vector<32x128xf32> -> vector<32x128xf32>
    %82 = arith.addf %76, %81 : vector<32x128xf32>
    %83 = vector.shape_cast %82 : vector<32x128xf32> to vector<2x16x128xf32>
    %84 = arith.truncf %83 : vector<2x16x128xf32> to vector<2x16x128xbf16>
    %c0_72 = arith.constant 0 : index
    %c0_73 = arith.constant 0 : index
    %c0_74 = arith.constant 0 : index
    %85 = vector.load %arg6[%c0_72, %c0_73, %c0_74] : memref<2x16x128xbf16, #tpu.memory_space<vmem>>, vector<2x16x128xbf16>
    tpu.vector_store %arg6[%c0_72, %c0_73, %c0_74], %84 {strides = array<i32>} : memref<2x16x128xbf16, #tpu.memory_space<vmem>>, vector<2x16x128xbf16>,
    return
  }
  func.func @transform_0(%arg0: i32, %arg1: i32) -> (i32, i32, i32, i32) {
    %c0_i32 = arith.constant 0 : i32
    %c0_i32_0 = arith.constant 0 : i32
    %c0_i32_1 = arith.constant 0 : i32
    %c0_i32_2 = arith.constant 0 : i32
    return %arg0, %c0_i32, %c0_i32_0, %c0_i32_1 : i32, i32, i32, i32
  }
  func.func @transform_1(%arg0: i32, %arg1: i32) -> (i32, i32) {
    %c0_i32 = arith.constant 0 : i32
    %c0_i32_0 = arith.constant 0 : i32
    %c0_i32_1 = arith.constant 0 : i32
    return %c0_i32, %c0_i32_0 : i32, i32
  }
  func.func @transform_2(%arg0: i32, %arg1: i32) -> (i32, i32) {
    %c0_i32 = arith.constant 0 : i32
    %c0_i32_0 = arith.constant 0 : i32
    %c0_i32_1 = arith.constant 0 : i32
    return %c0_i32, %c0_i32_0 : i32, i32
  }
  func.func @transform_3(%arg0: i32, %arg1: i32) -> (i32, i32, i32) {
    %c0_i32 = arith.constant 0 : i32
    %c0_i32_0 = arith.constant 0 : i32
    %c0_i32_1 = arith.constant 0 : i32
    return %c0_i32, %c0_i32_0, %arg1 : i32, i32, i32
  }
  func.func @transform_4(%arg0: i32, %arg1: i32) -> (i32, i32, i32) {
    %c0_i32 = arith.constant 0 : i32
    %c0_i32_0 = arith.constant 0 : i32
    return %arg0, %c0_i32, %arg1 : i32, i32, i32
  }
}

module attributes {stable_mosaic.version = 11 : i64} {
  func.func @_bn_relu_kernel(%arg0: i32, %arg1: memref<32x128xbf16, #tpu.memory_space<vmem>>, %arg2: memref<1x128xf32, #tpu.memory_space<vmem>>, %arg3: memref<1x128xf32, #tpu.memory_space<vmem>>, %arg4: memref<32x128xbf16, #tpu.memory_space<vmem>>) attributes {dimension_semantics = [#tpu.dimension_semantics<parallel>], iteration_bounds = array<i64: 1>, scalar_prefetch = 0 : i64, scratch_operands = 0 : i64, tpu.core_type = #tpu.core_type<tc>, window_params = [{transform_indices = @transform_0, window_bounds = array<i64: 32, 128>}, {pipeline_mode = #tpu.pipeline_mode<synchronous>, transform_indices = @transform_1, window_bounds = array<i64: 1, 128>}, {pipeline_mode = #tpu.pipeline_mode<synchronous>, transform_indices = @transform_2, window_bounds = array<i64: 1, 128>}, {transform_indices = @transform_3, window_bounds = array<i64: 32, 128>}]} {
    %c0 = arith.constant 0 : index
    %c0_0 = arith.constant 0 : index
    %0 = vector.load %arg1[%c0, %c0_0] : memref<32x128xbf16, #tpu.memory_space<vmem>>, vector<32x128xbf16>
    %1 = arith.extf %0 : vector<32x128xbf16> to vector<32x128xf32>
    %c0_1 = arith.constant 0 : index
    %c0_2 = arith.constant 0 : index
    %2 = vector.load %arg2[%c0_1, %c0_2] : memref<1x128xf32, #tpu.memory_space<vmem>>, vector<1x128xf32>
    %3 = vector.broadcast %2 : vector<1x128xf32> to vector<32x128xf32>
    %4 = arith.mulf %1, %3 : vector<32x128xf32>
    %c0_3 = arith.constant 0 : index
    %c0_4 = arith.constant 0 : index
    %5 = vector.load %arg3[%c0_3, %c0_4] : memref<1x128xf32, #tpu.memory_space<vmem>>, vector<1x128xf32>
    %6 = vector.broadcast %5 : vector<1x128xf32> to vector<32x128xf32>
    %7 = arith.addf %4, %6 : vector<32x128xf32>
    %cst = arith.constant 0.000000e+00 : f32
    %8 = vector.broadcast %cst : f32 to vector<32x128xf32>
    %9 = arith.maximumf %7, %8 : vector<32x128xf32>
    %10 = arith.truncf %9 : vector<32x128xf32> to vector<32x128xbf16>
    %c0_5 = arith.constant 0 : index
    %c0_6 = arith.constant 0 : index
    %11 = vector.load %arg4[%c0_5, %c0_6] : memref<32x128xbf16, #tpu.memory_space<vmem>>, vector<32x128xbf16>
    tpu.vector_store %arg4[%c0_5, %c0_6], %10 {strides = array<i32>} : memref<32x128xbf16, #tpu.memory_space<vmem>>, vector<32x128xbf16>,
    return
  }
  func.func @transform_0(%arg0: i32) -> (i32, i32) {
    %c0_i32 = arith.constant 0 : i32
    %c0_i32_0 = arith.constant 0 : i32
    return %arg0, %c0_i32 : i32, i32
  }
  func.func @transform_1(%arg0: i32) -> (i32, i32) {
    %c0_i32 = arith.constant 0 : i32
    %c0_i32_0 = arith.constant 0 : i32
    %c0_i32_1 = arith.constant 0 : i32
    return %c0_i32, %c0_i32_0 : i32, i32
  }
  func.func @transform_2(%arg0: i32) -> (i32, i32) {
    %c0_i32 = arith.constant 0 : i32
    %c0_i32_0 = arith.constant 0 : i32
    %c0_i32_1 = arith.constant 0 : i32
    return %c0_i32, %c0_i32_0 : i32, i32
  }
  func.func @transform_3(%arg0: i32) -> (i32, i32) {
    %c0_i32 = arith.constant 0 : i32
    %c0_i32_0 = arith.constant 0 : i32
    return %arg0, %c0_i32 : i32, i32
  }
}

</mosaic_0001>

<llo_original>
// kernel: densenet_forward.12
$region0: #{densenet_forward.12}
  #allocation0 [shape = 'u32[]', space=smem, size = 0x4, offset = 0x4, fixed_abs, tag = 'smem constant byte address 0x4 - core index']
  #allocation1 [shape = 'u32[144,128]{1,0:T(1,128)}', space=vmem, size = 0x12000, scoped, tag = 'internal scratch']
  %s0 = inlined_call_operand.vmem [shape: bf16[128,128], index: 0, kind: input, shape index: {}]
  %s1 = inlined_call_operand.vmem [shape: f32[1,128], index: 1, kind: input, shape index: {}]
  %s2 = inlined_call_operand.vmem [shape: f32[1,128], index: 2, kind: input, shape index: {}]
  %s3 = inlined_call_operand.vmem [shape: bf16[128,128], index: 3, kind: input, shape index: {}]
  %s4 = inlined_call_operand.vmem [shape: bf16[128,128], index: 4, kind: output, shape index: {}]
  %s5 = sld [smem:[#allocation0]]
  $region26: #{densenet_forward.12} parent=0
    _
  %s7 = ssub.s32 1, %s5
  %s8 = scalar_select 0, %s7, %s5
  // Predicated region
  $region2: #{densenet_forward.12} parent=0 // pred_check
    _
  $region3: #{densenet_forward.12} parent=0 // pred_check_branch
    %10 = sbr.rel (0) target = $region5
  $region4: #{densenet_forward.12} parent=0 // pred_region
    _
  $region5: #{densenet_forward.12} parent=0 // pred_fallthru
    _
  // Predicated region
  $region6: #{densenet_forward.12} parent=0 // pred_check
    _
  $region7: #{densenet_forward.12} parent=0 // pred_check_branch
    %12 = sbr.rel (0) target = $region9
  $region8: #{densenet_forward.12} parent=0 // pred_region
    _
  $region9: #{densenet_forward.12} parent=0 // pred_fallthru
    _
  // Predicated region
  $region10: #{densenet_forward.12} parent=0 // pred_check
    _
  $region11: #{densenet_forward.12} parent=0 // pred_check_branch
    %14 = sbr.rel (0) target = $region13
  $region12: #{densenet_forward.12} parent=0 // pred_region
    _
  $region13: #{densenet_forward.12} parent=0 // pred_fallthru
    _
  // Predicated region
  $region14: #{densenet_forward.12} parent=0 // pred_check
    _
  $region15: #{densenet_forward.12} parent=0 // pred_check_branch
    %16 = sbr.rel (0) target = $region17
  $region16: #{densenet_forward.12} parent=0 // pred_region
    _
  $region17: #{densenet_forward.12} parent=0 // pred_fallthru
    _
  %v18 = vld [vmem:[%s0] sm:$0xf]
  %v19 = vld [vmem:[%s0 + $0x4] sm:$0xf]
  %v20 = vld [vmem:[%s0 + $0x8] sm:$0xf]
  %v21 = vld [vmem:[%s0 + $0xc] sm:$0xf]
  %v22 = vld [vmem:[%s0 + $0x10] sm:$0xf]
  %v23 = vld [vmem:[%s0 + $0x14] sm:$0xf]
  %v24 = vld [vmem:[%s0 + $0x18] sm:$0xf]
  %v25 = vld [vmem:[%s0 + $0x1c] sm:$0xf]
  %v26 = vld [vmem:[%s0 + $0x20] sm:$0xf]
  %v27 = vld [vmem:[%s0 + $0x24] sm:$0xf]
  %v28 = vld [vmem:[%s0 + $0x28] sm:$0xf]
  %v29 = vld [vmem:[%s0 + $0x2c] sm:$0xf]
  %v30 = vld [vmem:[%s0 + $0x30] sm:$0xf]
  %v31 = vld [vmem:[%s0 + $0x34] sm:$0xf]
  %v32 = vld [vmem:[%s0 + $0x38] sm:$0xf]
  %v33 = vld [vmem:[%s0 + $0x3c] sm:$0xf]
  %v34 = vunpack.c.l.bf16 %v18
  %v35 = vunpack.c.l.bf16 %v19
  %v36 = vunpack.c.l.bf16 %v20
  %v37 = vunpack.c.l.bf16 %v21
  %v38 = vunpack.c.l.bf16 %v22
  %v39 = vunpack.c.l.bf16 %v23
  %v40 = vunpack.c.l.bf16 %v24
  %v41 = vunpack.c.l.bf16 %v25
  %v42 = vunpack.c.l.bf16 %v26
  %v43 = vunpack.c.l.bf16 %v27
  %v44 = vunpack.c.l.bf16 %v28
  %v45 = vunpack.c.l.bf16 %v29
  %v46 = vunpack.c.l.bf16 %v30
  %v47 = vunpack.c.l.bf16 %v31
  %v48 = vunpack.c.l.bf16 %v32
  %v49 = vunpack.c.l.bf16 %v33
  %v50 = vld [vmem:[%s1] sm:$0x1]
  %v52 = vlaneseq
  %v53 = vshrl.u32 %v52, 7
  %v54 = vsub.s32 0, %v53
  %v55 = vrot.slane %v50, %v54
  %v57 = vmul.f32 %v34, %v55
  %v58 = vmul.f32 %v35, %v55
  %v59 = vmul.f32 %v36, %v55
  %v60 = vmul.f32 %v37, %v55
  %v61 = vmul.f32 %v38, %v55
  %v62 = vmul.f32 %v39, %v55
  %v63 = vmul.f32 %v40, %v55
  %v64 = vmul.f32 %v41, %v55
  %v65 = vmul.f32 %v42, %v55
  %v66 = vmul.f32 %v43, %v55
  %v67 = vmul.f32 %v44, %v55
  %v68 = vmul.f32 %v45, %v55
  %v69 = vmul.f32 %v46, %v55
  %v70 = vmul.f32 %v47, %v55
  %v71 = vmul.f32 %v48, %v55
  %v72 = vmul.f32 %v49, %v55
  %v73 = vld [vmem:[%s2] sm:$0x1]
  %v75 = vlaneseq
  %v76 = vshrl.u32 %v75, 7
  %v77 = vsub.s32 0, %v76
  %v78 = vrot.slane %v73, %v77
  %v80 = vadd.f32 %v57, %v78
  %v81 = vadd.f32 %v58, %v78
  %v82 = vadd.f32 %v59, %v78
  %v83 = vadd.f32 %v60, %v78
  %v84 = vadd.f32 %v61, %v78
  %v85 = vadd.f32 %v62, %v78
  %v86 = vadd.f32 %v63, %v78
  %v87 = vadd.f32 %v64, %v78
  %v88 = vadd.f32 %v65, %v78
  %v89 = vadd.f32 %v66, %v78
  %v90 = vadd.f32 %v67, %v78
  %v91 = vadd.f32 %v68, %v78
  %v92 = vadd.f32 %v69, %v78
  %v93 = vadd.f32 %v70, %v78
  %v94 = vadd.f32 %v71, %v78
  %v95 = vadd.f32 %v72, %v78
  %v96 = vmax.f32 %v80, 0.0
  %v97 = vmax.f32 %v81, 0.0
  %v98 = vmax.f32 %v82, 0.0
  %v99 = vmax.f32 %v83, 0.0
  %v100 = vmax.f32 %v84, 0.0
  %v101 = vmax.f32 %v85, 0.0
  %v102 = vmax.f32 %v86, 0.0
  %v103 = vmax.f32 %v87, 0.0
  %v104 = vmax.f32 %v88, 0.0
  %v105 = vmax.f32 %v89, 0.0
  %v106 = vmax.f32 %v90, 0.0
  %v107 = vmax.f32 %v91, 0.0
  %v108 = vmax.f32 %v92, 0.0
  %v109 = vmax.f32 %v93, 0.0
  %v110 = vmax.f32 %v94, 0.0
  %v111 = vmax.f32 %v95, 0.0
  %v112 = vpack.c.bf16 %v97, %v96
  %v113 = vpack.c.bf16 %v99, %v98
  %v114 = vpack.c.bf16 %v101, %v100
  %v115 = vpack.c.bf16 %v103, %v102
  %v116 = vpack.c.bf16 %v105, %v104
  %v117 = vpack.c.bf16 %v107, %v106
  %v118 = vpack.c.bf16 %v109, %v108
  %v119 = vpack.c.bf16 %v111, %v110
  %v120 = vld [vmem:[%s3] sm:$0xf]
  %v121 = vld [vmem:[%s3 + $0x4] sm:$0xf]
  %v122 = vld [vmem:[%s3 + $0x8] sm:$0xf]
  %v123 = vld [vmem:[%s3 + $0xc] sm:$0xf]
  %v124 = vld [vmem:[%s3 + $0x10] sm:$0xf]
  %v125 = vld [vmem:[%s3 + $0x14] sm:$0xf]
  %v126 = vld [vmem:[%s3 + $0x18] sm:$0xf]
  %v127 = vld [vmem:[%s3 + $0x1c] sm:$0xf]
  %v128 = vld [vmem:[%s3 + $0x20] sm:$0xf]
  %v129 = vld [vmem:[%s3 + $0x24] sm:$0xf]
  %v130 = vld [vmem:[%s3 + $0x28] sm:$0xf]
  %v131 = vld [vmem:[%s3 + $0x2c] sm:$0xf]
  %v132 = vld [vmem:[%s3 + $0x30] sm:$0xf]
  %v133 = vld [vmem:[%s3 + $0x34] sm:$0xf]
  %v134 = vld [vmem:[%s3 + $0x38] sm:$0xf]
  %v135 = vld [vmem:[%s3 + $0x3c] sm:$0xf]
  %v152 = vunpack.c.l.b16 %v120
  %v153 = vunpack.c.l.b16 %v121
  %v154 = vunpack.c.l.b16 %v122
  %v155 = vunpack.c.l.b16 %v123
  %v156 = vunpack.c.l.b16 %v124
  %v157 = vunpack.c.l.b16 %v125
  %v158 = vunpack.c.l.b16 %v126
  %v159 = vunpack.c.l.b16 %v127
  %v160 = vunpack.c.l.b16 %v128
  %v161 = vunpack.c.l.b16 %v129
  %v162 = vunpack.c.l.b16 %v130
  %v163 = vunpack.c.l.b16 %v131
  %v164 = vunpack.c.l.b16 %v132
  %v165 = vunpack.c.l.b16 %v133
  %v166 = vunpack.c.l.b16 %v134
  %v167 = vunpack.c.l.b16 %v135
  %v168 = vpack.c.b16 %v153, %v152
  %v169 = vpack.c.b16 %v155, %v154
  %v170 = vpack.c.b16 %v157, %v156
  %v171 = vpack.c.b16 %v159, %v158
  %v172 = vpack.c.b16 %v161, %v160
  %v173 = vpack.c.b16 %v163, %v162
  %v174 = vpack.c.b16 %v165, %v164
  %v175 = vpack.c.b16 %v167, %v166
  %184 = vmatprep.subr.bf16.mxu0 0
  %185 = vmatpush1.bf16.msra.mxu0 %v168
  %186 = vmatprep.subr.bf16.mxu0 0
  %187 = vmatpush1.bf16.msra.mxu0 %v169
  %188 = vmatprep.subr.bf16.mxu0 0
  %189 = vmatpush1.bf16.msra.mxu0 %v170
  %190 = vmatprep.subr.bf16.mxu0 0
  %191 = vmatpush1.bf16.msra.mxu0 %v171
  %192 = vmatprep.subr.bf16.mxu0 0
  %193 = vmatpush1.bf16.msra.mxu0 %v172
  %194 = vmatprep.subr.bf16.mxu0 0
  %195 = vmatpush1.bf16.msra.mxu0 %v173
  %196 = vmatprep.subr.bf16.mxu0 0
  %197 = vmatpush1.bf16.msra.mxu0 %v174
  %198 = vmatprep.subr.bf16.mxu0 0
  %199 = vmatpush1.bf16.msra.mxu0 %v175
  %200 = vmatprep.subr.bf16.mxu0 0
  %201 = vmatpush1.bf16.msra.mxu0 0
  %202 = vmatprep.subr.bf16.mxu0 0
  %203 = vmatpush1.bf16.msra.mxu0 0
  %204 = vmatprep.subr.bf16.mxu0 0
  %205 = vmatpush1.bf16.msra.mxu0 0
  %206 = vmatprep.subr.bf16.mxu0 0
  %207 = vmatpush1.bf16.msra.mxu0 0
  %208 = vmatprep.subr.bf16.mxu0 0
  %209 = vmatpush1.bf16.msra.mxu0 0
  %210 = vmatprep.subr.bf16.mxu0 0
  %211 = vmatpush1.bf16.msra.mxu0 0
  %212 = vmatprep.subr.bf16.mxu0 0
  %213 = vmatpush1.bf16.msra.mxu0 0
  %214 = vmatprep.subr.bf16.mxu0 0
  %215 = vmatpush1.bf16.msra.mxu0 0
  %216 = vmatprep.mubr.bf16.mxu0 0
  %217 = vmatmul.mubr.bf16.gmra.mrb[0].mxu0 %v112
  %v218 = vpop.f32.mrb[0].mxu0
  %v219 = vadd.f32 0.0, %v218
  %v220 = vpop.f32.mrb[0].mxu0
  %v221 = vpop.f32.mrb[0].mxu0
  %v222 = vadd.f32 0.0, %v221
  %v223 = vpop.f32.mrb[0].mxu0
  %224 = vmatprep.mubr.bf16.mxu0 0
  %225 = vmatmul.mubr.bf16.gmra.mrb[0].mxu0 %v113
  %v226 = vpop.f32.mrb[0].mxu0
  %v227 = vadd.f32 0.0, %v226
  %v228 = vpop.f32.mrb[0].mxu0
  %v229 = vpop.f32.mrb[0].mxu0
  %v230 = vadd.f32 0.0, %v229
  %v231 = vpop.f32.mrb[0].mxu0
  %232 = vmatprep.mubr.bf16.mxu0 0
  %233 = vmatmul.mubr.bf16.gmra.mrb[0].mxu0 %v114
  %v234 = vpop.f32.mrb[0].mxu0
  %v235 = vadd.f32 0.0, %v234
  %v236 = vpop.f32.mrb[0].mxu0
  %v237 = vpop.f32.mrb[0].mxu0
  %v238 = vadd.f32 0.0, %v237
  %v239 = vpop.f32.mrb[0].mxu0
  %240 = vmatprep.mubr.bf16.mxu0 0
  %241 = vmatmul.mubr.bf16.gmra.mrb[0].mxu0 %v115
  %v242 = vpop.f32.mrb[0].mxu0
  %v243 = vadd.f32 0.0, %v242
  %v244 = vpop.f32.mrb[0].mxu0
  %v245 = vpop.f32.mrb[0].mxu0
  %v246 = vadd.f32 0.0, %v245
  %v247 = vpop.f32.mrb[0].mxu0
  %248 = vmatprep.mubr.bf16.mxu0 0
  %249 = vmatmul.mubr.bf16.gmra.mrb[0].mxu0 %v116
  %v250 = vpop.f32.mrb[0].mxu0
  %v251 = vadd.f32 0.0, %v250
  %v252 = vpop.f32.mrb[0].mxu0
  %v253 = vpop.f32.mrb[0].mxu0
  %v254 = vadd.f32 0.0, %v253
  %v255 = vpop.f32.mrb[0].mxu0
  %256 = vmatprep.mubr.bf16.mxu0 0
  %257 = vmatmul.mubr.bf16.gmra.mrb[0].mxu0 %v117
  %v258 = vpop.f32.mrb[0].mxu0
  %v259 = vadd.f32 0.0, %v258
  %v260 = vpop.f32.mrb[0].mxu0
  %v261 = vpop.f32.mrb[0].mxu0
  %v262 = vadd.f32 0.0, %v261
  %v263 = vpop.f32.mrb[0].mxu0
  %264 = vmatprep.mubr.bf16.mxu0 0
  %265 = vmatmul.mubr.bf16.gmra.mrb[0].mxu0 %v118
  %v266 = vpop.f32.mrb[0].mxu0
  %v267 = vadd.f32 0.0, %v266
  %v268 = vpop.f32.mrb[0].mxu0
  %v269 = vpop.f32.mrb[0].mxu0
  %v270 = vadd.f32 0.0, %v269
  %v271 = vpop.f32.mrb[0].mxu0
  %272 = vmatprep.mubr.bf16.mxu0 0
  %273 = vmatmul.mubr.bf16.gmra.mrb[0].mxu0 %v119
  %v274 = vpop.f32.mrb[0].mxu0
  %v275 = vadd.f32 0.0, %v274
  %v276 = vpop.f32.mrb[0].mxu0
  %v277 = vpop.f32.mrb[0].mxu0
  %v278 = vadd.f32 0.0, %v277
  %v279 = vpop.f32.mrb[0].mxu0
  %280 = vdwg.mxu0
  %v281 = vpack.c.bf16 %v222, %v219
  %v282 = vpack.c.bf16 %v230, %v227
  %v283 = vpack.c.bf16 %v238, %v235
  %v284 = vpack.c.bf16 %v246, %v243
  %v285 = vpack.c.bf16 %v254, %v251
  %v286 = vpack.c.bf16 %v262, %v259
  %v287 = vpack.c.bf16 %v270, %v267
  %v288 = vpack.c.bf16 %v278, %v275
  %v297 = vunpack.c.l.b16 %v281
  %v298 = vunpack.c.h.b16 %v281
  %v299 = vunpack.c.l.b16 %v282
  %v300 = vunpack.c.h.b16 %v282
  %v301 = vunpack.c.l.b16 %v283
  %v302 = vunpack.c.h.b16 %v283
  %v303 = vunpack.c.l.b16 %v284
  %v304 = vunpack.c.h.b16 %v284
  %v305 = vunpack.c.l.b16 %v285
  %v306 = vunpack.c.h.b16 %v285
  %v307 = vunpack.c.l.b16 %v286
  %v308 = vunpack.c.h.b16 %v286
  %v309 = vunpack.c.l.b16 %v287
  %v310 = vunpack.c.h.b16 %v287
  %v311 = vunpack.c.l.b16 %v288
  %v312 = vunpack.c.h.b16 %v288
  %v313 = vpack.c.b16 %v297, %v297
  %v314 = vpack.c.b16 %v298, %v298
  %v315 = vpack.c.b16 %v299, %v299
  %v316 = vpack.c.b16 %v300, %v300
  %v317 = vpack.c.b16 %v301, %v301
  %v318 = vpack.c.b16 %v302, %v302
  %v319 = vpack.c.b16 %v303, %v303
  %v320 = vpack.c.b16 %v304, %v304
  %v321 = vpack.c.b16 %v305, %v305
  %v322 = vpack.c.b16 %v306, %v306
  %v323 = vpack.c.b16 %v307, %v307
  %v324 = vpack.c.b16 %v308, %v308
  %v325 = vpack.c.b16 %v309, %v309
  %v326 = vpack.c.b16 %v310, %v310
  %v327 = vpack.c.b16 %v311, %v311
  %v328 = vpack.c.b16 %v312, %v312
  %345 = vst [vmem:[%s4] sm:$0xf] %v313
  %346 = vst [vmem:[%s4 + $0x4] sm:$0xf] %v314
  %347 = vst [vmem:[%s4 + $0x8] sm:$0xf] %v315
  %348 = vst [vmem:[%s4 + $0xc] sm:$0xf] %v316
  %349 = vst [vmem:[%s4 + $0x10] sm:$0xf] %v317
  %350 = vst [vmem:[%s4 + $0x14] sm:$0xf] %v318
  %351 = vst [vmem:[%s4 + $0x18] sm:$0xf] %v319
  %352 = vst [vmem:[%s4 + $0x1c] sm:$0xf] %v320
  %353 = vst [vmem:[%s4 + $0x20] sm:$0xf] %v321
  %354 = vst [vmem:[%s4 + $0x24] sm:$0xf] %v322
  %355 = vst [vmem:[%s4 + $0x28] sm:$0xf] %v323
  %356 = vst [vmem:[%s4 + $0x2c] sm:$0xf] %v324
  %357 = vst [vmem:[%s4 + $0x30] sm:$0xf] %v325
  %358 = vst [vmem:[%s4 + $0x34] sm:$0xf] %v326
  %359 = vst [vmem:[%s4 + $0x38] sm:$0xf] %v327
  %360 = vst [vmem:[%s4 + $0x3c] sm:$0xf] %v328
  // Predicated region
  $region18: #{densenet_forward.12} parent=0 // pred_check
    _
  $region19: #{densenet_forward.12} parent=0 // pred_check_branch
    %362 = sbr.rel (0) target = $region21
  $region20: #{densenet_forward.12} parent=0 // pred_region
    _
  $region21: #{densenet_forward.12} parent=0 // pred_fallthru
    _
  // Predicated region
  $region22: #{densenet_forward.12} parent=0 // pred_check
    _
  $region23: #{densenet_forward.12} parent=0 // pred_check_branch
    %364 = sbr.rel (0) target = $region25
  $region24: #{densenet_forward.12} parent=0 // pred_region
    _
  $region25: #{densenet_forward.12} parent=0 // pred_fallthru
    _

// kernel: densenet_forward.11
$region0: #{densenet_forward.11}
  #allocation0 [shape = 'u32[]', space=smem, size = 0x4, offset = 0x4, fixed_abs, tag = 'smem constant byte address 0x4 - core index']
  #allocation1 [shape = 'u32[144,128]{1,0:T(1,128)}', space=vmem, size = 0x12000, scoped, tag = 'internal scratch']
  %s0 = inlined_call_operand.vmem [shape: f32[512,128], index: 0, kind: input, shape index: {}]
  %s1 = inlined_call_operand.vmem [shape: f32[1,128], index: 1, kind: input, shape index: {}]
  %s2 = inlined_call_operand.vmem [shape: f32[1,128], index: 2, kind: input, shape index: {}]
  %s3 = inlined_call_operand.vmem [shape: bf16[512,128], index: 3, kind: output, shape index: {}]
  %s4 = sld [smem:[#allocation0]]
  $region22: #{densenet_forward.11} parent=0
    _
  %s6 = ssub.s32 1, %s4
  %s7 = scalar_select 0, %s6, %s4
  // Predicated region
  $region2: #{densenet_forward.11} parent=0 // pred_check
    _
  $region3: #{densenet_forward.11} parent=0 // pred_check_branch
    %9 = sbr.rel (0) target = $region5
  $region4: #{densenet_forward.11} parent=0 // pred_region
    _
  $region5: #{densenet_forward.11} parent=0 // pred_fallthru
    _
  // Predicated region
  $region6: #{densenet_forward.11} parent=0 // pred_check
    _
  $region7: #{densenet_forward.11} parent=0 // pred_check_branch
    %11 = sbr.rel (0) target = $region9
  $region8: #{densenet_forward.11} parent=0 // pred_region
    _
  $region9: #{densenet_forward.11} parent=0 // pred_fallthru
    _
  // Predicated region
  $region10: #{densenet_forward.11} parent=0 // pred_check
    _
  $region11: #{densenet_forward.11} parent=0 // pred_check_branch
    %13 = sbr.rel (0) target = $region13
  $region12: #{densenet_forward.11} parent=0 // pred_region
    _
  $region13: #{densenet_forward.11} parent=0 // pred_fallthru
    _
  %v14 = vld [vmem:[%s0] sm:$0xff]
  %v15 = vld [vmem:[%s0 + $0x8] sm:$0xff]
  %v16 = vld [vmem:[%s0 + $0x10] sm:$0xff]
  %v17 = vld [vmem:[%s0 + $0x18] sm:$0xff]
  %v18 = vld [vmem:[%s0 + $0x20] sm:$0xff]
  %v19 = vld [vmem:[%s0 + $0x28] sm:$0xff]
  %v20 = vld [vmem:[%s0 + $0x30] sm:$0xff]
  %v21 = vld [vmem:[%s0 + $0x38] sm:$0xff]
  %v22 = vld [vmem:[%s0 + $0x40] sm:$0xff]
  %v23 = vld [vmem:[%s0 + $0x48] sm:$0xff]
  %v24 = vld [vmem:[%s0 + $0x50] sm:$0xff]
  %v25 = vld [vmem:[%s0 + $0x58] sm:$0xff]
  %v26 = vld [vmem:[%s0 + $0x60] sm:$0xff]
  %v27 = vld [vmem:[%s0 + $0x68] sm:$0xff]
  %v28 = vld [vmem:[%s0 + $0x70] sm:$0xff]
  %v29 = vld [vmem:[%s0 + $0x78] sm:$0xff]
  %v30 = vld [vmem:[%s0 + $0x80] sm:$0xff]
  %v31 = vld [vmem:[%s0 + $0x88] sm:$0xff]
  %v32 = vld [vmem:[%s0 + $0x90] sm:$0xff]
  %v33 = vld [vmem:[%s0 + $0x98] sm:$0xff]
  %v34 = vld [vmem:[%s0 + $0xa0] sm:$0xff]
  %v35 = vld [vmem:[%s0 + $0xa8] sm:$0xff]
  %v36 = vld [vmem:[%s0 + $0xb0] sm:$0xff]
  %v37 = vld [vmem:[%s0 + $0xb8] sm:$0xff]
  %v38 = vld [vmem:[%s0 + $0xc0] sm:$0xff]
  %v39 = vld [vmem:[%s0 + $0xc8] sm:$0xff]
  %v40 = vld [vmem:[%s0 + $0xd0] sm:$0xff]
  %v41 = vld [vmem:[%s0 + $0xd8] sm:$0xff]
  %v42 = vld [vmem:[%s0 + $0xe0] sm:$0xff]
  %v43 = vld [vmem:[%s0 + $0xe8] sm:$0xff]
  %v44 = vld [vmem:[%s0 + $0xf0] sm:$0xff]
  %v45 = vld [vmem:[%s0 + $0xf8] sm:$0xff]
  %v46 = vld [vmem:[%s0 + $0x100] sm:$0xff]
  %v47 = vld [vmem:[%s0 + $0x108] sm:$0xff]
  %v48 = vld [vmem:[%s0 + $0x110] sm:$0xff]
  %v49 = vld [vmem:[%s0 + $0x118] sm:$0xff]
  %v50 = vld [vmem:[%s0 + $0x120] sm:$0xff]
  %v51 = vld [vmem:[%s0 + $0x128] sm:$0xff]
  %v52 = vld [vmem:[%s0 + $0x130] sm:$0xff]
  %v53 = vld [vmem:[%s0 + $0x138] sm:$0xff]
  %v54 = vld [vmem:[%s0 + $0x140] sm:$0xff]
  %v55 = vld [vmem:[%s0 + $0x148] sm:$0xff]
  %v56 = vld [vmem:[%s0 + $0x150] sm:$0xff]
  %v57 = vld [vmem:[%s0 + $0x158] sm:$0xff]
  %v58 = vld [vmem:[%s0 + $0x160] sm:$0xff]
  %v59 = vld [vmem:[%s0 + $0x168] sm:$0xff]
  %v60 = vld [vmem:[%s0 + $0x170] sm:$0xff]
  %v61 = vld [vmem:[%s0 + $0x178] sm:$0xff]
  %v62 = vld [vmem:[%s0 + $0x180] sm:$0xff]
  %v63 = vld [vmem:[%s0 + $0x188] sm:$0xff]
  %v64 = vld [vmem:[%s0 + $0x190] sm:$0xff]
  %v65 = vld [vmem:[%s0 + $0x198] sm:$0xff]
  %v66 = vld [vmem:[%s0 + $0x1a0] sm:$0xff]
  %v67 = vld [vmem:[%s0 + $0x1a8] sm:$0xff]
  %v68 = vld [vmem:[%s0 + $0x1b0] sm:$0xff]
  %v69 = vld [vmem:[%s0 + $0x1b8] sm:$0xff]
  %v70 = vld [vmem:[%s0 + $0x1c0] sm:$0xff]
  %v71 = vld [vmem:[%s0 + $0x1c8] sm:$0xff]
  %v72 = vld [vmem:[%s0 + $0x1d0] sm:$0xff]
  %v73 = vld [vmem:[%s0 + $0x1d8] sm:$0xff]
  %v74 = vld [vmem:[%s0 + $0x1e0] sm:$0xff]
  %v75 = vld [vmem:[%s0 + $0x1e8] sm:$0xff]
  %v76 = vld [vmem:[%s0 + $0x1f0] sm:$0xff]
  %v77 = vld [vmem:[%s0 + $0x1f8] sm:$0xff]
  %v78 = vld [vmem:[%s1] sm:$0x1]
  %v80 = vlaneseq
  %v81 = vshrl.u32 %v80, 7
  %v82 = vsub.s32 0, %v81
  %v83 = vrot.slane %v78, %v82
  %v85 = vmul.f32 %v14, %v83
  %v86 = vmul.f32 %v15, %v83
  %v87 = vmul.f32 %v16, %v83
  %v88 = vmul.f32 %v17, %v83
  %v89 = vmul.f32 %v18, %v83
  %v90 = vmul.f32 %v19, %v83
  %v91 = vmul.f32 %v20, %v83
  %v92 = vmul.f32 %v21, %v83
  %v93 = vmul.f32 %v22, %v83
  %v94 = vmul.f32 %v23, %v83
  %v95 = vmul.f32 %v24, %v83
  %v96 = vmul.f32 %v25, %v83
  %v97 = vmul.f32 %v26, %v83
  %v98 = vmul.f32 %v27, %v83
  %v99 = vmul.f32 %v28, %v83
  %v100 = vmul.f32 %v29, %v83
  %v101 = vmul.f32 %v30, %v83
  %v102 = vmul.f32 %v31, %v83
  %v103 = vmul.f32 %v32, %v83
  %v104 = vmul.f32 %v33, %v83
  %v105 = vmul.f32 %v34, %v83
  %v106 = vmul.f32 %v35, %v83
  %v107 = vmul.f32 %v36, %v83
  %v108 = vmul.f32 %v37, %v83
  %v109 = vmul.f32 %v38, %v83
  %v110 = vmul.f32 %v39, %v83
  %v111 = vmul.f32 %v40, %v83
  %v112 = vmul.f32 %v41, %v83
  %v113 = vmul.f32 %v42, %v83
  %v114 = vmul.f32 %v43, %v83
  %v115 = vmul.f32 %v44, %v83
  %v116 = vmul.f32 %v45, %v83
  %v117 = vmul.f32 %v46, %v83
  %v118 = vmul.f32 %v47, %v83
  %v119 = vmul.f32 %v48, %v83
  %v120 = vmul.f32 %v49, %v83
  %v121 = vmul.f32 %v50, %v83
  %v122 = vmul.f32 %v51, %v83
  %v123 = vmul.f32 %v52, %v83
  %v124 = vmul.f32 %v53, %v83
  %v125 = vmul.f32 %v54, %v83
  %v126 = vmul.f32 %v55, %v83
  %v127 = vmul.f32 %v56, %v83
  %v128 = vmul.f32 %v57, %v83
  %v129 = vmul.f32 %v58, %v83
  %v130 = vmul.f32 %v59, %v83
  %v131 = vmul.f32 %v60, %v83
  %v132 = vmul.f32 %v61, %v83
  %v133 = vmul.f32 %v62, %v83
  %v134 = vmul.f32 %v63, %v83
  %v135 = vmul.f32 %v64, %v83
  %v136 = vmul.f32 %v65, %v83
  %v137 = vmul.f32 %v66, %v83
  %v138 = vmul.f32 %v67, %v83
  %v139 = vmul.f32 %v68, %v83
  %v140 = vmul.f32 %v69, %v83
  %v141 = vmul.f32 %v70, %v83
  %v142 = vmul.f32 %v71, %v83
  %v143 = vmul.f32 %v72, %v83
  %v144 = vmul.f32 %v73, %v83
  %v145 = vmul.f32 %v74, %v83
  %v146 = vmul.f32 %v75, %v83
  %v147 = vmul.f32 %v76, %v83
  %v148 = vmul.f32 %v77, %v83
  %v149 = vld [vmem:[%s2] sm:$0x1]
  %v151 = vlaneseq
  %v152 = vshrl.u32 %v151, 7
  %v153 = vsub.s32 0, %v152
  %v154 = vrot.slane %v149, %v153
  %v156 = vadd.f32 %v85, %v154
  %v157 = vadd.f32 %v86, %v154
  %v158 = vadd.f32 %v87, %v154
  %v159 = vadd.f32 %v88, %v154
  %v160 = vadd.f32 %v89, %v154
  %v161 = vadd.f32 %v90, %v154
  %v162 = vadd.f32 %v91, %v154
  %v163 = vadd.f32 %v92, %v154
  %v164 = vadd.f32 %v93, %v154
  %v165 = vadd.f32 %v94, %v154
  %v166 = vadd.f32 %v95, %v154
  %v167 = vadd.f32 %v96, %v154
  %v168 = vadd.f32 %v97, %v154
  %v169 = vadd.f32 %v98, %v154
  %v170 = vadd.f32 %v99, %v154
  %v171 = vadd.f32 %v100, %v154
  %v172 = vadd.f32 %v101, %v154
  %v173 = vadd.f32 %v102, %v154
  %v174 = vadd.f32 %v103, %v154
  %v175 = vadd.f32 %v104, %v154
  %v176 = vadd.f32 %v105, %v154
  %v177 = vadd.f32 %v106, %v154
  %v178 = vadd.f32 %v107, %v154
  %v179 = vadd.f32 %v108, %v154
  %v180 = vadd.f32 %v109, %v154
  %v181 = vadd.f32 %v110, %v154
  %v182 = vadd.f32 %v111, %v154
  %v183 = vadd.f32 %v112, %v154
  %v184 = vadd.f32 %v113, %v154
  %v185 = vadd.f32 %v114, %v154
  %v186 = vadd.f32 %v115, %v154
  %v187 = vadd.f32 %v116, %v154
  %v188 = vadd.f32 %v117, %v154
  %v189 = vadd.f32 %v118, %v154
  %v190 = vadd.f32 %v119, %v154
  %v191 = vadd.f32 %v120, %v154
  %v192 = vadd.f32 %v121, %v154
  %v193 = vadd.f32 %v122, %v154
  %v194 = vadd.f32 %v123, %v154
  %v195 = vadd.f32 %v124, %v154
  %v196 = vadd.f32 %v125, %v154
  %v197 = vadd.f32 %v126, %v154
  %v198 = vadd.f32 %v127, %v154
  %v199 = vadd.f32 %v128, %v154
  %v200 = vadd.f32 %v129, %v154
  %v201 = vadd.f32 %v130, %v154
  %v202 = vadd.f32 %v131, %v154
  %v203 = vadd.f32 %v132, %v154
  %v204 = vadd.f32 %v133, %v154
  %v205 = vadd.f32 %v134, %v154
  %v206 = vadd.f32 %v135, %v154
  %v207 = vadd.f32 %v136, %v154
  %v208 = vadd.f32 %v137, %v154
  %v209 = vadd.f32 %v138, %v154
  %v210 = vadd.f32 %v139, %v154
  %v211 = vadd.f32 %v140, %v154
  %v212 = vadd.f32 %v141, %v154
  %v213 = vadd.f32 %v142, %v154
  %v214 = vadd.f32 %v143, %v154
  %v215 = vadd.f32 %v144, %v154
  %v216 = vadd.f32 %v145, %v154
  %v217 = vadd.f32 %v146, %v154
  %v218 = vadd.f32 %v147, %v154
  %v219 = vadd.f32 %v148, %v154
  %v220 = vmax.f32 %v156, 0.0
  %v221 = vmax.f32 %v157, 0.0
  %v222 = vmax.f32 %v158, 0.0
  %v223 = vmax.f32 %v159, 0.0
  %v224 = vmax.f32 %v160, 0.0
  %v225 = vmax.f32 %v161, 0.0
  %v226 = vmax.f32 %v162, 0.0
  %v227 = vmax.f32 %v163, 0.0
  %v228 = vmax.f32 %v164, 0.0
  %v229 = vmax.f32 %v165, 0.0
  %v230 = vmax.f32 %v166, 0.0
  %v231 = vmax.f32 %v167, 0.0
  %v232 = vmax.f32 %v168, 0.0
  %v233 = vmax.f32 %v169, 0.0
  %v234 = vmax.f32 %v170, 0.0
  %v235 = vmax.f32 %v171, 0.0
  %v236 = vmax.f32 %v172, 0.0
  %v237 = vmax.f32 %v173, 0.0
  %v238 = vmax.f32 %v174, 0.0
  %v239 = vmax.f32 %v175, 0.0
  %v240 = vmax.f32 %v176, 0.0
  %v241 = vmax.f32 %v177, 0.0
  %v242 = vmax.f32 %v178, 0.0
  %v243 = vmax.f32 %v179, 0.0
  %v244 = vmax.f32 %v180, 0.0
  %v245 = vmax.f32 %v181, 0.0
  %v246 = vmax.f32 %v182, 0.0
  %v247 = vmax.f32 %v183, 0.0
  %v248 = vmax.f32 %v184, 0.0
  %v249 = vmax.f32 %v185, 0.0
  %v250 = vmax.f32 %v186, 0.0
  %v251 = vmax.f32 %v187, 0.0
  %v252 = vmax.f32 %v188, 0.0
  %v253 = vmax.f32 %v189, 0.0
  %v254 = vmax.f32 %v190, 0.0
  %v255 = vmax.f32 %v191, 0.0
  %v256 = vmax.f32 %v192, 0.0
  %v257 = vmax.f32 %v193, 0.0
  %v258 = vmax.f32 %v194, 0.0
  %v259 = vmax.f32 %v195, 0.0
  %v260 = vmax.f32 %v196, 0.0
  %v261 = vmax.f32 %v197, 0.0
  %v262 = vmax.f32 %v198, 0.0
  %v263 = vmax.f32 %v199, 0.0
  %v264 = vmax.f32 %v200, 0.0
  %v265 = vmax.f32 %v201, 0.0
  %v266 = vmax.f32 %v202, 0.0
  %v267 = vmax.f32 %v203, 0.0
  %v268 = vmax.f32 %v204, 0.0
  %v269 = vmax.f32 %v205, 0.0
  %v270 = vmax.f32 %v206, 0.0
  %v271 = vmax.f32 %v207, 0.0
  %v272 = vmax.f32 %v208, 0.0
  %v273 = vmax.f32 %v209, 0.0
  %v274 = vmax.f32 %v210, 0.0
  %v275 = vmax.f32 %v211, 0.0
  %v276 = vmax.f32 %v212, 0.0
  %v277 = vmax.f32 %v213, 0.0
  %v278 = vmax.f32 %v214, 0.0
  %v279 = vmax.f32 %v215, 0.0
  %v280 = vmax.f32 %v216, 0.0
  %v281 = vmax.f32 %v217, 0.0
  %v282 = vmax.f32 %v218, 0.0
  %v283 = vmax.f32 %v219, 0.0
  %v284 = vpack.c.bf16 %v221, %v220
  %v285 = vpack.c.bf16 %v223, %v222
  %v286 = vpack.c.bf16 %v225, %v224
  %v287 = vpack.c.bf16 %v227, %v226
  %v288 = vpack.c.bf16 %v229, %v228
  %v289 = vpack.c.bf16 %v231, %v230
  %v290 = vpack.c.bf16 %v233, %v232
  %v291 = vpack.c.bf16 %v235, %v234
  %v292 = vpack.c.bf16 %v237, %v236
  %v293 = vpack.c.bf16 %v239, %v238
  %v294 = vpack.c.bf16 %v241, %v240
  %v295 = vpack.c.bf16 %v243, %v242
  %v296 = vpack.c.bf16 %v245, %v244
  %v297 = vpack.c.bf16 %v247, %v246
  %v298 = vpack.c.bf16 %v249, %v248
  %v299 = vpack.c.bf16 %v251, %v250
  %v300 = vpack.c.bf16 %v253, %v252
  %v301 = vpack.c.bf16 %v255, %v254
  %v302 = vpack.c.bf16 %v257, %v256
  %v303 = vpack.c.bf16 %v259, %v258
  %v304 = vpack.c.bf16 %v261, %v260
  %v305 = vpack.c.bf16 %v263, %v262
  %v306 = vpack.c.bf16 %v265, %v264
  %v307 = vpack.c.bf16 %v267, %v266
  %v308 = vpack.c.bf16 %v269, %v268
  %v309 = vpack.c.bf16 %v271, %v270
  %v310 = vpack.c.bf16 %v273, %v272
  %v311 = vpack.c.bf16 %v275, %v274
  %v312 = vpack.c.bf16 %v277, %v276
  %v313 = vpack.c.bf16 %v279, %v278
  %v314 = vpack.c.bf16 %v281, %v280
  %v315 = vpack.c.bf16 %v283, %v282
  %v348 = vunpack.c.l.b16 %v284
  %v349 = vunpack.c.h.b16 %v284
  %v350 = vunpack.c.l.b16 %v285
  %v351 = vunpack.c.h.b16 %v285
  %v352 = vunpack.c.l.b16 %v286
  %v353 = vunpack.c.h.b16 %v286
  %v354 = vunpack.c.l.b16 %v287
  %v355 = vunpack.c.h.b16 %v287
  %v356 = vunpack.c.l.b16 %v288
  %v357 = vunpack.c.h.b16 %v288
  %v358 = vunpack.c.l.b16 %v289
  %v359 = vunpack.c.h.b16 %v289
  %v360 = vunpack.c.l.b16 %v290
  %v361 = vunpack.c.h.b16 %v290
  %v362 = vunpack.c.l.b16 %v291
  %v363 = vunpack.c.h.b16 %v291
  %v364 = vunpack.c.l.b16 %v292
  %v365 = vunpack.c.h.b16 %v292
  %v366 = vunpack.c.l.b16 %v293
  %v367 = vunpack.c.h.b16 %v293
  %v368 = vunpack.c.l.b16 %v294
  %v369 = vunpack.c.h.b16 %v294
  %v370 = vunpack.c.l.b16 %v295
  %v371 = vunpack.c.h.b16 %v295
  %v372 = vunpack.c.l.b16 %v296
  %v373 = vunpack.c.h.b16 %v296
  %v374 = vunpack.c.l.b16 %v297
  %v375 = vunpack.c.h.b16 %v297
  %v376 = vunpack.c.l.b16 %v298
  %v377 = vunpack.c.h.b16 %v298
  %v378 = vunpack.c.l.b16 %v299
  %v379 = vunpack.c.h.b16 %v299
  %v380 = vunpack.c.l.b16 %v300
  %v381 = vunpack.c.h.b16 %v300
  %v382 = vunpack.c.l.b16 %v301
  %v383 = vunpack.c.h.b16 %v301
  %v384 = vunpack.c.l.b16 %v302
  %v385 = vunpack.c.h.b16 %v302
  %v386 = vunpack.c.l.b16 %v303
  %v387 = vunpack.c.h.b16 %v303
  %v388 = vunpack.c.l.b16 %v304
  %v389 = vunpack.c.h.b16 %v304
  %v390 = vunpack.c.l.b16 %v305
  %v391 = vunpack.c.h.b16 %v305
  %v392 = vunpack.c.l.b16 %v306
  %v393 = vunpack.c.h.b16 %v306
  %v394 = vunpack.c.l.b16 %v307
  %v395 = vunpack.c.h.b16 %v307
  %v396 = vunpack.c.l.b16 %v308
  %v397 = vunpack.c.h.b16 %v308
  %v398 = vunpack.c.l.b16 %v309
  %v399 = vunpack.c.h.b16 %v309
  %v400 = vunpack.c.l.b16 %v310
  %v401 = vunpack.c.h.b16 %v310
  %v402 = vunpack.c.l.b16 %v311
  %v403 = vunpack.c.h.b16 %v311
  %v404 = vunpack.c.l.b16 %v312
  %v405 = vunpack.c.h.b16 %v312
  %v406 = vunpack.c.l.b16 %v313
  %v407 = vunpack.c.h.b16 %v313
  %v408 = vunpack.c.l.b16 %v314
  %v409 = vunpack.c.h.b16 %v314
  %v410 = vunpack.c.l.b16 %v315
  %v411 = vunpack.c.h.b16 %v315
  %v412 = vpack.c.b16 %v348, %v348
  %v413 = vpack.c.b16 %v349, %v349
  %v414 = vpack.c.b16 %v350, %v350
  %v415 = vpack.c.b16 %v351, %v351
  %v416 = vpack.c.b16 %v352, %v352
  %v417 = vpack.c.b16 %v353, %v353
  %v418 = vpack.c.b16 %v354, %v354
  %v419 = vpack.c.b16 %v355, %v355
  %v420 = vpack.c.b16 %v356, %v356
  %v421 = vpack.c.b16 %v357, %v357
  %v422 = vpack.c.b16 %v358, %v358
  %v423 = vpack.c.b16 %v359, %v359
  %v424 = vpack.c.b16 %v360, %v360
  %v425 = vpack.c.b16 %v361, %v361
  %v426 = vpack.c.b16 %v362, %v362
  %v427 = vpack.c.b16 %v363, %v363
  %v428 = vpack.c.b16 %v364, %v364
  %v429 = vpack.c.b16 %v365, %v365
  %v430 = vpack.c.b16 %v366, %v366
  %v431 = vpack.c.b16 %v367, %v367
  %v432 = vpack.c.b16 %v368, %v368
  %v433 = vpack.c.b16 %v369, %v369
  %v434 = vpack.c.b16 %v370, %v370
  %v435 = vpack.c.b16 %v371, %v371
  %v436 = vpack.c.b16 %v372, %v372
  %v437 = vpack.c.b16 %v373, %v373
  %v438 = vpack.c.b16 %v374, %v374
  %v439 = vpack.c.b16 %v375, %v375
  %v440 = vpack.c.b16 %v376, %v376
  %v441 = vpack.c.b16 %v377, %v377
  %v442 = vpack.c.b16 %v378, %v378
  %v443 = vpack.c.b16 %v379, %v379
  %v444 = vpack.c.b16 %v380, %v380
  %v445 = vpack.c.b16 %v381, %v381
  %v446 = vpack.c.b16 %v382, %v382
  %v447 = vpack.c.b16 %v383, %v383
  %v448 = vpack.c.b16 %v384, %v384
  %v449 = vpack.c.b16 %v385, %v385
  %v450 = vpack.c.b16 %v386, %v386
  %v451 = vpack.c.b16 %v387, %v387
  %v452 = vpack.c.b16 %v388, %v388
  %v453 = vpack.c.b16 %v389, %v389
  %v454 = vpack.c.b16 %v390, %v390
  %v455 = vpack.c.b16 %v391, %v391
  %v456 = vpack.c.b16 %v392, %v392
  %v457 = vpack.c.b16 %v393, %v393
  %v458 = vpack.c.b16 %v394, %v394
  %v459 = vpack.c.b16 %v395, %v395
  %v460 = vpack.c.b16 %v396, %v396
  %v461 = vpack.c.b16 %v397, %v397
  %v462 = vpack.c.b16 %v398, %v398
  %v463 = vpack.c.b16 %v399, %v399
  %v464 = vpack.c.b16 %v400, %v400
  %v465 = vpack.c.b16 %v401, %v401
  %v466 = vpack.c.b16 %v402, %v402
  %v467 = vpack.c.b16 %v403, %v403
  %v468 = vpack.c.b16 %v404, %v404
  %v469 = vpack.c.b16 %v405, %v405
  %v470 = vpack.c.b16 %v406, %v406
  %v471 = vpack.c.b16 %v407, %v407
  %v472 = vpack.c.b16 %v408, %v408
  %v473 = vpack.c.b16 %v409, %v409
  %v474 = vpack.c.b16 %v410, %v410
  %v475 = vpack.c.b16 %v411, %v411
  %540 = vst [vmem:[%s3] sm:$0xf] %v412
  %541 = vst [vmem:[%s3 + $0x4] sm:$0xf] %v413
  %542 = vst [vmem:[%s3 + $0x8] sm:$0xf] %v414
  %543 = vst [vmem:[%s3 + $0xc] sm:$0xf] %v415
  %544 = vst [vmem:[%s3 + $0x10] sm:$0xf] %v416
  %545 = vst [vmem:[%s3 + $0x14] sm:$0xf] %v417
  %546 = vst [vmem:[%s3 + $0x18] sm:$0xf] %v418
  %547 = vst [vmem:[%s3 + $0x1c] sm:$0xf] %v419
  %548 = vst [vmem:[%s3 + $0x20] sm:$0xf] %v420
  %549 = vst [vmem:[%s3 + $0x24] sm:$0xf] %v421
  %550 = vst [vmem:[%s3 + $0x28] sm:$0xf] %v422
  %551 = vst [vmem:[%s3 + $0x2c] sm:$0xf] %v423
  %552 = vst [vmem:[%s3 + $0x30] sm:$0xf] %v424
  %553 = vst [vmem:[%s3 + $0x34] sm:$0xf] %v425
  %554 = vst [vmem:[%s3 + $0x38] sm:$0xf] %v426
  %555 = vst [vmem:[%s3 + $0x3c] sm:$0xf] %v427
  %556 = vst [vmem:[%s3 + $0x40] sm:$0xf] %v428
  %557 = vst [vmem:[%s3 + $0x44] sm:$0xf] %v429
  %558 = vst [vmem:[%s3 + $0x48] sm:$0xf] %v430
  %559 = vst [vmem:[%s3 + $0x4c] sm:$0xf] %v431
  %560 = vst [vmem:[%s3 + $0x50] sm:$0xf] %v432
  %561 = vst [vmem:[%s3 + $0x54] sm:$0xf] %v433
  %562 = vst [vmem:[%s3 + $0x58] sm:$0xf] %v434
  %563 = vst [vmem:[%s3 + $0x5c] sm:$0xf] %v435
  %564 = vst [vmem:[%s3 + $0x60] sm:$0xf] %v436
  %565 = vst [vmem:[%s3 + $0x64] sm:$0xf] %v437
  %566 = vst [vmem:[%s3 + $0x68] sm:$0xf] %v438
  %567 = vst [vmem:[%s3 + $0x6c] sm:$0xf] %v439
  %568 = vst [vmem:[%s3 + $0x70] sm:$0xf] %v440
  %569 = vst [vmem:[%s3 + $0x74] sm:$0xf] %v441
  %570 = vst [vmem:[%s3 + $0x78] sm:$0xf] %v442
  %571 = vst [vmem:[%s3 + $0x7c] sm:$0xf] %v443
  %572 = vst [vmem:[%s3 + $0x80] sm:$0xf] %v444
  %573 = vst [vmem:[%s3 + $0x84] sm:$0xf] %v445
  %574 = vst [vmem:[%s3 + $0x88] sm:$0xf] %v446
  %575 = vst [vmem:[%s3 + $0x8c] sm:$0xf] %v447
  %576 = vst [vmem:[%s3 + $0x90] sm:$0xf] %v448
  %577 = vst [vmem:[%s3 + $0x94] sm:$0xf] %v449
  %578 = vst [vmem:[%s3 + $0x98] sm:$0xf] %v450
  %579 = vst [vmem:[%s3 + $0x9c] sm:$0xf] %v451
  %580 = vst [vmem:[%s3 + $0xa0] sm:$0xf] %v452
  %581 = vst [vmem:[%s3 + $0xa4] sm:$0xf] %v453
  %582 = vst [vmem:[%s3 + $0xa8] sm:$0xf] %v454
  %583 = vst [vmem:[%s3 + $0xac] sm:$0xf] %v455
  %584 = vst [vmem:[%s3 + $0xb0] sm:$0xf] %v456
  %585 = vst [vmem:[%s3 + $0xb4] sm:$0xf] %v457
  %586 = vst [vmem:[%s3 + $0xb8] sm:$0xf] %v458
  %587 = vst [vmem:[%s3 + $0xbc] sm:$0xf] %v459
  %588 = vst [vmem:[%s3 + $0xc0] sm:$0xf] %v460
  %589 = vst [vmem:[%s3 + $0xc4] sm:$0xf] %v461
  %590 = vst [vmem:[%s3 + $0xc8] sm:$0xf] %v462
  %591 = vst [vmem:[%s3 + $0xcc] sm:$0xf] %v463
  %592 = vst [vmem:[%s3 + $0xd0] sm:$0xf] %v464
  %593 = vst [vmem:[%s3 + $0xd4] sm:$0xf] %v465
  %594 = vst [vmem:[%s3 + $0xd8] sm:$0xf] %v466
  %595 = vst [vmem:[%s3 + $0xdc] sm:$0xf] %v467
  %596 = vst [vmem:[%s3 + $0xe0] sm:$0xf] %v468
  %597 = vst [vmem:[%s3 + $0xe4] sm:$0xf] %v469
  %598 = vst [vmem:[%s3 + $0xe8] sm:$0xf] %v470
  %599 = vst [vmem:[%s3 + $0xec] sm:$0xf] %v471
  %600 = vst [vmem:[%s3 + $0xf0] sm:$0xf] %v472
  %601 = vst [vmem:[%s3 + $0xf4] sm:$0xf] %v473
  %602 = vst [vmem:[%s3 + $0xf8] sm:$0xf] %v474
  %603 = vst [vmem:[%s3 + $0xfc] sm:$0xf] %v475
  // Predicated region
  $region14: #{densenet_forward.11} parent=0 // pred_check
    _
  $region15: #{densenet_forward.11} parent=0 // pred_check_branch
    %605 = sbr.rel (0) target = $region17
  $region16: #{densenet_forward.11} parent=0 // pred_region
    _
  $region17: #{densenet_forward.11} parent=0 // pred_fallthru
    _
  // Predicated region
  $region18: #{densenet_forward.11} parent=0 // pred_check
    _
  $region19: #{densenet_forward.11} parent=0 // pred_check_branch
    %607 = sbr.rel (0) target = $region21
  $region20: #{densenet_forward.11} parent=0 // pred_region
    _
  $region21: #{densenet_forward.11} parent=0 // pred_fallthru
    _

// kernel: densenet_forward.13
$region0: #{densenet_forward.13}
  #allocation0 [shape = 'u32[]', space=smem, size = 0x4, offset = 0x4, fixed_abs, tag = 'smem constant byte address 0x4 - core index']
  #allocation1 [shape = 'u32[144,128]{1,0:T(1,128)}', space=vmem, size = 0x12000, scoped, tag = 'internal scratch']
  #allocation2 [shape = 'bf16[2,10,10,128]{3,2,1,0:T(8,128)(2,1)}', space=vmem, size = 0x14000, scoped, tag = 'scratch operand']
  %s0 = inlined_call_operand.vmem [shape: bf16[2,8,8,128], index: 0, kind: input, shape index: {}]
  %s1 = inlined_call_operand.vmem [shape: f32[1,128], index: 1, kind: input, shape index: {}]
  %s2 = inlined_call_operand.vmem [shape: f32[1,128], index: 2, kind: input, shape index: {}]
  %s3 = inlined_call_operand.vmem [shape: bf16[9,128,128], index: 3, kind: input, shape index: {}]
  %s4 = inlined_call_operand.vmem [shape: bf16[2,64,128], index: 4, kind: output, shape index: {}]
  %s5 = sld [smem:[#allocation0]]
  $region26: #{densenet_forward.13} parent=0
    _
  %s7 = ssub.s32 1, %s5
  %s8 = scalar_select 0, %s7, %s5
  // Predicated region
  $region2: #{densenet_forward.13} parent=0 // pred_check
    _
  $region3: #{densenet_forward.13} parent=0 // pred_check_branch
    %10 = sbr.rel (0) target = $region5
  $region4: #{densenet_forward.13} parent=0 // pred_region
    _
  $region5: #{densenet_forward.13} parent=0 // pred_fallthru
    _
  // Predicated region
  $region6: #{densenet_forward.13} parent=0 // pred_check
    _
  $region7: #{densenet_forward.13} parent=0 // pred_check_branch
    %12 = sbr.rel (0) target = $region9
  $region8: #{densenet_forward.13} parent=0 // pred_region
    _
  $region9: #{densenet_forward.13} parent=0 // pred_fallthru
    _
  // Predicated region
  $region10: #{densenet_forward.13} parent=0 // pred_check
    _
  $region11: #{densenet_forward.13} parent=0 // pred_check_branch
    %14 = sbr.rel (0) target = $region13
  $region12: #{densenet_forward.13} parent=0 // pred_region
    _
  $region13: #{densenet_forward.13} parent=0 // pred_fallthru
    _
  // Predicated region
  $region14: #{densenet_forward.13} parent=0 // pred_check
    _
  $region15: #{densenet_forward.13} parent=0 // pred_check_branch
    %16 = sbr.rel (0) target = $region17
  $region16: #{densenet_forward.13} parent=0 // pred_region
    _
  $region17: #{densenet_forward.13} parent=0 // pred_fallthru
    _
  %18 = vst [vmem:[#allocation2] sm:$0xf] 0
  %19 = vst [vmem:[#allocation2 + $0x4] sm:$0x1] 0
  %20 = vst [vmem:[#allocation2 + $0x50] sm:$0xf] 0
  %21 = vst [vmem:[#allocation2 + $0x54] sm:$0x1] 0
  %s22 = scalar_lea.vmem [#allocation2], 72
  %23 = vst [vmem:[%s22] sm:$0xf] 0
  %24 = vst [vmem:[%s22 + $0x4] sm:$0x1] 0
  %25 = vst [vmem:[%s22 + $0x50] sm:$0xf] 0
  %26 = vst [vmem:[%s22 + $0x54] sm:$0x1] 0
  %vm27 = vcmask 1040384
  %vm28 = vsmask.f32 256
  %vm29 = vmand %vm27, %vm28
  %v30 = vld [vmem:[#allocation2] sm:$0x1]
  %v31 = vsel %vm29, 0, %v30
  %32 = vst [vmem:[#allocation2] sm:$0x1] %v31
  %v33 = vld [vmem:[#allocation2 + $0x8] sm:$0x1]
  %v34 = vsel %vm29, 0, %v33
  %35 = vst [vmem:[#allocation2 + $0x8] sm:$0x1] %v34
  %v36 = vld [vmem:[#allocation2 + $0x10] sm:$0x1]
  %v37 = vsel %vm29, 0, %v36
  %38 = vst [vmem:[#allocation2 + $0x10] sm:$0x1] %v37
  %v39 = vld [vmem:[#allocation2 + $0x18] sm:$0x1]
  %v40 = vsel %vm29, 0, %v39
  %41 = vst [vmem:[#allocation2 + $0x18] sm:$0x1] %v40
  %v42 = vld [vmem:[#allocation2 + $0x20] sm:$0x1]
  %v43 = vsel %vm29, 0, %v42
  %44 = vst [vmem:[#allocation2 + $0x20] sm:$0x1] %v43
  %v45 = vld [vmem:[#allocation2 + $0x28] sm:$0x1]
  %v46 = vsel %vm29, 0, %v45
  %47 = vst [vmem:[#allocation2 + $0x28] sm:$0x1] %v46
  %v48 = vld [vmem:[#allocation2 + $0x30] sm:$0x1]
  %v49 = vsel %vm29, 0, %v48
  %50 = vst [vmem:[#allocation2 + $0x30] sm:$0x1] %v49
  %v51 = vld [vmem:[#allocation2 + $0x38] sm:$0x1]
  %v52 = vsel %vm29, 0, %v51
  %53 = vst [vmem:[#allocation2 + $0x38] sm:$0x1] %v52
  %v54 = vld [vmem:[#allocation2 + $0x40] sm:$0x1]
  %v55 = vsel %vm29, 0, %v54
  %56 = vst [vmem:[#allocation2 + $0x40] sm:$0x1] %v55
  %v57 = vld [vmem:[#allocation2 + $0x48] sm:$0x1]
  %v58 = vsel %vm29, 0, %v57
  %59 = vst [vmem:[#allocation2 + $0x48] sm:$0x1] %v58
  %v60 = vld [vmem:[#allocation2 + $0x50] sm:$0x1]
  %v61 = vsel %vm29, 0, %v60
  %62 = vst [vmem:[#allocation2 + $0x50] sm:$0x1] %v61
  %v63 = vld [vmem:[#allocation2 + $0x58] sm:$0x1]
  %v64 = vsel %vm29, 0, %v63
  %65 = vst [vmem:[#allocation2 + $0x58] sm:$0x1] %v64
  %v66 = vld [vmem:[#allocation2 + $0x60] sm:$0x1]
  %v67 = vsel %vm29, 0, %v66
  %68 = vst [vmem:[#allocation2 + $0x60] sm:$0x1] %v67
  %v69 = vld [vmem:[#allocation2 + $0x68] sm:$0x1]
  %v70 = vsel %vm29, 0, %v69
  %71 = vst [vmem:[#allocation2 + $0x68] sm:$0x1] %v70
  %v72 = vld [vmem:[#allocation2 + $0x70] sm:$0x1]
  %v73 = vsel %vm29, 0, %v72
  %74 = vst [vmem:[#allocation2 + $0x70] sm:$0x1] %v73
  %v75 = vld [vmem:[#allocation2 + $0x78] sm:$0x1]
  %v76 = vsel %vm29, 0, %v75
  %77 = vst [vmem:[#allocation2 + $0x78] sm:$0x1] %v76
  %v78 = vld [vmem:[#allocation2 + $0x80] sm:$0x1]
  %v79 = vsel %vm29, 0, %v78
  %80 = vst [vmem:[#allocation2 + $0x80] sm:$0x1] %v79
  %v81 = vld [vmem:[#allocation2 + $0x88] sm:$0x1]
  %v82 = vsel %vm29, 0, %v81
  %83 = vst [vmem:[#allocation2 + $0x88] sm:$0x1] %v82
  %v84 = vld [vmem:[#allocation2 + $0x90] sm:$0x1]
  %v85 = vsel %vm29, 0, %v84
  %86 = vst [vmem:[#allocation2 + $0x90] sm:$0x1] %v85
  %v87 = vld [vmem:[#allocation2 + $0x98] sm:$0x1]
  %v88 = vsel %vm29, 0, %v87
  %89 = vst [vmem:[#allocation2 + $0x98] sm:$0x1] %v88
  %vm90 = vsmask.f32 7938
  %vm91 = vmand %vm27, %vm90
  %v92 = vld [vmem:[#allocation2 + $0x4] sm:$0x1]
  %v93 = vsel %vm91, 0, %v92
  %94 = vst [vmem:[#allocation2 + $0x4] sm:$0x1] %v93
  %v95 = vld [vmem:[#allocation2 + $0xc] sm:$0x1]
  %v96 = vsel %vm91, 0, %v95
  %97 = vst [vmem:[#allocation2 + $0xc] sm:$0x1] %v96
  %v98 = vld [vmem:[#allocation2 + $0x14] sm:$0x1]
  %v99 = vsel %vm91, 0, %v98
  %100 = vst [vmem:[#allocation2 + $0x14] sm:$0x1] %v99
  %v101 = vld [vmem:[#allocation2 + $0x1c] sm:$0x1]
  %v102 = vsel %vm91, 0, %v101
  %103 = vst [vmem:[#allocation2 + $0x1c] sm:$0x1] %v102
  %v104 = vld [vmem:[#allocation2 + $0x24] sm:$0x1]
  %v105 = vsel %vm91, 0, %v104
  %106 = vst [vmem:[#allocation2 + $0x24] sm:$0x1] %v105
  %v107 = vld [vmem:[#allocation2 + $0x2c] sm:$0x1]
  %v108 = vsel %vm91, 0, %v107
  %109 = vst [vmem:[#allocation2 + $0x2c] sm:$0x1] %v108
  %v110 = vld [vmem:[#allocation2 + $0x34] sm:$0x1]
  %v111 = vsel %vm91, 0, %v110
  %112 = vst [vmem:[#allocation2 + $0x34] sm:$0x1] %v111
  %v113 = vld [vmem:[#allocation2 + $0x3c] sm:$0x1]
  %v114 = vsel %vm91, 0, %v113
  %115 = vst [vmem:[#allocation2 + $0x3c] sm:$0x1] %v114
  %v116 = vld [vmem:[#allocation2 + $0x44] sm:$0x1]
  %v117 = vsel %vm91, 0, %v116
  %118 = vst [vmem:[#allocation2 + $0x44] sm:$0x1] %v117
  %v119 = vld [vmem:[#allocation2 + $0x4c] sm:$0x1]
  %v120 = vsel %vm91, 0, %v119
  %121 = vst [vmem:[#allocation2 + $0x4c] sm:$0x1] %v120
  %v122 = vld [vmem:[#allocation2 + $0x54] sm:$0x1]
  %v123 = vsel %vm91, 0, %v122
  %124 = vst [vmem:[#allocation2 + $0x54] sm:$0x1] %v123
  %v125 = vld [vmem:[#allocation2 + $0x5c] sm:$0x1]
  %v126 = vsel %vm91, 0, %v125
  %127 = vst [vmem:[#allocation2 + $0x5c] sm:$0x1] %v126
  %v128 = vld [vmem:[#allocation2 + $0x64] sm:$0x1]
  %v129 = vsel %vm91, 0, %v128
  %130 = vst [vmem:[#allocation2 + $0x64] sm:$0x1] %v129
  %v131 = vld [vmem:[#allocation2 + $0x6c] sm:$0x1]
  %v132 = vsel %vm91, 0, %v131
  %133 = vst [vmem:[#allocation2 + $0x6c] sm:$0x1] %v132
  %v134 = vld [vmem:[#allocation2 + $0x74] sm:$0x1]
  %v135 = vsel %vm91, 0, %v134
  %136 = vst [vmem:[#allocation2 + $0x74] sm:$0x1] %v135
  %v137 = vld [vmem:[#allocation2 + $0x7c] sm:$0x1]
  %v138 = vsel %vm91, 0, %v137
  %139 = vst [vmem:[#allocation2 + $0x7c] sm:$0x1] %v138
  %v140 = vld [vmem:[#allocation2 + $0x84] sm:$0x1]
  %v141 = vsel %vm91, 0, %v140
  %142 = vst [vmem:[#allocation2 + $0x84] sm:$0x1] %v141
  %v143 = vld [vmem:[#allocation2 + $0x8c] sm:$0x1]
  %v144 = vsel %vm91, 0, %v143
  %145 = vst [vmem:[#allocation2 + $0x8c] sm:$0x1] %v144
  %v146 = vld [vmem:[#allocation2 + $0x94] sm:$0x1]
  %v147 = vsel %vm91, 0, %v146
  %148 = vst [vmem:[#allocation2 + $0x94] sm:$0x1] %v147
  %v149 = vld [vmem:[#allocation2 + $0x9c] sm:$0x1]
  %v150 = vsel %vm91, 0, %v149
  %151 = vst [vmem:[#allocation2 + $0x9c] sm:$0x1] %v150
  %v152 = vld [vmem:[%s0] sm:$0xf]
  %v153 = vld [vmem:[%s0 + $0x4] sm:$0xf]
  %v154 = vld [vmem:[%s0 + $0x8] sm:$0xf]
  %v155 = vld [vmem:[%s0 + $0xc] sm:$0xf]
  %v156 = vld [vmem:[%s0 + $0x10] sm:$0xf]
  %v157 = vld [vmem:[%s0 + $0x14] sm:$0xf]
  %v158 = vld [vmem:[%s0 + $0x18] sm:$0xf]
  %v159 = vld [vmem:[%s0 + $0x1c] sm:$0xf]
  %v160 = vld [vmem:[%s0 + $0x20] sm:$0xf]
  %v161 = vld [vmem:[%s0 + $0x24] sm:$0xf]
  %v162 = vld [vmem:[%s0 + $0x28] sm:$0xf]
  %v163 = vld [vmem:[%s0 + $0x2c] sm:$0xf]
  %v164 = vld [vmem:[%s0 + $0x30] sm:$0xf]
  %v165 = vld [vmem:[%s0 + $0x34] sm:$0xf]
  %v166 = vld [vmem:[%s0 + $0x38] sm:$0xf]
  %v167 = vld [vmem:[%s0 + $0x3c] sm:$0xf]
  %v168 = vunpack.c.l.bf16 %v152
  %v169 = vunpack.c.l.bf16 %v153
  %v170 = vunpack.c.l.bf16 %v154
  %v171 = vunpack.c.l.bf16 %v155
  %v172 = vunpack.c.l.bf16 %v156
  %v173 = vunpack.c.l.bf16 %v157
  %v174 = vunpack.c.l.bf16 %v158
  %v175 = vunpack.c.l.bf16 %v159
  %v176 = vunpack.c.l.bf16 %v160
  %v177 = vunpack.c.l.bf16 %v161
  %v178 = vunpack.c.l.bf16 %v162
  %v179 = vunpack.c.l.bf16 %v163
  %v180 = vunpack.c.l.bf16 %v164
  %v181 = vunpack.c.l.bf16 %v165
  %v182 = vunpack.c.l.bf16 %v166
  %v183 = vunpack.c.l.bf16 %v167
  %v184 = vld [vmem:[%s1] sm:$0x1]
  %v186 = vlaneseq
  %v187 = vshrl.u32 %v186, 7
  %v188 = vsub.s32 0, %v187
  %v189 = vrot.slane %v184, %v188
  %v191 = vmul.f32 %v168, %v189
  %v192 = vmul.f32 %v169, %v189
  %v193 = vmul.f32 %v170, %v189
  %v194 = vmul.f32 %v171, %v189
  %v195 = vmul.f32 %v172, %v189
  %v196 = vmul.f32 %v173, %v189
  %v197 = vmul.f32 %v174, %v189
  %v198 = vmul.f32 %v175, %v189
  %v199 = vmul.f32 %v176, %v189
  %v200 = vmul.f32 %v177, %v189
  %v201 = vmul.f32 %v178, %v189
  %v202 = vmul.f32 %v179, %v189
  %v203 = vmul.f32 %v180, %v189
  %v204 = vmul.f32 %v181, %v189
  %v205 = vmul.f32 %v182, %v189
  %v206 = vmul.f32 %v183, %v189
  %v207 = vld [vmem:[%s2] sm:$0x1]
  %v209 = vlaneseq
  %v210 = vshrl.u32 %v209, 7
  %v211 = vsub.s32 0, %v210
  %v212 = vrot.slane %v207, %v211
  %v214 = vadd.f32 %v191, %v212
  %v215 = vadd.f32 %v192, %v212
  %v216 = vadd.f32 %v193, %v212
  %v217 = vadd.f32 %v194, %v212
  %v218 = vadd.f32 %v195, %v212
  %v219 = vadd.f32 %v196, %v212
  %v220 = vadd.f32 %v197, %v212
  %v221 = vadd.f32 %v198, %v212
  %v222 = vadd.f32 %v199, %v212
  %v223 = vadd.f32 %v200, %v212
  %v224 = vadd.f32 %v201, %v212
  %v225 = vadd.f32 %v202, %v212
  %v226 = vadd.f32 %v203, %v212
  %v227 = vadd.f32 %v204, %v212
  %v228 = vadd.f32 %v205, %v212
  %v229 = vadd.f32 %v206, %v212
  %v230 = vmax.f32 %v214, 0.0
  %v231 = vmax.f32 %v215, 0.0
  %v232 = vmax.f32 %v216, 0.0
  %v233 = vmax.f32 %v217, 0.0
  %v234 = vmax.f32 %v218, 0.0
  %v235 = vmax.f32 %v219, 0.0
  %v236 = vmax.f32 %v220, 0.0
  %v237 = vmax.f32 %v221, 0.0
  %v238 = vmax.f32 %v222, 0.0
  %v239 = vmax.f32 %v223, 0.0
  %v240 = vmax.f32 %v224, 0.0
  %v241 = vmax.f32 %v225, 0.0
  %v242 = vmax.f32 %v226, 0.0
  %v243 = vmax.f32 %v227, 0.0
  %v244 = vmax.f32 %v228, 0.0
  %v245 = vmax.f32 %v229, 0.0
  %v246 = vpack.c.bf16 %v230, %v230
  %v247 = vpack.c.bf16 %v231, %v231
  %v248 = vpack.c.bf16 %v232, %v232
  %v249 = vpack.c.bf16 %v233, %v233
  %v250 = vpack.c.bf16 %v234, %v234
  %v251 = vpack.c.bf16 %v235, %v235
  %v252 = vpack.c.bf16 %v236, %v236
  %v253 = vpack.c.bf16 %v237, %v237
  %v254 = vpack.c.bf16 %v238, %v238
  %v255 = vpack.c.bf16 %v239, %v239
  %v256 = vpack.c.bf16 %v240, %v240
  %v257 = vpack.c.bf16 %v241, %v241
  %v258 = vpack.c.bf16 %v242, %v242
  %v259 = vpack.c.bf16 %v243, %v243
  %v260 = vpack.c.bf16 %v244, %v244
  %v261 = vpack.c.bf16 %v245, %v245
  %v278 = vunpack.c.l.b16 %v246
  %v279 = vunpack.c.l.b16 %v247
  %v280 = vunpack.c.l.b16 %v248
  %v281 = vunpack.c.l.b16 %v249
  %v282 = vunpack.c.l.b16 %v250
  %v283 = vunpack.c.l.b16 %v251
  %v284 = vunpack.c.l.b16 %v252
  %v285 = vunpack.c.l.b16 %v253
  %v286 = vunpack.c.l.b16 %v254
  %v287 = vunpack.c.l.b16 %v255
  %v288 = vunpack.c.l.b16 %v256
  %v289 = vunpack.c.l.b16 %v257
  %v290 = vunpack.c.l.b16 %v258
  %v291 = vunpack.c.l.b16 %v259
  %v292 = vunpack.c.l.b16 %v260
  %v293 = vunpack.c.l.b16 %v261
  %v294 = vpack.c.b16 %v278, %v278
  %v295 = vpack.c.b16 %v279, %v279
  %v296 = vpack.c.b16 %v280, %v280
  %v297 = vpack.c.b16 %v281, %v281
  %v298 = vpack.c.b16 %v282, %v282
  %v299 = vpack.c.b16 %v283, %v283
  %v300 = vpack.c.b16 %v284, %v284
  %v301 = vpack.c.b16 %v285, %v285
  %v302 = vpack.c.b16 %v286, %v286
  %v303 = vpack.c.b16 %v287, %v287
  %v304 = vpack.c.b16 %v288, %v288
  %v305 = vpack.c.b16 %v289, %v289
  %v306 = vpack.c.b16 %v290, %v290
  %v307 = vpack.c.b16 %v291, %v291
  %v308 = vpack.c.b16 %v292, %v292
  %v309 = vpack.c.b16 %v293, %v293
  %v311 = vshrl.u32 %v294, 16
  %v313 = vrot.slane %v311, 7
  %v314 = vshll.u32 %v294, 16
  %v316 = vor.u32 %v313, %v314
  %v317 = vrot.slane %v313, 4
  %v319 = vshrl.u32 %v295, 16
  %v321 = vrot.slane %v319, 7
  %v322 = vshll.u32 %v295, 16
  %v324 = vor.u32 %v321, %v322
  %v325 = vrot.slane %v321, 4
  %v327 = vshrl.u32 %v296, 16
  %v329 = vrot.slane %v327, 7
  %v330 = vshll.u32 %v296, 16
  %v332 = vor.u32 %v329, %v330
  %v333 = vrot.slane %v329, 4
  %v335 = vshrl.u32 %v297, 16
  %v337 = vrot.slane %v335, 7
  %v338 = vshll.u32 %v297, 16
  %v340 = vor.u32 %v337, %v338
  %v341 = vrot.slane %v337, 4
  %v343 = vshrl.u32 %v298, 16
  %v345 = vrot.slane %v343, 7
  %v346 = vshll.u32 %v298, 16
  %v348 = vor.u32 %v345, %v346
  %v349 = vrot.slane %v345, 4
  %v351 = vshrl.u32 %v299, 16
  %v353 = vrot.slane %v351, 7
  %v354 = vshll.u32 %v299, 16
  %v356 = vor.u32 %v353, %v354
  %v357 = vrot.slane %v353, 4
  %v359 = vshrl.u32 %v300, 16
  %v361 = vrot.slane %v359, 7
  %v362 = vshll.u32 %v300, 16
  %v364 = vor.u32 %v361, %v362
  %v365 = vrot.slane %v361, 4
  %v367 = vshrl.u32 %v301, 16
  %v369 = vrot.slane %v367, 7
  %v370 = vshll.u32 %v301, 16
  %v372 = vor.u32 %v369, %v370
  %v373 = vrot.slane %v369, 4
  %v375 = vshrl.u32 %v302, 16
  %v377 = vrot.slane %v375, 7
  %v378 = vshll.u32 %v302, 16
  %v380 = vor.u32 %v377, %v378
  %v381 = vrot.slane %v377, 4
  %v383 = vshrl.u32 %v303, 16
  %v385 = vrot.slane %v383, 7
  %v386 = vshll.u32 %v303, 16
  %v388 = vor.u32 %v385, %v386
  %v389 = vrot.slane %v385, 4
  %v391 = vshrl.u32 %v304, 16
  %v393 = vrot.slane %v391, 7
  %v394 = vshll.u32 %v304, 16
  %v396 = vor.u32 %v393, %v394
  %v397 = vrot.slane %v393, 4
  %v399 = vshrl.u32 %v305, 16
  %v401 = vrot.slane %v399, 7
  %v402 = vshll.u32 %v305, 16
  %v404 = vor.u32 %v401, %v402
  %v405 = vrot.slane %v401, 4
  %v407 = vshrl.u32 %v306, 16
  %v409 = vrot.slane %v407, 7
  %v410 = vshll.u32 %v306, 16
  %v412 = vor.u32 %v409, %v410
  %v413 = vrot.slane %v409, 4
  %v415 = vshrl.u32 %v307, 16
  %v417 = vrot.slane %v415, 7
  %v418 = vshll.u32 %v307, 16
  %v420 = vor.u32 %v417, %v418
  %v421 = vrot.slane %v417, 4
  %v423 = vshrl.u32 %v308, 16
  %v425 = vrot.slane %v423, 7
  %v426 = vshll.u32 %v308, 16
  %v428 = vor.u32 %v425, %v426
  %v429 = vrot.slane %v425, 4
  %v431 = vshrl.u32 %v309, 16
  %v433 = vrot.slane %v431, 7
  %v434 = vshll.u32 %v309, 16
  %v436 = vor.u32 %v433, %v434
  %v437 = vrot.slane %v433, 4
  %s470 = scalar_lea.vmem [#allocation2], 8
  %vm471 = vcmask 1043456
  %vm472 = vmand %vm471, %vm90
  %v473 = vld [vmem:[%s470] sm:$0xf]
  %v474 = vsel %vm472, %v316, %v473
  %475 = vst [vmem:[%s470] sm:$0xf] %v474
  %v476 = vld [vmem:[%s470 + $0x4] sm:$0x1]
  %v477 = vsel %vm29, %v317, %v476
  %478 = vst [vmem:[%s470 + $0x4] sm:$0x1] %v477
  %v479 = vld [vmem:[%s470 + $0x8] sm:$0xf]
  %v480 = vsel %vm472, %v324, %v479
  %481 = vst [vmem:[%s470 + $0x8] sm:$0xf] %v480
  %v482 = vld [vmem:[%s470 + $0xc] sm:$0x1]
  %v483 = vsel %vm29, %v325, %v482
  %484 = vst [vmem:[%s470 + $0xc] sm:$0x1] %v483
  %v485 = vld [vmem:[%s470 + $0x10] sm:$0xf]
  %v486 = vsel %vm472, %v332, %v485
  %487 = vst [vmem:[%s470 + $0x10] sm:$0xf] %v486
  %v488 = vld [vmem:[%s470 + $0x14] sm:$0x1]
  %v489 = vsel %vm29, %v333, %v488
  %490 = vst [vmem:[%s470 + $0x14] sm:$0x1] %v489
  %v491 = vld [vmem:[%s470 + $0x18] sm:$0xf]
  %v492 = vsel %vm472, %v340, %v491
  %493 = vst [vmem:[%s470 + $0x18] sm:$0xf] %v492
  %v494 = vld [vmem:[%s470 + $0x1c] sm:$0x1]
  %v495 = vsel %vm29, %v341, %v494
  %496 = vst [vmem:[%s470 + $0x1c] sm:$0x1] %v495
  %v497 = vld [vmem:[%s470 + $0x20] sm:$0xf]
  %v498 = vsel %vm472, %v348, %v497
  %499 = vst [vmem:[%s470 + $0x20] sm:$0xf] %v498
  %v500 = vld [vmem:[%s470 + $0x24] sm:$0x1]
  %v501 = vsel %vm29, %v349, %v500
  %502 = vst [vmem:[%s470 + $0x24] sm:$0x1] %v501
  %v503 = vld [vmem:[%s470 + $0x28] sm:$0xf]
  %v504 = vsel %vm472, %v356, %v503
  %505 = vst [vmem:[%s470 + $0x28] sm:$0xf] %v504
  %v506 = vld [vmem:[%s470 + $0x2c] sm:$0x1]
  %v507 = vsel %vm29, %v357, %v506
  %508 = vst [vmem:[%s470 + $0x2c] sm:$0x1] %v507
  %v509 = vld [vmem:[%s470 + $0x30] sm:$0xf]
  %v510 = vsel %vm472, %v364, %v509
  %511 = vst [vmem:[%s470 + $0x30] sm:$0xf] %v510
  %v512 = vld [vmem:[%s470 + $0x34] sm:$0x1]
  %v513 = vsel %vm29, %v365, %v512
  %514 = vst [vmem:[%s470 + $0x34] sm:$0x1] %v513
  %v515 = vld [vmem:[%s470 + $0x38] sm:$0xf]
  %v516 = vsel %vm472, %v372, %v515
  %517 = vst [vmem:[%s470 + $0x38] sm:$0xf] %v516
  %v518 = vld [vmem:[%s470 + $0x3c] sm:$0x1]
  %v519 = vsel %vm29, %v373, %v518
  %520 = vst [vmem:[%s470 + $0x3c] sm:$0x1] %v519
  %v521 = vld [vmem:[%s470 + $0x50] sm:$0xf]
  %v522 = vsel %vm472, %v380, %v521
  %523 = vst [vmem:[%s470 + $0x50] sm:$0xf] %v522
  %v524 = vld [vmem:[%s470 + $0x54] sm:$0x1]
  %v525 = vsel %vm29, %v381, %v524
  %526 = vst [vmem:[%s470 + $0x54] sm:$0x1] %v525
  %v527 = vld [vmem:[%s470 + $0x58] sm:$0xf]
  %v528 = vsel %vm472, %v388, %v527
  %529 = vst [vmem:[%s470 + $0x58] sm:$0xf] %v528
  %v530 = vld [vmem:[%s470 + $0x5c] sm:$0x1]
  %v531 = vsel %vm29, %v389, %v530
  %532 = vst [vmem:[%s470 + $0x5c] sm:$0x1] %v531
  %v533 = vld [vmem:[%s470 + $0x60] sm:$0xf]
  %v534 = vsel %vm472, %v396, %v533
  %535 = vst [vmem:[%s470 + $0x60] sm:$0xf] %v534
  %v536 = vld [vmem:[%s470 + $0x64] sm:$0x1]
  %v537 = vsel %vm29, %v397, %v536
  %538 = vst [vmem:[%s470 + $0x64] sm:$0x1] %v537
  %v539 = vld [vmem:[%s470 + $0x68] sm:$0xf]
  %v540 = vsel %vm472, %v404, %v539
  %541 = vst [vmem:[%s470 + $0x68] sm:$0xf] %v540
  %v542 = vld [vmem:[%s470 + $0x6c] sm:$0x1]
  %v543 = vsel %vm29, %v405, %v542
  %544 = vst [vmem:[%s470 + $0x6c] sm:$0x1] %v543
  %v545 = vld [vmem:[%s470 + $0x70] sm:$0xf]
  %v546 = vsel %vm472, %v412, %v545
  %547 = vst [vmem:[%s470 + $0x70] sm:$0xf] %v546
  %v548 = vld [vmem:[%s470 + $0x74] sm:$0x1]
  %v549 = vsel %vm29, %v413, %v548
  %550 = vst [vmem:[%s470 + $0x74] sm:$0x1] %v549
  %v551 = vld [vmem:[%s470 + $0x78] sm:$0xf]
  %v552 = vsel %vm472, %v420, %v551
  %553 = vst [vmem:[%s470 + $0x78] sm:$0xf] %v552
  %v554 = vld [vmem:[%s470 + $0x7c] sm:$0x1]
  %v555 = vsel %vm29, %v421, %v554
  %556 = vst [vmem:[%s470 + $0x7c] sm:$0x1] %v555
  %v557 = vld [vmem:[%s470 + $0x80] sm:$0xf]
  %v558 = vsel %vm472, %v428, %v557
  %559 = vst [vmem:[%s470 + $0x80] sm:$0xf] %v558
  %v560 = vld [vmem:[%s470 + $0x84] sm:$0x1]
  %v561 = vsel %vm29, %v429, %v560
  %562 = vst [vmem:[%s470 + $0x84] sm:$0x1] %v561
  %v563 = vld [vmem:[%s470 + $0x88] sm:$0xf]
  %v564 = vsel %vm472, %v436, %v563
  %565 = vst [vmem:[%s470 + $0x88] sm:$0xf] %v564
  %v566 = vld [vmem:[%s470 + $0x8c] sm:$0x1]
  %v567 = vsel %vm29, %v437, %v566
  %568 = vst [vmem:[%s470 + $0x8c] sm:$0x1] %v567
  %v569 = vld [vmem:[#allocation2] sm:$0xf]
  %v570 = vld [vmem:[#allocation2 + $0x8] sm:$0xf]
  %v571 = vld [vmem:[#allocation2 + $0x10] sm:$0xf]
  %v572 = vld [vmem:[#allocation2 + $0x18] sm:$0xf]
  %v573 = vld [vmem:[#allocation2 + $0x20] sm:$0xf]
  %v574 = vld [vmem:[#allocation2 + $0x28] sm:$0xf]
  %v575 = vld [vmem:[#allocation2 + $0x30] sm:$0xf]
  %v576 = vld [vmem:[#allocation2 + $0x38] sm:$0xf]
  %v577 = vld [vmem:[#allocation2 + $0x40] sm:$0xf]
  %v578 = vld [vmem:[#allocation2 + $0x48] sm:$0xf]
  %v579 = vld [vmem:[#allocation2 + $0x50] sm:$0xf]
  %v580 = vld [vmem:[#allocation2 + $0x58] sm:$0xf]
  %v581 = vld [vmem:[#allocation2 + $0x60] sm:$0xf]
  %v582 = vld [vmem:[#allocation2 + $0x68] sm:$0xf]
  %v583 = vld [vmem:[#allocation2 + $0x70] sm:$0xf]
  %v584 = vld [vmem:[#allocation2 + $0x78] sm:$0xf]
  %v585 = vld [vmem:[#allocation2 + $0x80] sm:$0xf]
  %v586 = vld [vmem:[#allocation2 + $0x88] sm:$0xf]
  %v587 = vld [vmem:[#allocation2 + $0x90] sm:$0xf]
  %v588 = vld [vmem:[#allocation2 + $0x98] sm:$0xf]
  %v589 = vld [vmem:[%s3] sm:$0xf]
  %v590 = vld [vmem:[%s3 + $0x4] sm:$0xf]
  %v591 = vld [vmem:[%s3 + $0x8] sm:$0xf]
  %v592 = vld [vmem:[%s3 + $0xc] sm:$0xf]
  %v593 = vld [vmem:[%s3 + $0x10] sm:$0xf]
  %v594 = vld [vmem:[%s3 + $0x14] sm:$0xf]
  %v595 = vld [vmem:[%s3 + $0x18] sm:$0xf]
  %v596 = vld [vmem:[%s3 + $0x1c] sm:$0xf]
  %v597 = vld [vmem:[%s3 + $0x20] sm:$0xf]
  %v598 = vld [vmem:[%s3 + $0x24] sm:$0xf]
  %v599 = vld [vmem:[%s3 + $0x28] sm:$0xf]
  %v600 = vld [vmem:[%s3 + $0x2c] sm:$0xf]
  %v601 = vld [vmem:[%s3 + $0x30] sm:$0xf]
  %v602 = vld [vmem:[%s3 + $0x34] sm:$0xf]
  %v603 = vld [vmem:[%s3 + $0x38] sm:$0xf]
  %v604 = vld [vmem:[%s3 + $0x3c] sm:$0xf]
  %s605 = scalar_lea.vmem %s3, 192
  %v606 = vld [vmem:[%s605] sm:$0xf]
  %v607 = vld [vmem:[%s605 + $0x4] sm:$0xf]
  %v608 = vld [vmem:[%s605 + $0x8] sm:$0xf]
  %v609 = vld [vmem:[%s605 + $0xc] sm:$0xf]
  %v610 = vld [vmem:[%s605 + $0x10] sm:$0xf]
  %v611 = vld [vmem:[%s605 + $0x14] sm:$0xf]
  %v612 = vld [vmem:[%s605 + $0x18] sm:$0xf]
  %v613 = vld [vmem:[%s605 + $0x1c] sm:$0xf]
  %v614 = vld [vmem:[%s605 + $0x20] sm:$0xf]
  %v615 = vld [vmem:[%s605 + $0x24] sm:$0xf]
  %v616 = vld [vmem:[%s605 + $0x28] sm:$0xf]
  %v617 = vld [vmem:[%s605 + $0x2c] sm:$0xf]
  %v618 = vld [vmem:[%s605 + $0x30] sm:$0xf]
  %v619 = vld [vmem:[%s605 + $0x34] sm:$0xf]
  %v620 = vld [vmem:[%s605 + $0x38] sm:$0xf]
  %v621 = vld [vmem:[%s605 + $0x3c] sm:$0xf]
  %v638 = vunpack.c.l.b16 %v570
  %v639 = vunpack.c.l.b16 %v571
  %v640 = vunpack.c.l.b16 %v572
  %v641 = vunpack.c.l.b16 %v573
  %v642 = vunpack.c.l.b16 %v574
  %v643 = vunpack.c.l.b16 %v575
  %v644 = vunpack.c.l.b16 %v576
  %v645 = vunpack.c.l.b16 %v577
  %v646 = vunpack.c.l.b16 %v580
  %v647 = vunpack.c.l.b16 %v581
  %v648 = vunpack.c.l.b16 %v582
  %v649 = vunpack.c.l.b16 %v583
  %v650 = vunpack.c.l.b16 %v584
  %v651 = vunpack.c.l.b16 %v585
  %v652 = vunpack.c.l.b16 %v586
  %v653 = vunpack.c.l.b16 %v587
  %v654 = vpack.c.b16 %v639, %v638
  %v655 = vpack.c.b16 %v641, %v640
  %v656 = vpack.c.b16 %v643, %v642
  %v657 = vpack.c.b16 %v645, %v644
  %v658 = vpack.c.b16 %v647, %v646
  %v659 = vpack.c.b16 %v649, %v648
  %v660 = vpack.c.b16 %v651, %v650
  %v661 = vpack.c.b16 %v653, %v652
  %v686 = vunpack.c.l.b16 %v606
  %v687 = vunpack.c.l.b16 %v607
  %v688 = vunpack.c.l.b16 %v608
  %v689 = vunpack.c.l.b16 %v609
  %v690 = vunpack.c.l.b16 %v610
  %v691 = vunpack.c.l.b16 %v611
  %v692 = vunpack.c.l.b16 %v612
  %v693 = vunpack.c.l.b16 %v613
  %v694 = vunpack.c.l.b16 %v614
  %v695 = vunpack.c.l.b16 %v615
  %v696 = vunpack.c.l.b16 %v616
  %v697 = vunpack.c.l.b16 %v617
  %v698 = vunpack.c.l.b16 %v618
  %v699 = vunpack.c.l.b16 %v619
  %v700 = vunpack.c.l.b16 %v620
  %v701 = vunpack.c.l.b16 %v621
  %v702 = vpack.c.b16 %v687, %v686
  %v703 = vpack.c.b16 %v689, %v688
  %v704 = vpack.c.b16 %v691, %v690
  %v705 = vpack.c.b16 %v693, %v692
  %v706 = vpack.c.b16 %v695, %v694
  %v707 = vpack.c.b16 %v697, %v696
  %v708 = vpack.c.b16 %v699, %v698
  %v709 = vpack.c.b16 %v701, %v700
  %718 = vmatprep.subr.bf16.mxu0 0
  %719 = vmatpush1.bf16.msra.mxu0 %v702
  %720 = vmatprep.subr.bf16.mxu0 0
  %721 = vmatpush1.bf16.msra.mxu0 %v703
  %722 = vmatprep.subr.bf16.mxu0 0
  %723 = vmatpush1.bf16.msra.mxu0 %v704
  %724 = vmatprep.subr.bf16.mxu0 0
  %725 = vmatpush1.bf16.msra.mxu0 %v705
  %726 = vmatprep.subr.bf16.mxu0 0
  %727 = vmatpush1.bf16.msra.mxu0 %v706
  %728 = vmatprep.subr.bf16.mxu0 0
  %729 = vmatpush1.bf16.msra.mxu0 %v707
  %730 = vmatprep.subr.bf16.mxu0 0
  %731 = vmatpush1.bf16.msra.mxu0 %v708
  %732 = vmatprep.subr.bf16.mxu0 0
  %733 = vmatpush1.bf16.msra.mxu0 %v709
  %734 = vmatprep.subr.bf16.mxu0 0
  %735 = vmatpush1.bf16.msra.mxu0 0
  %736 = vmatprep.subr.bf16.mxu0 0
  %737 = vmatpush1.bf16.msra.mxu0 0
  %738 = vmatprep.subr.bf16.mxu0 0
  %739 = vmatpush1.bf16.msra.mxu0 0
  %740 = vmatprep.subr.bf16.mxu0 0
  %741 = vmatpush1.bf16.msra.mxu0 0
  %742 = vmatprep.subr.bf16.mxu0 0
  %743 = vmatpush1.bf16.msra.mxu0 0
  %744 = vmatprep.subr.bf16.mxu0 0
  %745 = vmatpush1.bf16.msra.mxu0 0
  %746 = vmatprep.subr.bf16.mxu0 0
  %747 = vmatpush1.bf16.msra.mxu0 0
  %748 = vmatprep.subr.bf16.mxu0 0
  %749 = vmatpush1.bf16.msra.mxu0 0
  %750 = vmatprep.mubr.bf16.mxu0 0
  %751 = vmatmul.mubr.bf16.gmra.mrb[0].mxu0 %v654
  %v752 = vpop.f32.mrb[0].mxu0
  %v753 = vadd.f32 0.0, %v752
  %v754 = vpop.f32.mrb[0].mxu0
  %v755 = vpop.f32.mrb[0].mxu0
  %v756 = vadd.f32 0.0, %v755
  %v757 = vpop.f32.mrb[0].mxu0
  %758 = vmatprep.mubr.bf16.mxu0 0
  %759 = vmatmul.mubr.bf16.gmra.mrb[0].mxu0 %v655
  %v760 = vpop.f32.mrb[0].mxu0
  %v761 = vadd.f32 0.0, %v760
  %v762 = vpop.f32.mrb[0].mxu0
  %v763 = vpop.f32.mrb[0].mxu0
  %v764 = vadd.f32 0.0, %v763
  %v765 = vpop.f32.mrb[0].mxu0
  %766 = vmatprep.mubr.bf16.mxu0 0
  %767 = vmatmul.mubr.bf16.gmra.mrb[0].mxu0 %v656
  %v768 = vpop.f32.mrb[0].mxu0
  %v769 = vadd.f32 0.0, %v768
  %v770 = vpop.f32.mrb[0].mxu0
  %v771 = vpop.f32.mrb[0].mxu0
  %v772 = vadd.f32 0.0, %v771
  %v773 = vpop.f32.mrb[0].mxu0
  %774 = vmatprep.mubr.bf16.mxu0 0
  %775 = vmatmul.mubr.bf16.gmra.mrb[0].mxu0 %v657
  %v776 = vpop.f32.mrb[0].mxu0
  %v777 = vadd.f32 0.0, %v776
  %v778 = vpop.f32.mrb[0].mxu0
  %v779 = vpop.f32.mrb[0].mxu0
  %v780 = vadd.f32 0.0, %v779
  %v781 = vpop.f32.mrb[0].mxu0
  %782 = vmatprep.mubr.bf16.mxu0 0
  %783 = vmatmul.mubr.bf16.gmra.mrb[0].mxu0 %v658
  %v784 = vpop.f32.mrb[0].mxu0
  %v785 = vadd.f32 0.0, %v784
  %v786 = vpop.f32.mrb[0].mxu0
  %v787 = vpop.f32.mrb[0].mxu0
  %v788 = vadd.f32 0.0, %v787
  %v789 = vpop.f32.mrb[0].mxu0
  %790 = vmatprep.mubr.bf16.mxu0 0
  %791 = vmatmul.mubr.bf16.gmra.mrb[0].mxu0 %v659
  %v792 = vpop.f32.mrb[0].mxu0
  %v793 = vadd.f32 0.0, %v792
  %v794 = vpop.f32.mrb[0].mxu0
  %v795 = vpop.f32.mrb[0].mxu0
  %v796 = vadd.f32 0.0, %v795
  %v797 = vpop.f32.mrb[0].mxu0
  %798 = vmatprep.mubr.bf16.mxu0 0
  %799 = vmatmul.mubr.bf16.gmra.mrb[0].mxu0 %v660
  %v800 = vpop.f32.mrb[0].mxu0
  %v801 = vadd.f32 0.0, %v800
  %v802 = vpop.f32.mrb[0].mxu0
  %v803 = vpop.f32.mrb[0].mxu0
  %v804 = vadd.f32 0.0, %v803
  %v805 = vpop.f32.mrb[0].mxu0
  %806 = vmatprep.mubr.bf16.mxu0 0
  %807 = vmatmul.mubr.bf16.gmra.mrb[0].mxu0 %v661
  %v808 = vpop.f32.mrb[0].mxu0
  %v809 = vadd.f32 0.0, %v808
  %v810 = vpop.f32.mrb[0].mxu0
  %v811 = vpop.f32.mrb[0].mxu0
  %v812 = vadd.f32 0.0, %v811
  %v813 = vpop.f32.mrb[0].mxu0
  %814 = vdwg.mxu0
  %v817 = vunpack.c.l.b16 %v569
  %v818 = vunpack.c.l.b16 %v579
  %v819 = vpack.c.b16 %v638, %v817
  %v820 = vpack.c.b16 %v640, %v639
  %v821 = vpack.c.b16 %v642, %v641
  %v822 = vpack.c.b16 %v644, %v643
  %v823 = vpack.c.b16 %v646, %v818
  %v824 = vpack.c.b16 %v648, %v647
  %v825 = vpack.c.b16 %v650, %v649
  %v826 = vpack.c.b16 %v652, %v651
  %v851 = vunpack.c.l.b16 %v589
  %v852 = vunpack.c.l.b16 %v590
  %v853 = vunpack.c.l.b16 %v591
  %v854 = vunpack.c.l.b16 %v592
  %v855 = vunpack.c.l.b16 %v593
  %v856 = vunpack.c.l.b16 %v594
  %v857 = vunpack.c.l.b16 %v595
  %v858 = vunpack.c.l.b16 %v596
  %v859 = vunpack.c.l.b16 %v597
  %v860 = vunpack.c.l.b16 %v598
  %v861 = vunpack.c.l.b16 %v599
  %v862 = vunpack.c.l.b16 %v600
  %v863 = vunpack.c.l.b16 %v601
  %v864 = vunpack.c.l.b16 %v602
  %v865 = vunpack.c.l.b16 %v603
  %v866 = vunpack.c.l.b16 %v604
  %v867 = vpack.c.b16 %v852, %v851
  %v868 = vpack.c.b16 %v854, %v853
  %v869 = vpack.c.b16 %v856, %v855
  %v870 = vpack.c.b16 %v858, %v857
  %v871 = vpack.c.b16 %v860, %v859
  %v872 = vpack.c.b16 %v862, %v861
  %v873 = vpack.c.b16 %v864, %v863
  %v874 = vpack.c.b16 %v866, %v865
  %883 = vmatprep.subr.bf16.mxu0 0
  %884 = vmatpush1.bf16.msra.mxu0 %v867
  %885 = vmatprep.subr.bf16.mxu0 0
  %886 = vmatpush1.bf16.msra.mxu0 %v868
  %887 = vmatprep.subr.bf16.mxu0 0
  %888 = vmatpush1.bf16.msra.mxu0 %v869
  %889 = vmatprep.subr.bf16.mxu0 0
  %890 = vmatpush1.bf16.msra.mxu0 %v870
  %891 = vmatprep.subr.bf16.mxu0 0
  %892 = vmatpush1.bf16.msra.mxu0 %v871
  %893 = vmatprep.subr.bf16.mxu0 0
  %894 = vmatpush1.bf16.msra.mxu0 %v872
  %895 = vmatprep.subr.bf16.mxu0 0
  %896 = vmatpush1.bf16.msra.mxu0 %v873
  %897 = vmatprep.subr.bf16.mxu0 0
  %898 = vmatpush1.bf16.msra.mxu0 %v874
  %899 = vmatprep.subr.bf16.mxu0 0
  %900 = vmatpush1.bf16.msra.mxu0 0
  %901 = vmatprep.subr.bf16.mxu0 0
  %902 = vmatpush1.bf16.msra.mxu0 0
  %903 = vmatprep.subr.bf16.mxu0 0
  %904 = vmatpush1.bf16.msra.mxu0 0
  %905 = vmatprep.subr.bf16.mxu0 0
  %906 = vmatpush1.bf16.msra.mxu0 0
  %907 = vmatprep.subr.bf16.mxu0 0
  %908 = vmatpush1.bf16.msra.mxu0 0
  %909 = vmatprep.subr.bf16.mxu0 0
  %910 = vmatpush1.bf16.msra.mxu0 0
  %911 = vmatprep.subr.bf16.mxu0 0
  %912 = vmatpush1.bf16.msra.mxu0 0
  %913 = vmatprep.subr.bf16.mxu0 0
  %914 = vmatpush1.bf16.msra.mxu0 0
  %915 = vmatprep.mubr.bf16.mxu0 0
  %916 = vmatmul.mubr.bf16.gmra.mrb[0].mxu0 %v819
  %v917 = vpop.f32.mrb[0].mxu0
  %v918 = vadd.f32 %v753, %v917
  %v919 = vpop.f32.mrb[0].mxu0
  %v920 = vpop.f32.mrb[0].mxu0
  %v921 = vadd.f32 %v756, %v920
  %v922 = vpop.f32.mrb[0].mxu0
  %923 = vmatprep.mubr.bf16.mxu0 0
  %924 = vmatmul.mubr.bf16.gmra.mrb[0].mxu0 %v820
  %v925 = vpop.f32.mrb[0].mxu0
  %v926 = vadd.f32 %v761, %v925
  %v927 = vpop.f32.mrb[0].mxu0
  %v928 = vpop.f32.mrb[0].mxu0
  %v929 = vadd.f32 %v764, %v928
  %v930 = vpop.f32.mrb[0].mxu0
  %931 = vmatprep.mubr.bf16.mxu0 0
  %932 = vmatmul.mubr.bf16.gmra.mrb[0].mxu0 %v821
  %v933 = vpop.f32.mrb[0].mxu0
  %v934 = vadd.f32 %v769, %v933
  %v935 = vpop.f32.mrb[0].mxu0
  %v936 = vpop.f32.mrb[0].mxu0
  %v937 = vadd.f32 %v772, %v936
  %v938 = vpop.f32.mrb[0].mxu0
  %939 = vmatprep.mubr.bf16.mxu0 0
  %940 = vmatmul.mubr.bf16.gmra.mrb[0].mxu0 %v822
  %v941 = vpop.f32.mrb[0].mxu0
  %v942 = vadd.f32 %v777, %v941
  %v943 = vpop.f32.mrb[0].mxu0
  %v944 = vpop.f32.mrb[0].mxu0
  %v945 = vadd.f32 %v780, %v944
  %v946 = vpop.f32.mrb[0].mxu0
  %947 = vmatprep.mubr.bf16.mxu0 0
  %948 = vmatmul.mubr.bf16.gmra.mrb[0].mxu0 %v823
  %v949 = vpop.f32.mrb[0].mxu0
  %v950 = vadd.f32 %v785, %v949
  %v951 = vpop.f32.mrb[0].mxu0
  %v952 = vpop.f32.mrb[0].mxu0
  %v953 = vadd.f32 %v788, %v952
  %v954 = vpop.f32.mrb[0].mxu0
  %955 = vmatprep.mubr.bf16.mxu0 0
  %956 = vmatmul.mubr.bf16.gmra.mrb[0].mxu0 %v824
  %v957 = vpop.f32.mrb[0].mxu0
  %v958 = vadd.f32 %v793, %v957
  %v959 = vpop.f32.mrb[0].mxu0
  %v960 = vpop.f32.mrb[0].mxu0
  %v961 = vadd.f32 %v796, %v960
  %v962 = vpop.f32.mrb[0].mxu0
  %963 = vmatprep.mubr.bf16.mxu0 0
  %964 = vmatmul.mubr.bf16.gmra.mrb[0].mxu0 %v825
  %v965 = vpop.f32.mrb[0].mxu0
  %v966 = vadd.f32 %v801, %v965
  %v967 = vpop.f32.mrb[0].mxu0
  %v968 = vpop.f32.mrb[0].mxu0
  %v969 = vadd.f32 %v804, %v968
  %v970 = vpop.f32.mrb[0].mxu0
  %971 = vmatprep.mubr.bf16.mxu0 0
  %972 = vmatmul.mubr.bf16.gmra.mrb[0].mxu0 %v826
  %v973 = vpop.f32.mrb[0].mxu0
  %v974 = vadd.f32 %v809, %v973
  %v975 = vpop.f32.mrb[0].mxu0
  %v976 = vpop.f32.mrb[0].mxu0
  %v977 = vadd.f32 %v812, %v976
  %v978 = vpop.f32.mrb[0].mxu0
  %979 = vdwg.mxu0
  %s980 = scalar_lea.vmem %s3, 384
  %v981 = vld [vmem:[%s980] sm:$0xf]
  %v982 = vld [vmem:[%s980 + $0x4] sm:$0xf]
  %v983 = vld [vmem:[%s980 + $0x8] sm:$0xf]
  %v984 = vld [vmem:[%s980 + $0xc] sm:$0xf]
  %v985 = vld [vmem:[%s980 + $0x10] sm:$0xf]
  %v986 = vld [vmem:[%s980 + $0x14] sm:$0xf]
  %v987 = vld [vmem:[%s980 + $0x18] sm:$0xf]
  %v988 = vld [vmem:[%s980 + $0x1c] sm:$0xf]
  %v989 = vld [vmem:[%s980 + $0x20] sm:$0xf]
  %v990 = vld [vmem:[%s980 + $0x24] sm:$0xf]
  %v991 = vld [vmem:[%s980 + $0x28] sm:$0xf]
  %v992 = vld [vmem:[%s980 + $0x2c] sm:$0xf]
  %v993 = vld [vmem:[%s980 + $0x30] sm:$0xf]
  %v994 = vld [vmem:[%s980 + $0x34] sm:$0xf]
  %v995 = vld [vmem:[%s980 + $0x38] sm:$0xf]
  %v996 = vld [vmem:[%s980 + $0x3c] sm:$0xf]
  %v999 = vunpack.c.l.b16 %v578
  %v1000 = vunpack.c.l.b16 %v588
  %v1001 = vpack.c.b16 %v999, %v645
  %v1002 = vpack.c.b16 %v1000, %v653
  %v1021 = vunpack.c.l.b16 %v981
  %v1022 = vunpack.c.l.b16 %v982
  %v1023 = vunpack.c.l.b16 %v983
  %v1024 = vunpack.c.l.b16 %v984
  %v1025 = vunpack.c.l.b16 %v985
  %v1026 = vunpack.c.l.b16 %v986
  %v1027 = vunpack.c.l.b16 %v987
  %v1028 = vunpack.c.l.b16 %v988
  %v1029 = vunpack.c.l.b16 %v989
  %v1030 = vunpack.c.l.b16 %v990
  %v1031 = vunpack.c.l.b16 %v991
  %v1032 = vunpack.c.l.b16 %v992
  %v1033 = vunpack.c.l.b16 %v993
  %v1034 = vunpack.c.l.b16 %v994
  %v1035 = vunpack.c.l.b16 %v995
  %v1036 = vunpack.c.l.b16 %v996
  %v1037 = vpack.c.b16 %v1022, %v1021
  %v1038 = vpack.c.b16 %v1024, %v1023
  %v1039 = vpack.c.b16 %v1026, %v1025
  %v1040 = vpack.c.b16 %v1028, %v1027
  %v1041 = vpack.c.b16 %v1030, %v1029
  %v1042 = vpack.c.b16 %v1032, %v1031
  %v1043 = vpack.c.b16 %v1034, %v1033
  %v1044 = vpack.c.b16 %v1036, %v1035
  %1053 = vmatprep.subr.bf16.mxu0 0
  %1054 = vmatpush1.bf16.msra.mxu0 %v1037
  %1055 = vmatprep.subr.bf16.mxu0 0
  %1056 = vmatpush1.bf16.msra.mxu0 %v1038
  %1057 = vmatprep.subr.bf16.mxu0 0
  %1058 = vmatpush1.bf16.msra.mxu0 %v1039
  %1059 = vmatprep.subr.bf16.mxu0 0
  %1060 = vmatpush1.bf16.msra.mxu0 %v1040
  %1061 = vmatprep.subr.bf16.mxu0 0
  %1062 = vmatpush1.bf16.msra.mxu0 %v1041
  %1063 = vmatprep.subr.bf16.mxu0 0
  %1064 = vmatpush1.bf16.msra.mxu0 %v1042
  %1065 = vmatprep.subr.bf16.mxu0 0
  %1066 = vmatpush1.bf16.msra.mxu0 %v1043
  %1067 = vmatprep.subr.bf16.mxu0 0
  %1068 = vmatpush1.bf16.msra.mxu0 %v1044
  %1069 = vmatprep.subr.bf16.mxu0 0
  %1070 = vmatpush1.bf16.msra.mxu0 0
  %1071 = vmatprep.subr.bf16.mxu0 0
  %1072 = vmatpush1.bf16.msra.mxu0 0
  %1073 = vmatprep.subr.bf16.mxu0 0
  %1074 = vmatpush1.bf16.msra.mxu0 0
  %1075 = vmatprep.subr.bf16.mxu0 0
  %1076 = vmatpush1.bf16.msra.mxu0 0
  %1077 = vmatprep.subr.bf16.mxu0 0
  %1078 = vmatpush1.bf16.msra.mxu0 0
  %1079 = vmatprep.subr.bf16.mxu0 0
  %1080 = vmatpush1.bf16.msra.mxu0 0
  %1081 = vmatprep.subr.bf16.mxu0 0
  %1082 = vmatpush1.bf16.msra.mxu0 0
  %1083 = vmatprep.subr.bf16.mxu0 0
  %1084 = vmatpush1.bf16.msra.mxu0 0
  %1085 = vmatprep.mubr.bf16.mxu0 0
  %1086 = vmatmul.mubr.bf16.gmra.mrb[0].mxu0 %v820
  %v1087 = vpop.f32.mrb[0].mxu0
  %v1088 = vadd.f32 0.0, %v1087
  %v1089 = vpop.f32.mrb[0].mxu0
  %v1090 = vpop.f32.mrb[0].mxu0
  %v1091 = vadd.f32 0.0, %v1090
  %v1092 = vpop.f32.mrb[0].mxu0
  %1093 = vmatprep.mubr.bf16.mxu0 0
  %1094 = vmatmul.mubr.bf16.gmra.mrb[0].mxu0 %v821
  %v1095 = vpop.f32.mrb[0].mxu0
  %v1096 = vadd.f32 0.0, %v1095
  %v1097 = vpop.f32.mrb[0].mxu0
  %v1098 = vpop.f32.mrb[0].mxu0
  %v1099 = vadd.f32 0.0, %v1098
  %v1100 = vpop.f32.mrb[0].mxu0
  %1101 = vmatprep.mubr.bf16.mxu0 0
  %1102 = vmatmul.mubr.bf16.gmra.mrb[0].mxu0 %v822
  %v1103 = vpop.f32.mrb[0].mxu0
  %v1104 = vadd.f32 0.0, %v1103
  %v1105 = vpop.f32.mrb[0].mxu0
  %v1106 = vpop.f32.mrb[0].mxu0
  %v1107 = vadd.f32 0.0, %v1106
  %v1108 = vpop.f32.mrb[0].mxu0
  %1109 = vmatprep.mubr.bf16.mxu0 0
  %1110 = vmatmul.mubr.bf16.gmra.mrb[0].mxu0 %v1001
  %v1111 = vpop.f32.mrb[0].mxu0
  %v1112 = vadd.f32 0.0, %v1111
  %v1113 = vpop.f32.mrb[0].mxu0
  %v1114 = vpop.f32.mrb[0].mxu0
  %v1115 = vadd.f32 0.0, %v1114
  %v1116 = vpop.f32.mrb[0].mxu0
  %1117 = vmatprep.mubr.bf16.mxu0 0
  %1118 = vmatmul.mubr.bf16.gmra.mrb[0].mxu0 %v824
  %v1119 = vpop.f32.mrb[0].mxu0
  %v1120 = vadd.f32 0.0, %v1119
  %v1121 = vpop.f32.mrb[0].mxu0
  %v1122 = vpop.f32.mrb[0].mxu0
  %v1123 = vadd.f32 0.0, %v1122
  %v1124 = vpop.f32.mrb[0].mxu0
  %1125 = vmatprep.mubr.bf16.mxu0 0
  %1126 = vmatmul.mubr.bf16.gmra.mrb[0].mxu0 %v825
  %v1127 = vpop.f32.mrb[0].mxu0
  %v1128 = vadd.f32 0.0, %v1127
  %v1129 = vpop.f32.mrb[0].mxu0
  %v1130 = vpop.f32.mrb[0].mxu0
  %v1131 = vadd.f32 0.0, %v1130
  %v1132 = vpop.f32.mrb[0].mxu0
  %1133 = vmatprep.mubr.bf16.mxu0 0
  %1134 = vmatmul.mubr.bf16.gmra.mrb[0].mxu0 %v826
  %v1135 = vpop.f32.mrb[0].mxu0
  %v1136 = vadd.f32 0.0, %v1135
  %v1137 = vpop.f32.mrb[0].mxu0
  %v1138 = vpop.f32.mrb[0].mxu0
  %v1139 = vadd.f32 0.0, %v1138
  %v1140 = vpop.f32.mrb[0].mxu0
  %1141 = vmatprep.mubr.bf16.mxu0 0
  %1142 = vmatmul.mubr.bf16.gmra.mrb[0].mxu0 %v1002
  %v1143 = vpop.f32.mrb[0].mxu0
  %v1144 = vadd.f32 0.0, %v1143
  %v1145 = vpop.f32.mrb[0].mxu0
  %v1146 = vpop.f32.mrb[0].mxu0
  %v1147 = vadd.f32 0.0, %v1146
  %v1148 = vpop.f32.mrb[0].mxu0
  %1149 = vdwg.mxu0
  %v1150 = vadd.f32 %v918, %v1088
  %v1151 = vadd.f32 %v921, %v1091
  %v1152 = vadd.f32 %v926, %v1096
  %v1153 = vadd.f32 %v929, %v1099
  %v1154 = vadd.f32 %v934, %v1104
  %v1155 = vadd.f32 %v937, %v1107
  %v1156 = vadd.f32 %v942, %v1112
  %v1157 = vadd.f32 %v945, %v1115
  %v1158 = vadd.f32 %v950, %v1120
  %v1159 = vadd.f32 %v953, %v1123
  %v1160 = vadd.f32 %v958, %v1128
  %v1161 = vadd.f32 %v961, %v1131
  %v1162 = vadd.f32 %v966, %v1136
  %v1163 = vadd.f32 %v969, %v1139
  %v1164 = vadd.f32 %v974, %v1144
  %v1165 = vadd.f32 %v977, %v1147
  %v1166 = vld [vmem:[#allocation2] sm:$0xf]
  %v1167 = vld [vmem:[#allocation2 + $0x4] sm:$0x1]
  %v1168 = vld [vmem:[#allocation2 + $0x8] sm:$0xf]
  %v1169 = vld [vmem:[#allocation2 + $0xc] sm:$0x1]
  %v1170 = vld [vmem:[#allocation2 + $0x10] sm:$0xf]
  %v1171 = vld [vmem:[#allocation2 + $0x14] sm:$0x1]
  %v1172 = vld [vmem:[#allocation2 + $0x18] sm:$0xf]
  %v1173 = vld [vmem:[#allocation2 + $0x1c] sm:$0x1]
  %v1174 = vld [vmem:[#allocation2 + $0x20] sm:$0xf]
  %v1175 = vld [vmem:[#allocation2 + $0x24] sm:$0x1]
  %v1176 = vld [vmem:[#allocation2 + $0x28] sm:$0xf]
  %v1177 = vld [vmem:[#allocation2 + $0x2c] sm:$0x1]
  %v1178 = vld [vmem:[#allocation2 + $0x30] sm:$0xf]
  %v1179 = vld [vmem:[#allocation2 + $0x34] sm:$0x1]
  %v1180 = vld [vmem:[#allocation2 + $0x38] sm:$0xf]
  %v1181 = vld [vmem:[#allocation2 + $0x3c] sm:$0x1]
  %v1182 = vld [vmem:[#allocation2 + $0x40] sm:$0xf]
  %v1183 = vld [vmem:[#allocation2 + $0x44] sm:$0x1]
  %v1184 = vld [vmem:[#allocation2 + $0x48] sm:$0xf]
  %v1185 = vld [vmem:[#allocation2 + $0x4c] sm:$0x1]
  %v1186 = vld [vmem:[#allocation2 + $0x50] sm:$0xf]
  %v1187 = vld [vmem:[#allocation2 + $0x54] sm:$0x1]
  %v1188 = vld [vmem:[#allocation2 + $0x58] sm:$0xf]
  %v1189 = vld [vmem:[#allocation2 + $0x5c] sm:$0x1]
  %v1190 = vld [vmem:[#allocation2 + $0x60] sm:$0xf]
  %v1191 = vld [vmem:[#allocation2 + $0x64] sm:$0x1]
  %v1192 = vld [vmem:[#allocation2 + $0x68] sm:$0xf]
  %v1193 = vld [vmem:[#allocation2 + $0x6c] sm:$0x1]
  %v1194 = vld [vmem:[#allocation2 + $0x70] sm:$0xf]
  %v1195 = vld [vmem:[#allocation2 + $0x74] sm:$0x1]
  %v1196 = vld [vmem:[#allocation2 + $0x78] sm:$0xf]
  %v1197 = vld [vmem:[#allocation2 + $0x7c] sm:$0x1]
  %v1198 = vld [vmem:[#allocation2 + $0x80] sm:$0xf]
  %v1199 = vld [vmem:[#allocation2 + $0x84] sm:$0x1]
  %v1200 = vld [vmem:[#allocation2 + $0x88] sm:$0xf]
  %v1201 = vld [vmem:[#allocation2 + $0x8c] sm:$0x1]
  %v1202 = vld [vmem:[#allocation2 + $0x90] sm:$0xf]
  %v1203 = vld [vmem:[#allocation2 + $0x94] sm:$0x1]
  %v1204 = vld [vmem:[#allocation2 + $0x98] sm:$0xf]
  %v1205 = vld [vmem:[#allocation2 + $0x9c] sm:$0x1]
  %vm1206 = vsmask.f32 3328
  %vm1207 = vsmask.f32 7440
  %vm1208 = vmor %vm1206, %vm1207
  %v1210 = vshrl.u32 %v1166, 16
  %v1212 = vrot.slane %v1210, 4
  %v1213 = vshll.u32 %v1166, 16
  %v1215 = vrot.slane %v1213, 5
  %v1216 = vor.u32 %v1212, %v1215
  %v1217 = vrot.slane %v1216, 4
  %v1219 = vshll.u32 %v1167, 16
  %v1221 = vrot.slane %v1219, 5
  %v1222 = vsel %vm1208, %v1217, %v1221
  %v1224 = vshrl.u32 %v1168, 16
  %v1226 = vrot.slane %v1224, 4
  %v1227 = vshll.u32 %v1168, 16
  %v1229 = vrot.slane %v1227, 5
  %v1230 = vor.u32 %v1226, %v1229
  %v1231 = vrot.slane %v1230, 4
  %v1233 = vshll.u32 %v1169, 16
  %v1235 = vrot.slane %v1233, 5
  %v1236 = vsel %vm1208, %v1231, %v1235
  %v1238 = vshrl.u32 %v1170, 16
  %v1240 = vrot.slane %v1238, 4
  %v1241 = vshll.u32 %v1170, 16
  %v1243 = vrot.slane %v1241, 5
  %v1244 = vor.u32 %v1240, %v1243
  %v1245 = vrot.slane %v1244, 4
  %v1247 = vshll.u32 %v1171, 16
  %v1249 = vrot.slane %v1247, 5
  %v1250 = vsel %vm1208, %v1245, %v1249
  %v1252 = vshrl.u32 %v1172, 16
  %v1254 = vrot.slane %v1252, 4
  %v1255 = vshll.u32 %v1172, 16
  %v1257 = vrot.slane %v1255, 5
  %v1258 = vor.u32 %v1254, %v1257
  %v1259 = vrot.slane %v1258, 4
  %v1261 = vshll.u32 %v1173, 16
  %v1263 = vrot.slane %v1261, 5
  %v1264 = vsel %vm1208, %v1259, %v1263
  %v1266 = vshrl.u32 %v1174, 16
  %v1268 = vrot.slane %v1266, 4
  %v1269 = vshll.u32 %v1174, 16
  %v1271 = vrot.slane %v1269, 5
  %v1272 = vor.u32 %v1268, %v1271
  %v1273 = vrot.slane %v1272, 4
  %v1275 = vshll.u32 %v1175, 16
  %v1277 = vrot.slane %v1275, 5
  %v1278 = vsel %vm1208, %v1273, %v1277
  %v1280 = vshrl.u32 %v1176, 16
  %v1282 = vrot.slane %v1280, 4
  %v1283 = vshll.u32 %v1176, 16
  %v1285 = vrot.slane %v1283, 5
  %v1286 = vor.u32 %v1282, %v1285
  %v1287 = vrot.slane %v1286, 4
  %v1289 = vshll.u32 %v1177, 16
  %v1291 = vrot.slane %v1289, 5
  %v1292 = vsel %vm1208, %v1287, %v1291
  %v1294 = vshrl.u32 %v1178, 16
  %v1296 = vrot.slane %v1294, 4
  %v1297 = vshll.u32 %v1178, 16
  %v1299 = vrot.slane %v1297, 5
  %v1300 = vor.u32 %v1296, %v1299
  %v1301 = vrot.slane %v1300, 4
  %v1303 = vshll.u32 %v1179, 16
  %v1305 = vrot.slane %v1303, 5
  %v1306 = vsel %vm1208, %v1301, %v1305
  %v1308 = vshrl.u32 %v1180, 16
  %v1310 = vrot.slane %v1308, 4
  %v1311 = vshll.u32 %v1180, 16
  %v1313 = vrot.slane %v1311, 5
  %v1314 = vor.u32 %v1310, %v1313
  %v1315 = vrot.slane %v1314, 4
  %v1317 = vshll.u32 %v1181, 16
  %v1319 = vrot.slane %v1317, 5
  %v1320 = vsel %vm1208, %v1315, %v1319
  %v1322 = vshrl.u32 %v1182, 16
  %v1324 = vrot.slane %v1322, 4
  %v1325 = vshll.u32 %v1182, 16
  %v1327 = vrot.slane %v1325, 5
  %v1328 = vor.u32 %v1324, %v1327
  %v1329 = vrot.slane %v1328, 4
  %v1331 = vshll.u32 %v1183, 16
  %v1333 = vrot.slane %v1331, 5
  %v1334 = vsel %vm1208, %v1329, %v1333
  %v1336 = vshrl.u32 %v1184, 16
  %v1338 = vrot.slane %v1336, 4
  %v1339 = vshll.u32 %v1184, 16
  %v1341 = vrot.slane %v1339, 5
  %v1342 = vor.u32 %v1338, %v1341
  %v1343 = vrot.slane %v1342, 4
  %v1345 = vshll.u32 %v1185, 16
  %v1347 = vrot.slane %v1345, 5
  %v1348 = vsel %vm1208, %v1343, %v1347
  %v1350 = vshrl.u32 %v1186, 16
  %v1352 = vrot.slane %v1350, 4
  %v1353 = vshll.u32 %v1186, 16
  %v1355 = vrot.slane %v1353, 5
  %v1356 = vor.u32 %v1352, %v1355
  %v1357 = vrot.slane %v1356, 4
  %v1359 = vshll.u32 %v1187, 16
  %v1361 = vrot.slane %v1359, 5
  %v1362 = vsel %vm1208, %v1357, %v1361
  %v1364 = vshrl.u32 %v1188, 16
  %v1366 = vrot.slane %v1364, 4
  %v1367 = vshll.u32 %v1188, 16
  %v1369 = vrot.slane %v1367, 5
  %v1370 = vor.u32 %v1366, %v1369
  %v1371 = vrot.slane %v1370, 4
  %v1373 = vshll.u32 %v1189, 16
  %v1375 = vrot.slane %v1373, 5
  %v1376 = vsel %vm1208, %v1371, %v1375
  %v1378 = vshrl.u32 %v1190, 16
  %v1380 = vrot.slane %v1378, 4
  %v1381 = vshll.u32 %v1190, 16
  %v1383 = vrot.slane %v1381, 5
  %v1384 = vor.u32 %v1380, %v1383
  %v1385 = vrot.slane %v1384, 4
  %v1387 = vshll.u32 %v1191, 16
  %v1389 = vrot.slane %v1387, 5
  %v1390 = vsel %vm1208, %v1385, %v1389
  %v1392 = vshrl.u32 %v1192, 16
  %v1394 = vrot.slane %v1392, 4
  %v1395 = vshll.u32 %v1192, 16
  %v1397 = vrot.slane %v1395, 5
  %v1398 = vor.u32 %v1394, %v1397
  %v1399 = vrot.slane %v1398, 4
  %v1401 = vshll.u32 %v1193, 16
  %v1403 = vrot.slane %v1401, 5
  %v1404 = vsel %vm1208, %v1399, %v1403
  %v1406 = vshrl.u32 %v1194, 16
  %v1408 = vrot.slane %v1406, 4
  %v1409 = vshll.u32 %v1194, 16
  %v1411 = vrot.slane %v1409, 5
  %v1412 = vor.u32 %v1408, %v1411
  %v1413 = vrot.slane %v1412, 4
  %v1415 = vshll.u32 %v1195, 16
  %v1417 = vrot.slane %v1415, 5
  %v1418 = vsel %vm1208, %v1413, %v1417
  %v1420 = vshrl.u32 %v1196, 16
  %v1422 = vrot.slane %v1420, 4
  %v1423 = vshll.u32 %v1196, 16
  %v1425 = vrot.slane %v1423, 5
  %v1426 = vor.u32 %v1422, %v1425
  %v1427 = vrot.slane %v1426, 4
  %v1429 = vshll.u32 %v1197, 16
  %v1431 = vrot.slane %v1429, 5
  %v1432 = vsel %vm1208, %v1427, %v1431
  %v1434 = vshrl.u32 %v1198, 16
  %v1436 = vrot.slane %v1434, 4
  %v1437 = vshll.u32 %v1198, 16
  %v1439 = vrot.slane %v1437, 5
  %v1440 = vor.u32 %v1436, %v1439
  %v1441 = vrot.slane %v1440, 4
  %v1443 = vshll.u32 %v1199, 16
  %v1445 = vrot.slane %v1443, 5
  %v1446 = vsel %vm1208, %v1441, %v1445
  %v1448 = vshrl.u32 %v1200, 16
  %v1450 = vrot.slane %v1448, 4
  %v1451 = vshll.u32 %v1200, 16
  %v1453 = vrot.slane %v1451, 5
  %v1454 = vor.u32 %v1450, %v1453
  %v1455 = vrot.slane %v1454, 4
  %v1457 = vshll.u32 %v1201, 16
  %v1459 = vrot.slane %v1457, 5
  %v1460 = vsel %vm1208, %v1455, %v1459
  %v1462 = vshrl.u32 %v1202, 16
  %v1464 = vrot.slane %v1462, 4
  %v1465 = vshll.u32 %v1202, 16
  %v1467 = vrot.slane %v1465, 5
  %v1468 = vor.u32 %v1464, %v1467
  %v1469 = vrot.slane %v1468, 4
  %v1471 = vshll.u32 %v1203, 16
  %v1473 = vrot.slane %v1471, 5
  %v1474 = vsel %vm1208, %v1469, %v1473
  %v1476 = vshrl.u32 %v1204, 16
  %v1478 = vrot.slane %v1476, 4
  %v1479 = vshll.u32 %v1204, 16
  %v1481 = vrot.slane %v1479, 5
  %v1482 = vor.u32 %v1478, %v1481
  %v1483 = vrot.slane %v1482, 4
  %v1485 = vshll.u32 %v1205, 16
  %v1487 = vrot.slane %v1485, 5
  %v1488 = vsel %vm1208, %v1483, %v1487
  %s1489 = scalar_lea.vmem %s3, 64
  %v1490 = vld [vmem:[%s1489] sm:$0xf]
  %v1491 = vld [vmem:[%s1489 + $0x4] sm:$0xf]
  %v1492 = vld [vmem:[%s1489 + $0x8] sm:$0xf]
  %v1493 = vld [vmem:[%s1489 + $0xc] sm:$0xf]
  %v1494 = vld [vmem:[%s1489 + $0x10] sm:$0xf]
  %v1495 = vld [vmem:[%s1489 + $0x14] sm:$0xf]
  %v1496 = vld [vmem:[%s1489 + $0x18] sm:$0xf]
  %v1497 = vld [vmem:[%s1489 + $0x1c] sm:$0xf]
  %v1498 = vld [vmem:[%s1489 + $0x20] sm:$0xf]
  %v1499 = vld [vmem:[%s1489 + $0x24] sm:$0xf]
  %v1500 = vld [vmem:[%s1489 + $0x28] sm:$0xf]
  %v1501 = vld [vmem:[%s1489 + $0x2c] sm:$0xf]
  %v1502 = vld [vmem:[%s1489 + $0x30] sm:$0xf]
  %v1503 = vld [vmem:[%s1489 + $0x34] sm:$0xf]
  %v1504 = vld [vmem:[%s1489 + $0x38] sm:$0xf]
  %v1505 = vld [vmem:[%s1489 + $0x3c] sm:$0xf]
  %v1506 = vunpack.c.l.b16 %v1222
  %v1507 = vunpack.c.l.b16 %v1236
  %v1508 = vunpack.c.l.b16 %v1250
  %v1509 = vunpack.c.l.b16 %v1264
  %v1510 = vunpack.c.l.b16 %v1278
  %v1511 = vunpack.c.l.b16 %v1292
  %v1512 = vunpack.c.l.b16 %v1306
  %v1513 = vunpack.c.l.b16 %v1320
  %v1514 = vunpack.c.l.b16 %v1362
  %v1515 = vunpack.c.l.b16 %v1376
  %v1516 = vunpack.c.l.b16 %v1390
  %v1517 = vunpack.c.l.b16 %v1404
  %v1518 = vunpack.c.l.b16 %v1418
  %v1519 = vunpack.c.l.b16 %v1432
  %v1520 = vunpack.c.l.b16 %v1446
  %v1521 = vunpack.c.l.b16 %v1460
  %v1522 = vpack.c.b16 %v1507, %v1506
  %v1523 = vpack.c.b16 %v1509, %v1508
  %v1524 = vpack.c.b16 %v1511, %v1510
  %v1525 = vpack.c.b16 %v1513, %v1512
  %v1526 = vpack.c.b16 %v1515, %v1514
  %v1527 = vpack.c.b16 %v1517, %v1516
  %v1528 = vpack.c.b16 %v1519, %v1518
  %v1529 = vpack.c.b16 %v1521, %v1520
  %v1554 = vunpack.c.l.b16 %v1490
  %v1555 = vunpack.c.l.b16 %v1491
  %v1556 = vunpack.c.l.b16 %v1492
  %v1557 = vunpack.c.l.b16 %v1493
  %v1558 = vunpack.c.l.b16 %v1494
  %v1559 = vunpack.c.l.b16 %v1495
  %v1560 = vunpack.c.l.b16 %v1496
  %v1561 = vunpack.c.l.b16 %v1497
  %v1562 = vunpack.c.l.b16 %v1498
  %v1563 = vunpack.c.l.b16 %v1499
  %v1564 = vunpack.c.l.b16 %v1500
  %v1565 = vunpack.c.l.b16 %v1501
  %v1566 = vunpack.c.l.b16 %v1502
  %v1567 = vunpack.c.l.b16 %v1503
  %v1568 = vunpack.c.l.b16 %v1504
  %v1569 = vunpack.c.l.b16 %v1505
  %v1570 = vpack.c.b16 %v1555, %v1554
  %v1571 = vpack.c.b16 %v1557, %v1556
  %v1572 = vpack.c.b16 %v1559, %v1558
  %v1573 = vpack.c.b16 %v1561, %v1560
  %v1574 = vpack.c.b16 %v1563, %v1562
  %v1575 = vpack.c.b16 %v1565, %v1564
  %v1576 = vpack.c.b16 %v1567, %v1566
  %v1577 = vpack.c.b16 %v1569, %v1568
  %1586 = vmatprep.subr.bf16.mxu0 0
  %1587 = vmatpush1.bf16.msra.mxu0 %v1570
  %1588 = vmatprep.subr.bf16.mxu0 0
  %1589 = vmatpush1.bf16.msra.mxu0 %v1571
  %1590 = vmatprep.subr.bf16.mxu0 0
  %1591 = vmatpush1.bf16.msra.mxu0 %v1572
  %1592 = vmatprep.subr.bf16.mxu0 0
  %1593 = vmatpush1.bf16.msra.mxu0 %v1573
  %1594 = vmatprep.subr.bf16.mxu0 0
  %1595 = vmatpush1.bf16.msra.mxu0 %v1574
  %1596 = vmatprep.subr.bf16.mxu0 0
  %1597 = vmatpush1.bf16.msra.mxu0 %v1575
  %1598 = vmatprep.subr.bf16.mxu0 0
  %1599 = vmatpush1.bf16.msra.mxu0 %v1576
  %1600 = vmatprep.subr.bf16.mxu0 0
  %1601 = vmatpush1.bf16.msra.mxu0 %v1577
  %1602 = vmatprep.subr.bf16.mxu0 0
  %1603 = vmatpush1.bf16.msra.mxu0 0
  %1604 = vmatprep.subr.bf16.mxu0 0
  %1605 = vmatpush1.bf16.msra.mxu0 0
  %1606 = vmatprep.subr.bf16.mxu0 0
  %1607 = vmatpush1.bf16.msra.mxu0 0
  %1608 = vmatprep.subr.bf16.mxu0 0
  %1609 = vmatpush1.bf16.msra.mxu0 0
  %1610 = vmatprep.subr.bf16.mxu0 0
  %1611 = vmatpush1.bf16.msra.mxu0 0
  %1612 = vmatprep.subr.bf16.mxu0 0
  %1613 = vmatpush1.bf16.msra.mxu0 0
  %1614 = vmatprep.subr.bf16.mxu0 0
  %1615 = vmatpush1.bf16.msra.mxu0 0
  %1616 = vmatprep.subr.bf16.mxu0 0
  %1617 = vmatpush1.bf16.msra.mxu0 0
  %1618 = vmatprep.mubr.bf16.mxu0 0
  %1619 = vmatmul.mubr.bf16.gmra.mrb[0].mxu0 %v1522
  %v1620 = vpop.f32.mrb[0].mxu0
  %v1621 = vadd.f32 0.0, %v1620
  %v1622 = vpop.f32.mrb[0].mxu0
  %v1623 = vpop.f32.mrb[0].mxu0
  %v1624 = vadd.f32 0.0, %v1623
  %v1625 = vpop.f32.mrb[0].mxu0
  %1626 = vmatprep.mubr.bf16.mxu0 0
  %1627 = vmatmul.mubr.bf16.gmra.mrb[0].mxu0 %v1523
  %v1628 = vpop.f32.mrb[0].mxu0
  %v1629 = vadd.f32 0.0, %v1628
  %v1630 = vpop.f32.mrb[0].mxu0
  %v1631 = vpop.f32.mrb[0].mxu0
  %v1632 = vadd.f32 0.0, %v1631
  %v1633 = vpop.f32.mrb[0].mxu0
  %1634 = vmatprep.mubr.bf16.mxu0 0
  %1635 = vmatmul.mubr.bf16.gmra.mrb[0].mxu0 %v1524
  %v1636 = vpop.f32.mrb[0].mxu0
  %v1637 = vadd.f32 0.0, %v1636
  %v1638 = vpop.f32.mrb[0].mxu0
  %v1639 = vpop.f32.mrb[0].mxu0
  %v1640 = vadd.f32 0.0, %v1639
  %v1641 = vpop.f32.mrb[0].mxu0
  %1642 = vmatprep.mubr.bf16.mxu0 0
  %1643 = vmatmul.mubr.bf16.gmra.mrb[0].mxu0 %v1525
  %v1644 = vpop.f32.mrb[0].mxu0
  %v1645 = vadd.f32 0.0, %v1644
  %v1646 = vpop.f32.mrb[0].mxu0
  %v1647 = vpop.f32.mrb[0].mxu0
  %v1648 = vadd.f32 0.0, %v1647
  %v1649 = vpop.f32.mrb[0].mxu0
  %1650 = vmatprep.mubr.bf16.mxu0 0
  %1651 = vmatmul.mubr.bf16.gmra.mrb[0].mxu0 %v1526
  %v1652 = vpop.f32.mrb[0].mxu0
  %v1653 = vadd.f32 0.0, %v1652
  %v1654 = vpop.f32.mrb[0].mxu0
  %v1655 = vpop.f32.mrb[0].mxu0
  %v1656 = vadd.f32 0.0, %v1655
  %v1657 = vpop.f32.mrb[0].mxu0
  %1658 = vmatprep.mubr.bf16.mxu0 0
  %1659 = vmatmul.mubr.bf16.gmra.mrb[0].mxu0 %v1527
  %v1660 = vpop.f32.mrb[0].mxu0
  %v1661 = vadd.f32 0.0, %v1660
  %v1662 = vpop.f32.mrb[0].mxu0
  %v1663 = vpop.f32.mrb[0].mxu0
  %v1664 = vadd.f32 0.0, %v1663
  %v1665 = vpop.f32.mrb[0].mxu0
  %1666 = vmatprep.mubr.bf16.mxu0 0
  %1667 = vmatmul.mubr.bf16.gmra.mrb[0].mxu0 %v1528
  %v1668 = vpop.f32.mrb[0].mxu0
  %v1669 = vadd.f32 0.0, %v1668
  %v1670 = vpop.f32.mrb[0].mxu0
  %v1671 = vpop.f32.mrb[0].mxu0
  %v1672 = vadd.f32 0.0, %v1671
  %v1673 = vpop.f32.mrb[0].mxu0
  %1674 = vmatprep.mubr.bf16.mxu0 0
  %1675 = vmatmul.mubr.bf16.gmra.mrb[0].mxu0 %v1529
  %v1676 = vpop.f32.mrb[0].mxu0
  %v1677 = vadd.f32 0.0, %v1676
  %v1678 = vpop.f32.mrb[0].mxu0
  %v1679 = vpop.f32.mrb[0].mxu0
  %v1680 = vadd.f32 0.0, %v1679
  %v1681 = vpop.f32.mrb[0].mxu0
  %1682 = vdwg.mxu0
  %v1683 = vadd.f32 %v1150, %v1621
  %v1684 = vadd.f32 %v1151, %v1624
  %v1685 = vadd.f32 %v1152, %v1629
  %v1686 = vadd.f32 %v1153, %v1632
  %v1687 = vadd.f32 %v1154, %v1637
  %v1688 = vadd.f32 %v1155, %v1640
  %v1689 = vadd.f32 %v1156, %v1645
  %v1690 = vadd.f32 %v1157, %v1648
  %v1691 = vadd.f32 %v1158, %v1653
  %v1692 = vadd.f32 %v1159, %v1656
  %v1693 = vadd.f32 %v1160, %v1661
  %v1694 = vadd.f32 %v1161, %v1664
  %v1695 = vadd.f32 %v1162, %v1669
  %v1696 = vadd.f32 %v1163, %v1672
  %v1697 = vadd.f32 %v1164, %v1677
  %v1698 = vadd.f32 %v1165, %v1680
  %s1699 = scalar_lea.vmem %s3, 256
  %v1700 = vld [vmem:[%s1699] sm:$0xf]
  %v1701 = vld [vmem:[%s1699 + $0x4] sm:$0xf]
  %v1702 = vld [vmem:[%s1699 + $0x8] sm:$0xf]
  %v1703 = vld [vmem:[%s1699 + $0xc] sm:$0xf]
  %v1704 = vld [vmem:[%s1699 + $0x10] sm:$0xf]
  %v1705 = vld [vmem:[%s1699 + $0x14] sm:$0xf]
  %v1706 = vld [vmem:[%s1699 + $0x18] sm:$0xf]
  %v1707 = vld [vmem:[%s1699 + $0x1c] sm:$0xf]
  %v1708 = vld [vmem:[%s1699 + $0x20] sm:$0xf]
  %v1709 = vld [vmem:[%s1699 + $0x24] sm:$0xf]
  %v1710 = vld [vmem:[%s1699 + $0x28] sm:$0xf]
  %v1711 = vld [vmem:[%s1699 + $0x2c] sm:$0xf]
  %v1712 = vld [vmem:[%s1699 + $0x30] sm:$0xf]
  %v1713 = vld [vmem:[%s1699 + $0x34] sm:$0xf]
  %v1714 = vld [vmem:[%s1699 + $0x38] sm:$0xf]
  %v1715 = vld [vmem:[%s1699 + $0x3c] sm:$0xf]
  %v1716 = vunpack.c.l.b16 %v1334
  %v1717 = vunpack.c.l.b16 %v1474
  %v1718 = vpack.c.b16 %v1508, %v1507
  %v1719 = vpack.c.b16 %v1510, %v1509
  %v1720 = vpack.c.b16 %v1512, %v1511
  %v1721 = vpack.c.b16 %v1716, %v1513
  %v1722 = vpack.c.b16 %v1516, %v1515
  %v1723 = vpack.c.b16 %v1518, %v1517
  %v1724 = vpack.c.b16 %v1520, %v1519
  %v1725 = vpack.c.b16 %v1717, %v1521
  %v1750 = vunpack.c.l.b16 %v1700
  %v1751 = vunpack.c.l.b16 %v1701
  %v1752 = vunpack.c.l.b16 %v1702
  %v1753 = vunpack.c.l.b16 %v1703
  %v1754 = vunpack.c.l.b16 %v1704
  %v1755 = vunpack.c.l.b16 %v1705
  %v1756 = vunpack.c.l.b16 %v1706
  %v1757 = vunpack.c.l.b16 %v1707
  %v1758 = vunpack.c.l.b16 %v1708
  %v1759 = vunpack.c.l.b16 %v1709
  %v1760 = vunpack.c.l.b16 %v1710
  %v1761 = vunpack.c.l.b16 %v1711
  %v1762 = vunpack.c.l.b16 %v1712
  %v1763 = vunpack.c.l.b16 %v1713
  %v1764 = vunpack.c.l.b16 %v1714
  %v1765 = vunpack.c.l.b16 %v1715
  %v1766 = vpack.c.b16 %v1751, %v1750
  %v1767 = vpack.c.b16 %v1753, %v1752
  %v1768 = vpack.c.b16 %v1755, %v1754
  %v1769 = vpack.c.b16 %v1757, %v1756
  %v1770 = vpack.c.b16 %v1759, %v1758
  %v1771 = vpack.c.b16 %v1761, %v1760
  %v1772 = vpack.c.b16 %v1763, %v1762
  %v1773 = vpack.c.b16 %v1765, %v1764
  %1782 = vmatprep.subr.bf16.mxu0 0
  %1783 = vmatpush1.bf16.msra.mxu0 %v1766
  %1784 = vmatprep.subr.bf16.mxu0 0
  %1785 = vmatpush1.bf16.msra.mxu0 %v1767
  %1786 = vmatprep.subr.bf16.mxu0 0
  %1787 = vmatpush1.bf16.msra.mxu0 %v1768
  %1788 = vmatprep.subr.bf16.mxu0 0
  %1789 = vmatpush1.bf16.msra.mxu0 %v1769
  %1790 = vmatprep.subr.bf16.mxu0 0
  %1791 = vmatpush1.bf16.msra.mxu0 %v1770
  %1792 = vmatprep.subr.bf16.mxu0 0
  %1793 = vmatpush1.bf16.msra.mxu0 %v1771
  %1794 = vmatprep.subr.bf16.mxu0 0
  %1795 = vmatpush1.bf16.msra.mxu0 %v1772
  %1796 = vmatprep.subr.bf16.mxu0 0
  %1797 = vmatpush1.bf16.msra.mxu0 %v1773
  %1798 = vmatprep.subr.bf16.mxu0 0
  %1799 = vmatpush1.bf16.msra.mxu0 0
  %1800 = vmatprep.subr.bf16.mxu0 0
  %1801 = vmatpush1.bf16.msra.mxu0 0
  %1802 = vmatprep.subr.bf16.mxu0 0
  %1803 = vmatpush1.bf16.msra.mxu0 0
  %1804 = vmatprep.subr.bf16.mxu0 0
  %1805 = vmatpush1.bf16.msra.mxu0 0
  %1806 = vmatprep.subr.bf16.mxu0 0
  %1807 = vmatpush1.bf16.msra.mxu0 0
  %1808 = vmatprep.subr.bf16.mxu0 0
  %1809 = vmatpush1.bf16.msra.mxu0 0
  %1810 = vmatprep.subr.bf16.mxu0 0
  %1811 = vmatpush1.bf16.msra.mxu0 0
  %1812 = vmatprep.subr.bf16.mxu0 0
  %1813 = vmatpush1.bf16.msra.mxu0 0
  %1814 = vmatprep.mubr.bf16.mxu0 0
  %1815 = vmatmul.mubr.bf16.gmra.mrb[0].mxu0 %v1718
  %v1816 = vpop.f32.mrb[0].mxu0
  %v1817 = vadd.f32 0.0, %v1816
  %v1818 = vpop.f32.mrb[0].mxu0
  %v1819 = vpop.f32.mrb[0].mxu0
  %v1820 = vadd.f32 0.0, %v1819
  %v1821 = vpop.f32.mrb[0].mxu0
  %1822 = vmatprep.mubr.bf16.mxu0 0
  %1823 = vmatmul.mubr.bf16.gmra.mrb[0].mxu0 %v1719
  %v1824 = vpop.f32.mrb[0].mxu0
  %v1825 = vadd.f32 0.0, %v1824
  %v1826 = vpop.f32.mrb[0].mxu0
  %v1827 = vpop.f32.mrb[0].mxu0
  %v1828 = vadd.f32 0.0, %v1827
  %v1829 = vpop.f32.mrb[0].mxu0
  %1830 = vmatprep.mubr.bf16.mxu0 0
  %1831 = vmatmul.mubr.bf16.gmra.mrb[0].mxu0 %v1720
  %v1832 = vpop.f32.mrb[0].mxu0
  %v1833 = vadd.f32 0.0, %v1832
  %v1834 = vpop.f32.mrb[0].mxu0
  %v1835 = vpop.f32.mrb[0].mxu0
  %v1836 = vadd.f32 0.0, %v1835
  %v1837 = vpop.f32.mrb[0].mxu0
  %1838 = vmatprep.mubr.bf16.mxu0 0
  %1839 = vmatmul.mubr.bf16.gmra.mrb[0].mxu0 %v1721
  %v1840 = vpop.f32.mrb[0].mxu0
  %v1841 = vadd.f32 0.0, %v1840
  %v1842 = vpop.f32.mrb[0].mxu0
  %v1843 = vpop.f32.mrb[0].mxu0
  %v1844 = vadd.f32 0.0, %v1843
  %v1845 = vpop.f32.mrb[0].mxu0
  %1846 = vmatprep.mubr.bf16.mxu0 0
  %1847 = vmatmul.mubr.bf16.gmra.mrb[0].mxu0 %v1722
  %v1848 = vpop.f32.mrb[0].mxu0
  %v1849 = vadd.f32 0.0, %v1848
  %v1850 = vpop.f32.mrb[0].mxu0
  %v1851 = vpop.f32.mrb[0].mxu0
  %v1852 = vadd.f32 0.0, %v1851
  %v1853 = vpop.f32.mrb[0].mxu0
  %1854 = vmatprep.mubr.bf16.mxu0 0
  %1855 = vmatmul.mubr.bf16.gmra.mrb[0].mxu0 %v1723
  %v1856 = vpop.f32.mrb[0].mxu0
  %v1857 = vadd.f32 0.0, %v1856
  %v1858 = vpop.f32.mrb[0].mxu0
  %v1859 = vpop.f32.mrb[0].mxu0
  %v1860 = vadd.f32 0.0, %v1859
  %v1861 = vpop.f32.mrb[0].mxu0
  %1862 = vmatprep.mubr.bf16.mxu0 0
  %1863 = vmatmul.mubr.bf16.gmra.mrb[0].mxu0 %v1724
  %v1864 = vpop.f32.mrb[0].mxu0
  %v1865 = vadd.f32 0.0, %v1864
  %v1866 = vpop.f32.mrb[0].mxu0
  %v1867 = vpop.f32.mrb[0].mxu0
  %v1868 = vadd.f32 0.0, %v1867
  %v1869 = vpop.f32.mrb[0].mxu0
  %1870 = vmatprep.mubr.bf16.mxu0 0
  %1871 = vmatmul.mubr.bf16.gmra.mrb[0].mxu0 %v1725
  %v1872 = vpop.f32.mrb[0].mxu0
  %v1873 = vadd.f32 0.0, %v1872
  %v1874 = vpop.f32.mrb[0].mxu0
  %v1875 = vpop.f32.mrb[0].mxu0
  %v1876 = vadd.f32 0.0, %v1875
  %v1877 = vpop.f32.mrb[0].mxu0
  %1878 = vdwg.mxu0
  %v1879 = vadd.f32 %v1683, %v1817
  %v1880 = vadd.f32 %v1684, %v1820
  %v1881 = vadd.f32 %v1685, %v1825
  %v1882 = vadd.f32 %v1686, %v1828
  %v1883 = vadd.f32 %v1687, %v1833
  %v1884 = vadd.f32 %v1688, %v1836
  %v1885 = vadd.f32 %v1689, %v1841
  %v1886 = vadd.f32 %v1690, %v1844
  %v1887 = vadd.f32 %v1691, %v1849
  %v1888 = vadd.f32 %v1692, %v1852
  %v1889 = vadd.f32 %v1693, %v1857
  %v1890 = vadd.f32 %v1694, %v1860
  %v1891 = vadd.f32 %v1695, %v1865
  %v1892 = vadd.f32 %v1696, %v1868
  %v1893 = vadd.f32 %v1697, %v1873
  %v1894 = vadd.f32 %v1698, %v1876
  %s1895 = scalar_lea.vmem %s3, 448
  %v1896 = vld [vmem:[%s1895] sm:$0xf]
  %v1897 = vld [vmem:[%s1895 + $0x4] sm:$0xf]
  %v1898 = vld [vmem:[%s1895 + $0x8] sm:$0xf]
  %v1899 = vld [vmem:[%s1895 + $0xc] sm:$0xf]
  %v1900 = vld [vmem:[%s1895 + $0x10] sm:$0xf]
  %v1901 = vld [vmem:[%s1895 + $0x14] sm:$0xf]
  %v1902 = vld [vmem:[%s1895 + $0x18] sm:$0xf]
  %v1903 = vld [vmem:[%s1895 + $0x1c] sm:$0xf]
  %v1904 = vld [vmem:[%s1895 + $0x20] sm:$0xf]
  %v1905 = vld [vmem:[%s1895 + $0x24] sm:$0xf]
  %v1906 = vld [vmem:[%s1895 + $0x28] sm:$0xf]
  %v1907 = vld [vmem:[%s1895 + $0x2c] sm:$0xf]
  %v1908 = vld [vmem:[%s1895 + $0x30] sm:$0xf]
  %v1909 = vld [vmem:[%s1895 + $0x34] sm:$0xf]
  %v1910 = vld [vmem:[%s1895 + $0x38] sm:$0xf]
  %v1911 = vld [vmem:[%s1895 + $0x3c] sm:$0xf]
  %v1912 = vunpack.c.l.b16 %v1348
  %v1913 = vunpack.c.l.b16 %v1488
  %v1914 = vpack.c.b16 %v1912, %v1716
  %v1915 = vpack.c.b16 %v1913, %v1717
  %v1934 = vunpack.c.l.b16 %v1896
  %v1935 = vunpack.c.l.b16 %v1897
  %v1936 = vunpack.c.l.b16 %v1898
  %v1937 = vunpack.c.l.b16 %v1899
  %v1938 = vunpack.c.l.b16 %v1900
  %v1939 = vunpack.c.l.b16 %v1901
  %v1940 = vunpack.c.l.b16 %v1902
  %v1941 = vunpack.c.l.b16 %v1903
  %v1942 = vunpack.c.l.b16 %v1904
  %v1943 = vunpack.c.l.b16 %v1905
  %v1944 = vunpack.c.l.b16 %v1906
  %v1945 = vunpack.c.l.b16 %v1907
  %v1946 = vunpack.c.l.b16 %v1908
  %v1947 = vunpack.c.l.b16 %v1909
  %v1948 = vunpack.c.l.b16 %v1910
  %v1949 = vunpack.c.l.b16 %v1911
  %v1950 = vpack.c.b16 %v1935, %v1934
  %v1951 = vpack.c.b16 %v1937, %v1936
  %v1952 = vpack.c.b16 %v1939, %v1938
  %v1953 = vpack.c.b16 %v1941, %v1940
  %v1954 = vpack.c.b16 %v1943, %v1942
  %v1955 = vpack.c.b16 %v1945, %v1944
  %v1956 = vpack.c.b16 %v1947, %v1946
  %v1957 = vpack.c.b16 %v1949, %v1948
  %1966 = vmatprep.subr.bf16.mxu0 0
  %1967 = vmatpush1.bf16.msra.mxu0 %v1950
  %1968 = vmatprep.subr.bf16.mxu0 0
  %1969 = vmatpush1.bf16.msra.mxu0 %v1951
  %1970 = vmatprep.subr.bf16.mxu0 0
  %1971 = vmatpush1.bf16.msra.mxu0 %v1952
  %1972 = vmatprep.subr.bf16.mxu0 0
  %1973 = vmatpush1.bf16.msra.mxu0 %v1953
  %1974 = vmatprep.subr.bf16.mxu0 0
  %1975 = vmatpush1.bf16.msra.mxu0 %v1954
  %1976 = vmatprep.subr.bf16.mxu0 0
  %1977 = vmatpush1.bf16.msra.mxu0 %v1955
  %1978 = vmatprep.subr.bf16.mxu0 0
  %1979 = vmatpush1.bf16.msra.mxu0 %v1956
  %1980 = vmatprep.subr.bf16.mxu0 0
  %1981 = vmatpush1.bf16.msra.mxu0 %v1957
  %1982 = vmatprep.subr.bf16.mxu0 0
  %1983 = vmatpush1.bf16.msra.mxu0 0
  %1984 = vmatprep.subr.bf16.mxu0 0
  %1985 = vmatpush1.bf16.msra.mxu0 0
  %1986 = vmatprep.subr.bf16.mxu0 0
  %1987 = vmatpush1.bf16.msra.mxu0 0
  %1988 = vmatprep.subr.bf16.mxu0 0
  %1989 = vmatpush1.bf16.msra.mxu0 0
  %1990 = vmatprep.subr.bf16.mxu0 0
  %1991 = vmatpush1.bf16.msra.mxu0 0
  %1992 = vmatprep.subr.bf16.mxu0 0
  %1993 = vmatpush1.bf16.msra.mxu0 0
  %1994 = vmatprep.subr.bf16.mxu0 0
  %1995 = vmatpush1.bf16.msra.mxu0 0
  %1996 = vmatprep.subr.bf16.mxu0 0
  %1997 = vmatpush1.bf16.msra.mxu0 0
  %1998 = vmatprep.mubr.bf16.mxu0 0
  %1999 = vmatmul.mubr.bf16.gmra.mrb[0].mxu0 %v1523
  %v2000 = vpop.f32.mrb[0].mxu0
  %v2001 = vadd.f32 0.0, %v2000
  %v2002 = vpop.f32.mrb[0].mxu0
  %v2003 = vpop.f32.mrb[0].mxu0
  %v2004 = vadd.f32 0.0, %v2003
  %v2005 = vpop.f32.mrb[0].mxu0
  %2006 = vmatprep.mubr.bf16.mxu0 0
  %2007 = vmatmul.mubr.bf16.gmra.mrb[0].mxu0 %v1524
  %v2008 = vpop.f32.mrb[0].mxu0
  %v2009 = vadd.f32 0.0, %v2008
  %v2010 = vpop.f32.mrb[0].mxu0
  %v2011 = vpop.f32.mrb[0].mxu0
  %v2012 = vadd.f32 0.0, %v2011
  %v2013 = vpop.f32.mrb[0].mxu0
  %2014 = vmatprep.mubr.bf16.mxu0 0
  %2015 = vmatmul.mubr.bf16.gmra.mrb[0].mxu0 %v1525
  %v2016 = vpop.f32.mrb[0].mxu0
  %v2017 = vadd.f32 0.0, %v2016
  %v2018 = vpop.f32.mrb[0].mxu0
  %v2019 = vpop.f32.mrb[0].mxu0
  %v2020 = vadd.f32 0.0, %v2019
  %v2021 = vpop.f32.mrb[0].mxu0
  %2022 = vmatprep.mubr.bf16.mxu0 0
  %2023 = vmatmul.mubr.bf16.gmra.mrb[0].mxu0 %v1914
  %v2024 = vpop.f32.mrb[0].mxu0
  %v2025 = vadd.f32 0.0, %v2024
  %v2026 = vpop.f32.mrb[0].mxu0
  %v2027 = vpop.f32.mrb[0].mxu0
  %v2028 = vadd.f32 0.0, %v2027
  %v2029 = vpop.f32.mrb[0].mxu0
  %2030 = vmatprep.mubr.bf16.mxu0 0
  %2031 = vmatmul.mubr.bf16.gmra.mrb[0].mxu0 %v1527
  %v2032 = vpop.f32.mrb[0].mxu0
  %v2033 = vadd.f32 0.0, %v2032
  %v2034 = vpop.f32.mrb[0].mxu0
  %v2035 = vpop.f32.mrb[0].mxu0
  %v2036 = vadd.f32 0.0, %v2035
  %v2037 = vpop.f32.mrb[0].mxu0
  %2038 = vmatprep.mubr.bf16.mxu0 0
  %2039 = vmatmul.mubr.bf16.gmra.mrb[0].mxu0 %v1528
  %v2040 = vpop.f32.mrb[0].mxu0
  %v2041 = vadd.f32 0.0, %v2040
  %v2042 = vpop.f32.mrb[0].mxu0
  %v2043 = vpop.f32.mrb[0].mxu0
  %v2044 = vadd.f32 0.0, %v2043
  %v2045 = vpop.f32.mrb[0].mxu0
  %2046 = vmatprep.mubr.bf16.mxu0 0
  %2047 = vmatmul.mubr.bf16.gmra.mrb[0].mxu0 %v1529
  %v2048 = vpop.f32.mrb[0].mxu0
  %v2049 = vadd.f32 0.0, %v2048
  %v2050 = vpop.f32.mrb[0].mxu0
  %v2051 = vpop.f32.mrb[0].mxu0
  %v2052 = vadd.f32 0.0, %v2051
  %v2053 = vpop.f32.mrb[0].mxu0
  %2054 = vmatprep.mubr.bf16.mxu0 0
  %2055 = vmatmul.mubr.bf16.gmra.mrb[0].mxu0 %v1915
  %v2056 = vpop.f32.mrb[0].mxu0
  %v2057 = vadd.f32 0.0, %v2056
  %v2058 = vpop.f32.mrb[0].mxu0
  %v2059 = vpop.f32.mrb[0].mxu0
  %v2060 = vadd.f32 0.0, %v2059
  %v2061 = vpop.f32.mrb[0].mxu0
  %2062 = vdwg.mxu0
  %v2063 = vadd.f32 %v1879, %v2001
  %v2064 = vadd.f32 %v1880, %v2004
  %v2065 = vadd.f32 %v1881, %v2009
  %v2066 = vadd.f32 %v1882, %v2012
  %v2067 = vadd.f32 %v1883, %v2017
  %v2068 = vadd.f32 %v1884, %v2020
  %v2069 = vadd.f32 %v1885, %v2025
  %v2070 = vadd.f32 %v1886, %v2028
  %v2071 = vadd.f32 %v1887, %v2033
  %v2072 = vadd.f32 %v1888, %v2036
  %v2073 = vadd.f32 %v1889, %v2041
  %v2074 = vadd.f32 %v1890, %v2044
  %v2075 = vadd.f32 %v1891, %v2049
  %v2076 = vadd.f32 %v1892, %v2052
  %v2077 = vadd.f32 %v1893, %v2057
  %v2078 = vadd.f32 %v1894, %v2060
  %v2079 = vld [vmem:[#allocation2] sm:$0xe]
  %v2080 = vld [vmem:[#allocation2 + $0x8] sm:$0xe]
  %v2081 = vld [vmem:[#allocation2 + $0x10] sm:$0xe]
  %v2082 = vld [vmem:[#allocation2 + $0x18] sm:$0xe]
  %v2083 = vld [vmem:[#allocation2 + $0x20] sm:$0xe]
  %v2084 = vld [vmem:[#allocation2 + $0x28] sm:$0xe]
  %v2085 = vld [vmem:[#allocation2 + $0x30] sm:$0xe]
  %v2086 = vld [vmem:[#allocation2 + $0x38] sm:$0xe]
  %v2087 = vld [vmem:[#allocation2 + $0x40] sm:$0xe]
  %v2088 = vld [vmem:[#allocation2 + $0x48] sm:$0xe]
  %v2089 = vld [vmem:[#allocation2 + $0x50] sm:$0xe]
  %v2090 = vld [vmem:[#allocation2 + $0x58] sm:$0xe]
  %v2091 = vld [vmem:[#allocation2 + $0x60] sm:$0xe]
  %v2092 = vld [vmem:[#allocation2 + $0x68] sm:$0xe]
  %v2093 = vld [vmem:[#allocation2 + $0x70] sm:$0xe]
  %v2094 = vld [vmem:[#allocation2 + $0x78] sm:$0xe]
  %v2095 = vld [vmem:[#allocation2 + $0x80] sm:$0xe]
  %v2096 = vld [vmem:[#allocation2 + $0x88] sm:$0xe]
  %v2097 = vld [vmem:[#allocation2 + $0x90] sm:$0xe]
  %v2098 = vld [vmem:[#allocation2 + $0x98] sm:$0xe]
  %vm2139 = vcmask 1042432
  %vm2140 = vcmask 1046532
  %vm2141 = vmor %vm2139, %vm2140
  %v2142 = vrot.slane %v2079, 5
  %v2143 = vrot.slane %v2142, 4
  %v2144 = vrot.slane %v1167, 5
  %v2145 = vsel %vm2141, %v2143, %v2144
  %v2146 = vrot.slane %v2080, 5
  %v2147 = vrot.slane %v2146, 4
  %v2148 = vrot.slane %v1169, 5
  %v2149 = vsel %vm2141, %v2147, %v2148
  %v2150 = vrot.slane %v2081, 5
  %v2151 = vrot.slane %v2150, 4
  %v2152 = vrot.slane %v1171, 5
  %v2153 = vsel %vm2141, %v2151, %v2152
  %v2154 = vrot.slane %v2082, 5
  %v2155 = vrot.slane %v2154, 4
  %v2156 = vrot.slane %v1173, 5
  %v2157 = vsel %vm2141, %v2155, %v2156
  %v2158 = vrot.slane %v2083, 5
  %v2159 = vrot.slane %v2158, 4
  %v2160 = vrot.slane %v1175, 5
  %v2161 = vsel %vm2141, %v2159, %v2160
  %v2162 = vrot.slane %v2084, 5
  %v2163 = vrot.slane %v2162, 4
  %v2164 = vrot.slane %v1177, 5
  %v2165 = vsel %vm2141, %v2163, %v2164
  %v2166 = vrot.slane %v2085, 5
  %v2167 = vrot.slane %v2166, 4
  %v2168 = vrot.slane %v1179, 5
  %v2169 = vsel %vm2141, %v2167, %v2168
  %v2170 = vrot.slane %v2086, 5
  %v2171 = vrot.slane %v2170, 4
  %v2172 = vrot.slane %v1181, 5
  %v2173 = vsel %vm2141, %v2171, %v2172
  %v2174 = vrot.slane %v2087, 5
  %v2175 = vrot.slane %v2174, 4
  %v2176 = vrot.slane %v1183, 5
  %v2177 = vsel %vm2141, %v2175, %v2176
  %v2178 = vrot.slane %v2088, 5
  %v2179 = vrot.slane %v2178, 4
  %v2180 = vrot.slane %v1185, 5
  %v2181 = vsel %vm2141, %v2179, %v2180
  %v2182 = vrot.slane %v2089, 5
  %v2183 = vrot.slane %v2182, 4
  %v2184 = vrot.slane %v1187, 5
  %v2185 = vsel %vm2141, %v2183, %v2184
  %v2186 = vrot.slane %v2090, 5
  %v2187 = vrot.slane %v2186, 4
  %v2188 = vrot.slane %v1189, 5
  %v2189 = vsel %vm2141, %v2187, %v2188
  %v2190 = vrot.slane %v2091, 5
  %v2191 = vrot.slane %v2190, 4
  %v2192 = vrot.slane %v1191, 5
  %v2193 = vsel %vm2141, %v2191, %v2192
  %v2194 = vrot.slane %v2092, 5
  %v2195 = vrot.slane %v2194, 4
  %v2196 = vrot.slane %v1193, 5
  %v2197 = vsel %vm2141, %v2195, %v2196
  %v2198 = vrot.slane %v2093, 5
  %v2199 = vrot.slane %v2198, 4
  %v2200 = vrot.slane %v1195, 5
  %v2201 = vsel %vm2141, %v2199, %v2200
  %v2202 = vrot.slane %v2094, 5
  %v2203 = vrot.slane %v2202, 4
  %v2204 = vrot.slane %v1197, 5
  %v2205 = vsel %vm2141, %v2203, %v2204
  %v2206 = vrot.slane %v2095, 5
  %v2207 = vrot.slane %v2206, 4
  %v2208 = vrot.slane %v1199, 5
  %v2209 = vsel %vm2141, %v2207, %v2208
  %v2210 = vrot.slane %v2096, 5
  %v2211 = vrot.slane %v2210, 4
  %v2212 = vrot.slane %v1201, 5
  %v2213 = vsel %vm2141, %v2211, %v2212
  %v2214 = vrot.slane %v2097, 5
  %v2215 = vrot.slane %v2214, 4
  %v2216 = vrot.slane %v1203, 5
  %v2217 = vsel %vm2141, %v2215, %v2216
  %v2218 = vrot.slane %v2098, 5
  %v2219 = vrot.slane %v2218, 4
  %v2220 = vrot.slane %v1205, 5
  %v2221 = vsel %vm2141, %v2219, %v2220
  %s2222 = scalar_lea.vmem %s3, 128
  %v2223 = vld [vmem:[%s2222] sm:$0xf]
  %v2224 = vld [vmem:[%s2222 + $0x4] sm:$0xf]
  %v2225 = vld [vmem:[%s2222 + $0x8] sm:$0xf]
  %v2226 = vld [vmem:[%s2222 + $0xc] sm:$0xf]
  %v2227 = vld [vmem:[%s2222 + $0x10] sm:$0xf]
  %v2228 = vld [vmem:[%s2222 + $0x14] sm:$0xf]
  %v2229 = vld [vmem:[%s2222 + $0x18] sm:$0xf]
  %v2230 = vld [vmem:[%s2222 + $0x1c] sm:$0xf]
  %v2231 = vld [vmem:[%s2222 + $0x20] sm:$0xf]
  %v2232 = vld [vmem:[%s2222 + $0x24] sm:$0xf]
  %v2233 = vld [vmem:[%s2222 + $0x28] sm:$0xf]
  %v2234 = vld [vmem:[%s2222 + $0x2c] sm:$0xf]
  %v2235 = vld [vmem:[%s2222 + $0x30] sm:$0xf]
  %v2236 = vld [vmem:[%s2222 + $0x34] sm:$0xf]
  %v2237 = vld [vmem:[%s2222 + $0x38] sm:$0xf]
  %v2238 = vld [vmem:[%s2222 + $0x3c] sm:$0xf]
  %v2239 = vunpack.c.l.b16 %v2145
  %v2240 = vunpack.c.l.b16 %v2149
  %v2241 = vunpack.c.l.b16 %v2153
  %v2242 = vunpack.c.l.b16 %v2157
  %v2243 = vunpack.c.l.b16 %v2161
  %v2244 = vunpack.c.l.b16 %v2165
  %v2245 = vunpack.c.l.b16 %v2169
  %v2246 = vunpack.c.l.b16 %v2173
  %v2247 = vunpack.c.l.b16 %v2185
  %v2248 = vunpack.c.l.b16 %v2189
  %v2249 = vunpack.c.l.b16 %v2193
  %v2250 = vunpack.c.l.b16 %v2197
  %v2251 = vunpack.c.l.b16 %v2201
  %v2252 = vunpack.c.l.b16 %v2205
  %v2253 = vunpack.c.l.b16 %v2209
  %v2254 = vunpack.c.l.b16 %v2213
  %v2255 = vpack.c.b16 %v2240, %v2239
  %v2256 = vpack.c.b16 %v2242, %v2241
  %v2257 = vpack.c.b16 %v2244, %v2243
  %v2258 = vpack.c.b16 %v2246, %v2245
  %v2259 = vpack.c.b16 %v2248, %v2247
  %v2260 = vpack.c.b16 %v2250, %v2249
  %v2261 = vpack.c.b16 %v2252, %v2251
  %v2262 = vpack.c.b16 %v2254, %v2253
  %v2287 = vunpack.c.l.b16 %v2223
  %v2288 = vunpack.c.l.b16 %v2224
  %v2289 = vunpack.c.l.b16 %v2225
  %v2290 = vunpack.c.l.b16 %v2226
  %v2291 = vunpack.c.l.b16 %v2227
  %v2292 = vunpack.c.l.b16 %v2228
  %v2293 = vunpack.c.l.b16 %v2229
  %v2294 = vunpack.c.l.b16 %v2230
  %v2295 = vunpack.c.l.b16 %v2231
  %v2296 = vunpack.c.l.b16 %v2232
  %v2297 = vunpack.c.l.b16 %v2233
  %v2298 = vunpack.c.l.b16 %v2234
  %v2299 = vunpack.c.l.b16 %v2235
  %v2300 = vunpack.c.l.b16 %v2236
  %v2301 = vunpack.c.l.b16 %v2237
  %v2302 = vunpack.c.l.b16 %v2238
  %v2303 = vpack.c.b16 %v2288, %v2287
  %v2304 = vpack.c.b16 %v2290, %v2289
  %v2305 = vpack.c.b16 %v2292, %v2291
  %v2306 = vpack.c.b16 %v2294, %v2293
  %v2307 = vpack.c.b16 %v2296, %v2295
  %v2308 = vpack.c.b16 %v2298, %v2297
  %v2309 = vpack.c.b16 %v2300, %v2299
  %v2310 = vpack.c.b16 %v2302, %v2301
  %2319 = vmatprep.subr.bf16.mxu0 0
  %2320 = vmatpush1.bf16.msra.mxu0 %v2303
  %2321 = vmatprep.subr.bf16.mxu0 0
  %2322 = vmatpush1.bf16.msra.mxu0 %v2304
  %2323 = vmatprep.subr.bf16.mxu0 0
  %2324 = vmatpush1.bf16.msra.mxu0 %v2305
  %2325 = vmatprep.subr.bf16.mxu0 0
  %2326 = vmatpush1.bf16.msra.mxu0 %v2306
  %2327 = vmatprep.subr.bf16.mxu0 0
  %2328 = vmatpush1.bf16.msra.mxu0 %v2307
  %2329 = vmatprep.subr.bf16.mxu0 0
  %2330 = vmatpush1.bf16.msra.mxu0 %v2308
  %2331 = vmatprep.subr.bf16.mxu0 0
  %2332 = vmatpush1.bf16.msra.mxu0 %v2309
  %2333 = vmatprep.subr.bf16.mxu0 0
  %2334 = vmatpush1.bf16.msra.mxu0 %v2310
  %2335 = vmatprep.subr.bf16.mxu0 0
  %2336 = vmatpush1.bf16.msra.mxu0 0
  %2337 = vmatprep.subr.bf16.mxu0 0
  %2338 = vmatpush1.bf16.msra.mxu0 0
  %2339 = vmatprep.subr.bf16.mxu0 0
  %2340 = vmatpush1.bf16.msra.mxu0 0
  %2341 = vmatprep.subr.bf16.mxu0 0
  %2342 = vmatpush1.bf16.msra.mxu0 0
  %2343 = vmatprep.subr.bf16.mxu0 0
  %2344 = vmatpush1.bf16.msra.mxu0 0
  %2345 = vmatprep.subr.bf16.mxu0 0
  %2346 = vmatpush1.bf16.msra.mxu0 0
  %2347 = vmatprep.subr.bf16.mxu0 0
  %2348 = vmatpush1.bf16.msra.mxu0 0
  %2349 = vmatprep.subr.bf16.mxu0 0
  %2350 = vmatpush1.bf16.msra.mxu0 0
  %2351 = vmatprep.mubr.bf16.mxu0 0
  %2352 = vmatmul.mubr.bf16.gmra.mrb[0].mxu0 %v2255
  %v2353 = vpop.f32.mrb[0].mxu0
  %v2354 = vadd.f32 0.0, %v2353
  %v2355 = vpop.f32.mrb[0].mxu0
  %v2356 = vpop.f32.mrb[0].mxu0
  %v2357 = vadd.f32 0.0, %v2356
  %v2358 = vpop.f32.mrb[0].mxu0
  %2359 = vmatprep.mubr.bf16.mxu0 0
  %2360 = vmatmul.mubr.bf16.gmra.mrb[0].mxu0 %v2256
  %v2361 = vpop.f32.mrb[0].mxu0
  %v2362 = vadd.f32 0.0, %v2361
  %v2363 = vpop.f32.mrb[0].mxu0
  %v2364 = vpop.f32.mrb[0].mxu0
  %v2365 = vadd.f32 0.0, %v2364
  %v2366 = vpop.f32.mrb[0].mxu0
  %2367 = vmatprep.mubr.bf16.mxu0 0
  %2368 = vmatmul.mubr.bf16.gmra.mrb[0].mxu0 %v2257
  %v2369 = vpop.f32.mrb[0].mxu0
  %v2370 = vadd.f32 0.0, %v2369
  %v2371 = vpop.f32.mrb[0].mxu0
  %v2372 = vpop.f32.mrb[0].mxu0
  %v2373 = vadd.f32 0.0, %v2372
  %v2374 = vpop.f32.mrb[0].mxu0
  %2375 = vmatprep.mubr.bf16.mxu0 0
  %2376 = vmatmul.mubr.bf16.gmra.mrb[0].mxu0 %v2258
  %v2377 = vpop.f32.mrb[0].mxu0
  %v2378 = vadd.f32 0.0, %v2377
  %v2379 = vpop.f32.mrb[0].mxu0
  %v2380 = vpop.f32.mrb[0].mxu0
  %v2381 = vadd.f32 0.0, %v2380
  %v2382 = vpop.f32.mrb[0].mxu0
  %2383 = vmatprep.mubr.bf16.mxu0 0
  %2384 = vmatmul.mubr.bf16.gmra.mrb[0].mxu0 %v2259
  %v2385 = vpop.f32.mrb[0].mxu0
  %v2386 = vadd.f32 0.0, %v2385
  %v2387 = vpop.f32.mrb[0].mxu0
  %v2388 = vpop.f32.mrb[0].mxu0
  %v2389 = vadd.f32 0.0, %v2388
  %v2390 = vpop.f32.mrb[0].mxu0
  %2391 = vmatprep.mubr.bf16.mxu0 0
  %2392 = vmatmul.mubr.bf16.gmra.mrb[0].mxu0 %v2260
  %v2393 = vpop.f32.mrb[0].mxu0
  %v2394 = vadd.f32 0.0, %v2393
  %v2395 = vpop.f32.mrb[0].mxu0
  %v2396 = vpop.f32.mrb[0].mxu0
  %v2397 = vadd.f32 0.0, %v2396
  %v2398 = vpop.f32.mrb[0].mxu0
  %2399 = vmatprep.mubr.bf16.mxu0 0
  %2400 = vmatmul.mubr.bf16.gmra.mrb[0].mxu0 %v2261
  %v2401 = vpop.f32.mrb[0].mxu0
  %v2402 = vadd.f32 0.0, %v2401
  %v2403 = vpop.f32.mrb[0].mxu0
  %v2404 = vpop.f32.mrb[0].mxu0
  %v2405 = vadd.f32 0.0, %v2404
  %v2406 = vpop.f32.mrb[0].mxu0
  %2407 = vmatprep.mubr.bf16.mxu0 0
  %2408 = vmatmul.mubr.bf16.gmra.mrb[0].mxu0 %v2262
  %v2409 = vpop.f32.mrb[0].mxu0
  %v2410 = vadd.f32 0.0, %v2409
  %v2411 = vpop.f32.mrb[0].mxu0
  %v2412 = vpop.f32.mrb[0].mxu0
  %v2413 = vadd.f32 0.0, %v2412
  %v2414 = vpop.f32.mrb[0].mxu0
  %2415 = vdwg.mxu0
  %v2416 = vadd.f32 %v2063, %v2354
  %v2417 = vadd.f32 %v2064, %v2357
  %v2418 = vadd.f32 %v2065, %v2362
  %v2419 = vadd.f32 %v2066, %v2365
  %v2420 = vadd.f32 %v2067, %v2370
  %v2421 = vadd.f32 %v2068, %v2373
  %v2422 = vadd.f32 %v2069, %v2378
  %v2423 = vadd.f32 %v2070, %v2381
  %v2424 = vadd.f32 %v2071, %v2386
  %v2425 = vadd.f32 %v2072, %v2389
  %v2426 = vadd.f32 %v2073, %v2394
  %v2427 = vadd.f32 %v2074, %v2397
  %v2428 = vadd.f32 %v2075, %v2402
  %v2429 = vadd.f32 %v2076, %v2405
  %v2430 = vadd.f32 %v2077, %v2410
  %v2431 = vadd.f32 %v2078, %v2413
  %s2432 = scalar_lea.vmem %s3, 320
  %v2433 = vld [vmem:[%s2432] sm:$0xf]
  %v2434 = vld [vmem:[%s2432 + $0x4] sm:$0xf]
  %v2435 = vld [vmem:[%s2432 + $0x8] sm:$0xf]
  %v2436 = vld [vmem:[%s2432 + $0xc] sm:$0xf]
  %v2437 = vld [vmem:[%s2432 + $0x10] sm:$0xf]
  %v2438 = vld [vmem:[%s2432 + $0x14] sm:$0xf]
  %v2439 = vld [vmem:[%s2432 + $0x18] sm:$0xf]
  %v2440 = vld [vmem:[%s2432 + $0x1c] sm:$0xf]
  %v2441 = vld [vmem:[%s2432 + $0x20] sm:$0xf]
  %v2442 = vld [vmem:[%s2432 + $0x24] sm:$0xf]
  %v2443 = vld [vmem:[%s2432 + $0x28] sm:$0xf]
  %v2444 = vld [vmem:[%s2432 + $0x2c] sm:$0xf]
  %v2445 = vld [vmem:[%s2432 + $0x30] sm:$0xf]
  %v2446 = vld [vmem:[%s2432 + $0x34] sm:$0xf]
  %v2447 = vld [vmem:[%s2432 + $0x38] sm:$0xf]
  %v2448 = vld [vmem:[%s2432 + $0x3c] sm:$0xf]
  %v2449 = vunpack.c.l.b16 %v2177
  %v2450 = vunpack.c.l.b16 %v2217
  %v2451 = vpack.c.b16 %v2241, %v2240
  %v2452 = vpack.c.b16 %v2243, %v2242
  %v2453 = vpack.c.b16 %v2245, %v2244
  %v2454 = vpack.c.b16 %v2449, %v2246
  %v2455 = vpack.c.b16 %v2249, %v2248
  %v2456 = vpack.c.b16 %v2251, %v2250
  %v2457 = vpack.c.b16 %v2253, %v2252
  %v2458 = vpack.c.b16 %v2450, %v2254
  %v2483 = vunpack.c.l.b16 %v2433
  %v2484 = vunpack.c.l.b16 %v2434
  %v2485 = vunpack.c.l.b16 %v2435
  %v2486 = vunpack.c.l.b16 %v2436
  %v2487 = vunpack.c.l.b16 %v2437
  %v2488 = vunpack.c.l.b16 %v2438
  %v2489 = vunpack.c.l.b16 %v2439
  %v2490 = vunpack.c.l.b16 %v2440
  %v2491 = vunpack.c.l.b16 %v2441
  %v2492 = vunpack.c.l.b16 %v2442
  %v2493 = vunpack.c.l.b16 %v2443
  %v2494 = vunpack.c.l.b16 %v2444
  %v2495 = vunpack.c.l.b16 %v2445
  %v2496 = vunpack.c.l.b16 %v2446
  %v2497 = vunpack.c.l.b16 %v2447
  %v2498 = vunpack.c.l.b16 %v2448
  %v2499 = vpack.c.b16 %v2484, %v2483
  %v2500 = vpack.c.b16 %v2486, %v2485
  %v2501 = vpack.c.b16 %v2488, %v2487
  %v2502 = vpack.c.b16 %v2490, %v2489
  %v2503 = vpack.c.b16 %v2492, %v2491
  %v2504 = vpack.c.b16 %v2494, %v2493
  %v2505 = vpack.c.b16 %v2496, %v2495
  %v2506 = vpack.c.b16 %v2498, %v2497
  %2515 = vmatprep.subr.bf16.mxu0 0
  %2516 = vmatpush1.bf16.msra.mxu0 %v2499
  %2517 = vmatprep.subr.bf16.mxu0 0
  %2518 = vmatpush1.bf16.msra.mxu0 %v2500
  %2519 = vmatprep.subr.bf16.mxu0 0
  %2520 = vmatpush1.bf16.msra.mxu0 %v2501
  %2521 = vmatprep.subr.bf16.mxu0 0
  %2522 = vmatpush1.bf16.msra.mxu0 %v2502
  %2523 = vmatprep.subr.bf16.mxu0 0
  %2524 = vmatpush1.bf16.msra.mxu0 %v2503
  %2525 = vmatprep.subr.bf16.mxu0 0
  %2526 = vmatpush1.bf16.msra.mxu0 %v2504
  %2527 = vmatprep.subr.bf16.mxu0 0
  %2528 = vmatpush1.bf16.msra.mxu0 %v2505
  %2529 = vmatprep.subr.bf16.mxu0 0
  %2530 = vmatpush1.bf16.msra.mxu0 %v2506
  %2531 = vmatprep.subr.bf16.mxu0 0
  %2532 = vmatpush1.bf16.msra.mxu0 0
  %2533 = vmatprep.subr.bf16.mxu0 0
  %2534 = vmatpush1.bf16.msra.mxu0 0
  %2535 = vmatprep.subr.bf16.mxu0 0
  %2536 = vmatpush1.bf16.msra.mxu0 0
  %2537 = vmatprep.subr.bf16.mxu0 0
  %2538 = vmatpush1.bf16.msra.mxu0 0
  %2539 = vmatprep.subr.bf16.mxu0 0
  %2540 = vmatpush1.bf16.msra.mxu0 0
  %2541 = vmatprep.subr.bf16.mxu0 0
  %2542 = vmatpush1.bf16.msra.mxu0 0
  %2543 = vmatprep.subr.bf16.mxu0 0
  %2544 = vmatpush1.bf16.msra.mxu0 0
  %2545 = vmatprep.subr.bf16.mxu0 0
  %2546 = vmatpush1.bf16.msra.mxu0 0
  %2547 = vmatprep.mubr.bf16.mxu0 0
  %2548 = vmatmul.mubr.bf16.gmra.mrb[0].mxu0 %v2451
  %v2549 = vpop.f32.mrb[0].mxu0
  %v2550 = vadd.f32 0.0, %v2549
  %v2551 = vpop.f32.mrb[0].mxu0
  %v2552 = vpop.f32.mrb[0].mxu0
  %v2553 = vadd.f32 0.0, %v2552
  %v2554 = vpop.f32.mrb[0].mxu0
  %2555 = vmatprep.mubr.bf16.mxu0 0
  %2556 = vmatmul.mubr.bf16.gmra.mrb[0].mxu0 %v2452
  %v2557 = vpop.f32.mrb[0].mxu0
  %v2558 = vadd.f32 0.0, %v2557
  %v2559 = vpop.f32.mrb[0].mxu0
  %v2560 = vpop.f32.mrb[0].mxu0
  %v2561 = vadd.f32 0.0, %v2560
  %v2562 = vpop.f32.mrb[0].mxu0
  %2563 = vmatprep.mubr.bf16.mxu0 0
  %2564 = vmatmul.mubr.bf16.gmra.mrb[0].mxu0 %v2453
  %v2565 = vpop.f32.mrb[0].mxu0
  %v2566 = vadd.f32 0.0, %v2565
  %v2567 = vpop.f32.mrb[0].mxu0
  %v2568 = vpop.f32.mrb[0].mxu0
  %v2569 = vadd.f32 0.0, %v2568
  %v2570 = vpop.f32.mrb[0].mxu0
  %2571 = vmatprep.mubr.bf16.mxu0 0
  %2572 = vmatmul.mubr.bf16.gmra.mrb[0].mxu0 %v2454
  %v2573 = vpop.f32.mrb[0].mxu0
  %v2574 = vadd.f32 0.0, %v2573
  %v2575 = vpop.f32.mrb[0].mxu0
  %v2576 = vpop.f32.mrb[0].mxu0
  %v2577 = vadd.f32 0.0, %v2576
  %v2578 = vpop.f32.mrb[0].mxu0
  %2579 = vmatprep.mubr.bf16.mxu0 0
  %2580 = vmatmul.mubr.bf16.gmra.mrb[0].mxu0 %v2455
  %v2581 = vpop.f32.mrb[0].mxu0
  %v2582 = vadd.f32 0.0, %v2581
  %v2583 = vpop.f32.mrb[0].mxu0
  %v2584 = vpop.f32.mrb[0].mxu0
  %v2585 = vadd.f32 0.0, %v2584
  %v2586 = vpop.f32.mrb[0].mxu0
  %2587 = vmatprep.mubr.bf16.mxu0 0
  %2588 = vmatmul.mubr.bf16.gmra.mrb[0].mxu0 %v2456
  %v2589 = vpop.f32.mrb[0].mxu0
  %v2590 = vadd.f32 0.0, %v2589
  %v2591 = vpop.f32.mrb[0].mxu0
  %v2592 = vpop.f32.mrb[0].mxu0
  %v2593 = vadd.f32 0.0, %v2592
  %v2594 = vpop.f32.mrb[0].mxu0
  %2595 = vmatprep.mubr.bf16.mxu0 0
  %2596 = vmatmul.mubr.bf16.gmra.mrb[0].mxu0 %v2457
  %v2597 = vpop.f32.mrb[0].mxu0
  %v2598 = vadd.f32 0.0, %v2597
  %v2599 = vpop.f32.mrb[0].mxu0
  %v2600 = vpop.f32.mrb[0].mxu0
  %v2601 = vadd.f32 0.0, %v2600
  %v2602 = vpop.f32.mrb[0].mxu0
  %2603 = vmatprep.mubr.bf16.mxu0 0
  %2604 = vmatmul.mubr.bf16.gmra.mrb[0].mxu0 %v2458
  %v2605 = vpop.f32.mrb[0].mxu0
  %v2606 = vadd.f32 0.0, %v2605
  %v2607 = vpop.f32.mrb[0].mxu0
  %v2608 = vpop.f32.mrb[0].mxu0
  %v2609 = vadd.f32 0.0, %v2608
  %v2610 = vpop.f32.mrb[0].mxu0
  %2611 = vdwg.mxu0
  %v2612 = vadd.f32 %v2416, %v2550
  %v2613 = vadd.f32 %v2417, %v2553
  %v2614 = vadd.f32 %v2418, %v2558
  %v2615 = vadd.f32 %v2419, %v2561
  %v2616 = vadd.f32 %v2420, %v2566
  %v2617 = vadd.f32 %v2421, %v2569
  %v2618 = vadd.f32 %v2422, %v2574
  %v2619 = vadd.f32 %v2423, %v2577
  %v2620 = vadd.f32 %v2424, %v2582
  %v2621 = vadd.f32 %v2425, %v2585
  %v2622 = vadd.f32 %v2426, %v2590
  %v2623 = vadd.f32 %v2427, %v2593
  %v2624 = vadd.f32 %v2428, %v2598
  %v2625 = vadd.f32 %v2429, %v2601
  %v2626 = vadd.f32 %v2430, %v2606
  %v2627 = vadd.f32 %v2431, %v2609
  %s2628 = scalar_lea.vmem %s3, 512
  %v2629 = vld [vmem:[%s2628] sm:$0xf]
  %v2630 = vld [vmem:[%s2628 + $0x4] sm:$0xf]
  %v2631 = vld [vmem:[%s2628 + $0x8] sm:$0xf]
  %v2632 = vld [vmem:[%s2628 + $0xc] sm:$0xf]
  %v2633 = vld [vmem:[%s2628 + $0x10] sm:$0xf]
  %v2634 = vld [vmem:[%s2628 + $0x14] sm:$0xf]
  %v2635 = vld [vmem:[%s2628 + $0x18] sm:$0xf]
  %v2636 = vld [vmem:[%s2628 + $0x1c] sm:$0xf]
  %v2637 = vld [vmem:[%s2628 + $0x20] sm:$0xf]
  %v2638 = vld [vmem:[%s2628 + $0x24] sm:$0xf]
  %v2639 = vld [vmem:[%s2628 + $0x28] sm:$0xf]
  %v2640 = vld [vmem:[%s2628 + $0x2c] sm:$0xf]
  %v2641 = vld [vmem:[%s2628 + $0x30] sm:$0xf]
  %v2642 = vld [vmem:[%s2628 + $0x34] sm:$0xf]
  %v2643 = vld [vmem:[%s2628 + $0x38] sm:$0xf]
  %v2644 = vld [vmem:[%s2628 + $0x3c] sm:$0xf]
  %v2645 = vunpack.c.l.b16 %v2181
  %v2646 = vunpack.c.l.b16 %v2221
  %v2647 = vpack.c.b16 %v2645, %v2449
  %v2648 = vpack.c.b16 %v2646, %v2450
  %v2667 = vunpack.c.l.b16 %v2629
  %v2668 = vunpack.c.l.b16 %v2630
  %v2669 = vunpack.c.l.b16 %v2631
  %v2670 = vunpack.c.l.b16 %v2632
  %v2671 = vunpack.c.l.b16 %v2633
  %v2672 = vunpack.c.l.b16 %v2634
  %v2673 = vunpack.c.l.b16 %v2635
  %v2674 = vunpack.c.l.b16 %v2636
  %v2675 = vunpack.c.l.b16 %v2637
  %v2676 = vunpack.c.l.b16 %v2638
  %v2677 = vunpack.c.l.b16 %v2639
  %v2678 = vunpack.c.l.b16 %v2640
  %v2679 = vunpack.c.l.b16 %v2641
  %v2680 = vunpack.c.l.b16 %v2642
  %v2681 = vunpack.c.l.b16 %v2643
  %v2682 = vunpack.c.l.b16 %v2644
  %v2683 = vpack.c.b16 %v2668, %v2667
  %v2684 = vpack.c.b16 %v2670, %v2669
  %v2685 = vpack.c.b16 %v2672, %v2671
  %v2686 = vpack.c.b16 %v2674, %v2673
  %v2687 = vpack.c.b16 %v2676, %v2675
  %v2688 = vpack.c.b16 %v2678, %v2677
  %v2689 = vpack.c.b16 %v2680, %v2679
  %v2690 = vpack.c.b16 %v2682, %v2681
  %2699 = vmatprep.subr.bf16.mxu0 0
  %2700 = vmatpush1.bf16.msra.mxu0 %v2683
  %2701 = vmatprep.subr.bf16.mxu0 0
  %2702 = vmatpush1.bf16.msra.mxu0 %v2684
  %2703 = vmatprep.subr.bf16.mxu0 0
  %2704 = vmatpush1.bf16.msra.mxu0 %v2685
  %2705 = vmatprep.subr.bf16.mxu0 0
  %2706 = vmatpush1.bf16.msra.mxu0 %v2686
  %2707 = vmatprep.subr.bf16.mxu0 0
  %2708 = vmatpush1.bf16.msra.mxu0 %v2687
  %2709 = vmatprep.subr.bf16.mxu0 0
  %2710 = vmatpush1.bf16.msra.mxu0 %v2688
  %2711 = vmatprep.subr.bf16.mxu0 0
  %2712 = vmatpush1.bf16.msra.mxu0 %v2689
  %2713 = vmatprep.subr.bf16.mxu0 0
  %2714 = vmatpush1.bf16.msra.mxu0 %v2690
  %2715 = vmatprep.subr.bf16.mxu0 0
  %2716 = vmatpush1.bf16.msra.mxu0 0
  %2717 = vmatprep.subr.bf16.mxu0 0
  %2718 = vmatpush1.bf16.msra.mxu0 0
  %2719 = vmatprep.subr.bf16.mxu0 0
  %2720 = vmatpush1.bf16.msra.mxu0 0
  %2721 = vmatprep.subr.bf16.mxu0 0
  %2722 = vmatpush1.bf16.msra.mxu0 0
  %2723 = vmatprep.subr.bf16.mxu0 0
  %2724 = vmatpush1.bf16.msra.mxu0 0
  %2725 = vmatprep.subr.bf16.mxu0 0
  %2726 = vmatpush1.bf16.msra.mxu0 0
  %2727 = vmatprep.subr.bf16.mxu0 0
  %2728 = vmatpush1.bf16.msra.mxu0 0
  %2729 = vmatprep.subr.bf16.mxu0 0
  %2730 = vmatpush1.bf16.msra.mxu0 0
  %2731 = vmatprep.mubr.bf16.mxu0 0
  %2732 = vmatmul.mubr.bf16.gmra.mrb[0].mxu0 %v2256
  %v2733 = vpop.f32.mrb[0].mxu0
  %v2734 = vadd.f32 0.0, %v2733
  %v2735 = vpop.f32.mrb[0].mxu0
  %v2736 = vpop.f32.mrb[0].mxu0
  %v2737 = vadd.f32 0.0, %v2736
  %v2738 = vpop.f32.mrb[0].mxu0
  %2739 = vmatprep.mubr.bf16.mxu0 0
  %2740 = vmatmul.mubr.bf16.gmra.mrb[0].mxu0 %v2257
  %v2741 = vpop.f32.mrb[0].mxu0
  %v2742 = vadd.f32 0.0, %v2741
  %v2743 = vpop.f32.mrb[0].mxu0
  %v2744 = vpop.f32.mrb[0].mxu0
  %v2745 = vadd.f32 0.0, %v2744
  %v2746 = vpop.f32.mrb[0].mxu0
  %2747 = vmatprep.mubr.bf16.mxu0 0
  %2748 = vmatmul.mubr.bf16.gmra.mrb[0].mxu0 %v2258
  %v2749 = vpop.f32.mrb[0].mxu0
  %v2750 = vadd.f32 0.0, %v2749
  %v2751 = vpop.f32.mrb[0].mxu0
  %v2752 = vpop.f32.mrb[0].mxu0
  %v2753 = vadd.f32 0.0, %v2752
  %v2754 = vpop.f32.mrb[0].mxu0
  %2755 = vmatprep.mubr.bf16.mxu0 0
  %2756 = vmatmul.mubr.bf16.gmra.mrb[0].mxu0 %v2647
  %v2757 = vpop.f32.mrb[0].mxu0
  %v2758 = vadd.f32 0.0, %v2757
  %v2759 = vpop.f32.mrb[0].mxu0
  %v2760 = vpop.f32.mrb[0].mxu0
  %v2761 = vadd.f32 0.0, %v2760
  %v2762 = vpop.f32.mrb[0].mxu0
  %2763 = vmatprep.mubr.bf16.mxu0 0
  %2764 = vmatmul.mubr.bf16.gmra.mrb[0].mxu0 %v2260
  %v2765 = vpop.f32.mrb[0].mxu0
  %v2766 = vadd.f32 0.0, %v2765
  %v2767 = vpop.f32.mrb[0].mxu0
  %v2768 = vpop.f32.mrb[0].mxu0
  %v2769 = vadd.f32 0.0, %v2768
  %v2770 = vpop.f32.mrb[0].mxu0
  %2771 = vmatprep.mubr.bf16.mxu0 0
  %2772 = vmatmul.mubr.bf16.gmra.mrb[0].mxu0 %v2261
  %v2773 = vpop.f32.mrb[0].mxu0
  %v2774 = vadd.f32 0.0, %v2773
  %v2775 = vpop.f32.mrb[0].mxu0
  %v2776 = vpop.f32.mrb[0].mxu0
  %v2777 = vadd.f32 0.0, %v2776
  %v2778 = vpop.f32.mrb[0].mxu0
  %2779 = vmatprep.mubr.bf16.mxu0 0
  %2780 = vmatmul.mubr.bf16.gmra.mrb[0].mxu0 %v2262
  %v2781 = vpop.f32.mrb[0].mxu0
  %v2782 = vadd.f32 0.0, %v2781
  %v2783 = vpop.f32.mrb[0].mxu0
  %v2784 = vpop.f32.mrb[0].mxu0
  %v2785 = vadd.f32 0.0, %v2784
  %v2786 = vpop.f32.mrb[0].mxu0
  %2787 = vmatprep.mubr.bf16.mxu0 0
  %2788 = vmatmul.mubr.bf16.gmra.mrb[0].mxu0 %v2648
  %v2789 = vpop.f32.mrb[0].mxu0
  %v2790 = vadd.f32 0.0, %v2789
  %v2791 = vpop.f32.mrb[0].mxu0
  %v2792 = vpop.f32.mrb[0].mxu0
  %v2793 = vadd.f32 0.0, %v2792
  %v2794 = vpop.f32.mrb[0].mxu0
  %2795 = vdwg.mxu0
  %v2796 = vadd.f32 %v2612, %v2734
  %v2797 = vadd.f32 %v2613, %v2737
  %v2798 = vadd.f32 %v2614, %v2742
  %v2799 = vadd.f32 %v2615, %v2745
  %v2800 = vadd.f32 %v2616, %v2750
  %v2801 = vadd.f32 %v2617, %v2753
  %v2802 = vadd.f32 %v2618, %v2758
  %v2803 = vadd.f32 %v2619, %v2761
  %v2804 = vadd.f32 %v2620, %v2766
  %v2805 = vadd.f32 %v2621, %v2769
  %v2806 = vadd.f32 %v2622, %v2774
  %v2807 = vadd.f32 %v2623, %v2777
  %v2808 = vadd.f32 %v2624, %v2782
  %v2809 = vadd.f32 %v2625, %v2785
  %v2810 = vadd.f32 %v2626, %v2790
  %v2811 = vadd.f32 %v2627, %v2793
  %v2812 = vpack.c.bf16 %v2797, %v2796
  %v2813 = vpack.c.bf16 %v2799, %v2798
  %v2814 = vpack.c.bf16 %v2801, %v2800
  %v2815 = vpack.c.bf16 %v2803, %v2802
  %v2816 = vpack.c.bf16 %v2805, %v2804
  %v2817 = vpack.c.bf16 %v2807, %v2806
  %v2818 = vpack.c.bf16 %v2809, %v2808
  %v2819 = vpack.c.bf16 %v2811, %v2810
  %v2828 = vunpack.c.l.b16 %v2812
  %v2829 = vunpack.c.h.b16 %v2812
  %v2830 = vunpack.c.l.b16 %v2813
  %v2831 = vunpack.c.h.b16 %v2813
  %v2832 = vunpack.c.l.b16 %v2814
  %v2833 = vunpack.c.h.b16 %v2814
  %v2834 = vunpack.c.l.b16 %v2815
  %v2835 = vunpack.c.h.b16 %v2815
  %v2836 = vunpack.c.l.b16 %v2816
  %v2837 = vunpack.c.h.b16 %v2816
  %v2838 = vunpack.c.l.b16 %v2817
  %v2839 = vunpack.c.h.b16 %v2817
  %v2840 = vunpack.c.l.b16 %v2818
  %v2841 = vunpack.c.h.b16 %v2818
  %v2842 = vunpack.c.l.b16 %v2819
  %v2843 = vunpack.c.h.b16 %v2819
  %v2844 = vpack.c.b16 %v2828, %v2828
  %v2845 = vpack.c.b16 %v2829, %v2829
  %v2846 = vpack.c.b16 %v2830, %v2830
  %v2847 = vpack.c.b16 %v2831, %v2831
  %v2848 = vpack.c.b16 %v2832, %v2832
  %v2849 = vpack.c.b16 %v2833, %v2833
  %v2850 = vpack.c.b16 %v2834, %v2834
  %v2851 = vpack.c.b16 %v2835, %v2835
  %v2852 = vpack.c.b16 %v2836, %v2836
  %v2853 = vpack.c.b16 %v2837, %v2837
  %v2854 = vpack.c.b16 %v2838, %v2838
  %v2855 = vpack.c.b16 %v2839, %v2839
  %v2856 = vpack.c.b16 %v2840, %v2840
  %v2857 = vpack.c.b16 %v2841, %v2841
  %v2858 = vpack.c.b16 %v2842, %v2842
  %v2859 = vpack.c.b16 %v2843, %v2843
  %2876 = vst [vmem:[%s4] sm:$0xf] %v2844
  %2877 = vst [vmem:[%s4 + $0x4] sm:$0xf] %v2845
  %2878 = vst [vmem:[%s4 + $0x8] sm:$0xf] %v2846
  %2879 = vst [vmem:[%s4 + $0xc] sm:$0xf] %v2847
  %2880 = vst [vmem:[%s4 + $0x10] sm:$0xf] %v2848
  %2881 = vst [vmem:[%s4 + $0x14] sm:$0xf] %v2849
  %2882 = vst [vmem:[%s4 + $0x18] sm:$0xf] %v2850
  %2883 = vst [vmem:[%s4 + $0x1c] sm:$0xf] %v2851
  %2884 = vst [vmem:[%s4 + $0x20] sm:$0xf] %v2852
  %2885 = vst [vmem:[%s4 + $0x24] sm:$0xf] %v2853
  %2886 = vst [vmem:[%s4 + $0x28] sm:$0xf] %v2854
  %2887 = vst [vmem:[%s4 + $0x2c] sm:$0xf] %v2855
  %2888 = vst [vmem:[%s4 + $0x30] sm:$0xf] %v2856
  %2889 = vst [vmem:[%s4 + $0x34] sm:$0xf] %v2857
  %2890 = vst [vmem:[%s4 + $0x38] sm:$0xf] %v2858
  %2891 = vst [vmem:[%s4 + $0x3c] sm:$0xf] %v2859
  // Predicated region
  $region18: #{densenet_forward.13} parent=0 // pred_check
    _
  $region19: #{densenet_forward.13} parent=0 // pred_check_branch
    %2893 = sbr.rel (0) target = $region21
  $region20: #{densenet_forward.13} parent=0 // pred_region
    _
  $region21: #{densenet_forward.13} parent=0 // pred_fallthru
    _
  // Predicated region
  $region22: #{densenet_forward.13} parent=0 // pred_check
    _
  $region23: #{densenet_forward.13} parent=0 // pred_check_branch
    %2895 = sbr.rel (0) target = $region25
  $region24: #{densenet_forward.13} parent=0 // pred_region
    _
  $region25: #{densenet_forward.13} parent=0 // pred_fallthru
    _

// kernel: densenet_forward.16
$region0: #{densenet_forward.16}
  #allocation0 [shape = 'u32[]', space=smem, size = 0x4, offset = 0x4, fixed_abs, tag = 'smem constant byte address 0x4 - core index']
  #allocation1 [shape = 'u32[144,128]{1,0:T(1,128)}', space=vmem, size = 0x12000, scoped, tag = 'internal scratch']
  %s0 = inlined_call_operand.vmem [shape: bf16[2,8,8,128], index: 0, kind: input, shape index: {}]
  %s1 = inlined_call_operand.vmem [shape: f32[1,128], index: 1, kind: input, shape index: {}]
  %s2 = inlined_call_operand.vmem [shape: f32[1,128], index: 2, kind: input, shape index: {}]
  %s3 = inlined_call_operand.vmem [shape: bf16[128,128], index: 3, kind: input, shape index: {}]
  %s4 = inlined_call_operand.vmem [shape: bf16[2,16,128], index: 4, kind: output, shape index: {}]
  %s5 = sld [smem:[#allocation0]]
  $region26: #{densenet_forward.16} parent=0
    _
  %s7 = ssub.s32 1, %s5
  %s8 = scalar_select 0, %s7, %s5
  // Predicated region
  $region2: #{densenet_forward.16} parent=0 // pred_check
    _
  $region3: #{densenet_forward.16} parent=0 // pred_check_branch
    %10 = sbr.rel (0) target = $region5
  $region4: #{densenet_forward.16} parent=0 // pred_region
    _
  $region5: #{densenet_forward.16} parent=0 // pred_fallthru
    _
  // Predicated region
  $region6: #{densenet_forward.16} parent=0 // pred_check
    _
  $region7: #{densenet_forward.16} parent=0 // pred_check_branch
    %12 = sbr.rel (0) target = $region9
  $region8: #{densenet_forward.16} parent=0 // pred_region
    _
  $region9: #{densenet_forward.16} parent=0 // pred_fallthru
    _
  // Predicated region
  $region10: #{densenet_forward.16} parent=0 // pred_check
    _
  $region11: #{densenet_forward.16} parent=0 // pred_check_branch
    %14 = sbr.rel (0) target = $region13
  $region12: #{densenet_forward.16} parent=0 // pred_region
    _
  $region13: #{densenet_forward.16} parent=0 // pred_fallthru
    _
  // Predicated region
  $region14: #{densenet_forward.16} parent=0 // pred_check
    _
  $region15: #{densenet_forward.16} parent=0 // pred_check_branch
    %16 = sbr.rel (0) target = $region17
  $region16: #{densenet_forward.16} parent=0 // pred_region
    _
  $region17: #{densenet_forward.16} parent=0 // pred_fallthru
    _
  %v18 = vld [vmem:[%s0] sm:$0xf]
  %v19 = vld [vmem:[%s0 + $0x4] sm:$0xf]
  %v20 = vld [vmem:[%s0 + $0x8] sm:$0xf]
  %v21 = vld [vmem:[%s0 + $0xc] sm:$0xf]
  %v22 = vld [vmem:[%s0 + $0x10] sm:$0xf]
  %v23 = vld [vmem:[%s0 + $0x14] sm:$0xf]
  %v24 = vld [vmem:[%s0 + $0x18] sm:$0xf]
  %v25 = vld [vmem:[%s0 + $0x1c] sm:$0xf]
  %v26 = vld [vmem:[%s0 + $0x20] sm:$0xf]
  %v27 = vld [vmem:[%s0 + $0x24] sm:$0xf]
  %v28 = vld [vmem:[%s0 + $0x28] sm:$0xf]
  %v29 = vld [vmem:[%s0 + $0x2c] sm:$0xf]
  %v30 = vld [vmem:[%s0 + $0x30] sm:$0xf]
  %v31 = vld [vmem:[%s0 + $0x34] sm:$0xf]
  %v32 = vld [vmem:[%s0 + $0x38] sm:$0xf]
  %v33 = vld [vmem:[%s0 + $0x3c] sm:$0xf]
  %v34 = vunpack.c.l.bf16 %v18
  %v35 = vunpack.c.l.bf16 %v19
  %v36 = vunpack.c.l.bf16 %v20
  %v37 = vunpack.c.l.bf16 %v21
  %v38 = vunpack.c.l.bf16 %v22
  %v39 = vunpack.c.l.bf16 %v23
  %v40 = vunpack.c.l.bf16 %v24
  %v41 = vunpack.c.l.bf16 %v25
  %v42 = vunpack.c.l.bf16 %v26
  %v43 = vunpack.c.l.bf16 %v27
  %v44 = vunpack.c.l.bf16 %v28
  %v45 = vunpack.c.l.bf16 %v29
  %v46 = vunpack.c.l.bf16 %v30
  %v47 = vunpack.c.l.bf16 %v31
  %v48 = vunpack.c.l.bf16 %v32
  %v49 = vunpack.c.l.bf16 %v33
  %v50 = vld [vmem:[%s1] sm:$0x1]
  %v52 = vlaneseq
  %v53 = vshrl.u32 %v52, 7
  %v54 = vsub.s32 0, %v53
  %v55 = vrot.slane %v50, %v54
  %v57 = vmul.f32 %v34, %v55
  %v58 = vmul.f32 %v35, %v55
  %v59 = vmul.f32 %v36, %v55
  %v60 = vmul.f32 %v37, %v55
  %v61 = vmul.f32 %v38, %v55
  %v62 = vmul.f32 %v39, %v55
  %v63 = vmul.f32 %v40, %v55
  %v64 = vmul.f32 %v41, %v55
  %v65 = vmul.f32 %v42, %v55
  %v66 = vmul.f32 %v43, %v55
  %v67 = vmul.f32 %v44, %v55
  %v68 = vmul.f32 %v45, %v55
  %v69 = vmul.f32 %v46, %v55
  %v70 = vmul.f32 %v47, %v55
  %v71 = vmul.f32 %v48, %v55
  %v72 = vmul.f32 %v49, %v55
  %v73 = vld [vmem:[%s2] sm:$0x1]
  %v75 = vlaneseq
  %v76 = vshrl.u32 %v75, 7
  %v77 = vsub.s32 0, %v76
  %v78 = vrot.slane %v73, %v77
  %v80 = vadd.f32 %v57, %v78
  %v81 = vadd.f32 %v58, %v78
  %v82 = vadd.f32 %v59, %v78
  %v83 = vadd.f32 %v60, %v78
  %v84 = vadd.f32 %v61, %v78
  %v85 = vadd.f32 %v62, %v78
  %v86 = vadd.f32 %v63, %v78
  %v87 = vadd.f32 %v64, %v78
  %v88 = vadd.f32 %v65, %v78
  %v89 = vadd.f32 %v66, %v78
  %v90 = vadd.f32 %v67, %v78
  %v91 = vadd.f32 %v68, %v78
  %v92 = vadd.f32 %v69, %v78
  %v93 = vadd.f32 %v70, %v78
  %v94 = vadd.f32 %v71, %v78
  %v95 = vadd.f32 %v72, %v78
  %v96 = vmax.f32 %v80, 0.0
  %v97 = vmax.f32 %v81, 0.0
  %v98 = vmax.f32 %v82, 0.0
  %v99 = vmax.f32 %v83, 0.0
  %v100 = vmax.f32 %v84, 0.0
  %v101 = vmax.f32 %v85, 0.0
  %v102 = vmax.f32 %v86, 0.0
  %v103 = vmax.f32 %v87, 0.0
  %v104 = vmax.f32 %v88, 0.0
  %v105 = vmax.f32 %v89, 0.0
  %v106 = vmax.f32 %v90, 0.0
  %v107 = vmax.f32 %v91, 0.0
  %v108 = vmax.f32 %v92, 0.0
  %v109 = vmax.f32 %v93, 0.0
  %v110 = vmax.f32 %v94, 0.0
  %v111 = vmax.f32 %v95, 0.0
  %v112 = vadd.f32 %v96, %v97
  %v113 = vadd.f32 %v98, %v99
  %v114 = vadd.f32 %v100, %v101
  %v115 = vadd.f32 %v102, %v103
  %v116 = vadd.f32 %v104, %v105
  %v117 = vadd.f32 %v106, %v107
  %v118 = vadd.f32 %v108, %v109
  %v119 = vadd.f32 %v110, %v111
  %v128 = vcombine.high %v112, %v112
  %v130 = vunpack.c.l.s4 1983009808
  %v131 = vunpack.c.0.s8 %v130
  %v132 = vlaneseq
  %v133 = vshrl.u32 %v132, 7
  %v134 = vsub.s32 %v131, %v133
  %v135 = vrot.slane %v112, %v134
  %v137 = vunpack.c.l.s4 1983009808
  %v138 = vunpack.c.0.s8 %v137
  %v139 = vlaneseq
  %v140 = vshrl.u32 %v139, 7
  %v141 = vsub.s32 %v138, %v140
  %v142 = vrot.slane %v128, %v141
  %v143 = vcombine.high %v135, %v135
  %v144 = vcombine.high %v142, %v142
  %v145 = vcombine.high %v113, %v113
  %v147 = vunpack.c.l.s4 1983009808
  %v148 = vunpack.c.0.s8 %v147
  %v149 = vlaneseq
  %v150 = vshrl.u32 %v149, 7
  %v151 = vsub.s32 %v148, %v150
  %v152 = vrot.slane %v113, %v151
  %v154 = vunpack.c.l.s4 1983009808
  %v155 = vunpack.c.0.s8 %v154
  %v156 = vlaneseq
  %v157 = vshrl.u32 %v156, 7
  %v158 = vsub.s32 %v155, %v157
  %v159 = vrot.slane %v145, %v158
  %v160 = vcombine.high %v152, %v152
  %v161 = vcombine.high %v159, %v159
  %v162 = vcombine.high %v114, %v114
  %v164 = vunpack.c.l.s4 1983009808
  %v165 = vunpack.c.0.s8 %v164
  %v166 = vlaneseq
  %v167 = vshrl.u32 %v166, 7
  %v168 = vsub.s32 %v165, %v167
  %v169 = vrot.slane %v114, %v168
  %v171 = vunpack.c.l.s4 1983009808
  %v172 = vunpack.c.0.s8 %v171
  %v173 = vlaneseq
  %v174 = vshrl.u32 %v173, 7
  %v175 = vsub.s32 %v172, %v174
  %v176 = vrot.slane %v162, %v175
  %v177 = vcombine.high %v169, %v169
  %v178 = vcombine.high %v176, %v176
  %v179 = vcombine.high %v115, %v115
  %v181 = vunpack.c.l.s4 1983009808
  %v182 = vunpack.c.0.s8 %v181
  %v183 = vlaneseq
  %v184 = vshrl.u32 %v183, 7
  %v185 = vsub.s32 %v182, %v184
  %v186 = vrot.slane %v115, %v185
  %v188 = vunpack.c.l.s4 1983009808
  %v189 = vunpack.c.0.s8 %v188
  %v190 = vlaneseq
  %v191 = vshrl.u32 %v190, 7
  %v192 = vsub.s32 %v189, %v191
  %v193 = vrot.slane %v179, %v192
  %v194 = vcombine.high %v186, %v186
  %v195 = vcombine.high %v193, %v193
  %v196 = vcombine.high %v116, %v116
  %v198 = vunpack.c.l.s4 1983009808
  %v199 = vunpack.c.0.s8 %v198
  %v200 = vlaneseq
  %v201 = vshrl.u32 %v200, 7
  %v202 = vsub.s32 %v199, %v201
  %v203 = vrot.slane %v116, %v202
  %v205 = vunpack.c.l.s4 1983009808
  %v206 = vunpack.c.0.s8 %v205
  %v207 = vlaneseq
  %v208 = vshrl.u32 %v207, 7
  %v209 = vsub.s32 %v206, %v208
  %v210 = vrot.slane %v196, %v209
  %v211 = vcombine.high %v203, %v203
  %v212 = vcombine.high %v210, %v210
  %v213 = vcombine.high %v117, %v117
  %v215 = vunpack.c.l.s4 1983009808
  %v216 = vunpack.c.0.s8 %v215
  %v217 = vlaneseq
  %v218 = vshrl.u32 %v217, 7
  %v219 = vsub.s32 %v216, %v218
  %v220 = vrot.slane %v117, %v219
  %v222 = vunpack.c.l.s4 1983009808
  %v223 = vunpack.c.0.s8 %v222
  %v224 = vlaneseq
  %v225 = vshrl.u32 %v224, 7
  %v226 = vsub.s32 %v223, %v225
  %v227 = vrot.slane %v213, %v226
  %v228 = vcombine.high %v220, %v220
  %v229 = vcombine.high %v227, %v227
  %v230 = vcombine.high %v118, %v118
  %v232 = vunpack.c.l.s4 1983009808
  %v233 = vunpack.c.0.s8 %v232
  %v234 = vlaneseq
  %v235 = vshrl.u32 %v234, 7
  %v236 = vsub.s32 %v233, %v235
  %v237 = vrot.slane %v118, %v236
  %v239 = vunpack.c.l.s4 1983009808
  %v240 = vunpack.c.0.s8 %v239
  %v241 = vlaneseq
  %v242 = vshrl.u32 %v241, 7
  %v243 = vsub.s32 %v240, %v242
  %v244 = vrot.slane %v230, %v243
  %v245 = vcombine.high %v237, %v237
  %v246 = vcombine.high %v244, %v244
  %v247 = vcombine.high %v119, %v119
  %v249 = vunpack.c.l.s4 1983009808
  %v250 = vunpack.c.0.s8 %v249
  %v251 = vlaneseq
  %v252 = vshrl.u32 %v251, 7
  %v253 = vsub.s32 %v250, %v252
  %v254 = vrot.slane %v119, %v253
  %v256 = vunpack.c.l.s4 1983009808
  %v257 = vunpack.c.0.s8 %v256
  %v258 = vlaneseq
  %v259 = vshrl.u32 %v258, 7
  %v260 = vsub.s32 %v257, %v259
  %v261 = vrot.slane %v247, %v260
  %v262 = vcombine.high %v254, %v254
  %v263 = vcombine.high %v261, %v261
  %v296 = vrot.slane %v135, 7
  %v297 = vrot.slane %v296, 2
  %v298 = vrot.slane %v143, 7
  %v299 = vrot.slane %v298, 2
  %v300 = vrot.slane %v142, 7
  %v301 = vrot.slane %v300, 2
  %v302 = vrot.slane %v144, 7
  %v303 = vrot.slane %v302, 2
  %v304 = vrot.slane %v152, 7
  %v305 = vrot.slane %v304, 2
  %v306 = vrot.slane %v160, 7
  %v307 = vrot.slane %v306, 2
  %v308 = vrot.slane %v159, 7
  %v309 = vrot.slane %v308, 2
  %v310 = vrot.slane %v161, 7
  %v311 = vrot.slane %v310, 2
  %v312 = vrot.slane %v169, 7
  %v313 = vrot.slane %v312, 2
  %v314 = vrot.slane %v177, 7
  %v315 = vrot.slane %v314, 2
  %v316 = vrot.slane %v176, 7
  %v317 = vrot.slane %v316, 2
  %v318 = vrot.slane %v178, 7
  %v319 = vrot.slane %v318, 2
  %v320 = vrot.slane %v186, 7
  %v321 = vrot.slane %v320, 2
  %v322 = vrot.slane %v194, 7
  %v323 = vrot.slane %v322, 2
  %v324 = vrot.slane %v193, 7
  %v325 = vrot.slane %v324, 2
  %v326 = vrot.slane %v195, 7
  %v327 = vrot.slane %v326, 2
  %v328 = vrot.slane %v203, 7
  %v329 = vrot.slane %v328, 2
  %v330 = vrot.slane %v211, 7
  %v331 = vrot.slane %v330, 2
  %v332 = vrot.slane %v210, 7
  %v333 = vrot.slane %v332, 2
  %v334 = vrot.slane %v212, 7
  %v335 = vrot.slane %v334, 2
  %v336 = vrot.slane %v220, 7
  %v337 = vrot.slane %v336, 2
  %v338 = vrot.slane %v228, 7
  %v339 = vrot.slane %v338, 2
  %v340 = vrot.slane %v227, 7
  %v341 = vrot.slane %v340, 2
  %v342 = vrot.slane %v229, 7
  %v343 = vrot.slane %v342, 2
  %v344 = vrot.slane %v237, 7
  %v345 = vrot.slane %v344, 2
  %v346 = vrot.slane %v245, 7
  %v347 = vrot.slane %v346, 2
  %v348 = vrot.slane %v244, 7
  %v349 = vrot.slane %v348, 2
  %v350 = vrot.slane %v246, 7
  %v351 = vrot.slane %v350, 2
  %v352 = vrot.slane %v254, 7
  %v353 = vrot.slane %v352, 2
  %v354 = vrot.slane %v262, 7
  %v355 = vrot.slane %v354, 2
  %v356 = vrot.slane %v261, 7
  %v357 = vrot.slane %v356, 2
  %v358 = vrot.slane %v263, 7
  %v359 = vrot.slane %v358, 2
  %v392 = vadd.f32 %v135, %v297
  %v393 = vadd.f32 %v143, %v299
  %v394 = vadd.f32 %v142, %v301
  %v395 = vadd.f32 %v144, %v303
  %v396 = vadd.f32 %v152, %v305
  %v397 = vadd.f32 %v160, %v307
  %v398 = vadd.f32 %v159, %v309
  %v399 = vadd.f32 %v161, %v311
  %v400 = vadd.f32 %v169, %v313
  %v401 = vadd.f32 %v177, %v315
  %v402 = vadd.f32 %v176, %v317
  %v403 = vadd.f32 %v178, %v319
  %v404 = vadd.f32 %v186, %v321
  %v405 = vadd.f32 %v194, %v323
  %v406 = vadd.f32 %v193, %v325
  %v407 = vadd.f32 %v195, %v327
  %v408 = vadd.f32 %v203, %v329
  %v409 = vadd.f32 %v211, %v331
  %v410 = vadd.f32 %v210, %v333
  %v411 = vadd.f32 %v212, %v335
  %v412 = vadd.f32 %v220, %v337
  %v413 = vadd.f32 %v228, %v339
  %v414 = vadd.f32 %v227, %v341
  %v415 = vadd.f32 %v229, %v343
  %v416 = vadd.f32 %v237, %v345
  %v417 = vadd.f32 %v245, %v347
  %v418 = vadd.f32 %v244, %v349
  %v419 = vadd.f32 %v246, %v351
  %v420 = vadd.f32 %v254, %v353
  %v421 = vadd.f32 %v262, %v355
  %v422 = vadd.f32 %v261, %v357
  %v423 = vadd.f32 %v263, %v359
  %v424 = vmul.f32 %v392, 0.25
  %v425 = vmul.f32 %v393, 0.25
  %v426 = vmul.f32 %v394, 0.25
  %v427 = vmul.f32 %v395, 0.25
  %v428 = vmul.f32 %v396, 0.25
  %v429 = vmul.f32 %v397, 0.25
  %v430 = vmul.f32 %v398, 0.25
  %v431 = vmul.f32 %v399, 0.25
  %v432 = vmul.f32 %v400, 0.25
  %v433 = vmul.f32 %v401, 0.25
  %v434 = vmul.f32 %v402, 0.25
  %v435 = vmul.f32 %v403, 0.25
  %v436 = vmul.f32 %v404, 0.25
  %v437 = vmul.f32 %v405, 0.25
  %v438 = vmul.f32 %v406, 0.25
  %v439 = vmul.f32 %v407, 0.25
  %v440 = vmul.f32 %v408, 0.25
  %v441 = vmul.f32 %v409, 0.25
  %v442 = vmul.f32 %v410, 0.25
  %v443 = vmul.f32 %v411, 0.25
  %v444 = vmul.f32 %v412, 0.25
  %v445 = vmul.f32 %v413, 0.25
  %v446 = vmul.f32 %v414, 0.25
  %v447 = vmul.f32 %v415, 0.25
  %v448 = vmul.f32 %v416, 0.25
  %v449 = vmul.f32 %v417, 0.25
  %v450 = vmul.f32 %v418, 0.25
  %v451 = vmul.f32 %v419, 0.25
  %v452 = vmul.f32 %v420, 0.25
  %v453 = vmul.f32 %v421, 0.25
  %v454 = vmul.f32 %v422, 0.25
  %v455 = vmul.f32 %v423, 0.25
  %v456 = vpack.c.bf16 %v424, %v424
  %v457 = vpack.c.bf16 %v425, %v425
  %v458 = vpack.c.bf16 %v426, %v426
  %v459 = vpack.c.bf16 %v427, %v427
  %v460 = vpack.c.bf16 %v428, %v428
  %v461 = vpack.c.bf16 %v429, %v429
  %v462 = vpack.c.bf16 %v430, %v430
  %v463 = vpack.c.bf16 %v431, %v431
  %v464 = vpack.c.bf16 %v432, %v432
  %v465 = vpack.c.bf16 %v433, %v433
  %v466 = vpack.c.bf16 %v434, %v434
  %v467 = vpack.c.bf16 %v435, %v435
  %v468 = vpack.c.bf16 %v436, %v436
  %v469 = vpack.c.bf16 %v437, %v437
  %v470 = vpack.c.bf16 %v438, %v438
  %v471 = vpack.c.bf16 %v439, %v439
  %v472 = vpack.c.bf16 %v440, %v440
  %v473 = vpack.c.bf16 %v441, %v441
  %v474 = vpack.c.bf16 %v442, %v442
  %v475 = vpack.c.bf16 %v443, %v443
  %v476 = vpack.c.bf16 %v444, %v444
  %v477 = vpack.c.bf16 %v445, %v445
  %v478 = vpack.c.bf16 %v446, %v446
  %v479 = vpack.c.bf16 %v447, %v447
  %v480 = vpack.c.bf16 %v448, %v448
  %v481 = vpack.c.bf16 %v449, %v449
  %v482 = vpack.c.bf16 %v450, %v450
  %v483 = vpack.c.bf16 %v451, %v451
  %v484 = vpack.c.bf16 %v452, %v452
  %v485 = vpack.c.bf16 %v453, %v453
  %v486 = vpack.c.bf16 %v454, %v454
  %v487 = vpack.c.bf16 %v455, %v455
  %v488 = vld [vmem:[%s3] sm:$0xf]
  %v489 = vld [vmem:[%s3 + $0x4] sm:$0xf]
  %v490 = vld [vmem:[%s3 + $0x8] sm:$0xf]
  %v491 = vld [vmem:[%s3 + $0xc] sm:$0xf]
  %v492 = vld [vmem:[%s3 + $0x10] sm:$0xf]
  %v493 = vld [vmem:[%s3 + $0x14] sm:$0xf]
  %v494 = vld [vmem:[%s3 + $0x18] sm:$0xf]
  %v495 = vld [vmem:[%s3 + $0x1c] sm:$0xf]
  %v496 = vld [vmem:[%s3 + $0x20] sm:$0xf]
  %v497 = vld [vmem:[%s3 + $0x24] sm:$0xf]
  %v498 = vld [vmem:[%s3 + $0x28] sm:$0xf]
  %v499 = vld [vmem:[%s3 + $0x2c] sm:$0xf]
  %v500 = vld [vmem:[%s3 + $0x30] sm:$0xf]
  %v501 = vld [vmem:[%s3 + $0x34] sm:$0xf]
  %v502 = vld [vmem:[%s3 + $0x38] sm:$0xf]
  %v503 = vld [vmem:[%s3 + $0x3c] sm:$0xf]
  %v536 = vunpack.c.l.b16 %v456
  %v537 = vunpack.c.l.b16 %v457
  %v538 = vunpack.c.l.b16 %v458
  %v539 = vunpack.c.l.b16 %v459
  %v540 = vunpack.c.l.b16 %v460
  %v541 = vunpack.c.l.b16 %v461
  %v542 = vunpack.c.l.b16 %v462
  %v543 = vunpack.c.l.b16 %v463
  %v544 = vunpack.c.l.b16 %v464
  %v545 = vunpack.c.l.b16 %v465
  %v546 = vunpack.c.l.b16 %v466
  %v547 = vunpack.c.l.b16 %v467
  %v548 = vunpack.c.l.b16 %v468
  %v549 = vunpack.c.l.b16 %v469
  %v550 = vunpack.c.l.b16 %v470
  %v551 = vunpack.c.l.b16 %v471
  %v552 = vunpack.c.l.b16 %v472
  %v553 = vunpack.c.l.b16 %v473
  %v554 = vunpack.c.l.b16 %v474
  %v555 = vunpack.c.l.b16 %v475
  %v556 = vunpack.c.l.b16 %v476
  %v557 = vunpack.c.l.b16 %v477
  %v558 = vunpack.c.l.b16 %v478
  %v559 = vunpack.c.l.b16 %v479
  %v560 = vunpack.c.l.b16 %v480
  %v561 = vunpack.c.l.b16 %v481
  %v562 = vunpack.c.l.b16 %v482
  %v563 = vunpack.c.l.b16 %v483
  %v564 = vunpack.c.l.b16 %v484
  %v565 = vunpack.c.l.b16 %v485
  %v566 = vunpack.c.l.b16 %v486
  %v567 = vunpack.c.l.b16 %v487
  %v568 = vrot.slane %v537, 7
  %vm569 = vcmask 1041409
  %v570 = vsel %vm569, %v568, %v536
  %v571 = vrot.slane %v538, 6
  %vm572 = vcmask 1042434
  %v573 = vsel %vm572, %v571, %v570
  %v574 = vrot.slane %v539, 5
  %vm575 = vcmask 1043459
  %v576 = vsel %vm575, %v574, %v573
  %v577 = vrot.slane %v540, 4
  %vm578 = vcmask 1044484
  %v579 = vsel %vm578, %v577, %v576
  %v580 = vrot.slane %v541, 3
  %vm581 = vcmask 1045509
  %v582 = vsel %vm581, %v580, %v579
  %v583 = vrot.slane %v542, 2
  %vm584 = vcmask 1046534
  %v585 = vsel %vm584, %v583, %v582
  %v586 = vrot.slane %v543, 1
  %vm587 = vcmask 1047559
  %v588 = vsel %vm587, %v586, %v585
  %v589 = vrot.slane %v545, 7
  %v590 = vsel %vm569, %v589, %v544
  %v591 = vrot.slane %v546, 6
  %v592 = vsel %vm572, %v591, %v590
  %v593 = vrot.slane %v547, 5
  %v594 = vsel %vm575, %v593, %v592
  %v595 = vrot.slane %v548, 4
  %v596 = vsel %vm578, %v595, %v594
  %v597 = vrot.slane %v549, 3
  %v598 = vsel %vm581, %v597, %v596
  %v599 = vrot.slane %v550, 2
  %v600 = vsel %vm584, %v599, %v598
  %v601 = vrot.slane %v551, 1
  %v602 = vsel %vm587, %v601, %v600
  %v603 = vrot.slane %v553, 7
  %v604 = vsel %vm569, %v603, %v552
  %v605 = vrot.slane %v554, 6
  %v606 = vsel %vm572, %v605, %v604
  %v607 = vrot.slane %v555, 5
  %v608 = vsel %vm575, %v607, %v606
  %v609 = vrot.slane %v556, 4
  %v610 = vsel %vm578, %v609, %v608
  %v611 = vrot.slane %v557, 3
  %v612 = vsel %vm581, %v611, %v610
  %v613 = vrot.slane %v558, 2
  %v614 = vsel %vm584, %v613, %v612
  %v615 = vrot.slane %v559, 1
  %v616 = vsel %vm587, %v615, %v614
  %v617 = vrot.slane %v561, 7
  %v618 = vsel %vm569, %v617, %v560
  %v619 = vrot.slane %v562, 6
  %v620 = vsel %vm572, %v619, %v618
  %v621 = vrot.slane %v563, 5
  %v622 = vsel %vm575, %v621, %v620
  %v623 = vrot.slane %v564, 4
  %v624 = vsel %vm578, %v623, %v622
  %v625 = vrot.slane %v565, 3
  %v626 = vsel %vm581, %v625, %v624
  %v627 = vrot.slane %v566, 2
  %v628 = vsel %vm584, %v627, %v626
  %v629 = vrot.slane %v567, 1
  %v630 = vsel %vm587, %v629, %v628
  %v631 = vpack.c.b16 %v602, %v588
  %v632 = vpack.c.b16 %v630, %v616
  %v651 = vunpack.c.l.b16 %v488
  %v652 = vunpack.c.l.b16 %v489
  %v653 = vunpack.c.l.b16 %v490
  %v654 = vunpack.c.l.b16 %v491
  %v655 = vunpack.c.l.b16 %v492
  %v656 = vunpack.c.l.b16 %v493
  %v657 = vunpack.c.l.b16 %v494
  %v658 = vunpack.c.l.b16 %v495
  %v659 = vunpack.c.l.b16 %v496
  %v660 = vunpack.c.l.b16 %v497
  %v661 = vunpack.c.l.b16 %v498
  %v662 = vunpack.c.l.b16 %v499
  %v663 = vunpack.c.l.b16 %v500
  %v664 = vunpack.c.l.b16 %v501
  %v665 = vunpack.c.l.b16 %v502
  %v666 = vunpack.c.l.b16 %v503
  %v667 = vpack.c.b16 %v652, %v651
  %v668 = vpack.c.b16 %v654, %v653
  %v669 = vpack.c.b16 %v656, %v655
  %v670 = vpack.c.b16 %v658, %v657
  %v671 = vpack.c.b16 %v660, %v659
  %v672 = vpack.c.b16 %v662, %v661
  %v673 = vpack.c.b16 %v664, %v663
  %v674 = vpack.c.b16 %v666, %v665
  %683 = vmatprep.subr.bf16.mxu0 0
  %684 = vmatpush1.bf16.msra.mxu0 %v667
  %685 = vmatprep.subr.bf16.mxu0 0
  %686 = vmatpush1.bf16.msra.mxu0 %v668
  %687 = vmatprep.subr.bf16.mxu0 0
  %688 = vmatpush1.bf16.msra.mxu0 %v669
  %689 = vmatprep.subr.bf16.mxu0 0
  %690 = vmatpush1.bf16.msra.mxu0 %v670
  %691 = vmatprep.subr.bf16.mxu0 0
  %692 = vmatpush1.bf16.msra.mxu0 %v671
  %693 = vmatprep.subr.bf16.mxu0 0
  %694 = vmatpush1.bf16.msra.mxu0 %v672
  %695 = vmatprep.subr.bf16.mxu0 0
  %696 = vmatpush1.bf16.msra.mxu0 %v673
  %697 = vmatprep.subr.bf16.mxu0 0
  %698 = vmatpush1.bf16.msra.mxu0 %v674
  %699 = vmatprep.subr.bf16.mxu0 0
  %700 = vmatpush1.bf16.msra.mxu0 0
  %701 = vmatprep.subr.bf16.mxu0 0
  %702 = vmatpush1.bf16.msra.mxu0 0
  %703 = vmatprep.subr.bf16.mxu0 0
  %704 = vmatpush1.bf16.msra.mxu0 0
  %705 = vmatprep.subr.bf16.mxu0 0
  %706 = vmatpush1.bf16.msra.mxu0 0
  %707 = vmatprep.subr.bf16.mxu0 0
  %708 = vmatpush1.bf16.msra.mxu0 0
  %709 = vmatprep.subr.bf16.mxu0 0
  %710 = vmatpush1.bf16.msra.mxu0 0
  %711 = vmatprep.subr.bf16.mxu0 0
  %712 = vmatpush1.bf16.msra.mxu0 0
  %713 = vmatprep.subr.bf16.mxu0 0
  %714 = vmatpush1.bf16.msra.mxu0 0
  %715 = vmatprep.mubr.bf16.mxu0 0
  %716 = vmatmul.mubr.bf16.gmra.mrb[0].mxu0 %v631
  %v717 = vpop.f32.mrb[0].mxu0
  %v718 = vadd.f32 0.0, %v717
  %v719 = vpop.f32.mrb[0].mxu0
  %v720 = vpop.f32.mrb[0].mxu0
  %v721 = vadd.f32 0.0, %v720
  %v722 = vpop.f32.mrb[0].mxu0
  %723 = vmatprep.mubr.bf16.mxu0 0
  %724 = vmatmul.mubr.bf16.gmra.mrb[0].mxu0 %v632
  %v725 = vpop.f32.mrb[0].mxu0
  %v726 = vadd.f32 0.0, %v725
  %v727 = vpop.f32.mrb[0].mxu0
  %v728 = vpop.f32.mrb[0].mxu0
  %v729 = vadd.f32 0.0, %v728
  %v730 = vpop.f32.mrb[0].mxu0
  %731 = vdwg.mxu0
  %v732 = vpack.c.bf16 %v721, %v718
  %v733 = vpack.c.bf16 %v729, %v726
  %v736 = vunpack.c.l.b16 %v732
  %v737 = vunpack.c.h.b16 %v732
  %v738 = vunpack.c.l.b16 %v733
  %v739 = vunpack.c.h.b16 %v733
  %v740 = vpack.c.b16 %v736, %v736
  %v741 = vpack.c.b16 %v737, %v737
  %v742 = vpack.c.b16 %v738, %v738
  %v743 = vpack.c.b16 %v739, %v739
  %748 = vst [vmem:[%s4] sm:$0xf] %v740
  %749 = vst [vmem:[%s4 + $0x4] sm:$0xf] %v741
  %750 = vst [vmem:[%s4 + $0x8] sm:$0xf] %v742
  %751 = vst [vmem:[%s4 + $0xc] sm:$0xf] %v743
  // Predicated region
  $region18: #{densenet_forward.16} parent=0 // pred_check
    _
  $region19: #{densenet_forward.16} parent=0 // pred_check_branch
    %753 = sbr.rel (0) target = $region21
  $region20: #{densenet_forward.16} parent=0 // pred_region
    _
  $region21: #{densenet_forward.16} parent=0 // pred_fallthru
    _
  // Predicated region
  $region22: #{densenet_forward.16} parent=0 // pred_check
    _
  $region23: #{densenet_forward.16} parent=0 // pred_check_branch
    %755 = sbr.rel (0) target = $region25
  $region24: #{densenet_forward.16} parent=0 // pred_region
    _
  $region25: #{densenet_forward.16} parent=0 // pred_fallthru
    _

// kernel: densenet_forward.17
$region0: #{densenet_forward.17}
  #allocation0 [shape = 'u32[]', space=smem, size = 0x4, offset = 0x4, fixed_abs, tag = 'smem constant byte address 0x4 - core index']
  #allocation1 [shape = 'u32[144,128]{1,0:T(1,128)}', space=vmem, size = 0x12000, scoped, tag = 'internal scratch']
  %s0 = inlined_call_operand.vmem [shape: bf16[32,128], index: 0, kind: input, shape index: {}]
  %s1 = inlined_call_operand.vmem [shape: f32[1,128], index: 1, kind: input, shape index: {}]
  %s2 = inlined_call_operand.vmem [shape: f32[1,128], index: 2, kind: input, shape index: {}]
  %s3 = inlined_call_operand.vmem [shape: bf16[128,128], index: 3, kind: input, shape index: {}]
  %s4 = inlined_call_operand.vmem [shape: bf16[32,128], index: 4, kind: output, shape index: {}]
  %s5 = sld [smem:[#allocation0]]
  $region26: #{densenet_forward.17} parent=0
    _
  %s7 = ssub.s32 1, %s5
  %s8 = scalar_select 0, %s7, %s5
  // Predicated region
  $region2: #{densenet_forward.17} parent=0 // pred_check
    _
  $region3: #{densenet_forward.17} parent=0 // pred_check_branch
    %10 = sbr.rel (0) target = $region5
  $region4: #{densenet_forward.17} parent=0 // pred_region
    _
  $region5: #{densenet_forward.17} parent=0 // pred_fallthru
    _
  // Predicated region
  $region6: #{densenet_forward.17} parent=0 // pred_check
    _
  $region7: #{densenet_forward.17} parent=0 // pred_check_branch
    %12 = sbr.rel (0) target = $region9
  $region8: #{densenet_forward.17} parent=0 // pred_region
    _
  $region9: #{densenet_forward.17} parent=0 // pred_fallthru
    _
  // Predicated region
  $region10: #{densenet_forward.17} parent=0 // pred_check
    _
  $region11: #{densenet_forward.17} parent=0 // pred_check_branch
    %14 = sbr.rel (0) target = $region13
  $region12: #{densenet_forward.17} parent=0 // pred_region
    _
  $region13: #{densenet_forward.17} parent=0 // pred_fallthru
    _
  // Predicated region
  $region14: #{densenet_forward.17} parent=0 // pred_check
    _
  $region15: #{densenet_forward.17} parent=0 // pred_check_branch
    %16 = sbr.rel (0) target = $region17
  $region16: #{densenet_forward.17} parent=0 // pred_region
    _
  $region17: #{densenet_forward.17} parent=0 // pred_fallthru
    _
  %v18 = vld [vmem:[%s0] sm:$0xf]
  %v19 = vld [vmem:[%s0 + $0x4] sm:$0xf]
  %v20 = vld [vmem:[%s0 + $0x8] sm:$0xf]
  %v21 = vld [vmem:[%s0 + $0xc] sm:$0xf]
  %v22 = vunpack.c.l.bf16 %v18
  %v23 = vunpack.c.l.bf16 %v19
  %v24 = vunpack.c.l.bf16 %v20
  %v25 = vunpack.c.l.bf16 %v21
  %v26 = vld [vmem:[%s1] sm:$0x1]
  %v28 = vlaneseq
  %v29 = vshrl.u32 %v28, 7
  %v30 = vsub.s32 0, %v29
  %v31 = vrot.slane %v26, %v30
  %v33 = vmul.f32 %v22, %v31
  %v34 = vmul.f32 %v23, %v31
  %v35 = vmul.f32 %v24, %v31
  %v36 = vmul.f32 %v25, %v31
  %v37 = vld [vmem:[%s2] sm:$0x1]
  %v39 = vlaneseq
  %v40 = vshrl.u32 %v39, 7
  %v41 = vsub.s32 0, %v40
  %v42 = vrot.slane %v37, %v41
  %v44 = vadd.f32 %v33, %v42
  %v45 = vadd.f32 %v34, %v42
  %v46 = vadd.f32 %v35, %v42
  %v47 = vadd.f32 %v36, %v42
  %v48 = vmax.f32 %v44, 0.0
  %v49 = vmax.f32 %v45, 0.0
  %v50 = vmax.f32 %v46, 0.0
  %v51 = vmax.f32 %v47, 0.0
  %v52 = vpack.c.bf16 %v49, %v48
  %v53 = vpack.c.bf16 %v51, %v50
  %v54 = vld [vmem:[%s3] sm:$0xf]
  %v55 = vld [vmem:[%s3 + $0x4] sm:$0xf]
  %v56 = vld [vmem:[%s3 + $0x8] sm:$0xf]
  %v57 = vld [vmem:[%s3 + $0xc] sm:$0xf]
  %v58 = vld [vmem:[%s3 + $0x10] sm:$0xf]
  %v59 = vld [vmem:[%s3 + $0x14] sm:$0xf]
  %v60 = vld [vmem:[%s3 + $0x18] sm:$0xf]
  %v61 = vld [vmem:[%s3 + $0x1c] sm:$0xf]
  %v62 = vld [vmem:[%s3 + $0x20] sm:$0xf]
  %v63 = vld [vmem:[%s3 + $0x24] sm:$0xf]
  %v64 = vld [vmem:[%s3 + $0x28] sm:$0xf]
  %v65 = vld [vmem:[%s3 + $0x2c] sm:$0xf]
  %v66 = vld [vmem:[%s3 + $0x30] sm:$0xf]
  %v67 = vld [vmem:[%s3 + $0x34] sm:$0xf]
  %v68 = vld [vmem:[%s3 + $0x38] sm:$0xf]
  %v69 = vld [vmem:[%s3 + $0x3c] sm:$0xf]
  %v86 = vunpack.c.l.b16 %v54
  %v87 = vunpack.c.l.b16 %v55
  %v88 = vunpack.c.l.b16 %v56
  %v89 = vunpack.c.l.b16 %v57
  %v90 = vunpack.c.l.b16 %v58
  %v91 = vunpack.c.l.b16 %v59
  %v92 = vunpack.c.l.b16 %v60
  %v93 = vunpack.c.l.b16 %v61
  %v94 = vunpack.c.l.b16 %v62
  %v95 = vunpack.c.l.b16 %v63
  %v96 = vunpack.c.l.b16 %v64
  %v97 = vunpack.c.l.b16 %v65
  %v98 = vunpack.c.l.b16 %v66
  %v99 = vunpack.c.l.b16 %v67
  %v100 = vunpack.c.l.b16 %v68
  %v101 = vunpack.c.l.b16 %v69
  %v102 = vpack.c.b16 %v87, %v86
  %v103 = vpack.c.b16 %v89, %v88
  %v104 = vpack.c.b16 %v91, %v90
  %v105 = vpack.c.b16 %v93, %v92
  %v106 = vpack.c.b16 %v95, %v94
  %v107 = vpack.c.b16 %v97, %v96
  %v108 = vpack.c.b16 %v99, %v98
  %v109 = vpack.c.b16 %v101, %v100
  %118 = vmatprep.subr.bf16.mxu0 0
  %119 = vmatpush1.bf16.msra.mxu0 %v102
  %120 = vmatprep.subr.bf16.mxu0 0
  %121 = vmatpush1.bf16.msra.mxu0 %v103
  %122 = vmatprep.subr.bf16.mxu0 0
  %123 = vmatpush1.bf16.msra.mxu0 %v104
  %124 = vmatprep.subr.bf16.mxu0 0
  %125 = vmatpush1.bf16.msra.mxu0 %v105
  %126 = vmatprep.subr.bf16.mxu0 0
  %127 = vmatpush1.bf16.msra.mxu0 %v106
  %128 = vmatprep.subr.bf16.mxu0 0
  %129 = vmatpush1.bf16.msra.mxu0 %v107
  %130 = vmatprep.subr.bf16.mxu0 0
  %131 = vmatpush1.bf16.msra.mxu0 %v108
  %132 = vmatprep.subr.bf16.mxu0 0
  %133 = vmatpush1.bf16.msra.mxu0 %v109
  %134 = vmatprep.subr.bf16.mxu0 0
  %135 = vmatpush1.bf16.msra.mxu0 0
  %136 = vmatprep.subr.bf16.mxu0 0
  %137 = vmatpush1.bf16.msra.mxu0 0
  %138 = vmatprep.subr.bf16.mxu0 0
  %139 = vmatpush1.bf16.msra.mxu0 0
  %140 = vmatprep.subr.bf16.mxu0 0
  %141 = vmatpush1.bf16.msra.mxu0 0
  %142 = vmatprep.subr.bf16.mxu0 0
  %143 = vmatpush1.bf16.msra.mxu0 0
  %144 = vmatprep.subr.bf16.mxu0 0
  %145 = vmatpush1.bf16.msra.mxu0 0
  %146 = vmatprep.subr.bf16.mxu0 0
  %147 = vmatpush1.bf16.msra.mxu0 0
  %148 = vmatprep.subr.bf16.mxu0 0
  %149 = vmatpush1.bf16.msra.mxu0 0
  %150 = vmatprep.mubr.bf16.mxu0 0
  %151 = vmatmul.mubr.bf16.gmra.mrb[0].mxu0 %v52
  %v152 = vpop.f32.mrb[0].mxu0
  %v153 = vadd.f32 0.0, %v152
  %v154 = vpop.f32.mrb[0].mxu0
  %v155 = vpop.f32.mrb[0].mxu0
  %v156 = vadd.f32 0.0, %v155
  %v157 = vpop.f32.mrb[0].mxu0
  %158 = vmatprep.mubr.bf16.mxu0 0
  %159 = vmatmul.mubr.bf16.gmra.mrb[0].mxu0 %v53
  %v160 = vpop.f32.mrb[0].mxu0
  %v161 = vadd.f32 0.0, %v160
  %v162 = vpop.f32.mrb[0].mxu0
  %v163 = vpop.f32.mrb[0].mxu0
  %v164 = vadd.f32 0.0, %v163
  %v165 = vpop.f32.mrb[0].mxu0
  %166 = vdwg.mxu0
  %v167 = vpack.c.bf16 %v156, %v153
  %v168 = vpack.c.bf16 %v164, %v161
  %v171 = vunpack.c.l.b16 %v167
  %v172 = vunpack.c.h.b16 %v167
  %v173 = vunpack.c.l.b16 %v168
  %v174 = vunpack.c.h.b16 %v168
  %v175 = vpack.c.b16 %v171, %v171
  %v176 = vpack.c.b16 %v172, %v172
  %v177 = vpack.c.b16 %v173, %v173
  %v178 = vpack.c.b16 %v174, %v174
  %183 = vst [vmem:[%s4] sm:$0xf] %v175
  %184 = vst [vmem:[%s4 + $0x4] sm:$0xf] %v176
  %185 = vst [vmem:[%s4 + $0x8] sm:$0xf] %v177
  %186 = vst [vmem:[%s4 + $0xc] sm:$0xf] %v178
  // Predicated region
  $region18: #{densenet_forward.17} parent=0 // pred_check
    _
  $region19: #{densenet_forward.17} parent=0 // pred_check_branch
    %188 = sbr.rel (0) target = $region21
  $region20: #{densenet_forward.17} parent=0 // pred_region
    _
  $region21: #{densenet_forward.17} parent=0 // pred_fallthru
    _
  // Predicated region
  $region22: #{densenet_forward.17} parent=0 // pred_check
    _
  $region23: #{densenet_forward.17} parent=0 // pred_check_branch
    %190 = sbr.rel (0) target = $region25
  $region24: #{densenet_forward.17} parent=0 // pred_region
    _
  $region25: #{densenet_forward.17} parent=0 // pred_fallthru
    _

// kernel: densenet_forward.18
$region0: #{densenet_forward.18}
  #allocation0 [shape = 'u32[]', space=smem, size = 0x4, offset = 0x4, fixed_abs, tag = 'smem constant byte address 0x4 - core index']
  #allocation1 [shape = 'u32[144,128]{1,0:T(1,128)}', space=vmem, size = 0x12000, scoped, tag = 'internal scratch']
  #allocation2 [shape = 'bf16[2,6,6,128]{3,2,1,0:T(8,128)(2,1)}', space=vmem, size = 0x6000, scoped, tag = 'scratch operand']
  %s0 = inlined_call_operand.vmem [shape: bf16[2,4,4,128], index: 0, kind: input, shape index: {}]
  %s1 = inlined_call_operand.vmem [shape: f32[1,128], index: 1, kind: input, shape index: {}]
  %s2 = inlined_call_operand.vmem [shape: f32[1,128], index: 2, kind: input, shape index: {}]
  %s3 = inlined_call_operand.vmem [shape: bf16[9,128,128], index: 3, kind: input, shape index: {}]
  %s4 = inlined_call_operand.vmem [shape: bf16[2,16,128], index: 4, kind: output, shape index: {}]
  %s5 = sld [smem:[#allocation0]]
  $region26: #{densenet_forward.18} parent=0
    _
  %s7 = ssub.s32 1, %s5
  %s8 = scalar_select 0, %s7, %s5
  // Predicated region
  $region2: #{densenet_forward.18} parent=0 // pred_check
    _
  $region3: #{densenet_forward.18} parent=0 // pred_check_branch
    %10 = sbr.rel (0) target = $region5
  $region4: #{densenet_forward.18} parent=0 // pred_region
    _
  $region5: #{densenet_forward.18} parent=0 // pred_fallthru
    _
  // Predicated region
  $region6: #{densenet_forward.18} parent=0 // pred_check
    _
  $region7: #{densenet_forward.18} parent=0 // pred_check_branch
    %12 = sbr.rel (0) target = $region9
  $region8: #{densenet_forward.18} parent=0 // pred_region
    _
  $region9: #{densenet_forward.18} parent=0 // pred_fallthru
    _
  // Predicated region
  $region10: #{densenet_forward.18} parent=0 // pred_check
    _
  $region11: #{densenet_forward.18} parent=0 // pred_check_branch
    %14 = sbr.rel (0) target = $region13
  $region12: #{densenet_forward.18} parent=0 // pred_region
    _
  $region13: #{densenet_forward.18} parent=0 // pred_fallthru
    _
  // Predicated region
  $region14: #{densenet_forward.18} parent=0 // pred_check
    _
  $region15: #{densenet_forward.18} parent=0 // pred_check_branch
    %16 = sbr.rel (0) target = $region17
  $region16: #{densenet_forward.18} parent=0 // pred_region
    _
  $region17: #{densenet_forward.18} parent=0 // pred_fallthru
    _
  %18 = vst [vmem:[#allocation2] sm:$0x7] 0
  %19 = vst [vmem:[#allocation2 + $0x18] sm:$0x7] 0
  %s20 = scalar_lea.vmem [#allocation2], 20
  %21 = vst [vmem:[%s20] sm:$0x7] 0
  %22 = vst [vmem:[%s20 + $0x18] sm:$0x7] 0
  %vm23 = vcmask 1040384
  %vm24 = vsmask.f32 256
  %vm25 = vmand %vm23, %vm24
  %v26 = vld [vmem:[#allocation2] sm:$0x1]
  %v27 = vsel %vm25, 0, %v26
  %28 = vst [vmem:[#allocation2] sm:$0x1] %v27
  %v29 = vld [vmem:[#allocation2 + $0x4] sm:$0x1]
  %v30 = vsel %vm25, 0, %v29
  %31 = vst [vmem:[#allocation2 + $0x4] sm:$0x1] %v30
  %v32 = vld [vmem:[#allocation2 + $0x8] sm:$0x1]
  %v33 = vsel %vm25, 0, %v32
  %34 = vst [vmem:[#allocation2 + $0x8] sm:$0x1] %v33
  %v35 = vld [vmem:[#allocation2 + $0xc] sm:$0x1]
  %v36 = vsel %vm25, 0, %v35
  %37 = vst [vmem:[#allocation2 + $0xc] sm:$0x1] %v36
  %v38 = vld [vmem:[#allocation2 + $0x10] sm:$0x1]
  %v39 = vsel %vm25, 0, %v38
  %40 = vst [vmem:[#allocation2 + $0x10] sm:$0x1] %v39
  %v41 = vld [vmem:[#allocation2 + $0x14] sm:$0x1]
  %v42 = vsel %vm25, 0, %v41
  %43 = vst [vmem:[#allocation2 + $0x14] sm:$0x1] %v42
  %v44 = vld [vmem:[#allocation2 + $0x18] sm:$0x1]
  %v45 = vsel %vm25, 0, %v44
  %46 = vst [vmem:[#allocation2 + $0x18] sm:$0x1] %v45
  %v47 = vld [vmem:[#allocation2 + $0x1c] sm:$0x1]
  %v48 = vsel %vm25, 0, %v47
  %49 = vst [vmem:[#allocation2 + $0x1c] sm:$0x1] %v48
  %v50 = vld [vmem:[#allocation2 + $0x20] sm:$0x1]
  %v51 = vsel %vm25, 0, %v50
  %52 = vst [vmem:[#allocation2 + $0x20] sm:$0x1] %v51
  %v53 = vld [vmem:[#allocation2 + $0x24] sm:$0x1]
  %v54 = vsel %vm25, 0, %v53
  %55 = vst [vmem:[#allocation2 + $0x24] sm:$0x1] %v54
  %v56 = vld [vmem:[#allocation2 + $0x28] sm:$0x1]
  %v57 = vsel %vm25, 0, %v56
  %58 = vst [vmem:[#allocation2 + $0x28] sm:$0x1] %v57
  %v59 = vld [vmem:[#allocation2 + $0x2c] sm:$0x1]
  %v60 = vsel %vm25, 0, %v59
  %61 = vst [vmem:[#allocation2 + $0x2c] sm:$0x1] %v60
  %vm62 = vcmask 1042434
  %vm63 = vsmask.f32 7946
  %vm64 = vmand %vm62, %vm63
  %v65 = vld [vmem:[#allocation2] sm:$0x4]
  %v66 = vsel %vm64, 0, %v65
  %67 = vst [vmem:[#allocation2] sm:$0x4] %v66
  %v68 = vld [vmem:[#allocation2 + $0x4] sm:$0x4]
  %v69 = vsel %vm64, 0, %v68
  %70 = vst [vmem:[#allocation2 + $0x4] sm:$0x4] %v69
  %v71 = vld [vmem:[#allocation2 + $0x8] sm:$0x4]
  %v72 = vsel %vm64, 0, %v71
  %73 = vst [vmem:[#allocation2 + $0x8] sm:$0x4] %v72
  %v74 = vld [vmem:[#allocation2 + $0xc] sm:$0x4]
  %v75 = vsel %vm64, 0, %v74
  %76 = vst [vmem:[#allocation2 + $0xc] sm:$0x4] %v75
  %v77 = vld [vmem:[#allocation2 + $0x10] sm:$0x4]
  %v78 = vsel %vm64, 0, %v77
  %79 = vst [vmem:[#allocation2 + $0x10] sm:$0x4] %v78
  %v80 = vld [vmem:[#allocation2 + $0x14] sm:$0x4]
  %v81 = vsel %vm64, 0, %v80
  %82 = vst [vmem:[#allocation2 + $0x14] sm:$0x4] %v81
  %v83 = vld [vmem:[#allocation2 + $0x18] sm:$0x4]
  %v84 = vsel %vm64, 0, %v83
  %85 = vst [vmem:[#allocation2 + $0x18] sm:$0x4] %v84
  %v86 = vld [vmem:[#allocation2 + $0x1c] sm:$0x4]
  %v87 = vsel %vm64, 0, %v86
  %88 = vst [vmem:[#allocation2 + $0x1c] sm:$0x4] %v87
  %v89 = vld [vmem:[#allocation2 + $0x20] sm:$0x4]
  %v90 = vsel %vm64, 0, %v89
  %91 = vst [vmem:[#allocation2 + $0x20] sm:$0x4] %v90
  %v92 = vld [vmem:[#allocation2 + $0x24] sm:$0x4]
  %v93 = vsel %vm64, 0, %v92
  %94 = vst [vmem:[#allocation2 + $0x24] sm:$0x4] %v93
  %v95 = vld [vmem:[#allocation2 + $0x28] sm:$0x4]
  %v96 = vsel %vm64, 0, %v95
  %97 = vst [vmem:[#allocation2 + $0x28] sm:$0x4] %v96
  %v98 = vld [vmem:[#allocation2 + $0x2c] sm:$0x4]
  %v99 = vsel %vm64, 0, %v98
  %100 = vst [vmem:[#allocation2 + $0x2c] sm:$0x4] %v99
  %v101 = vld [vmem:[%s0] sm:$0x3]
  %v102 = vld [vmem:[%s0 + $0x2] sm:$0x3]
  %v103 = vld [vmem:[%s0 + $0x4] sm:$0x3]
  %v104 = vld [vmem:[%s0 + $0x6] sm:$0x3]
  %v105 = vld [vmem:[%s0 + $0x8] sm:$0x3]
  %v106 = vld [vmem:[%s0 + $0xa] sm:$0x3]
  %v107 = vld [vmem:[%s0 + $0xc] sm:$0x3]
  %v108 = vld [vmem:[%s0 + $0xe] sm:$0x3]
  %v109 = vunpack.c.l.bf16 %v101
  %v110 = vunpack.c.l.bf16 %v102
  %v111 = vunpack.c.l.bf16 %v103
  %v112 = vunpack.c.l.bf16 %v104
  %v113 = vunpack.c.l.bf16 %v105
  %v114 = vunpack.c.l.bf16 %v106
  %v115 = vunpack.c.l.bf16 %v107
  %v116 = vunpack.c.l.bf16 %v108
  %v117 = vld [vmem:[%s1] sm:$0x1]
  %v119 = vlaneseq
  %v120 = vshrl.u32 %v119, 7
  %v121 = vsub.s32 0, %v120
  %v122 = vrot.slane %v117, %v121
  %v124 = vmul.f32 %v109, %v122
  %v125 = vmul.f32 %v110, %v122
  %v126 = vmul.f32 %v111, %v122
  %v127 = vmul.f32 %v112, %v122
  %v128 = vmul.f32 %v113, %v122
  %v129 = vmul.f32 %v114, %v122
  %v130 = vmul.f32 %v115, %v122
  %v131 = vmul.f32 %v116, %v122
  %v132 = vld [vmem:[%s2] sm:$0x1]
  %v134 = vlaneseq
  %v135 = vshrl.u32 %v134, 7
  %v136 = vsub.s32 0, %v135
  %v137 = vrot.slane %v132, %v136
  %v139 = vadd.f32 %v124, %v137
  %v140 = vadd.f32 %v125, %v137
  %v141 = vadd.f32 %v126, %v137
  %v142 = vadd.f32 %v127, %v137
  %v143 = vadd.f32 %v128, %v137
  %v144 = vadd.f32 %v129, %v137
  %v145 = vadd.f32 %v130, %v137
  %v146 = vadd.f32 %v131, %v137
  %v147 = vmax.f32 %v139, 0.0
  %v148 = vmax.f32 %v140, 0.0
  %v149 = vmax.f32 %v141, 0.0
  %v150 = vmax.f32 %v142, 0.0
  %v151 = vmax.f32 %v143, 0.0
  %v152 = vmax.f32 %v144, 0.0
  %v153 = vmax.f32 %v145, 0.0
  %v154 = vmax.f32 %v146, 0.0
  %v155 = vpack.c.bf16 %v147, %v147
  %v156 = vpack.c.bf16 %v148, %v148
  %v157 = vpack.c.bf16 %v149, %v149
  %v158 = vpack.c.bf16 %v150, %v150
  %v159 = vpack.c.bf16 %v151, %v151
  %v160 = vpack.c.bf16 %v152, %v152
  %v161 = vpack.c.bf16 %v153, %v153
  %v162 = vpack.c.bf16 %v154, %v154
  %v171 = vunpack.c.l.b16 %v155
  %v172 = vunpack.c.l.b16 %v156
  %v173 = vunpack.c.l.b16 %v157
  %v174 = vunpack.c.l.b16 %v158
  %v175 = vunpack.c.l.b16 %v159
  %v176 = vunpack.c.l.b16 %v160
  %v177 = vunpack.c.l.b16 %v161
  %v178 = vunpack.c.l.b16 %v162
  %v179 = vpack.c.b16 %v171, %v171
  %v180 = vpack.c.b16 %v172, %v172
  %v181 = vpack.c.b16 %v173, %v173
  %v182 = vpack.c.b16 %v174, %v174
  %v183 = vpack.c.b16 %v175, %v175
  %v184 = vpack.c.b16 %v176, %v176
  %v185 = vpack.c.b16 %v177, %v177
  %v186 = vpack.c.b16 %v178, %v178
  %v188 = vshrl.u32 %v179, 16
  %v190 = vrot.slane %v188, 7
  %v191 = vshll.u32 %v179, 16
  %v193 = vor.u32 %v190, %v191
  %v195 = vshrl.u32 %v180, 16
  %v197 = vrot.slane %v195, 7
  %v198 = vshll.u32 %v180, 16
  %v200 = vor.u32 %v197, %v198
  %v202 = vshrl.u32 %v181, 16
  %v204 = vrot.slane %v202, 7
  %v205 = vshll.u32 %v181, 16
  %v207 = vor.u32 %v204, %v205
  %v209 = vshrl.u32 %v182, 16
  %v211 = vrot.slane %v209, 7
  %v212 = vshll.u32 %v182, 16
  %v214 = vor.u32 %v211, %v212
  %v216 = vshrl.u32 %v183, 16
  %v218 = vrot.slane %v216, 7
  %v219 = vshll.u32 %v183, 16
  %v221 = vor.u32 %v218, %v219
  %v223 = vshrl.u32 %v184, 16
  %v225 = vrot.slane %v223, 7
  %v226 = vshll.u32 %v184, 16
  %v228 = vor.u32 %v225, %v226
  %v230 = vshrl.u32 %v185, 16
  %v232 = vrot.slane %v230, 7
  %v233 = vshll.u32 %v185, 16
  %v235 = vor.u32 %v232, %v233
  %v237 = vshrl.u32 %v186, 16
  %v239 = vrot.slane %v237, 7
  %v240 = vshll.u32 %v186, 16
  %v242 = vor.u32 %v239, %v240
  %s251 = scalar_lea.vmem [#allocation2], 4
  %vm252 = vcmask 1042432
  %vm253 = vsmask.f32 2306
  %vm254 = vmand %vm252, %vm253
  %v255 = vld [vmem:[%s251] sm:$0x7]
  %v256 = vsel %vm254, %v193, %v255
  %257 = vst [vmem:[%s251] sm:$0x7] %v256
  %v258 = vld [vmem:[%s251 + $0x4] sm:$0x7]
  %v259 = vsel %vm254, %v200, %v258
  %260 = vst [vmem:[%s251 + $0x4] sm:$0x7] %v259
  %v261 = vld [vmem:[%s251 + $0x8] sm:$0x7]
  %v262 = vsel %vm254, %v207, %v261
  %263 = vst [vmem:[%s251 + $0x8] sm:$0x7] %v262
  %v264 = vld [vmem:[%s251 + $0xc] sm:$0x7]
  %v265 = vsel %vm254, %v214, %v264
  %266 = vst [vmem:[%s251 + $0xc] sm:$0x7] %v265
  %v267 = vld [vmem:[%s251 + $0x18] sm:$0x7]
  %v268 = vsel %vm254, %v221, %v267
  %269 = vst [vmem:[%s251 + $0x18] sm:$0x7] %v268
  %v270 = vld [vmem:[%s251 + $0x1c] sm:$0x7]
  %v271 = vsel %vm254, %v228, %v270
  %272 = vst [vmem:[%s251 + $0x1c] sm:$0x7] %v271
  %v273 = vld [vmem:[%s251 + $0x20] sm:$0x7]
  %v274 = vsel %vm254, %v235, %v273
  %275 = vst [vmem:[%s251 + $0x20] sm:$0x7] %v274
  %v276 = vld [vmem:[%s251 + $0x24] sm:$0x7]
  %v277 = vsel %vm254, %v242, %v276
  %278 = vst [vmem:[%s251 + $0x24] sm:$0x7] %v277
  %v279 = vld [vmem:[#allocation2] sm:$0x3]
  %v280 = vld [vmem:[#allocation2 + $0x4] sm:$0x3]
  %v281 = vld [vmem:[#allocation2 + $0x8] sm:$0x3]
  %v282 = vld [vmem:[#allocation2 + $0xc] sm:$0x3]
  %v283 = vld [vmem:[#allocation2 + $0x10] sm:$0x3]
  %v284 = vld [vmem:[#allocation2 + $0x14] sm:$0x3]
  %v285 = vld [vmem:[#allocation2 + $0x18] sm:$0x3]
  %v286 = vld [vmem:[#allocation2 + $0x1c] sm:$0x3]
  %v287 = vld [vmem:[#allocation2 + $0x20] sm:$0x3]
  %v288 = vld [vmem:[#allocation2 + $0x24] sm:$0x3]
  %v289 = vld [vmem:[#allocation2 + $0x28] sm:$0x3]
  %v290 = vld [vmem:[#allocation2 + $0x2c] sm:$0x3]
  %v291 = vld [vmem:[%s3] sm:$0xf]
  %v292 = vld [vmem:[%s3 + $0x4] sm:$0xf]
  %v293 = vld [vmem:[%s3 + $0x8] sm:$0xf]
  %v294 = vld [vmem:[%s3 + $0xc] sm:$0xf]
  %v295 = vld [vmem:[%s3 + $0x10] sm:$0xf]
  %v296 = vld [vmem:[%s3 + $0x14] sm:$0xf]
  %v297 = vld [vmem:[%s3 + $0x18] sm:$0xf]
  %v298 = vld [vmem:[%s3 + $0x1c] sm:$0xf]
  %v299 = vld [vmem:[%s3 + $0x20] sm:$0xf]
  %v300 = vld [vmem:[%s3 + $0x24] sm:$0xf]
  %v301 = vld [vmem:[%s3 + $0x28] sm:$0xf]
  %v302 = vld [vmem:[%s3 + $0x2c] sm:$0xf]
  %v303 = vld [vmem:[%s3 + $0x30] sm:$0xf]
  %v304 = vld [vmem:[%s3 + $0x34] sm:$0xf]
  %v305 = vld [vmem:[%s3 + $0x38] sm:$0xf]
  %v306 = vld [vmem:[%s3 + $0x3c] sm:$0xf]
  %s307 = scalar_lea.vmem %s3, 192
  %v308 = vld [vmem:[%s307] sm:$0xf]
  %v309 = vld [vmem:[%s307 + $0x4] sm:$0xf]
  %v310 = vld [vmem:[%s307 + $0x8] sm:$0xf]
  %v311 = vld [vmem:[%s307 + $0xc] sm:$0xf]
  %v312 = vld [vmem:[%s307 + $0x10] sm:$0xf]
  %v313 = vld [vmem:[%s307 + $0x14] sm:$0xf]
  %v314 = vld [vmem:[%s307 + $0x18] sm:$0xf]
  %v315 = vld [vmem:[%s307 + $0x1c] sm:$0xf]
  %v316 = vld [vmem:[%s307 + $0x20] sm:$0xf]
  %v317 = vld [vmem:[%s307 + $0x24] sm:$0xf]
  %v318 = vld [vmem:[%s307 + $0x28] sm:$0xf]
  %v319 = vld [vmem:[%s307 + $0x2c] sm:$0xf]
  %v320 = vld [vmem:[%s307 + $0x30] sm:$0xf]
  %v321 = vld [vmem:[%s307 + $0x34] sm:$0xf]
  %v322 = vld [vmem:[%s307 + $0x38] sm:$0xf]
  %v323 = vld [vmem:[%s307 + $0x3c] sm:$0xf]
  %v332 = vcombine.low %v280, %v281
  %v333 = vcombine.low %v282, %v283
  %v335 = vunpack.c.l.s4 1983009808
  %v336 = vunpack.c.0.s8 %v335
  %v337 = vlaneseq
  %v338 = vshrl.u32 %v337, 7
  %v339 = vsub.s32 %v336, %v338
  %v340 = vrot.slane %v332, %v339
  %v342 = vunpack.c.l.s4 1983009808
  %v343 = vunpack.c.0.s8 %v342
  %v344 = vlaneseq
  %v345 = vshrl.u32 %v344, 7
  %v346 = vsub.s32 %v343, %v345
  %v347 = vrot.slane %v333, %v346
  %v348 = vcombine.low %v340, %v347
  %v349 = vcombine.low %v286, %v287
  %v350 = vcombine.low %v288, %v289
  %v352 = vunpack.c.l.s4 1983009808
  %v353 = vunpack.c.0.s8 %v352
  %v354 = vlaneseq
  %v355 = vshrl.u32 %v354, 7
  %v356 = vsub.s32 %v353, %v355
  %v357 = vrot.slane %v349, %v356
  %v359 = vunpack.c.l.s4 1983009808
  %v360 = vunpack.c.0.s8 %v359
  %v361 = vlaneseq
  %v362 = vshrl.u32 %v361, 7
  %v363 = vsub.s32 %v360, %v362
  %v364 = vrot.slane %v350, %v363
  %v365 = vcombine.low %v357, %v364
  %v384 = vunpack.c.l.b16 %v308
  %v385 = vunpack.c.l.b16 %v309
  %v386 = vunpack.c.l.b16 %v310
  %v387 = vunpack.c.l.b16 %v311
  %v388 = vunpack.c.l.b16 %v312
  %v389 = vunpack.c.l.b16 %v313
  %v390 = vunpack.c.l.b16 %v314
  %v391 = vunpack.c.l.b16 %v315
  %v392 = vunpack.c.l.b16 %v316
  %v393 = vunpack.c.l.b16 %v317
  %v394 = vunpack.c.l.b16 %v318
  %v395 = vunpack.c.l.b16 %v319
  %v396 = vunpack.c.l.b16 %v320
  %v397 = vunpack.c.l.b16 %v321
  %v398 = vunpack.c.l.b16 %v322
  %v399 = vunpack.c.l.b16 %v323
  %v400 = vpack.c.b16 %v385, %v384
  %v401 = vpack.c.b16 %v387, %v386
  %v402 = vpack.c.b16 %v389, %v388
  %v403 = vpack.c.b16 %v391, %v390
  %v404 = vpack.c.b16 %v393, %v392
  %v405 = vpack.c.b16 %v395, %v394
  %v406 = vpack.c.b16 %v397, %v396
  %v407 = vpack.c.b16 %v399, %v398
  %416 = vmatprep.subr.bf16.mxu0 0
  %417 = vmatpush1.bf16.msra.mxu0 %v400
  %418 = vmatprep.subr.bf16.mxu0 0
  %419 = vmatpush1.bf16.msra.mxu0 %v401
  %420 = vmatprep.subr.bf16.mxu0 0
  %421 = vmatpush1.bf16.msra.mxu0 %v402
  %422 = vmatprep.subr.bf16.mxu0 0
  %423 = vmatpush1.bf16.msra.mxu0 %v403
  %424 = vmatprep.subr.bf16.mxu0 0
  %425 = vmatpush1.bf16.msra.mxu0 %v404
  %426 = vmatprep.subr.bf16.mxu0 0
  %427 = vmatpush1.bf16.msra.mxu0 %v405
  %428 = vmatprep.subr.bf16.mxu0 0
  %429 = vmatpush1.bf16.msra.mxu0 %v406
  %430 = vmatprep.subr.bf16.mxu0 0
  %431 = vmatpush1.bf16.msra.mxu0 %v407
  %432 = vmatprep.subr.bf16.mxu0 0
  %433 = vmatpush1.bf16.msra.mxu0 0
  %434 = vmatprep.subr.bf16.mxu0 0
  %435 = vmatpush1.bf16.msra.mxu0 0
  %436 = vmatprep.subr.bf16.mxu0 0
  %437 = vmatpush1.bf16.msra.mxu0 0
  %438 = vmatprep.subr.bf16.mxu0 0
  %439 = vmatpush1.bf16.msra.mxu0 0
  %440 = vmatprep.subr.bf16.mxu0 0
  %441 = vmatpush1.bf16.msra.mxu0 0
  %442 = vmatprep.subr.bf16.mxu0 0
  %443 = vmatpush1.bf16.msra.mxu0 0
  %444 = vmatprep.subr.bf16.mxu0 0
  %445 = vmatpush1.bf16.msra.mxu0 0
  %446 = vmatprep.subr.bf16.mxu0 0
  %447 = vmatpush1.bf16.msra.mxu0 0
  %448 = vmatprep.mubr.bf16.mxu0 0
  %449 = vmatmul.mubr.bf16.gmra.mrb[0].mxu0 %v348
  %v450 = vpop.f32.mrb[0].mxu0
  %v451 = vadd.f32 0.0, %v450
  %v452 = vpop.f32.mrb[0].mxu0
  %v453 = vpop.f32.mrb[0].mxu0
  %v454 = vadd.f32 0.0, %v453
  %v455 = vpop.f32.mrb[0].mxu0
  %456 = vmatprep.mubr.bf16.mxu0 0
  %457 = vmatmul.mubr.bf16.gmra.mrb[0].mxu0 %v365
  %v458 = vpop.f32.mrb[0].mxu0
  %v459 = vadd.f32 0.0, %v458
  %v460 = vpop.f32.mrb[0].mxu0
  %v461 = vpop.f32.mrb[0].mxu0
  %v462 = vadd.f32 0.0, %v461
  %v463 = vpop.f32.mrb[0].mxu0
  %464 = vdwg.mxu0
  %v467 = vcombine.low %v279, %v280
  %v468 = vcombine.low %v281, %v282
  %v470 = vunpack.c.l.s4 1983009808
  %v471 = vunpack.c.0.s8 %v470
  %v472 = vlaneseq
  %v473 = vshrl.u32 %v472, 7
  %v474 = vsub.s32 %v471, %v473
  %v475 = vrot.slane %v467, %v474
  %v477 = vunpack.c.l.s4 1983009808
  %v478 = vunpack.c.0.s8 %v477
  %v479 = vlaneseq
  %v480 = vshrl.u32 %v479, 7
  %v481 = vsub.s32 %v478, %v480
  %v482 = vrot.slane %v468, %v481
  %v483 = vcombine.low %v475, %v482
  %v484 = vcombine.low %v285, %v286
  %v485 = vcombine.low %v287, %v288
  %v487 = vunpack.c.l.s4 1983009808
  %v488 = vunpack.c.0.s8 %v487
  %v489 = vlaneseq
  %v490 = vshrl.u32 %v489, 7
  %v491 = vsub.s32 %v488, %v490
  %v492 = vrot.slane %v484, %v491
  %v494 = vunpack.c.l.s4 1983009808
  %v495 = vunpack.c.0.s8 %v494
  %v496 = vlaneseq
  %v497 = vshrl.u32 %v496, 7
  %v498 = vsub.s32 %v495, %v497
  %v499 = vrot.slane %v485, %v498
  %v500 = vcombine.low %v492, %v499
  %v519 = vunpack.c.l.b16 %v291
  %v520 = vunpack.c.l.b16 %v292
  %v521 = vunpack.c.l.b16 %v293
  %v522 = vunpack.c.l.b16 %v294
  %v523 = vunpack.c.l.b16 %v295
  %v524 = vunpack.c.l.b16 %v296
  %v525 = vunpack.c.l.b16 %v297
  %v526 = vunpack.c.l.b16 %v298
  %v527 = vunpack.c.l.b16 %v299
  %v528 = vunpack.c.l.b16 %v300
  %v529 = vunpack.c.l.b16 %v301
  %v530 = vunpack.c.l.b16 %v302
  %v531 = vunpack.c.l.b16 %v303
  %v532 = vunpack.c.l.b16 %v304
  %v533 = vunpack.c.l.b16 %v305
  %v534 = vunpack.c.l.b16 %v306
  %v535 = vpack.c.b16 %v520, %v519
  %v536 = vpack.c.b16 %v522, %v521
  %v537 = vpack.c.b16 %v524, %v523
  %v538 = vpack.c.b16 %v526, %v525
  %v539 = vpack.c.b16 %v528, %v527
  %v540 = vpack.c.b16 %v530, %v529
  %v541 = vpack.c.b16 %v532, %v531
  %v542 = vpack.c.b16 %v534, %v533
  %551 = vmatprep.subr.bf16.mxu0 0
  %552 = vmatpush1.bf16.msra.mxu0 %v535
  %553 = vmatprep.subr.bf16.mxu0 0
  %554 = vmatpush1.bf16.msra.mxu0 %v536
  %555 = vmatprep.subr.bf16.mxu0 0
  %556 = vmatpush1.bf16.msra.mxu0 %v537
  %557 = vmatprep.subr.bf16.mxu0 0
  %558 = vmatpush1.bf16.msra.mxu0 %v538
  %559 = vmatprep.subr.bf16.mxu0 0
  %560 = vmatpush1.bf16.msra.mxu0 %v539
  %561 = vmatprep.subr.bf16.mxu0 0
  %562 = vmatpush1.bf16.msra.mxu0 %v540
  %563 = vmatprep.subr.bf16.mxu0 0
  %564 = vmatpush1.bf16.msra.mxu0 %v541
  %565 = vmatprep.subr.bf16.mxu0 0
  %566 = vmatpush1.bf16.msra.mxu0 %v542
  %567 = vmatprep.subr.bf16.mxu0 0
  %568 = vmatpush1.bf16.msra.mxu0 0
  %569 = vmatprep.subr.bf16.mxu0 0
  %570 = vmatpush1.bf16.msra.mxu0 0
  %571 = vmatprep.subr.bf16.mxu0 0
  %572 = vmatpush1.bf16.msra.mxu0 0
  %573 = vmatprep.subr.bf16.mxu0 0
  %574 = vmatpush1.bf16.msra.mxu0 0
  %575 = vmatprep.subr.bf16.mxu0 0
  %576 = vmatpush1.bf16.msra.mxu0 0
  %577 = vmatprep.subr.bf16.mxu0 0
  %578 = vmatpush1.bf16.msra.mxu0 0
  %579 = vmatprep.subr.bf16.mxu0 0
  %580 = vmatpush1.bf16.msra.mxu0 0
  %581 = vmatprep.subr.bf16.mxu0 0
  %582 = vmatpush1.bf16.msra.mxu0 0
  %583 = vmatprep.mubr.bf16.mxu0 0
  %584 = vmatmul.mubr.bf16.gmra.mrb[0].mxu0 %v483
  %v585 = vpop.f32.mrb[0].mxu0
  %v586 = vadd.f32 %v451, %v585
  %v587 = vpop.f32.mrb[0].mxu0
  %v588 = vpop.f32.mrb[0].mxu0
  %v589 = vadd.f32 %v454, %v588
  %v590 = vpop.f32.mrb[0].mxu0
  %591 = vmatprep.mubr.bf16.mxu0 0
  %592 = vmatmul.mubr.bf16.gmra.mrb[0].mxu0 %v500
  %v593 = vpop.f32.mrb[0].mxu0
  %v594 = vadd.f32 %v459, %v593
  %v595 = vpop.f32.mrb[0].mxu0
  %v596 = vpop.f32.mrb[0].mxu0
  %v597 = vadd.f32 %v462, %v596
  %v598 = vpop.f32.mrb[0].mxu0
  %599 = vdwg.mxu0
  %s600 = scalar_lea.vmem %s3, 384
  %v601 = vld [vmem:[%s600] sm:$0xf]
  %v602 = vld [vmem:[%s600 + $0x4] sm:$0xf]
  %v603 = vld [vmem:[%s600 + $0x8] sm:$0xf]
  %v604 = vld [vmem:[%s600 + $0xc] sm:$0xf]
  %v605 = vld [vmem:[%s600 + $0x10] sm:$0xf]
  %v606 = vld [vmem:[%s600 + $0x14] sm:$0xf]
  %v607 = vld [vmem:[%s600 + $0x18] sm:$0xf]
  %v608 = vld [vmem:[%s600 + $0x1c] sm:$0xf]
  %v609 = vld [vmem:[%s600 + $0x20] sm:$0xf]
  %v610 = vld [vmem:[%s600 + $0x24] sm:$0xf]
  %v611 = vld [vmem:[%s600 + $0x28] sm:$0xf]
  %v612 = vld [vmem:[%s600 + $0x2c] sm:$0xf]
  %v613 = vld [vmem:[%s600 + $0x30] sm:$0xf]
  %v614 = vld [vmem:[%s600 + $0x34] sm:$0xf]
  %v615 = vld [vmem:[%s600 + $0x38] sm:$0xf]
  %v616 = vld [vmem:[%s600 + $0x3c] sm:$0xf]
  %v619 = vcombine.low %v283, %v284
  %v621 = vunpack.c.l.s4 1983009808
  %v622 = vunpack.c.0.s8 %v621
  %v623 = vlaneseq
  %v624 = vshrl.u32 %v623, 7
  %v625 = vsub.s32 %v622, %v624
  %v626 = vrot.slane %v619, %v625
  %v627 = vcombine.low %v482, %v626
  %v628 = vcombine.low %v289, %v290
  %v630 = vunpack.c.l.s4 1983009808
  %v631 = vunpack.c.0.s8 %v630
  %v632 = vlaneseq
  %v633 = vshrl.u32 %v632, 7
  %v634 = vsub.s32 %v631, %v633
  %v635 = vrot.slane %v628, %v634
  %v636 = vcombine.low %v499, %v635
  %v655 = vunpack.c.l.b16 %v601
  %v656 = vunpack.c.l.b16 %v602
  %v657 = vunpack.c.l.b16 %v603
  %v658 = vunpack.c.l.b16 %v604
  %v659 = vunpack.c.l.b16 %v605
  %v660 = vunpack.c.l.b16 %v606
  %v661 = vunpack.c.l.b16 %v607
  %v662 = vunpack.c.l.b16 %v608
  %v663 = vunpack.c.l.b16 %v609
  %v664 = vunpack.c.l.b16 %v610
  %v665 = vunpack.c.l.b16 %v611
  %v666 = vunpack.c.l.b16 %v612
  %v667 = vunpack.c.l.b16 %v613
  %v668 = vunpack.c.l.b16 %v614
  %v669 = vunpack.c.l.b16 %v615
  %v670 = vunpack.c.l.b16 %v616
  %v671 = vpack.c.b16 %v656, %v655
  %v672 = vpack.c.b16 %v658, %v657
  %v673 = vpack.c.b16 %v660, %v659
  %v674 = vpack.c.b16 %v662, %v661
  %v675 = vpack.c.b16 %v664, %v663
  %v676 = vpack.c.b16 %v666, %v665
  %v677 = vpack.c.b16 %v668, %v667
  %v678 = vpack.c.b16 %v670, %v669
  %687 = vmatprep.subr.bf16.mxu0 0
  %688 = vmatpush1.bf16.msra.mxu0 %v671
  %689 = vmatprep.subr.bf16.mxu0 0
  %690 = vmatpush1.bf16.msra.mxu0 %v672
  %691 = vmatprep.subr.bf16.mxu0 0
  %692 = vmatpush1.bf16.msra.mxu0 %v673
  %693 = vmatprep.subr.bf16.mxu0 0
  %694 = vmatpush1.bf16.msra.mxu0 %v674
  %695 = vmatprep.subr.bf16.mxu0 0
  %696 = vmatpush1.bf16.msra.mxu0 %v675
  %697 = vmatprep.subr.bf16.mxu0 0
  %698 = vmatpush1.bf16.msra.mxu0 %v676
  %699 = vmatprep.subr.bf16.mxu0 0
  %700 = vmatpush1.bf16.msra.mxu0 %v677
  %701 = vmatprep.subr.bf16.mxu0 0
  %702 = vmatpush1.bf16.msra.mxu0 %v678
  %703 = vmatprep.subr.bf16.mxu0 0
  %704 = vmatpush1.bf16.msra.mxu0 0
  %705 = vmatprep.subr.bf16.mxu0 0
  %706 = vmatpush1.bf16.msra.mxu0 0
  %707 = vmatprep.subr.bf16.mxu0 0
  %708 = vmatpush1.bf16.msra.mxu0 0
  %709 = vmatprep.subr.bf16.mxu0 0
  %710 = vmatpush1.bf16.msra.mxu0 0
  %711 = vmatprep.subr.bf16.mxu0 0
  %712 = vmatpush1.bf16.msra.mxu0 0
  %713 = vmatprep.subr.bf16.mxu0 0
  %714 = vmatpush1.bf16.msra.mxu0 0
  %715 = vmatprep.subr.bf16.mxu0 0
  %716 = vmatpush1.bf16.msra.mxu0 0
  %717 = vmatprep.subr.bf16.mxu0 0
  %718 = vmatpush1.bf16.msra.mxu0 0
  %719 = vmatprep.mubr.bf16.mxu0 0
  %720 = vmatmul.mubr.bf16.gmra.mrb[0].mxu0 %v627
  %v721 = vpop.f32.mrb[0].mxu0
  %v722 = vadd.f32 0.0, %v721
  %v723 = vpop.f32.mrb[0].mxu0
  %v724 = vpop.f32.mrb[0].mxu0
  %v725 = vadd.f32 0.0, %v724
  %v726 = vpop.f32.mrb[0].mxu0
  %727 = vmatprep.mubr.bf16.mxu0 0
  %728 = vmatmul.mubr.bf16.gmra.mrb[0].mxu0 %v636
  %v729 = vpop.f32.mrb[0].mxu0
  %v730 = vadd.f32 0.0, %v729
  %v731 = vpop.f32.mrb[0].mxu0
  %v732 = vpop.f32.mrb[0].mxu0
  %v733 = vadd.f32 0.0, %v732
  %v734 = vpop.f32.mrb[0].mxu0
  %735 = vdwg.mxu0
  %v736 = vadd.f32 %v586, %v722
  %v737 = vadd.f32 %v589, %v725
  %v738 = vadd.f32 %v594, %v730
  %v739 = vadd.f32 %v597, %v733
  %v740 = vld [vmem:[#allocation2] sm:$0x7]
  %v741 = vld [vmem:[#allocation2 + $0x4] sm:$0x7]
  %v742 = vld [vmem:[#allocation2 + $0x8] sm:$0x7]
  %v743 = vld [vmem:[#allocation2 + $0xc] sm:$0x7]
  %v744 = vld [vmem:[#allocation2 + $0x10] sm:$0x7]
  %v745 = vld [vmem:[#allocation2 + $0x14] sm:$0x7]
  %v746 = vld [vmem:[#allocation2 + $0x18] sm:$0x7]
  %v747 = vld [vmem:[#allocation2 + $0x1c] sm:$0x7]
  %v748 = vld [vmem:[#allocation2 + $0x20] sm:$0x7]
  %v749 = vld [vmem:[#allocation2 + $0x24] sm:$0x7]
  %v750 = vld [vmem:[#allocation2 + $0x28] sm:$0x7]
  %v751 = vld [vmem:[#allocation2 + $0x2c] sm:$0x7]
  %v765 = vunpack.c.l.s4 1983009808
  %v766 = vunpack.c.0.s8 %v765
  %v767 = vlaneseq
  %v768 = vshrl.u32 %v767, 7
  %v769 = vsub.s32 %v766, %v768
  %v770 = vrot.slane %v740, %v769
  %v771 = vcombine.high %v770, %v770
  %v773 = vunpack.c.l.s4 1983009808
  %v774 = vunpack.c.0.s8 %v773
  %v775 = vlaneseq
  %v776 = vshrl.u32 %v775, 7
  %v777 = vsub.s32 %v774, %v776
  %v778 = vrot.slane %v741, %v777
  %v779 = vcombine.high %v778, %v778
  %v781 = vunpack.c.l.s4 1983009808
  %v782 = vunpack.c.0.s8 %v781
  %v783 = vlaneseq
  %v784 = vshrl.u32 %v783, 7
  %v785 = vsub.s32 %v782, %v784
  %v786 = vrot.slane %v742, %v785
  %v787 = vcombine.high %v786, %v786
  %v789 = vunpack.c.l.s4 1983009808
  %v790 = vunpack.c.0.s8 %v789
  %v791 = vlaneseq
  %v792 = vshrl.u32 %v791, 7
  %v793 = vsub.s32 %v790, %v792
  %v794 = vrot.slane %v743, %v793
  %v795 = vcombine.high %v794, %v794
  %v797 = vunpack.c.l.s4 1983009808
  %v798 = vunpack.c.0.s8 %v797
  %v799 = vlaneseq
  %v800 = vshrl.u32 %v799, 7
  %v801 = vsub.s32 %v798, %v800
  %v802 = vrot.slane %v744, %v801
  %v803 = vcombine.high %v802, %v802
  %v805 = vunpack.c.l.s4 1983009808
  %v806 = vunpack.c.0.s8 %v805
  %v807 = vlaneseq
  %v808 = vshrl.u32 %v807, 7
  %v809 = vsub.s32 %v806, %v808
  %v810 = vrot.slane %v745, %v809
  %v811 = vcombine.high %v810, %v810
  %v813 = vunpack.c.l.s4 1983009808
  %v814 = vunpack.c.0.s8 %v813
  %v815 = vlaneseq
  %v816 = vshrl.u32 %v815, 7
  %v817 = vsub.s32 %v814, %v816
  %v818 = vrot.slane %v746, %v817
  %v819 = vcombine.high %v818, %v818
  %v821 = vunpack.c.l.s4 1983009808
  %v822 = vunpack.c.0.s8 %v821
  %v823 = vlaneseq
  %v824 = vshrl.u32 %v823, 7
  %v825 = vsub.s32 %v822, %v824
  %v826 = vrot.slane %v747, %v825
  %v827 = vcombine.high %v826, %v826
  %v829 = vunpack.c.l.s4 1983009808
  %v830 = vunpack.c.0.s8 %v829
  %v831 = vlaneseq
  %v832 = vshrl.u32 %v831, 7
  %v833 = vsub.s32 %v830, %v832
  %v834 = vrot.slane %v748, %v833
  %v835 = vcombine.high %v834, %v834
  %v837 = vunpack.c.l.s4 1983009808
  %v838 = vunpack.c.0.s8 %v837
  %v839 = vlaneseq
  %v840 = vshrl.u32 %v839, 7
  %v841 = vsub.s32 %v838, %v840
  %v842 = vrot.slane %v749, %v841
  %v843 = vcombine.high %v842, %v842
  %v845 = vunpack.c.l.s4 1983009808
  %v846 = vunpack.c.0.s8 %v845
  %v847 = vlaneseq
  %v848 = vshrl.u32 %v847, 7
  %v849 = vsub.s32 %v846, %v848
  %v850 = vrot.slane %v750, %v849
  %v851 = vcombine.high %v850, %v850
  %v853 = vunpack.c.l.s4 1983009808
  %v854 = vunpack.c.0.s8 %v853
  %v855 = vlaneseq
  %v856 = vshrl.u32 %v855, 7
  %v857 = vsub.s32 %v854, %v856
  %v858 = vrot.slane %v751, %v857
  %v859 = vcombine.high %v858, %v858
  %vm860 = vsmask.f32 1280
  %vm861 = vsmask.f32 3336
  %vm862 = vmor %vm860, %vm861
  %vm863 = vsmask.f32 5392
  %vm864 = vmor %vm862, %vm863
  %vm865 = vsmask.f32 7448
  %vm866 = vmor %vm864, %vm865
  %v868 = vshrl.u32 %v770, 16
  %v870 = vrot.slane %v868, 6
  %v871 = vshll.u32 %v770, 16
  %v873 = vrot.slane %v871, 7
  %v874 = vor.u32 %v870, %v873
  %v875 = vrot.slane %v874, 2
  %v877 = vshll.u32 %v771, 16
  %v879 = vrot.slane %v877, 7
  %v880 = vsel %vm866, %v875, %v879
  %v882 = vshrl.u32 %v778, 16
  %v884 = vrot.slane %v882, 6
  %v885 = vshll.u32 %v778, 16
  %v887 = vrot.slane %v885, 7
  %v888 = vor.u32 %v884, %v887
  %v889 = vrot.slane %v888, 2
  %v891 = vshll.u32 %v779, 16
  %v893 = vrot.slane %v891, 7
  %v894 = vsel %vm866, %v889, %v893
  %v896 = vshrl.u32 %v786, 16
  %v898 = vrot.slane %v896, 6
  %v899 = vshll.u32 %v786, 16
  %v901 = vrot.slane %v899, 7
  %v902 = vor.u32 %v898, %v901
  %v903 = vrot.slane %v902, 2
  %v905 = vshll.u32 %v787, 16
  %v907 = vrot.slane %v905, 7
  %v908 = vsel %vm866, %v903, %v907
  %v910 = vshrl.u32 %v794, 16
  %v912 = vrot.slane %v910, 6
  %v913 = vshll.u32 %v794, 16
  %v915 = vrot.slane %v913, 7
  %v916 = vor.u32 %v912, %v915
  %v917 = vrot.slane %v916, 2
  %v919 = vshll.u32 %v795, 16
  %v921 = vrot.slane %v919, 7
  %v922 = vsel %vm866, %v917, %v921
  %v924 = vshrl.u32 %v802, 16
  %v926 = vrot.slane %v924, 6
  %v927 = vshll.u32 %v802, 16
  %v929 = vrot.slane %v927, 7
  %v930 = vor.u32 %v926, %v929
  %v931 = vrot.slane %v930, 2
  %v933 = vshll.u32 %v803, 16
  %v935 = vrot.slane %v933, 7
  %v936 = vsel %vm866, %v931, %v935
  %v938 = vshrl.u32 %v810, 16
  %v940 = vrot.slane %v938, 6
  %v941 = vshll.u32 %v810, 16
  %v943 = vrot.slane %v941, 7
  %v944 = vor.u32 %v940, %v943
  %v945 = vrot.slane %v944, 2
  %v947 = vshll.u32 %v811, 16
  %v949 = vrot.slane %v947, 7
  %v950 = vsel %vm866, %v945, %v949
  %v952 = vshrl.u32 %v818, 16
  %v954 = vrot.slane %v952, 6
  %v955 = vshll.u32 %v818, 16
  %v957 = vrot.slane %v955, 7
  %v958 = vor.u32 %v954, %v957
  %v959 = vrot.slane %v958, 2
  %v961 = vshll.u32 %v819, 16
  %v963 = vrot.slane %v961, 7
  %v964 = vsel %vm866, %v959, %v963
  %v966 = vshrl.u32 %v826, 16
  %v968 = vrot.slane %v966, 6
  %v969 = vshll.u32 %v826, 16
  %v971 = vrot.slane %v969, 7
  %v972 = vor.u32 %v968, %v971
  %v973 = vrot.slane %v972, 2
  %v975 = vshll.u32 %v827, 16
  %v977 = vrot.slane %v975, 7
  %v978 = vsel %vm866, %v973, %v977
  %v980 = vshrl.u32 %v834, 16
  %v982 = vrot.slane %v980, 6
  %v983 = vshll.u32 %v834, 16
  %v985 = vrot.slane %v983, 7
  %v986 = vor.u32 %v982, %v985
  %v987 = vrot.slane %v986, 2
  %v989 = vshll.u32 %v835, 16
  %v991 = vrot.slane %v989, 7
  %v992 = vsel %vm866, %v987, %v991
  %v994 = vshrl.u32 %v842, 16
  %v996 = vrot.slane %v994, 6
  %v997 = vshll.u32 %v842, 16
  %v999 = vrot.slane %v997, 7
  %v1000 = vor.u32 %v996, %v999
  %v1001 = vrot.slane %v1000, 2
  %v1003 = vshll.u32 %v843, 16
  %v1005 = vrot.slane %v1003, 7
  %v1006 = vsel %vm866, %v1001, %v1005
  %v1008 = vshrl.u32 %v850, 16
  %v1010 = vrot.slane %v1008, 6
  %v1011 = vshll.u32 %v850, 16
  %v1013 = vrot.slane %v1011, 7
  %v1014 = vor.u32 %v1010, %v1013
  %v1015 = vrot.slane %v1014, 2
  %v1017 = vshll.u32 %v851, 16
  %v1019 = vrot.slane %v1017, 7
  %v1020 = vsel %vm866, %v1015, %v1019
  %v1022 = vshrl.u32 %v858, 16
  %v1024 = vrot.slane %v1022, 6
  %v1025 = vshll.u32 %v858, 16
  %v1027 = vrot.slane %v1025, 7
  %v1028 = vor.u32 %v1024, %v1027
  %v1029 = vrot.slane %v1028, 2
  %v1031 = vshll.u32 %v859, 16
  %v1033 = vrot.slane %v1031, 7
  %v1034 = vsel %vm866, %v1029, %v1033
  %s1035 = scalar_lea.vmem %s3, 64
  %v1036 = vld [vmem:[%s1035] sm:$0xf]
  %v1037 = vld [vmem:[%s1035 + $0x4] sm:$0xf]
  %v1038 = vld [vmem:[%s1035 + $0x8] sm:$0xf]
  %v1039 = vld [vmem:[%s1035 + $0xc] sm:$0xf]
  %v1040 = vld [vmem:[%s1035 + $0x10] sm:$0xf]
  %v1041 = vld [vmem:[%s1035 + $0x14] sm:$0xf]
  %v1042 = vld [vmem:[%s1035 + $0x18] sm:$0xf]
  %v1043 = vld [vmem:[%s1035 + $0x1c] sm:$0xf]
  %v1044 = vld [vmem:[%s1035 + $0x20] sm:$0xf]
  %v1045 = vld [vmem:[%s1035 + $0x24] sm:$0xf]
  %v1046 = vld [vmem:[%s1035 + $0x28] sm:$0xf]
  %v1047 = vld [vmem:[%s1035 + $0x2c] sm:$0xf]
  %v1048 = vld [vmem:[%s1035 + $0x30] sm:$0xf]
  %v1049 = vld [vmem:[%s1035 + $0x34] sm:$0xf]
  %v1050 = vld [vmem:[%s1035 + $0x38] sm:$0xf]
  %v1051 = vld [vmem:[%s1035 + $0x3c] sm:$0xf]
  %v1052 = vcombine.low %v880, %v894
  %v1053 = vcombine.low %v908, %v922
  %v1055 = vunpack.c.l.s4 1983009808
  %v1056 = vunpack.c.0.s8 %v1055
  %v1057 = vlaneseq
  %v1058 = vshrl.u32 %v1057, 7
  %v1059 = vsub.s32 %v1056, %v1058
  %v1060 = vrot.slane %v1052, %v1059
  %v1062 = vunpack.c.l.s4 1983009808
  %v1063 = vunpack.c.0.s8 %v1062
  %v1064 = vlaneseq
  %v1065 = vshrl.u32 %v1064, 7
  %v1066 = vsub.s32 %v1063, %v1065
  %v1067 = vrot.slane %v1053, %v1066
  %v1068 = vcombine.low %v1060, %v1067
  %v1069 = vcombine.low %v964, %v978
  %v1070 = vcombine.low %v992, %v1006
  %v1072 = vunpack.c.l.s4 1983009808
  %v1073 = vunpack.c.0.s8 %v1072
  %v1074 = vlaneseq
  %v1075 = vshrl.u32 %v1074, 7
  %v1076 = vsub.s32 %v1073, %v1075
  %v1077 = vrot.slane %v1069, %v1076
  %v1079 = vunpack.c.l.s4 1983009808
  %v1080 = vunpack.c.0.s8 %v1079
  %v1081 = vlaneseq
  %v1082 = vshrl.u32 %v1081, 7
  %v1083 = vsub.s32 %v1080, %v1082
  %v1084 = vrot.slane %v1070, %v1083
  %v1085 = vcombine.low %v1077, %v1084
  %v1104 = vunpack.c.l.b16 %v1036
  %v1105 = vunpack.c.l.b16 %v1037
  %v1106 = vunpack.c.l.b16 %v1038
  %v1107 = vunpack.c.l.b16 %v1039
  %v1108 = vunpack.c.l.b16 %v1040
  %v1109 = vunpack.c.l.b16 %v1041
  %v1110 = vunpack.c.l.b16 %v1042
  %v1111 = vunpack.c.l.b16 %v1043
  %v1112 = vunpack.c.l.b16 %v1044
  %v1113 = vunpack.c.l.b16 %v1045
  %v1114 = vunpack.c.l.b16 %v1046
  %v1115 = vunpack.c.l.b16 %v1047
  %v1116 = vunpack.c.l.b16 %v1048
  %v1117 = vunpack.c.l.b16 %v1049
  %v1118 = vunpack.c.l.b16 %v1050
  %v1119 = vunpack.c.l.b16 %v1051
  %v1120 = vpack.c.b16 %v1105, %v1104
  %v1121 = vpack.c.b16 %v1107, %v1106
  %v1122 = vpack.c.b16 %v1109, %v1108
  %v1123 = vpack.c.b16 %v1111, %v1110
  %v1124 = vpack.c.b16 %v1113, %v1112
  %v1125 = vpack.c.b16 %v1115, %v1114
  %v1126 = vpack.c.b16 %v1117, %v1116
  %v1127 = vpack.c.b16 %v1119, %v1118
  %1136 = vmatprep.subr.bf16.mxu0 0
  %1137 = vmatpush1.bf16.msra.mxu0 %v1120
  %1138 = vmatprep.subr.bf16.mxu0 0
  %1139 = vmatpush1.bf16.msra.mxu0 %v1121
  %1140 = vmatprep.subr.bf16.mxu0 0
  %1141 = vmatpush1.bf16.msra.mxu0 %v1122
  %1142 = vmatprep.subr.bf16.mxu0 0
  %1143 = vmatpush1.bf16.msra.mxu0 %v1123
  %1144 = vmatprep.subr.bf16.mxu0 0
  %1145 = vmatpush1.bf16.msra.mxu0 %v1124
  %1146 = vmatprep.subr.bf16.mxu0 0
  %1147 = vmatpush1.bf16.msra.mxu0 %v1125
  %1148 = vmatprep.subr.bf16.mxu0 0
  %1149 = vmatpush1.bf16.msra.mxu0 %v1126
  %1150 = vmatprep.subr.bf16.mxu0 0
  %1151 = vmatpush1.bf16.msra.mxu0 %v1127
  %1152 = vmatprep.subr.bf16.mxu0 0
  %1153 = vmatpush1.bf16.msra.mxu0 0
  %1154 = vmatprep.subr.bf16.mxu0 0
  %1155 = vmatpush1.bf16.msra.mxu0 0
  %1156 = vmatprep.subr.bf16.mxu0 0
  %1157 = vmatpush1.bf16.msra.mxu0 0
  %1158 = vmatprep.subr.bf16.mxu0 0
  %1159 = vmatpush1.bf16.msra.mxu0 0
  %1160 = vmatprep.subr.bf16.mxu0 0
  %1161 = vmatpush1.bf16.msra.mxu0 0
  %1162 = vmatprep.subr.bf16.mxu0 0
  %1163 = vmatpush1.bf16.msra.mxu0 0
  %1164 = vmatprep.subr.bf16.mxu0 0
  %1165 = vmatpush1.bf16.msra.mxu0 0
  %1166 = vmatprep.subr.bf16.mxu0 0
  %1167 = vmatpush1.bf16.msra.mxu0 0
  %1168 = vmatprep.mubr.bf16.mxu0 0
  %1169 = vmatmul.mubr.bf16.gmra.mrb[0].mxu0 %v1068
  %v1170 = vpop.f32.mrb[0].mxu0
  %v1171 = vadd.f32 0.0, %v1170
  %v1172 = vpop.f32.mrb[0].mxu0
  %v1173 = vpop.f32.mrb[0].mxu0
  %v1174 = vadd.f32 0.0, %v1173
  %v1175 = vpop.f32.mrb[0].mxu0
  %1176 = vmatprep.mubr.bf16.mxu0 0
  %1177 = vmatmul.mubr.bf16.gmra.mrb[0].mxu0 %v1085
  %v1178 = vpop.f32.mrb[0].mxu0
  %v1179 = vadd.f32 0.0, %v1178
  %v1180 = vpop.f32.mrb[0].mxu0
  %v1181 = vpop.f32.mrb[0].mxu0
  %v1182 = vadd.f32 0.0, %v1181
  %v1183 = vpop.f32.mrb[0].mxu0
  %1184 = vdwg.mxu0
  %v1185 = vadd.f32 %v736, %v1171
  %v1186 = vadd.f32 %v737, %v1174
  %v1187 = vadd.f32 %v738, %v1179
  %v1188 = vadd.f32 %v739, %v1182
  %s1189 = scalar_lea.vmem %s3, 256
  %v1190 = vld [vmem:[%s1189] sm:$0xf]
  %v1191 = vld [vmem:[%s1189 + $0x4] sm:$0xf]
  %v1192 = vld [vmem:[%s1189 + $0x8] sm:$0xf]
  %v1193 = vld [vmem:[%s1189 + $0xc] sm:$0xf]
  %v1194 = vld [vmem:[%s1189 + $0x10] sm:$0xf]
  %v1195 = vld [vmem:[%s1189 + $0x14] sm:$0xf]
  %v1196 = vld [vmem:[%s1189 + $0x18] sm:$0xf]
  %v1197 = vld [vmem:[%s1189 + $0x1c] sm:$0xf]
  %v1198 = vld [vmem:[%s1189 + $0x20] sm:$0xf]
  %v1199 = vld [vmem:[%s1189 + $0x24] sm:$0xf]
  %v1200 = vld [vmem:[%s1189 + $0x28] sm:$0xf]
  %v1201 = vld [vmem:[%s1189 + $0x2c] sm:$0xf]
  %v1202 = vld [vmem:[%s1189 + $0x30] sm:$0xf]
  %v1203 = vld [vmem:[%s1189 + $0x34] sm:$0xf]
  %v1204 = vld [vmem:[%s1189 + $0x38] sm:$0xf]
  %v1205 = vld [vmem:[%s1189 + $0x3c] sm:$0xf]
  %v1206 = vcombine.low %v894, %v908
  %v1207 = vcombine.low %v922, %v936
  %v1209 = vunpack.c.l.s4 1983009808
  %v1210 = vunpack.c.0.s8 %v1209
  %v1211 = vlaneseq
  %v1212 = vshrl.u32 %v1211, 7
  %v1213 = vsub.s32 %v1210, %v1212
  %v1214 = vrot.slane %v1206, %v1213
  %v1216 = vunpack.c.l.s4 1983009808
  %v1217 = vunpack.c.0.s8 %v1216
  %v1218 = vlaneseq
  %v1219 = vshrl.u32 %v1218, 7
  %v1220 = vsub.s32 %v1217, %v1219
  %v1221 = vrot.slane %v1207, %v1220
  %v1222 = vcombine.low %v1214, %v1221
  %v1223 = vcombine.low %v978, %v992
  %v1224 = vcombine.low %v1006, %v1020
  %v1226 = vunpack.c.l.s4 1983009808
  %v1227 = vunpack.c.0.s8 %v1226
  %v1228 = vlaneseq
  %v1229 = vshrl.u32 %v1228, 7
  %v1230 = vsub.s32 %v1227, %v1229
  %v1231 = vrot.slane %v1223, %v1230
  %v1233 = vunpack.c.l.s4 1983009808
  %v1234 = vunpack.c.0.s8 %v1233
  %v1235 = vlaneseq
  %v1236 = vshrl.u32 %v1235, 7
  %v1237 = vsub.s32 %v1234, %v1236
  %v1238 = vrot.slane %v1224, %v1237
  %v1239 = vcombine.low %v1231, %v1238
  %v1258 = vunpack.c.l.b16 %v1190
  %v1259 = vunpack.c.l.b16 %v1191
  %v1260 = vunpack.c.l.b16 %v1192
  %v1261 = vunpack.c.l.b16 %v1193
  %v1262 = vunpack.c.l.b16 %v1194
  %v1263 = vunpack.c.l.b16 %v1195
  %v1264 = vunpack.c.l.b16 %v1196
  %v1265 = vunpack.c.l.b16 %v1197
  %v1266 = vunpack.c.l.b16 %v1198
  %v1267 = vunpack.c.l.b16 %v1199
  %v1268 = vunpack.c.l.b16 %v1200
  %v1269 = vunpack.c.l.b16 %v1201
  %v1270 = vunpack.c.l.b16 %v1202
  %v1271 = vunpack.c.l.b16 %v1203
  %v1272 = vunpack.c.l.b16 %v1204
  %v1273 = vunpack.c.l.b16 %v1205
  %v1274 = vpack.c.b16 %v1259, %v1258
  %v1275 = vpack.c.b16 %v1261, %v1260
  %v1276 = vpack.c.b16 %v1263, %v1262
  %v1277 = vpack.c.b16 %v1265, %v1264
  %v1278 = vpack.c.b16 %v1267, %v1266
  %v1279 = vpack.c.b16 %v1269, %v1268
  %v1280 = vpack.c.b16 %v1271, %v1270
  %v1281 = vpack.c.b16 %v1273, %v1272
  %1290 = vmatprep.subr.bf16.mxu0 0
  %1291 = vmatpush1.bf16.msra.mxu0 %v1274
  %1292 = vmatprep.subr.bf16.mxu0 0
  %1293 = vmatpush1.bf16.msra.mxu0 %v1275
  %1294 = vmatprep.subr.bf16.mxu0 0
  %1295 = vmatpush1.bf16.msra.mxu0 %v1276
  %1296 = vmatprep.subr.bf16.mxu0 0
  %1297 = vmatpush1.bf16.msra.mxu0 %v1277
  %1298 = vmatprep.subr.bf16.mxu0 0
  %1299 = vmatpush1.bf16.msra.mxu0 %v1278
  %1300 = vmatprep.subr.bf16.mxu0 0
  %1301 = vmatpush1.bf16.msra.mxu0 %v1279
  %1302 = vmatprep.subr.bf16.mxu0 0
  %1303 = vmatpush1.bf16.msra.mxu0 %v1280
  %1304 = vmatprep.subr.bf16.mxu0 0
  %1305 = vmatpush1.bf16.msra.mxu0 %v1281
  %1306 = vmatprep.subr.bf16.mxu0 0
  %1307 = vmatpush1.bf16.msra.mxu0 0
  %1308 = vmatprep.subr.bf16.mxu0 0
  %1309 = vmatpush1.bf16.msra.mxu0 0
  %1310 = vmatprep.subr.bf16.mxu0 0
  %1311 = vmatpush1.bf16.msra.mxu0 0
  %1312 = vmatprep.subr.bf16.mxu0 0
  %1313 = vmatpush1.bf16.msra.mxu0 0
  %1314 = vmatprep.subr.bf16.mxu0 0
  %1315 = vmatpush1.bf16.msra.mxu0 0
  %1316 = vmatprep.subr.bf16.mxu0 0
  %1317 = vmatpush1.bf16.msra.mxu0 0
  %1318 = vmatprep.subr.bf16.mxu0 0
  %1319 = vmatpush1.bf16.msra.mxu0 0
  %1320 = vmatprep.subr.bf16.mxu0 0
  %1321 = vmatpush1.bf16.msra.mxu0 0
  %1322 = vmatprep.mubr.bf16.mxu0 0
  %1323 = vmatmul.mubr.bf16.gmra.mrb[0].mxu0 %v1222
  %v1324 = vpop.f32.mrb[0].mxu0
  %v1325 = vadd.f32 0.0, %v1324
  %v1326 = vpop.f32.mrb[0].mxu0
  %v1327 = vpop.f32.mrb[0].mxu0
  %v1328 = vadd.f32 0.0, %v1327
  %v1329 = vpop.f32.mrb[0].mxu0
  %1330 = vmatprep.mubr.bf16.mxu0 0
  %1331 = vmatmul.mubr.bf16.gmra.mrb[0].mxu0 %v1239
  %v1332 = vpop.f32.mrb[0].mxu0
  %v1333 = vadd.f32 0.0, %v1332
  %v1334 = vpop.f32.mrb[0].mxu0
  %v1335 = vpop.f32.mrb[0].mxu0
  %v1336 = vadd.f32 0.0, %v1335
  %v1337 = vpop.f32.mrb[0].mxu0
  %1338 = vdwg.mxu0
  %v1339 = vadd.f32 %v1185, %v1325
  %v1340 = vadd.f32 %v1186, %v1328
  %v1341 = vadd.f32 %v1187, %v1333
  %v1342 = vadd.f32 %v1188, %v1336
  %s1343 = scalar_lea.vmem %s3, 448
  %v1344 = vld [vmem:[%s1343] sm:$0xf]
  %v1345 = vld [vmem:[%s1343 + $0x4] sm:$0xf]
  %v1346 = vld [vmem:[%s1343 + $0x8] sm:$0xf]
  %v1347 = vld [vmem:[%s1343 + $0xc] sm:$0xf]
  %v1348 = vld [vmem:[%s1343 + $0x10] sm:$0xf]
  %v1349 = vld [vmem:[%s1343 + $0x14] sm:$0xf]
  %v1350 = vld [vmem:[%s1343 + $0x18] sm:$0xf]
  %v1351 = vld [vmem:[%s1343 + $0x1c] sm:$0xf]
  %v1352 = vld [vmem:[%s1343 + $0x20] sm:$0xf]
  %v1353 = vld [vmem:[%s1343 + $0x24] sm:$0xf]
  %v1354 = vld [vmem:[%s1343 + $0x28] sm:$0xf]
  %v1355 = vld [vmem:[%s1343 + $0x2c] sm:$0xf]
  %v1356 = vld [vmem:[%s1343 + $0x30] sm:$0xf]
  %v1357 = vld [vmem:[%s1343 + $0x34] sm:$0xf]
  %v1358 = vld [vmem:[%s1343 + $0x38] sm:$0xf]
  %v1359 = vld [vmem:[%s1343 + $0x3c] sm:$0xf]
  %v1360 = vcombine.low %v936, %v950
  %v1362 = vunpack.c.l.s4 1983009808
  %v1363 = vunpack.c.0.s8 %v1362
  %v1364 = vlaneseq
  %v1365 = vshrl.u32 %v1364, 7
  %v1366 = vsub.s32 %v1363, %v1365
  %v1367 = vrot.slane %v1360, %v1366
  %v1368 = vcombine.low %v1067, %v1367
  %v1369 = vcombine.low %v1020, %v1034
  %v1371 = vunpack.c.l.s4 1983009808
  %v1372 = vunpack.c.0.s8 %v1371
  %v1373 = vlaneseq
  %v1374 = vshrl.u32 %v1373, 7
  %v1375 = vsub.s32 %v1372, %v1374
  %v1376 = vrot.slane %v1369, %v1375
  %v1377 = vcombine.low %v1084, %v1376
  %v1396 = vunpack.c.l.b16 %v1344
  %v1397 = vunpack.c.l.b16 %v1345
  %v1398 = vunpack.c.l.b16 %v1346
  %v1399 = vunpack.c.l.b16 %v1347
  %v1400 = vunpack.c.l.b16 %v1348
  %v1401 = vunpack.c.l.b16 %v1349
  %v1402 = vunpack.c.l.b16 %v1350
  %v1403 = vunpack.c.l.b16 %v1351
  %v1404 = vunpack.c.l.b16 %v1352
  %v1405 = vunpack.c.l.b16 %v1353
  %v1406 = vunpack.c.l.b16 %v1354
  %v1407 = vunpack.c.l.b16 %v1355
  %v1408 = vunpack.c.l.b16 %v1356
  %v1409 = vunpack.c.l.b16 %v1357
  %v1410 = vunpack.c.l.b16 %v1358
  %v1411 = vunpack.c.l.b16 %v1359
  %v1412 = vpack.c.b16 %v1397, %v1396
  %v1413 = vpack.c.b16 %v1399, %v1398
  %v1414 = vpack.c.b16 %v1401, %v1400
  %v1415 = vpack.c.b16 %v1403, %v1402
  %v1416 = vpack.c.b16 %v1405, %v1404
  %v1417 = vpack.c.b16 %v1407, %v1406
  %v1418 = vpack.c.b16 %v1409, %v1408
  %v1419 = vpack.c.b16 %v1411, %v1410
  %1428 = vmatprep.subr.bf16.mxu0 0
  %1429 = vmatpush1.bf16.msra.mxu0 %v1412
  %1430 = vmatprep.subr.bf16.mxu0 0
  %1431 = vmatpush1.bf16.msra.mxu0 %v1413
  %1432 = vmatprep.subr.bf16.mxu0 0
  %1433 = vmatpush1.bf16.msra.mxu0 %v1414
  %1434 = vmatprep.subr.bf16.mxu0 0
  %1435 = vmatpush1.bf16.msra.mxu0 %v1415
  %1436 = vmatprep.subr.bf16.mxu0 0
  %1437 = vmatpush1.bf16.msra.mxu0 %v1416
  %1438 = vmatprep.subr.bf16.mxu0 0
  %1439 = vmatpush1.bf16.msra.mxu0 %v1417
  %1440 = vmatprep.subr.bf16.mxu0 0
  %1441 = vmatpush1.bf16.msra.mxu0 %v1418
  %1442 = vmatprep.subr.bf16.mxu0 0
  %1443 = vmatpush1.bf16.msra.mxu0 %v1419
  %1444 = vmatprep.subr.bf16.mxu0 0
  %1445 = vmatpush1.bf16.msra.mxu0 0
  %1446 = vmatprep.subr.bf16.mxu0 0
  %1447 = vmatpush1.bf16.msra.mxu0 0
  %1448 = vmatprep.subr.bf16.mxu0 0
  %1449 = vmatpush1.bf16.msra.mxu0 0
  %1450 = vmatprep.subr.bf16.mxu0 0
  %1451 = vmatpush1.bf16.msra.mxu0 0
  %1452 = vmatprep.subr.bf16.mxu0 0
  %1453 = vmatpush1.bf16.msra.mxu0 0
  %1454 = vmatprep.subr.bf16.mxu0 0
  %1455 = vmatpush1.bf16.msra.mxu0 0
  %1456 = vmatprep.subr.bf16.mxu0 0
  %1457 = vmatpush1.bf16.msra.mxu0 0
  %1458 = vmatprep.subr.bf16.mxu0 0
  %1459 = vmatpush1.bf16.msra.mxu0 0
  %1460 = vmatprep.mubr.bf16.mxu0 0
  %1461 = vmatmul.mubr.bf16.gmra.mrb[0].mxu0 %v1368
  %v1462 = vpop.f32.mrb[0].mxu0
  %v1463 = vadd.f32 0.0, %v1462
  %v1464 = vpop.f32.mrb[0].mxu0
  %v1465 = vpop.f32.mrb[0].mxu0
  %v1466 = vadd.f32 0.0, %v1465
  %v1467 = vpop.f32.mrb[0].mxu0
  %1468 = vmatprep.mubr.bf16.mxu0 0
  %1469 = vmatmul.mubr.bf16.gmra.mrb[0].mxu0 %v1377
  %v1470 = vpop.f32.mrb[0].mxu0
  %v1471 = vadd.f32 0.0, %v1470
  %v1472 = vpop.f32.mrb[0].mxu0
  %v1473 = vpop.f32.mrb[0].mxu0
  %v1474 = vadd.f32 0.0, %v1473
  %v1475 = vpop.f32.mrb[0].mxu0
  %1476 = vdwg.mxu0
  %v1477 = vadd.f32 %v1339, %v1463
  %v1478 = vadd.f32 %v1340, %v1466
  %v1479 = vadd.f32 %v1341, %v1471
  %v1480 = vadd.f32 %v1342, %v1474
  %v1481 = vld [vmem:[#allocation2] sm:$0x6]
  %v1482 = vld [vmem:[#allocation2 + $0x4] sm:$0x6]
  %v1483 = vld [vmem:[#allocation2 + $0x8] sm:$0x6]
  %v1484 = vld [vmem:[#allocation2 + $0xc] sm:$0x6]
  %v1485 = vld [vmem:[#allocation2 + $0x10] sm:$0x6]
  %v1486 = vld [vmem:[#allocation2 + $0x14] sm:$0x6]
  %v1487 = vld [vmem:[#allocation2 + $0x18] sm:$0x6]
  %v1488 = vld [vmem:[#allocation2 + $0x1c] sm:$0x6]
  %v1489 = vld [vmem:[#allocation2 + $0x20] sm:$0x6]
  %v1490 = vld [vmem:[#allocation2 + $0x24] sm:$0x6]
  %v1491 = vld [vmem:[#allocation2 + $0x28] sm:$0x6]
  %v1492 = vld [vmem:[#allocation2 + $0x2c] sm:$0x6]
  %v1506 = vunpack.c.l.s4 1983009808
  %v1507 = vunpack.c.0.s8 %v1506
  %v1508 = vlaneseq
  %v1509 = vshrl.u32 %v1508, 7
  %v1510 = vsub.s32 %v1507, %v1509
  %v1511 = vrot.slane %v1481, %v1510
  %v1512 = vcombine.high %v1511, %v1511
  %v1514 = vunpack.c.l.s4 1983009808
  %v1515 = vunpack.c.0.s8 %v1514
  %v1516 = vlaneseq
  %v1517 = vshrl.u32 %v1516, 7
  %v1518 = vsub.s32 %v1515, %v1517
  %v1519 = vrot.slane %v1482, %v1518
  %v1520 = vcombine.high %v1519, %v1519
  %v1522 = vunpack.c.l.s4 1983009808
  %v1523 = vunpack.c.0.s8 %v1522
  %v1524 = vlaneseq
  %v1525 = vshrl.u32 %v1524, 7
  %v1526 = vsub.s32 %v1523, %v1525
  %v1527 = vrot.slane %v1483, %v1526
  %v1528 = vcombine.high %v1527, %v1527
  %v1530 = vunpack.c.l.s4 1983009808
  %v1531 = vunpack.c.0.s8 %v1530
  %v1532 = vlaneseq
  %v1533 = vshrl.u32 %v1532, 7
  %v1534 = vsub.s32 %v1531, %v1533
  %v1535 = vrot.slane %v1484, %v1534
  %v1536 = vcombine.high %v1535, %v1535
  %v1538 = vunpack.c.l.s4 1983009808
  %v1539 = vunpack.c.0.s8 %v1538
  %v1540 = vlaneseq
  %v1541 = vshrl.u32 %v1540, 7
  %v1542 = vsub.s32 %v1539, %v1541
  %v1543 = vrot.slane %v1485, %v1542
  %v1544 = vcombine.high %v1543, %v1543
  %v1546 = vunpack.c.l.s4 1983009808
  %v1547 = vunpack.c.0.s8 %v1546
  %v1548 = vlaneseq
  %v1549 = vshrl.u32 %v1548, 7
  %v1550 = vsub.s32 %v1547, %v1549
  %v1551 = vrot.slane %v1486, %v1550
  %v1552 = vcombine.high %v1551, %v1551
  %v1554 = vunpack.c.l.s4 1983009808
  %v1555 = vunpack.c.0.s8 %v1554
  %v1556 = vlaneseq
  %v1557 = vshrl.u32 %v1556, 7
  %v1558 = vsub.s32 %v1555, %v1557
  %v1559 = vrot.slane %v1487, %v1558
  %v1560 = vcombine.high %v1559, %v1559
  %v1562 = vunpack.c.l.s4 1983009808
  %v1563 = vunpack.c.0.s8 %v1562
  %v1564 = vlaneseq
  %v1565 = vshrl.u32 %v1564, 7
  %v1566 = vsub.s32 %v1563, %v1565
  %v1567 = vrot.slane %v1488, %v1566
  %v1568 = vcombine.high %v1567, %v1567
  %v1570 = vunpack.c.l.s4 1983009808
  %v1571 = vunpack.c.0.s8 %v1570
  %v1572 = vlaneseq
  %v1573 = vshrl.u32 %v1572, 7
  %v1574 = vsub.s32 %v1571, %v1573
  %v1575 = vrot.slane %v1489, %v1574
  %v1576 = vcombine.high %v1575, %v1575
  %v1578 = vunpack.c.l.s4 1983009808
  %v1579 = vunpack.c.0.s8 %v1578
  %v1580 = vlaneseq
  %v1581 = vshrl.u32 %v1580, 7
  %v1582 = vsub.s32 %v1579, %v1581
  %v1583 = vrot.slane %v1490, %v1582
  %v1584 = vcombine.high %v1583, %v1583
  %v1586 = vunpack.c.l.s4 1983009808
  %v1587 = vunpack.c.0.s8 %v1586
  %v1588 = vlaneseq
  %v1589 = vshrl.u32 %v1588, 7
  %v1590 = vsub.s32 %v1587, %v1589
  %v1591 = vrot.slane %v1491, %v1590
  %v1592 = vcombine.high %v1591, %v1591
  %v1594 = vunpack.c.l.s4 1983009808
  %v1595 = vunpack.c.0.s8 %v1594
  %v1596 = vlaneseq
  %v1597 = vshrl.u32 %v1596, 7
  %v1598 = vsub.s32 %v1595, %v1597
  %v1599 = vrot.slane %v1492, %v1598
  %v1600 = vcombine.high %v1599, %v1599
  %vm1601 = vmor %vm23, %vm62
  %vm1602 = vcmask 1044484
  %vm1603 = vmor %vm1601, %vm1602
  %vm1604 = vcmask 1046534
  %vm1605 = vmor %vm1603, %vm1604
  %v1606 = vrot.slane %v1511, 7
  %v1607 = vrot.slane %v1606, 2
  %v1608 = vrot.slane %v1512, 7
  %v1609 = vsel %vm1605, %v1607, %v1608
  %v1610 = vrot.slane %v1519, 7
  %v1611 = vrot.slane %v1610, 2
  %v1612 = vrot.slane %v1520, 7
  %v1613 = vsel %vm1605, %v1611, %v1612
  %v1614 = vrot.slane %v1527, 7
  %v1615 = vrot.slane %v1614, 2
  %v1616 = vrot.slane %v1528, 7
  %v1617 = vsel %vm1605, %v1615, %v1616
  %v1618 = vrot.slane %v1535, 7
  %v1619 = vrot.slane %v1618, 2
  %v1620 = vrot.slane %v1536, 7
  %v1621 = vsel %vm1605, %v1619, %v1620
  %v1622 = vrot.slane %v1543, 7
  %v1623 = vrot.slane %v1622, 2
  %v1624 = vrot.slane %v1544, 7
  %v1625 = vsel %vm1605, %v1623, %v1624
  %v1626 = vrot.slane %v1551, 7
  %v1627 = vrot.slane %v1626, 2
  %v1628 = vrot.slane %v1552, 7
  %v1629 = vsel %vm1605, %v1627, %v1628
  %v1630 = vrot.slane %v1559, 7
  %v1631 = vrot.slane %v1630, 2
  %v1632 = vrot.slane %v1560, 7
  %v1633 = vsel %vm1605, %v1631, %v1632
  %v1634 = vrot.slane %v1567, 7
  %v1635 = vrot.slane %v1634, 2
  %v1636 = vrot.slane %v1568, 7
  %v1637 = vsel %vm1605, %v1635, %v1636
  %v1638 = vrot.slane %v1575, 7
  %v1639 = vrot.slane %v1638, 2
  %v1640 = vrot.slane %v1576, 7
  %v1641 = vsel %vm1605, %v1639, %v1640
  %v1642 = vrot.slane %v1583, 7
  %v1643 = vrot.slane %v1642, 2
  %v1644 = vrot.slane %v1584, 7
  %v1645 = vsel %vm1605, %v1643, %v1644
  %v1646 = vrot.slane %v1591, 7
  %v1647 = vrot.slane %v1646, 2
  %v1648 = vrot.slane %v1592, 7
  %v1649 = vsel %vm1605, %v1647, %v1648
  %v1650 = vrot.slane %v1599, 7
  %v1651 = vrot.slane %v1650, 2
  %v1652 = vrot.slane %v1600, 7
  %v1653 = vsel %vm1605, %v1651, %v1652
  %s1654 = scalar_lea.vmem %s3, 128
  %v1655 = vld [vmem:[%s1654] sm:$0xf]
  %v1656 = vld [vmem:[%s1654 + $0x4] sm:$0xf]
  %v1657 = vld [vmem:[%s1654 + $0x8] sm:$0xf]
  %v1658 = vld [vmem:[%s1654 + $0xc] sm:$0xf]
  %v1659 = vld [vmem:[%s1654 + $0x10] sm:$0xf]
  %v1660 = vld [vmem:[%s1654 + $0x14] sm:$0xf]
  %v1661 = vld [vmem:[%s1654 + $0x18] sm:$0xf]
  %v1662 = vld [vmem:[%s1654 + $0x1c] sm:$0xf]
  %v1663 = vld [vmem:[%s1654 + $0x20] sm:$0xf]
  %v1664 = vld [vmem:[%s1654 + $0x24] sm:$0xf]
  %v1665 = vld [vmem:[%s1654 + $0x28] sm:$0xf]
  %v1666 = vld [vmem:[%s1654 + $0x2c] sm:$0xf]
  %v1667 = vld [vmem:[%s1654 + $0x30] sm:$0xf]
  %v1668 = vld [vmem:[%s1654 + $0x34] sm:$0xf]
  %v1669 = vld [vmem:[%s1654 + $0x38] sm:$0xf]
  %v1670 = vld [vmem:[%s1654 + $0x3c] sm:$0xf]
  %v1671 = vcombine.low %v1609, %v1613
  %v1672 = vcombine.low %v1617, %v1621
  %v1674 = vunpack.c.l.s4 1983009808
  %v1675 = vunpack.c.0.s8 %v1674
  %v1676 = vlaneseq
  %v1677 = vshrl.u32 %v1676, 7
  %v1678 = vsub.s32 %v1675, %v1677
  %v1679 = vrot.slane %v1671, %v1678
  %v1681 = vunpack.c.l.s4 1983009808
  %v1682 = vunpack.c.0.s8 %v1681
  %v1683 = vlaneseq
  %v1684 = vshrl.u32 %v1683, 7
  %v1685 = vsub.s32 %v1682, %v1684
  %v1686 = vrot.slane %v1672, %v1685
  %v1687 = vcombine.low %v1679, %v1686
  %v1688 = vcombine.low %v1633, %v1637
  %v1689 = vcombine.low %v1641, %v1645
  %v1691 = vunpack.c.l.s4 1983009808
  %v1692 = vunpack.c.0.s8 %v1691
  %v1693 = vlaneseq
  %v1694 = vshrl.u32 %v1693, 7
  %v1695 = vsub.s32 %v1692, %v1694
  %v1696 = vrot.slane %v1688, %v1695
  %v1698 = vunpack.c.l.s4 1983009808
  %v1699 = vunpack.c.0.s8 %v1698
  %v1700 = vlaneseq
  %v1701 = vshrl.u32 %v1700, 7
  %v1702 = vsub.s32 %v1699, %v1701
  %v1703 = vrot.slane %v1689, %v1702
  %v1704 = vcombine.low %v1696, %v1703
  %v1723 = vunpack.c.l.b16 %v1655
  %v1724 = vunpack.c.l.b16 %v1656
  %v1725 = vunpack.c.l.b16 %v1657
  %v1726 = vunpack.c.l.b16 %v1658
  %v1727 = vunpack.c.l.b16 %v1659
  %v1728 = vunpack.c.l.b16 %v1660
  %v1729 = vunpack.c.l.b16 %v1661
  %v1730 = vunpack.c.l.b16 %v1662
  %v1731 = vunpack.c.l.b16 %v1663
  %v1732 = vunpack.c.l.b16 %v1664
  %v1733 = vunpack.c.l.b16 %v1665
  %v1734 = vunpack.c.l.b16 %v1666
  %v1735 = vunpack.c.l.b16 %v1667
  %v1736 = vunpack.c.l.b16 %v1668
  %v1737 = vunpack.c.l.b16 %v1669
  %v1738 = vunpack.c.l.b16 %v1670
  %v1739 = vpack.c.b16 %v1724, %v1723
  %v1740 = vpack.c.b16 %v1726, %v1725
  %v1741 = vpack.c.b16 %v1728, %v1727
  %v1742 = vpack.c.b16 %v1730, %v1729
  %v1743 = vpack.c.b16 %v1732, %v1731
  %v1744 = vpack.c.b16 %v1734, %v1733
  %v1745 = vpack.c.b16 %v1736, %v1735
  %v1746 = vpack.c.b16 %v1738, %v1737
  %1755 = vmatprep.subr.bf16.mxu0 0
  %1756 = vmatpush1.bf16.msra.mxu0 %v1739
  %1757 = vmatprep.subr.bf16.mxu0 0
  %1758 = vmatpush1.bf16.msra.mxu0 %v1740
  %1759 = vmatprep.subr.bf16.mxu0 0
  %1760 = vmatpush1.bf16.msra.mxu0 %v1741
  %1761 = vmatprep.subr.bf16.mxu0 0
  %1762 = vmatpush1.bf16.msra.mxu0 %v1742
  %1763 = vmatprep.subr.bf16.mxu0 0
  %1764 = vmatpush1.bf16.msra.mxu0 %v1743
  %1765 = vmatprep.subr.bf16.mxu0 0
  %1766 = vmatpush1.bf16.msra.mxu0 %v1744
  %1767 = vmatprep.subr.bf16.mxu0 0
  %1768 = vmatpush1.bf16.msra.mxu0 %v1745
  %1769 = vmatprep.subr.bf16.mxu0 0
  %1770 = vmatpush1.bf16.msra.mxu0 %v1746
  %1771 = vmatprep.subr.bf16.mxu0 0
  %1772 = vmatpush1.bf16.msra.mxu0 0
  %1773 = vmatprep.subr.bf16.mxu0 0
  %1774 = vmatpush1.bf16.msra.mxu0 0
  %1775 = vmatprep.subr.bf16.mxu0 0
  %1776 = vmatpush1.bf16.msra.mxu0 0
  %1777 = vmatprep.subr.bf16.mxu0 0
  %1778 = vmatpush1.bf16.msra.mxu0 0
  %1779 = vmatprep.subr.bf16.mxu0 0
  %1780 = vmatpush1.bf16.msra.mxu0 0
  %1781 = vmatprep.subr.bf16.mxu0 0
  %1782 = vmatpush1.bf16.msra.mxu0 0
  %1783 = vmatprep.subr.bf16.mxu0 0
  %1784 = vmatpush1.bf16.msra.mxu0 0
  %1785 = vmatprep.subr.bf16.mxu0 0
  %1786 = vmatpush1.bf16.msra.mxu0 0
  %1787 = vmatprep.mubr.bf16.mxu0 0
  %1788 = vmatmul.mubr.bf16.gmra.mrb[0].mxu0 %v1687
  %v1789 = vpop.f32.mrb[0].mxu0
  %v1790 = vadd.f32 0.0, %v1789
  %v1791 = vpop.f32.mrb[0].mxu0
  %v1792 = vpop.f32.mrb[0].mxu0
  %v1793 = vadd.f32 0.0, %v1792
  %v1794 = vpop.f32.mrb[0].mxu0
  %1795 = vmatprep.mubr.bf16.mxu0 0
  %1796 = vmatmul.mubr.bf16.gmra.mrb[0].mxu0 %v1704
  %v1797 = vpop.f32.mrb[0].mxu0
  %v1798 = vadd.f32 0.0, %v1797
  %v1799 = vpop.f32.mrb[0].mxu0
  %v1800 = vpop.f32.mrb[0].mxu0
  %v1801 = vadd.f32 0.0, %v1800
  %v1802 = vpop.f32.mrb[0].mxu0
  %1803 = vdwg.mxu0
  %v1804 = vadd.f32 %v1477, %v1790
  %v1805 = vadd.f32 %v1478, %v1793
  %v1806 = vadd.f32 %v1479, %v1798
  %v1807 = vadd.f32 %v1480, %v1801
  %s1808 = scalar_lea.vmem %s3, 320
  %v1809 = vld [vmem:[%s1808] sm:$0xf]
  %v1810 = vld [vmem:[%s1808 + $0x4] sm:$0xf]
  %v1811 = vld [vmem:[%s1808 + $0x8] sm:$0xf]
  %v1812 = vld [vmem:[%s1808 + $0xc] sm:$0xf]
  %v1813 = vld [vmem:[%s1808 + $0x10] sm:$0xf]
  %v1814 = vld [vmem:[%s1808 + $0x14] sm:$0xf]
  %v1815 = vld [vmem:[%s1808 + $0x18] sm:$0xf]
  %v1816 = vld [vmem:[%s1808 + $0x1c] sm:$0xf]
  %v1817 = vld [vmem:[%s1808 + $0x20] sm:$0xf]
  %v1818 = vld [vmem:[%s1808 + $0x24] sm:$0xf]
  %v1819 = vld [vmem:[%s1808 + $0x28] sm:$0xf]
  %v1820 = vld [vmem:[%s1808 + $0x2c] sm:$0xf]
  %v1821 = vld [vmem:[%s1808 + $0x30] sm:$0xf]
  %v1822 = vld [vmem:[%s1808 + $0x34] sm:$0xf]
  %v1823 = vld [vmem:[%s1808 + $0x38] sm:$0xf]
  %v1824 = vld [vmem:[%s1808 + $0x3c] sm:$0xf]
  %v1825 = vcombine.low %v1613, %v1617
  %v1826 = vcombine.low %v1621, %v1625
  %v1828 = vunpack.c.l.s4 1983009808
  %v1829 = vunpack.c.0.s8 %v1828
  %v1830 = vlaneseq
  %v1831 = vshrl.u32 %v1830, 7
  %v1832 = vsub.s32 %v1829, %v1831
  %v1833 = vrot.slane %v1825, %v1832
  %v1835 = vunpack.c.l.s4 1983009808
  %v1836 = vunpack.c.0.s8 %v1835
  %v1837 = vlaneseq
  %v1838 = vshrl.u32 %v1837, 7
  %v1839 = vsub.s32 %v1836, %v1838
  %v1840 = vrot.slane %v1826, %v1839
  %v1841 = vcombine.low %v1833, %v1840
  %v1842 = vcombine.low %v1637, %v1641
  %v1843 = vcombine.low %v1645, %v1649
  %v1845 = vunpack.c.l.s4 1983009808
  %v1846 = vunpack.c.0.s8 %v1845
  %v1847 = vlaneseq
  %v1848 = vshrl.u32 %v1847, 7
  %v1849 = vsub.s32 %v1846, %v1848
  %v1850 = vrot.slane %v1842, %v1849
  %v1852 = vunpack.c.l.s4 1983009808
  %v1853 = vunpack.c.0.s8 %v1852
  %v1854 = vlaneseq
  %v1855 = vshrl.u32 %v1854, 7
  %v1856 = vsub.s32 %v1853, %v1855
  %v1857 = vrot.slane %v1843, %v1856
  %v1858 = vcombine.low %v1850, %v1857
  %v1877 = vunpack.c.l.b16 %v1809
  %v1878 = vunpack.c.l.b16 %v1810
  %v1879 = vunpack.c.l.b16 %v1811
  %v1880 = vunpack.c.l.b16 %v1812
  %v1881 = vunpack.c.l.b16 %v1813
  %v1882 = vunpack.c.l.b16 %v1814
  %v1883 = vunpack.c.l.b16 %v1815
  %v1884 = vunpack.c.l.b16 %v1816
  %v1885 = vunpack.c.l.b16 %v1817
  %v1886 = vunpack.c.l.b16 %v1818
  %v1887 = vunpack.c.l.b16 %v1819
  %v1888 = vunpack.c.l.b16 %v1820
  %v1889 = vunpack.c.l.b16 %v1821
  %v1890 = vunpack.c.l.b16 %v1822
  %v1891 = vunpack.c.l.b16 %v1823
  %v1892 = vunpack.c.l.b16 %v1824
  %v1893 = vpack.c.b16 %v1878, %v1877
  %v1894 = vpack.c.b16 %v1880, %v1879
  %v1895 = vpack.c.b16 %v1882, %v1881
  %v1896 = vpack.c.b16 %v1884, %v1883
  %v1897 = vpack.c.b16 %v1886, %v1885
  %v1898 = vpack.c.b16 %v1888, %v1887
  %v1899 = vpack.c.b16 %v1890, %v1889
  %v1900 = vpack.c.b16 %v1892, %v1891
  %1909 = vmatprep.subr.bf16.mxu0 0
  %1910 = vmatpush1.bf16.msra.mxu0 %v1893
  %1911 = vmatprep.subr.bf16.mxu0 0
  %1912 = vmatpush1.bf16.msra.mxu0 %v1894
  %1913 = vmatprep.subr.bf16.mxu0 0
  %1914 = vmatpush1.bf16.msra.mxu0 %v1895
  %1915 = vmatprep.subr.bf16.mxu0 0
  %1916 = vmatpush1.bf16.msra.mxu0 %v1896
  %1917 = vmatprep.subr.bf16.mxu0 0
  %1918 = vmatpush1.bf16.msra.mxu0 %v1897
  %1919 = vmatprep.subr.bf16.mxu0 0
  %1920 = vmatpush1.bf16.msra.mxu0 %v1898
  %1921 = vmatprep.subr.bf16.mxu0 0
  %1922 = vmatpush1.bf16.msra.mxu0 %v1899
  %1923 = vmatprep.subr.bf16.mxu0 0
  %1924 = vmatpush1.bf16.msra.mxu0 %v1900
  %1925 = vmatprep.subr.bf16.mxu0 0
  %1926 = vmatpush1.bf16.msra.mxu0 0
  %1927 = vmatprep.subr.bf16.mxu0 0
  %1928 = vmatpush1.bf16.msra.mxu0 0
  %1929 = vmatprep.subr.bf16.mxu0 0
  %1930 = vmatpush1.bf16.msra.mxu0 0
  %1931 = vmatprep.subr.bf16.mxu0 0
  %1932 = vmatpush1.bf16.msra.mxu0 0
  %1933 = vmatprep.subr.bf16.mxu0 0
  %1934 = vmatpush1.bf16.msra.mxu0 0
  %1935 = vmatprep.subr.bf16.mxu0 0
  %1936 = vmatpush1.bf16.msra.mxu0 0
  %1937 = vmatprep.subr.bf16.mxu0 0
  %1938 = vmatpush1.bf16.msra.mxu0 0
  %1939 = vmatprep.subr.bf16.mxu0 0
  %1940 = vmatpush1.bf16.msra.mxu0 0
  %1941 = vmatprep.mubr.bf16.mxu0 0
  %1942 = vmatmul.mubr.bf16.gmra.mrb[0].mxu0 %v1841
  %v1943 = vpop.f32.mrb[0].mxu0
  %v1944 = vadd.f32 0.0, %v1943
  %v1945 = vpop.f32.mrb[0].mxu0
  %v1946 = vpop.f32.mrb[0].mxu0
  %v1947 = vadd.f32 0.0, %v1946
  %v1948 = vpop.f32.mrb[0].mxu0
  %1949 = vmatprep.mubr.bf16.mxu0 0
  %1950 = vmatmul.mubr.bf16.gmra.mrb[0].mxu0 %v1858
  %v1951 = vpop.f32.mrb[0].mxu0
  %v1952 = vadd.f32 0.0, %v1951
  %v1953 = vpop.f32.mrb[0].mxu0
  %v1954 = vpop.f32.mrb[0].mxu0
  %v1955 = vadd.f32 0.0, %v1954
  %v1956 = vpop.f32.mrb[0].mxu0
  %1957 = vdwg.mxu0
  %v1958 = vadd.f32 %v1804, %v1944
  %v1959 = vadd.f32 %v1805, %v1947
  %v1960 = vadd.f32 %v1806, %v1952
  %v1961 = vadd.f32 %v1807, %v1955
  %s1962 = scalar_lea.vmem %s3, 512
  %v1963 = vld [vmem:[%s1962] sm:$0xf]
  %v1964 = vld [vmem:[%s1962 + $0x4] sm:$0xf]
  %v1965 = vld [vmem:[%s1962 + $0x8] sm:$0xf]
  %v1966 = vld [vmem:[%s1962 + $0xc] sm:$0xf]
  %v1967 = vld [vmem:[%s1962 + $0x10] sm:$0xf]
  %v1968 = vld [vmem:[%s1962 + $0x14] sm:$0xf]
  %v1969 = vld [vmem:[%s1962 + $0x18] sm:$0xf]
  %v1970 = vld [vmem:[%s1962 + $0x1c] sm:$0xf]
  %v1971 = vld [vmem:[%s1962 + $0x20] sm:$0xf]
  %v1972 = vld [vmem:[%s1962 + $0x24] sm:$0xf]
  %v1973 = vld [vmem:[%s1962 + $0x28] sm:$0xf]
  %v1974 = vld [vmem:[%s1962 + $0x2c] sm:$0xf]
  %v1975 = vld [vmem:[%s1962 + $0x30] sm:$0xf]
  %v1976 = vld [vmem:[%s1962 + $0x34] sm:$0xf]
  %v1977 = vld [vmem:[%s1962 + $0x38] sm:$0xf]
  %v1978 = vld [vmem:[%s1962 + $0x3c] sm:$0xf]
  %v1979 = vcombine.low %v1625, %v1629
  %v1981 = vunpack.c.l.s4 1983009808
  %v1982 = vunpack.c.0.s8 %v1981
  %v1983 = vlaneseq
  %v1984 = vshrl.u32 %v1983, 7
  %v1985 = vsub.s32 %v1982, %v1984
  %v1986 = vrot.slane %v1979, %v1985
  %v1987 = vcombine.low %v1686, %v1986
  %v1988 = vcombine.low %v1649, %v1653
  %v1990 = vunpack.c.l.s4 1983009808
  %v1991 = vunpack.c.0.s8 %v1990
  %v1992 = vlaneseq
  %v1993 = vshrl.u32 %v1992, 7
  %v1994 = vsub.s32 %v1991, %v1993
  %v1995 = vrot.slane %v1988, %v1994
  %v1996 = vcombine.low %v1703, %v1995
  %v2015 = vunpack.c.l.b16 %v1963
  %v2016 = vunpack.c.l.b16 %v1964
  %v2017 = vunpack.c.l.b16 %v1965
  %v2018 = vunpack.c.l.b16 %v1966
  %v2019 = vunpack.c.l.b16 %v1967
  %v2020 = vunpack.c.l.b16 %v1968
  %v2021 = vunpack.c.l.b16 %v1969
  %v2022 = vunpack.c.l.b16 %v1970
  %v2023 = vunpack.c.l.b16 %v1971
  %v2024 = vunpack.c.l.b16 %v1972
  %v2025 = vunpack.c.l.b16 %v1973
  %v2026 = vunpack.c.l.b16 %v1974
  %v2027 = vunpack.c.l.b16 %v1975
  %v2028 = vunpack.c.l.b16 %v1976
  %v2029 = vunpack.c.l.b16 %v1977
  %v2030 = vunpack.c.l.b16 %v1978
  %v2031 = vpack.c.b16 %v2016, %v2015
  %v2032 = vpack.c.b16 %v2018, %v2017
  %v2033 = vpack.c.b16 %v2020, %v2019
  %v2034 = vpack.c.b16 %v2022, %v2021
  %v2035 = vpack.c.b16 %v2024, %v2023
  %v2036 = vpack.c.b16 %v2026, %v2025
  %v2037 = vpack.c.b16 %v2028, %v2027
  %v2038 = vpack.c.b16 %v2030, %v2029
  %2047 = vmatprep.subr.bf16.mxu0 0
  %2048 = vmatpush1.bf16.msra.mxu0 %v2031
  %2049 = vmatprep.subr.bf16.mxu0 0
  %2050 = vmatpush1.bf16.msra.mxu0 %v2032
  %2051 = vmatprep.subr.bf16.mxu0 0
  %2052 = vmatpush1.bf16.msra.mxu0 %v2033
  %2053 = vmatprep.subr.bf16.mxu0 0
  %2054 = vmatpush1.bf16.msra.mxu0 %v2034
  %2055 = vmatprep.subr.bf16.mxu0 0
  %2056 = vmatpush1.bf16.msra.mxu0 %v2035
  %2057 = vmatprep.subr.bf16.mxu0 0
  %2058 = vmatpush1.bf16.msra.mxu0 %v2036
  %2059 = vmatprep.subr.bf16.mxu0 0
  %2060 = vmatpush1.bf16.msra.mxu0 %v2037
  %2061 = vmatprep.subr.bf16.mxu0 0
  %2062 = vmatpush1.bf16.msra.mxu0 %v2038
  %2063 = vmatprep.subr.bf16.mxu0 0
  %2064 = vmatpush1.bf16.msra.mxu0 0
  %2065 = vmatprep.subr.bf16.mxu0 0
  %2066 = vmatpush1.bf16.msra.mxu0 0
  %2067 = vmatprep.subr.bf16.mxu0 0
  %2068 = vmatpush1.bf16.msra.mxu0 0
  %2069 = vmatprep.subr.bf16.mxu0 0
  %2070 = vmatpush1.bf16.msra.mxu0 0
  %2071 = vmatprep.subr.bf16.mxu0 0
  %2072 = vmatpush1.bf16.msra.mxu0 0
  %2073 = vmatprep.subr.bf16.mxu0 0
  %2074 = vmatpush1.bf16.msra.mxu0 0
  %2075 = vmatprep.subr.bf16.mxu0 0
  %2076 = vmatpush1.bf16.msra.mxu0 0
  %2077 = vmatprep.subr.bf16.mxu0 0
  %2078 = vmatpush1.bf16.msra.mxu0 0
  %2079 = vmatprep.mubr.bf16.mxu0 0
  %2080 = vmatmul.mubr.bf16.gmra.mrb[0].mxu0 %v1987
  %v2081 = vpop.f32.mrb[0].mxu0
  %v2082 = vadd.f32 0.0, %v2081
  %v2083 = vpop.f32.mrb[0].mxu0
  %v2084 = vpop.f32.mrb[0].mxu0
  %v2085 = vadd.f32 0.0, %v2084
  %v2086 = vpop.f32.mrb[0].mxu0
  %2087 = vmatprep.mubr.bf16.mxu0 0
  %2088 = vmatmul.mubr.bf16.gmra.mrb[0].mxu0 %v1996
  %v2089 = vpop.f32.mrb[0].mxu0
  %v2090 = vadd.f32 0.0, %v2089
  %v2091 = vpop.f32.mrb[0].mxu0
  %v2092 = vpop.f32.mrb[0].mxu0
  %v2093 = vadd.f32 0.0, %v2092
  %v2094 = vpop.f32.mrb[0].mxu0
  %2095 = vdwg.mxu0
  %v2096 = vadd.f32 %v1958, %v2082
  %v2097 = vadd.f32 %v1959, %v2085
  %v2098 = vadd.f32 %v1960, %v2090
  %v2099 = vadd.f32 %v1961, %v2093
  %v2100 = vpack.c.bf16 %v2097, %v2096
  %v2101 = vpack.c.bf16 %v2099, %v2098
  %v2104 = vunpack.c.l.b16 %v2100
  %v2105 = vunpack.c.h.b16 %v2100
  %v2106 = vunpack.c.l.b16 %v2101
  %v2107 = vunpack.c.h.b16 %v2101
  %v2108 = vpack.c.b16 %v2104, %v2104
  %v2109 = vpack.c.b16 %v2105, %v2105
  %v2110 = vpack.c.b16 %v2106, %v2106
  %v2111 = vpack.c.b16 %v2107, %v2107
  %2116 = vst [vmem:[%s4] sm:$0xf] %v2108
  %2117 = vst [vmem:[%s4 + $0x4] sm:$0xf] %v2109
  %2118 = vst [vmem:[%s4 + $0x8] sm:$0xf] %v2110
  %2119 = vst [vmem:[%s4 + $0xc] sm:$0xf] %v2111
  // Predicated region
  $region18: #{densenet_forward.18} parent=0 // pred_check
    _
  $region19: #{densenet_forward.18} parent=0 // pred_check_branch
    %2121 = sbr.rel (0) target = $region21
  $region20: #{densenet_forward.18} parent=0 // pred_region
    _
  $region21: #{densenet_forward.18} parent=0 // pred_fallthru
    _
  // Predicated region
  $region22: #{densenet_forward.18} parent=0 // pred_check
    _
  $region23: #{densenet_forward.18} parent=0 // pred_check_branch
    %2123 = sbr.rel (0) target = $region25
  $region24: #{densenet_forward.18} parent=0 // pred_region
    _
  $region25: #{densenet_forward.18} parent=0 // pred_fallthru
    _

// kernel: densenet_forward.21
$region0: #{densenet_forward.21}
  #allocation0 [shape = 'u32[]', space=smem, size = 0x4, offset = 0x4, fixed_abs, tag = 'smem constant byte address 0x4 - core index']
  #allocation1 [shape = 'u32[144,128]{1,0:T(1,128)}', space=vmem, size = 0x12000, scoped, tag = 'internal scratch']
  %s0 = inlined_call_operand.vmem [shape: bf16[32,128], index: 0, kind: input, shape index: {}]
  %s1 = inlined_call_operand.vmem [shape: f32[1,128], index: 1, kind: input, shape index: {}]
  %s2 = inlined_call_operand.vmem [shape: f32[1,128], index: 2, kind: input, shape index: {}]
  %s3 = inlined_call_operand.vmem [shape: bf16[32,128], index: 3, kind: output, shape index: {}]
  %s4 = sld [smem:[#allocation0]]
  $region22: #{densenet_forward.21} parent=0
    _
  %s6 = ssub.s32 1, %s4
  %s7 = scalar_select 0, %s6, %s4
  // Predicated region
  $region2: #{densenet_forward.21} parent=0 // pred_check
    _
  $region3: #{densenet_forward.21} parent=0 // pred_check_branch
    %9 = sbr.rel (0) target = $region5
  $region4: #{densenet_forward.21} parent=0 // pred_region
    _
  $region5: #{densenet_forward.21} parent=0 // pred_fallthru
    _
  // Predicated region
  $region6: #{densenet_forward.21} parent=0 // pred_check
    _
  $region7: #{densenet_forward.21} parent=0 // pred_check_branch
    %11 = sbr.rel (0) target = $region9
  $region8: #{densenet_forward.21} parent=0 // pred_region
    _
  $region9: #{densenet_forward.21} parent=0 // pred_fallthru
    _
  // Predicated region
  $region10: #{densenet_forward.21} parent=0 // pred_check
    _
  $region11: #{densenet_forward.21} parent=0 // pred_check_branch
    %13 = sbr.rel (0) target = $region13
  $region12: #{densenet_forward.21} parent=0 // pred_region
    _
  $region13: #{densenet_forward.21} parent=0 // pred_fallthru
    _
  %v14 = vld [vmem:[%s0] sm:$0xf]
  %v15 = vld [vmem:[%s0 + $0x4] sm:$0xf]
  %v16 = vld [vmem:[%s0 + $0x8] sm:$0xf]
  %v17 = vld [vmem:[%s0 + $0xc] sm:$0xf]
  %v18 = vunpack.c.l.bf16 %v14
  %v19 = vunpack.c.l.bf16 %v15
  %v20 = vunpack.c.l.bf16 %v16
  %v21 = vunpack.c.l.bf16 %v17
  %v22 = vld [vmem:[%s1] sm:$0x1]
  %v24 = vlaneseq
  %v25 = vshrl.u32 %v24, 7
  %v26 = vsub.s32 0, %v25
  %v27 = vrot.slane %v22, %v26
  %v29 = vmul.f32 %v18, %v27
  %v30 = vmul.f32 %v19, %v27
  %v31 = vmul.f32 %v20, %v27
  %v32 = vmul.f32 %v21, %v27
  %v33 = vld [vmem:[%s2] sm:$0x1]
  %v35 = vlaneseq
  %v36 = vshrl.u32 %v35, 7
  %v37 = vsub.s32 0, %v36
  %v38 = vrot.slane %v33, %v37
  %v40 = vadd.f32 %v29, %v38
  %v41 = vadd.f32 %v30, %v38
  %v42 = vadd.f32 %v31, %v38
  %v43 = vadd.f32 %v32, %v38
  %v44 = vmax.f32 %v40, 0.0
  %v45 = vmax.f32 %v41, 0.0
  %v46 = vmax.f32 %v42, 0.0
  %v47 = vmax.f32 %v43, 0.0
  %v48 = vpack.c.bf16 %v45, %v44
  %v49 = vpack.c.bf16 %v47, %v46
  %v52 = vunpack.c.l.b16 %v48
  %v53 = vunpack.c.h.b16 %v48
  %v54 = vunpack.c.l.b16 %v49
  %v55 = vunpack.c.h.b16 %v49
  %v56 = vpack.c.b16 %v52, %v52
  %v57 = vpack.c.b16 %v53, %v53
  %v58 = vpack.c.b16 %v54, %v54
  %v59 = vpack.c.b16 %v55, %v55
  %64 = vst [vmem:[%s3] sm:$0xf] %v56
  %65 = vst [vmem:[%s3 + $0x4] sm:$0xf] %v57
  %66 = vst [vmem:[%s3 + $0x8] sm:$0xf] %v58
  %67 = vst [vmem:[%s3 + $0xc] sm:$0xf] %v59
  // Predicated region
  $region14: #{densenet_forward.21} parent=0 // pred_check
    _
  $region15: #{densenet_forward.21} parent=0 // pred_check_branch
    %69 = sbr.rel (0) target = $region17
  $region16: #{densenet_forward.21} parent=0 // pred_region
    _
  $region17: #{densenet_forward.21} parent=0 // pred_fallthru
    _
  // Predicated region
  $region18: #{densenet_forward.21} parent=0 // pred_check
    _
  $region19: #{densenet_forward.21} parent=0 // pred_check_branch
    %71 = sbr.rel (0) target = $region21
  $region20: #{densenet_forward.21} parent=0 // pred_region
    _
  $region21: #{densenet_forward.21} parent=0 // pred_fallthru
    _

</llo_original>
